<compile_context>
chip_gen: v5e
topology: v5e:2x2
jax: 0.10.0
libtpu: 0.0.40
codegen_flags: <defaults>
</compile_context>

<pallas_src>
import math

import jax
import jax.numpy as jnp
import numpy as np
from jax.experimental import pallas as pl
from jax.experimental.pallas import tpu as pltpu


# ----------------------------------------------------------------------------
# Static network geometry (CIFAR 32x32 input)
# ----------------------------------------------------------------------------
def _pool_out_dim(n, k=3, s=2):
    """PyTorch pooling output size with ceil_mode=True, padding=0."""
    o = -(-(n - k) // s) + 1
    if (o - 1) * s >= n:          # last window must start inside the input
        o -= 1
    return o


_H1 = (32 - 7) // 2 + 1            # 13 : conv7x7 / stride 2 output
_H2 = _pool_out_dim(_H1)           # 6  : after MaxPool(3,2,ceil)
_H3 = _pool_out_dim(_H2)           # 3  : after pool1 (avg)
_H4 = _pool_out_dim(_H3)           # 1  : after pool2 (avg)
_K1 = 160                          # conv1 contraction 7*7*3=147 padded to 160

FIRE_CFG = [
    ("fire2", 96, 16, 64, 64), ("fire3", 128, 16, 64, 64),
    ("fire4", 128, 32, 128, 128), ("fire5", 256, 32, 128, 128),
    ("fire6", 256, 48, 192, 192), ("fire7", 384, 48, 192, 192),
    ("fire8", 384, 64, 256, 256), ("fire9", 512, 64, 256, 256),
]


# ----------------------------------------------------------------------------
# Compile-time constant matrices (pooling / layout / masks), built with numpy
# ----------------------------------------------------------------------------
def _interior_mask(H, W):
    """(P, 1) f32 mask: 1 on interior pixels of the padded (H+2)x(W+2) layout."""
    Wp = W + 2
    m = np.zeros(((H + 2) * Wp, 1), np.float32)
    for y in range(H):
        m[(y + 1) * Wp + 1:(y + 1) * Wp + 1 + W, 0] = 1.0
    return m


def _maxpool_select_matrix(H, W):
    """Selects window (2y,2x) from the shifted-max tensor and lays the result
    out in the zero-bordered padded layout of the pooled stage."""
    Ho, Wo = _pool_out_dim(H), _pool_out_dim(W)
    # All windows are full 3x3 for 13->6 (no ceil-mode overhang clipping).
    assert 2 * (Ho - 1) + 3 <= H and 2 * (Wo - 1) + 3 <= W
    wp_out = Wo + 2
    n_cw = (H - 2) * W - 2
    S = np.zeros(((Ho + 2) * wp_out, n_cw), np.float32)
    for y in range(Ho):
        for x in range(Wo):
            S[(y + 1) * wp_out + (x + 1), (2 * y) * W + 2 * x] = 1.0
    return S


def _avgpool_matrix(H, W):
    """AvgPool2d(3, 2, ceil_mode=True): padded (H+2)(W+2) layout in, padded
    (Ho+2)(Wo+2) layout out, divisor = PyTorch's clipped (valid-element)
    window count (padding=0)."""
    Ho, Wo = _pool_out_dim(H), _pool_out_dim(W)
    wp_in, wp_out = W + 2, Wo + 2
    A = np.zeros(((Ho + 2) * wp_out, (H + 2) * wp_in), np.float32)
    for oy in range(Ho):
        for ox in range(Wo):
            r1 = min(2 * oy + 3, H)
            c1 = min(2 * ox + 3, W)
            cnt = (r1 - 2 * oy) * (c1 - 2 * ox)
            for r in range(2 * oy, r1):
                for c in range(2 * ox, c1):
                    A[(oy + 1) * wp_out + (ox + 1),
                      (r + 1) * wp_in + (c + 1)] = 1.0 / cnt
    return A


_SEL_MAX = _maxpool_select_matrix(_H1, _H1)   # (64, 141)
_A_POOL1 = _avgpool_matrix(_H2, _H2)          # (25, 64)
_A_POOL2 = _avgpool_matrix(_H3, _H3)          # (9, 25)
_MASK6 = _interior_mask(_H2, _H2)             # (64, 1)
_MASK3 = _interior_mask(_H3, _H3)             # (25, 1)
_MASK1 = _interior_mask(_H4, _H4)             # (9, 1)


# ----------------------------------------------------------------------------
# Fused kernel
# ----------------------------------------------------------------------------
def _fire(x_p, mask, H, W, wsq_ref, bsq_ref, wex_ref, bex_ref, residual):
    """Fused Fire module on a padded-layout ((H+2)*(W+2), Cin) f32 value."""
    Wp = W + 2
    Lint = (H - 1) * Wp + W
    # squeeze 1x1 + ReLU (bf16 MXU operands, f32 accumulate / elementwise);
    # the interior mask restores the exact zero conv border.
    s = jnp.dot(x_p.astype(jnp.bfloat16), wsq_ref[...],
                preferred_element_type=jnp.float32)
    s = jnp.maximum(s + bsq_ref[...], 0.0) * mask              # (P, Csq)
    # merged expand1x1 || expand3x3: the 9 conv taps are contiguous row slices
    # of the padded squeeze value; lane-concatenate them into one
    # (Lint, 9*Csq) im2col and contract in a single matmul.
    cols = jnp.concatenate(
        [s[(t // 3) * Wp + (t % 3):(t // 3) * Wp + (t % 3) + Lint, :]
         for t in range(9)], axis=-1).astype(jnp.bfloat16)
    e = jnp.dot(cols, wex_ref[...], preferred_element_type=jnp.float32)
    e = jnp.maximum(e + bex_ref[...], 0.0)                     # (Lint, Ce)
    # back to the padded layout: re-zero border / inter-row pad positions and
    # fuse the residual skip-add (skip == this fire's input).
    z = jnp.zeros((Wp + 1, e.shape[-1]), jnp.float32)
    out = jnp.concatenate([z, e, z], axis=0) * mask            # (P, Ce)
    if residual:
        out = out + x_p
    return out


def _squeezenet_kernel(*refs):
    (p_ref, sel_ref, a1_ref, a2_ref, m6_ref, m3_ref, m1_ref,
     w1_ref, b1_ref) = refs[:9]
    fire = refs[9:9 + 4 * len(FIRE_CFG)]
    wf_ref, bf_ref, o_ref = refs[-3:]

    # conv 7x7 / stride 2 (im2col matmul, bf16 operands) + ReLU
    c = jnp.dot(p_ref[...], w1_ref[...], preferred_element_type=jnp.float32)
    c = jnp.maximum(c + b1_ref[...], 0.0)                      # (169, 96)

    # MaxPool(3,2,ceil): 2x shifted-max passes (rows then cols, full-tile VPU
    # ops) + one constant selection matmul that also emits the zero-bordered
    # 8x8 padded layout of the 6x6 stage.
    W1 = _H1
    n = W1 * W1
    m = jnp.maximum(jnp.maximum(c[:n - 2 * W1, :], c[W1:n - W1, :]),
                    c[2 * W1:, :])                             # (143, 96)
    cw = jnp.maximum(jnp.maximum(m[:-2, :], m[1:-1, :]), m[2:, :])  # (141, 96)
    x = jnp.dot(sel_ref[...], cw, preferred_element_type=jnp.float32)  # (64, 96)

    m6 = m6_ref[...]
    m3 = m3_ref[...]
    m1 = m1_ref[...]

    # ---- stage 1: 6x6 spatial (8x8 padded layout) ----------------------------
    x = _fire(x, m6, _H2, _H2, *fire[0:4], residual=False)     # fire2
    x = _fire(x, m6, _H2, _H2, *fire[4:8], residual=True)      # x + fire3(x)
    x = _fire(x, m6, _H2, _H2, *fire[8:12], residual=False)    # fire4
    x = jnp.dot(a1_ref[...], x, preferred_element_type=jnp.float32)  # pool1

    # ---- stage 2: 3x3 spatial (5x5 padded layout) ----------------------------
    x = _fire(x, m3, _H3, _H3, *fire[12:16], residual=True)    # x + fire5(x)
    x = _fire(x, m3, _H3, _H3, *fire[16:20], residual=False)   # fire6
    x = _fire(x, m3, _H3, _H3, *fire[20:24], residual=True)    # x + fire7(x)
    x = _fire(x, m3, _H3, _H3, *fire[24:28], residual=False)   # fire8
    x = jnp.dot(a2_ref[...], x, preferred_element_type=jnp.float32)  # pool2

    # ---- stage 3: 1x1 spatial (3x3 padded layout) ----------------------------
    x = _fire(x, m1, _H4, _H4, *fire[28:32], residual=True)    # x + fire9(x)

    # classifier: Dropout (eval identity) + 1x1 conv + ReLU + AdaptiveAvgPool
    # (spatial is already 1x1, so the global average is the interior pixel).
    # TODO(synk): Dropout(p=0.5) training-mode randomness not implemented
    # (inference-mode identity).
    feat = jnp.sum(x * m1, axis=0, keepdims=True)              # (1, 512)
    logits = jnp.dot(feat.astype(jnp.bfloat16), wf_ref[...],
                     preferred_element_type=jnp.float32)
    o_ref[...] = jnp.maximum(logits + bf_ref[...], 0.0)


# ----------------------------------------------------------------------------
# Wrapper: one pallas_call for the whole forward, batch-parallel grid
# ----------------------------------------------------------------------------
_COMPILER_PARAMS = pltpu.CompilerParams(
    dimension_semantics=("parallel",),
    vmem_limit_bytes=32 * 1024 * 1024,
)


def squeezenet_forward(x_nchw, params):
    x = jnp.transpose(x_nchw, (0, 2, 3, 1)).astype(jnp.float32)   # NCHW->NHWC
    N, H, W, C = x.shape
    assert (H, W, C) == (32, 32, 3)

    # conv7x7/s2 im2col (cheap wrapper-side XLA glue; ~85 KB bf16 per image),
    # contraction zero-padded 147 -> 160 for sublane alignment.
    cols = []
    for dy in range(7):
        for dx in range(7):
            cols.append(x[:, dy:dy + 2 * (_H1 - 1) + 1:2,
                          dx:dx + 2 * (_H1 - 1) + 1:2, :])
    p = jnp.concatenate(cols, axis=-1).reshape(N, _H1 * _H1, 49 * C)
    p = jnp.concatenate(
        [p, jnp.zeros((N, _H1 * _H1, _K1 - 49 * C), jnp.float32)], axis=-1)
    p = p.astype(jnp.bfloat16)

    w1, b1 = params["conv1"]
    wf, bf = params["final"]
    nc = wf.shape[1]
    fire_args = []
    for name, *_ in FIRE_CFG:
        fp = params[name]
        fire_args += [fp["w_sq"], fp["b_sq"], fp["w_ex"], fp["b_ex"]]

    inputs = ([p, jnp.asarray(_SEL_MAX), jnp.asarray(_A_POOL1),
               jnp.asarray(_A_POOL2), jnp.asarray(_MASK6),
               jnp.asarray(_MASK3), jnp.asarray(_MASK1), w1, b1]
              + fire_args + [wf, bf])

    in_specs = ([pl.BlockSpec((None, _H1 * _H1, _K1), lambda n: (n, 0, 0))]
                + [pl.BlockSpec(a.shape, lambda n: (0, 0))
                   for a in inputs[1:]])

    out = pl.pallas_call(
        _squeezenet_kernel,
        out_shape=jax.ShapeDtypeStruct((N, 1, nc), jnp.float32),
        grid=(N,),
        in_specs=in_specs,
        out_specs=pl.BlockSpec((None, 1, nc), lambda n: (n, 0, 0)),
        compiler_params=_COMPILER_PARAMS,
    )(*inputs)
    return out.reshape(N, nc)


# ----------------------------------------------------------------------------
# Parameter init (kaiming-uniform convs, zero biases, N(0, 0.01) final conv),
# expand1x1 merged into the centre tap of the expand3x3 weight, bf16 storage.
# ----------------------------------------------------------------------------
# TODO(synk): Dconv_shuffle (used by Fire_Shuffle when layer < 9) is not
# defined in the reference source, so only the all-plain-Fire (layer=9)
# configuration is implemented.
def _kaiming_uniform(key, kh, kw, cin, cout):
    bound = math.sqrt(6.0 / (kh * kw * cin))
    w = jax.random.uniform(key, (kh, kw, cin, cout), jnp.float32,
                           minval=-bound, maxval=bound)
    return w.reshape(kh * kw * cin, cout)    # tap-major (dy, dx, cin) rows


def init_params(key, num_classes):
    keys = iter(jax.random.split(key, 2 + 3 * len(FIRE_CFG)))
    w1 = _kaiming_uniform(next(keys), 7, 7, 3, 96)            # (147, 96)
    w1 = jnp.concatenate(
        [w1, jnp.zeros((_K1 - w1.shape[0], 96), jnp.float32)], axis=0)
    params = {"conv1": (w1.astype(jnp.bfloat16),
                        jnp.zeros((1, 96), jnp.float32))}
    for name, cin, sq, e1, e3 in FIRE_CFG:
        w_sq = _kaiming_uniform(next(keys), 1, 1, cin, sq)
        w1x1 = _kaiming_uniform(next(keys), 1, 1, sq, e1)
        w3x3 = _kaiming_uniform(next(keys), 3, 3, sq, e3)     # (9*sq, e3)
        w_ex = jnp.zeros((9 * sq, e1 + e3), jnp.float32)
        w_ex = w_ex.at[:, e1:].set(w3x3)                      # expand3x3 cols
        w_ex = w_ex.at[4 * sq:5 * sq, :e1].set(w1x1)          # 1x1 -> centre tap
        params[name] = {
            "w_sq": w_sq.astype(jnp.bfloat16),
            "b_sq": jnp.zeros((1, sq), jnp.float32),
            "w_ex": w_ex.astype(jnp.bfloat16),
            "b_ex": jnp.zeros((1, e1 + e3), jnp.float32),
        }
    wf = 0.01 * jax.random.normal(next(keys), (512, num_classes), jnp.float32)
    params["final"] = (wf.astype(jnp.bfloat16),
                       jnp.zeros((1, num_classes), jnp.float32))
    return params


# ----------------------------------------------------------------------------
if __name__ == "__main__":
    num_classes = 10
    key = jax.random.PRNGKey(0)
    kx, kp = jax.random.split(key)
    # NCHW CIFAR-sized input, as in the PyTorch module.
    x = jax.random.normal(kx, (2, 3, 32, 32), jnp.float32)
    params = init_params(kp, num_classes)

    fwd = jax.jit(squeezenet_forward)
    out = jax.block_until_ready(fwd(x, params))
    assert out.shape == (2, num_classes), out.shape
    assert bool(jnp.all(jnp.isfinite(out)))
    print("KERNEL_OK")
</pallas_src>

<mosaic_0001>
module attributes {stable_mosaic.version = 11 : i64} {
  func.func @_squeezenet_kernel(%arg0: i32, %arg1: memref<1x169x160xbf16, #tpu.memory_space<vmem>>, %arg2: memref<64x141xf32, #tpu.memory_space<vmem>>, %arg3: memref<25x64xf32, #tpu.memory_space<vmem>>, %arg4: memref<9x25xf32, #tpu.memory_space<vmem>>, %arg5: memref<64x1xf32, #tpu.memory_space<vmem>>, %arg6: memref<25x1xf32, #tpu.memory_space<vmem>>, %arg7: memref<9x1xf32, #tpu.memory_space<vmem>>, %arg8: memref<160x96xbf16, #tpu.memory_space<vmem>>, %arg9: memref<1x96xf32, #tpu.memory_space<vmem>>, %arg10: memref<96x16xbf16, #tpu.memory_space<vmem>>, %arg11: memref<1x16xf32, #tpu.memory_space<vmem>>, %arg12: memref<144x128xbf16, #tpu.memory_space<vmem>>, %arg13: memref<1x128xf32, #tpu.memory_space<vmem>>, %arg14: memref<128x16xbf16, #tpu.memory_space<vmem>>, %arg15: memref<1x16xf32, #tpu.memory_space<vmem>>, %arg16: memref<144x128xbf16, #tpu.memory_space<vmem>>, %arg17: memref<1x128xf32, #tpu.memory_space<vmem>>, %arg18: memref<128x32xbf16, #tpu.memory_space<vmem>>, %arg19: memref<1x32xf32, #tpu.memory_space<vmem>>, %arg20: memref<288x256xbf16, #tpu.memory_space<vmem>>, %arg21: memref<1x256xf32, #tpu.memory_space<vmem>>, %arg22: memref<256x32xbf16, #tpu.memory_space<vmem>>, %arg23: memref<1x32xf32, #tpu.memory_space<vmem>>, %arg24: memref<288x256xbf16, #tpu.memory_space<vmem>>, %arg25: memref<1x256xf32, #tpu.memory_space<vmem>>, %arg26: memref<256x48xbf16, #tpu.memory_space<vmem>>, %arg27: memref<1x48xf32, #tpu.memory_space<vmem>>, %arg28: memref<432x384xbf16, #tpu.memory_space<vmem>>, %arg29: memref<1x384xf32, #tpu.memory_space<vmem>>, %arg30: memref<384x48xbf16, #tpu.memory_space<vmem>>, %arg31: memref<1x48xf32, #tpu.memory_space<vmem>>, %arg32: memref<432x384xbf16, #tpu.memory_space<vmem>>, %arg33: memref<1x384xf32, #tpu.memory_space<vmem>>, %arg34: memref<384x64xbf16, #tpu.memory_space<vmem>>, %arg35: memref<1x64xf32, #tpu.memory_space<vmem>>, %arg36: memref<576x512xbf16, #tpu.memory_space<vmem>>, %arg37: memref<1x512xf32, #tpu.memory_space<vmem>>, %arg38: memref<512x64xbf16, #tpu.memory_space<vmem>>, %arg39: memref<1x64xf32, #tpu.memory_space<vmem>>, %arg40: memref<576x512xbf16, #tpu.memory_space<vmem>>, %arg41: memref<1x512xf32, #tpu.memory_space<vmem>>, %arg42: memref<512x10xbf16, #tpu.memory_space<vmem>>, %arg43: memref<1x10xf32, #tpu.memory_space<vmem>>, %arg44: memref<1x1x10xf32, #tpu.memory_space<vmem>>) attributes {dimension_semantics = [#tpu.dimension_semantics<parallel>], iteration_bounds = array<i64: 2>, scalar_prefetch = 0 : i64, scratch_operands = 0 : i64, tpu.core_type = #tpu.core_type<tc>, window_params = [{transform_indices = @transform_0, window_bounds = array<i64: 1, 169, 160>}, {pipeline_mode = #tpu.pipeline_mode<synchronous>, transform_indices = @transform_1, window_bounds = array<i64: 64, 141>}, {pipeline_mode = #tpu.pipeline_mode<synchronous>, transform_indices = @transform_2, window_bounds = array<i64: 25, 64>}, {pipeline_mode = #tpu.pipeline_mode<synchronous>, transform_indices = @transform_3, window_bounds = array<i64: 9, 25>}, {pipeline_mode = #tpu.pipeline_mode<synchronous>, transform_indices = @transform_4, window_bounds = array<i64: 64, 1>}, {pipeline_mode = #tpu.pipeline_mode<synchronous>, transform_indices = @transform_5, window_bounds = array<i64: 25, 1>}, {pipeline_mode = #tpu.pipeline_mode<synchronous>, transform_indices = @transform_6, window_bounds = array<i64: 9, 1>}, {pipeline_mode = #tpu.pipeline_mode<synchronous>, transform_indices = @transform_7, window_bounds = array<i64: 160, 96>}, {pipeline_mode = #tpu.pipeline_mode<synchronous>, transform_indices = @transform_8, window_bounds = array<i64: 1, 96>}, {pipeline_mode = #tpu.pipeline_mode<synchronous>, transform_indices = @transform_9, window_bounds = array<i64: 96, 16>}, {pipeline_mode = #tpu.pipeline_mode<synchronous>, transform_indices = @transform_10, window_bounds = array<i64: 1, 16>}, {pipeline_mode = #tpu.pipeline_mode<synchronous>, transform_indices = @transform_11, window_bounds = array<i64: 144, 128>}, {pipeline_mode = #tpu.pipeline_mode<synchronous>, transform_indices = @transform_12, window_bounds = array<i64: 1, 128>}, {pipeline_mode = #tpu.pipeline_mode<synchronous>, transform_indices = @transform_13, window_bounds = array<i64: 128, 16>}, {pipeline_mode = #tpu.pipeline_mode<synchronous>, transform_indices = @transform_14, window_bounds = array<i64: 1, 16>}, {pipeline_mode = #tpu.pipeline_mode<synchronous>, transform_indices = @transform_15, window_bounds = array<i64: 144, 128>}, {pipeline_mode = #tpu.pipeline_mode<synchronous>, transform_indices = @transform_16, window_bounds = array<i64: 1, 128>}, {pipeline_mode = #tpu.pipeline_mode<synchronous>, transform_indices = @transform_17, window_bounds = array<i64: 128, 32>}, {pipeline_mode = #tpu.pipeline_mode<synchronous>, transform_indices = @transform_18, window_bounds = array<i64: 1, 32>}, {pipeline_mode = #tpu.pipeline_mode<synchronous>, transform_indices = @transform_19, window_bounds = array<i64: 288, 256>}, {pipeline_mode = #tpu.pipeline_mode<synchronous>, transform_indices = @transform_20, window_bounds = array<i64: 1, 256>}, {pipeline_mode = #tpu.pipeline_mode<synchronous>, transform_indices = @transform_21, window_bounds = array<i64: 256, 32>}, {pipeline_mode = #tpu.pipeline_mode<synchronous>, transform_indices = @transform_22, window_bounds = array<i64: 1, 32>}, {pipeline_mode = #tpu.pipeline_mode<synchronous>, transform_indices = @transform_23, window_bounds = array<i64: 288, 256>}, {pipeline_mode = #tpu.pipeline_mode<synchronous>, transform_indices = @transform_24, window_bounds = array<i64: 1, 256>}, {pipeline_mode = #tpu.pipeline_mode<synchronous>, transform_indices = @transform_25, window_bounds = array<i64: 256, 48>}, {pipeline_mode = #tpu.pipeline_mode<synchronous>, transform_indices = @transform_26, window_bounds = array<i64: 1, 48>}, {pipeline_mode = #tpu.pipeline_mode<synchronous>, transform_indices = @transform_27, window_bounds = array<i64: 432, 384>}, {pipeline_mode = #tpu.pipeline_mode<synchronous>, transform_indices = @transform_28, window_bounds = array<i64: 1, 384>}, {pipeline_mode = #tpu.pipeline_mode<synchronous>, transform_indices = @transform_29, window_bounds = array<i64: 384, 48>}, {pipeline_mode = #tpu.pipeline_mode<synchronous>, transform_indices = @transform_30, window_bounds = array<i64: 1, 48>}, {pipeline_mode = #tpu.pipeline_mode<synchronous>, transform_indices = @transform_31, window_bounds = array<i64: 432, 384>}, {pipeline_mode = #tpu.pipeline_mode<synchronous>, transform_indices = @transform_32, window_bounds = array<i64: 1, 384>}, {pipeline_mode = #tpu.pipeline_mode<synchronous>, transform_indices = @transform_33, window_bounds = array<i64: 384, 64>}, {pipeline_mode = #tpu.pipeline_mode<synchronous>, transform_indices = @transform_34, window_bounds = array<i64: 1, 64>}, {pipeline_mode = #tpu.pipeline_mode<synchronous>, transform_indices = @transform_35, window_bounds = array<i64: 576, 512>}, {pipeline_mode = #tpu.pipeline_mode<synchronous>, transform_indices = @transform_36, window_bounds = array<i64: 1, 512>}, {pipeline_mode = #tpu.pipeline_mode<synchronous>, transform_indices = @transform_37, window_bounds = array<i64: 512, 64>}, {pipeline_mode = #tpu.pipeline_mode<synchronous>, transform_indices = @transform_38, window_bounds = array<i64: 1, 64>}, {pipeline_mode = #tpu.pipeline_mode<synchronous>, transform_indices = @transform_39, window_bounds = array<i64: 576, 512>}, {pipeline_mode = #tpu.pipeline_mode<synchronous>, transform_indices = @transform_40, window_bounds = array<i64: 1, 512>}, {pipeline_mode = #tpu.pipeline_mode<synchronous>, transform_indices = @transform_41, window_bounds = array<i64: 512, 10>}, {pipeline_mode = #tpu.pipeline_mode<synchronous>, transform_indices = @transform_42, window_bounds = array<i64: 1, 10>}, {transform_indices = @transform_43, window_bounds = array<i64: 1, 1, 10>}]} {
    %c0 = arith.constant 0 : index
    %c0_0 = arith.constant 0 : index
    %c0_1 = arith.constant 0 : index
    %0 = vector.load %arg1[%c0, %c0_0, %c0_1] : memref<1x169x160xbf16, #tpu.memory_space<vmem>>, vector<1x169x160xbf16>
    %1 = vector.shape_cast %0 : vector<1x169x160xbf16> to vector<169x160xbf16>
    %c0_2 = arith.constant 0 : index
    %c0_3 = arith.constant 0 : index
    %2 = vector.load %arg8[%c0_2, %c0_3] : memref<160x96xbf16, #tpu.memory_space<vmem>>, vector<160x96xbf16>
    %cst = arith.constant dense<0.000000e+00> : vector<169x96xf32>
    %3 = tpu.matmul %1, %2, %cst {dimension_numbers = #tpu.dot_dimension_numbers<[1], [0], [0], [1], [0, 0, 1, 1], [], []>} : vector<169x160xbf16>, vector<160x96xbf16>, vector<169x96xf32> -> vector<169x96xf32>
    %c0_4 = arith.constant 0 : index
    %c0_5 = arith.constant 0 : index
    %4 = vector.load %arg9[%c0_4, %c0_5] : memref<1x96xf32, #tpu.memory_space<vmem>>, vector<1x96xf32>
    %5 = vector.broadcast %4 : vector<1x96xf32> to vector<169x96xf32>
    %6 = arith.addf %3, %5 : vector<169x96xf32>
    %cst_6 = arith.constant 0.000000e+00 : f32
    %7 = vector.broadcast %cst_6 : f32 to vector<169x96xf32>
    %8 = arith.maximumf %6, %7 : vector<169x96xf32>
    %9 = vector.extract_strided_slice %8 {offsets = [0, 0], sizes = [143, 96], strides = [1, 1]} : vector<169x96xf32> to vector<143x96xf32>
    %10 = vector.extract_strided_slice %8 {offsets = [13, 0], sizes = [143, 96], strides = [1, 1]} : vector<169x96xf32> to vector<143x96xf32>
    %11 = arith.maximumf %9, %10 : vector<143x96xf32>
    %12 = vector.extract_strided_slice %8 {offsets = [26, 0], sizes = [143, 96], strides = [1, 1]} : vector<169x96xf32> to vector<143x96xf32>
    %13 = arith.maximumf %11, %12 : vector<143x96xf32>
    %14 = vector.extract_strided_slice %13 {offsets = [0, 0], sizes = [141, 96], strides = [1, 1]} : vector<143x96xf32> to vector<141x96xf32>
    %15 = vector.extract_strided_slice %13 {offsets = [1, 0], sizes = [141, 96], strides = [1, 1]} : vector<143x96xf32> to vector<141x96xf32>
    %16 = arith.maximumf %14, %15 : vector<141x96xf32>
    %17 = vector.extract_strided_slice %13 {offsets = [2, 0], sizes = [141, 96], strides = [1, 1]} : vector<143x96xf32> to vector<141x96xf32>
    %18 = arith.maximumf %16, %17 : vector<141x96xf32>
    %c0_7 = arith.constant 0 : index
    %c0_8 = arith.constant 0 : index
    %19 = vector.load %arg2[%c0_7, %c0_8] : memref<64x141xf32, #tpu.memory_space<vmem>>, vector<64x141xf32>
    %cst_9 = arith.constant dense<0.000000e+00> : vector<64x96xf32>
    %20 = tpu.matmul %19, %18, %cst_9 {dimension_numbers = #tpu.dot_dimension_numbers<[1], [0], [0], [1], [0, 0, 1, 1], [], []>} : vector<64x141xf32>, vector<141x96xf32>, vector<64x96xf32> -> vector<64x96xf32>
    %c0_10 = arith.constant 0 : index
    %c0_11 = arith.constant 0 : index
    %21 = vector.load %arg5[%c0_10, %c0_11] : memref<64x1xf32, #tpu.memory_space<vmem>>, vector<64x1xf32>
    %c0_12 = arith.constant 0 : index
    %c0_13 = arith.constant 0 : index
    %22 = vector.load %arg6[%c0_12, %c0_13] : memref<25x1xf32, #tpu.memory_space<vmem>>, vector<25x1xf32>
    %c0_14 = arith.constant 0 : index
    %c0_15 = arith.constant 0 : index
    %23 = vector.load %arg7[%c0_14, %c0_15] : memref<9x1xf32, #tpu.memory_space<vmem>>, vector<9x1xf32>
    %24 = arith.truncf %20 : vector<64x96xf32> to vector<64x96xbf16>
    %c0_16 = arith.constant 0 : index
    %c0_17 = arith.constant 0 : index
    %25 = vector.load %arg10[%c0_16, %c0_17] : memref<96x16xbf16, #tpu.memory_space<vmem>>, vector<96x16xbf16>
    %cst_18 = arith.constant dense<0.000000e+00> : vector<64x16xf32>
    %26 = tpu.matmul %24, %25, %cst_18 {dimension_numbers = #tpu.dot_dimension_numbers<[1], [0], [0], [1], [0, 0, 1, 1], [], []>} : vector<64x96xbf16>, vector<96x16xbf16>, vector<64x16xf32> -> vector<64x16xf32>
    %c0_19 = arith.constant 0 : index
    %c0_20 = arith.constant 0 : index
    %27 = vector.load %arg11[%c0_19, %c0_20] : memref<1x16xf32, #tpu.memory_space<vmem>>, vector<1x16xf32>
    %28 = vector.broadcast %27 : vector<1x16xf32> to vector<64x16xf32>
    %29 = arith.addf %26, %28 : vector<64x16xf32>
    %cst_21 = arith.constant 0.000000e+00 : f32
    %30 = vector.broadcast %cst_21 : f32 to vector<64x16xf32>
    %31 = arith.maximumf %29, %30 : vector<64x16xf32>
    %32 = vector.broadcast %21 : vector<64x1xf32> to vector<64x16xf32>
    %33 = arith.mulf %31, %32 : vector<64x16xf32>
    %34 = vector.extract_strided_slice %33 {offsets = [0, 0], sizes = [46, 16], strides = [1, 1]} : vector<64x16xf32> to vector<46x16xf32>
    %35 = vector.extract_strided_slice %33 {offsets = [1, 0], sizes = [46, 16], strides = [1, 1]} : vector<64x16xf32> to vector<46x16xf32>
    %36 = vector.extract_strided_slice %33 {offsets = [2, 0], sizes = [46, 16], strides = [1, 1]} : vector<64x16xf32> to vector<46x16xf32>
    %37 = vector.extract_strided_slice %33 {offsets = [8, 0], sizes = [46, 16], strides = [1, 1]} : vector<64x16xf32> to vector<46x16xf32>
    %38 = vector.extract_strided_slice %33 {offsets = [9, 0], sizes = [46, 16], strides = [1, 1]} : vector<64x16xf32> to vector<46x16xf32>
    %39 = vector.extract_strided_slice %33 {offsets = [10, 0], sizes = [46, 16], strides = [1, 1]} : vector<64x16xf32> to vector<46x16xf32>
    %40 = vector.extract_strided_slice %33 {offsets = [16, 0], sizes = [46, 16], strides = [1, 1]} : vector<64x16xf32> to vector<46x16xf32>
    %41 = vector.extract_strided_slice %33 {offsets = [17, 0], sizes = [46, 16], strides = [1, 1]} : vector<64x16xf32> to vector<46x16xf32>
    %42 = vector.extract_strided_slice %33 {offsets = [18, 0], sizes = [46, 16], strides = [1, 1]} : vector<64x16xf32> to vector<46x16xf32>
    %43 = tpu.concatenate %34, %35, %36, %37, %38, %39, %40, %41, %42 in 1 : vector<46x16xf32>, vector<46x16xf32>, vector<46x16xf32>, vector<46x16xf32>, vector<46x16xf32>, vector<46x16xf32>, vector<46x16xf32>, vector<46x16xf32>, vector<46x16xf32> -> vector<46x144xf32>
    %44 = arith.truncf %43 : vector<46x144xf32> to vector<46x144xbf16>
    %c0_22 = arith.constant 0 : index
    %c0_23 = arith.constant 0 : index
    %45 = vector.load %arg12[%c0_22, %c0_23] : memref<144x128xbf16, #tpu.memory_space<vmem>>, vector<144x128xbf16>
    %cst_24 = arith.constant dense<0.000000e+00> : vector<46x128xf32>
    %46 = tpu.matmul %44, %45, %cst_24 {dimension_numbers = #tpu.dot_dimension_numbers<[1], [0], [0], [1], [0, 0, 1, 1], [], []>} : vector<46x144xbf16>, vector<144x128xbf16>, vector<46x128xf32> -> vector<46x128xf32>
    %c0_25 = arith.constant 0 : index
    %c0_26 = arith.constant 0 : index
    %47 = vector.load %arg13[%c0_25, %c0_26] : memref<1x128xf32, #tpu.memory_space<vmem>>, vector<1x128xf32>
    %48 = vector.broadcast %47 : vector<1x128xf32> to vector<46x128xf32>
    %49 = arith.addf %46, %48 : vector<46x128xf32>
    %cst_27 = arith.constant 0.000000e+00 : f32
    %50 = vector.broadcast %cst_27 : f32 to vector<46x128xf32>
    %51 = arith.maximumf %49, %50 : vector<46x128xf32>
    %cst_28 = arith.constant 0.000000e+00 : f32
    %52 = vector.broadcast %cst_28 : f32 to vector<9x128xf32>
    %53 = tpu.concatenate %52, %51, %52 in 0 : vector<9x128xf32>, vector<46x128xf32>, vector<9x128xf32> -> vector<64x128xf32>
    %54 = vector.broadcast %21 : vector<64x1xf32> to vector<64x128xf32>
    %55 = arith.mulf %53, %54 : vector<64x128xf32>
    %56 = arith.truncf %55 : vector<64x128xf32> to vector<64x128xbf16>
    %c0_29 = arith.constant 0 : index
    %c0_30 = arith.constant 0 : index
    %57 = vector.load %arg14[%c0_29, %c0_30] : memref<128x16xbf16, #tpu.memory_space<vmem>>, vector<128x16xbf16>
    %cst_31 = arith.constant dense<0.000000e+00> : vector<64x16xf32>
    %58 = tpu.matmul %56, %57, %cst_31 {dimension_numbers = #tpu.dot_dimension_numbers<[1], [0], [0], [1], [0, 0, 1, 1], [], []>} : vector<64x128xbf16>, vector<128x16xbf16>, vector<64x16xf32> -> vector<64x16xf32>
    %c0_32 = arith.constant 0 : index
    %c0_33 = arith.constant 0 : index
    %59 = vector.load %arg15[%c0_32, %c0_33] : memref<1x16xf32, #tpu.memory_space<vmem>>, vector<1x16xf32>
    %60 = vector.broadcast %59 : vector<1x16xf32> to vector<64x16xf32>
    %61 = arith.addf %58, %60 : vector<64x16xf32>
    %cst_34 = arith.constant 0.000000e+00 : f32
    %62 = vector.broadcast %cst_34 : f32 to vector<64x16xf32>
    %63 = arith.maximumf %61, %62 : vector<64x16xf32>
    %64 = vector.broadcast %21 : vector<64x1xf32> to vector<64x16xf32>
    %65 = arith.mulf %63, %64 : vector<64x16xf32>
    %66 = vector.extract_strided_slice %65 {offsets = [0, 0], sizes = [46, 16], strides = [1, 1]} : vector<64x16xf32> to vector<46x16xf32>
    %67 = vector.extract_strided_slice %65 {offsets = [1, 0], sizes = [46, 16], strides = [1, 1]} : vector<64x16xf32> to vector<46x16xf32>
    %68 = vector.extract_strided_slice %65 {offsets = [2, 0], sizes = [46, 16], strides = [1, 1]} : vector<64x16xf32> to vector<46x16xf32>
    %69 = vector.extract_strided_slice %65 {offsets = [8, 0], sizes = [46, 16], strides = [1, 1]} : vector<64x16xf32> to vector<46x16xf32>
    %70 = vector.extract_strided_slice %65 {offsets = [9, 0], sizes = [46, 16], strides = [1, 1]} : vector<64x16xf32> to vector<46x16xf32>
    %71 = vector.extract_strided_slice %65 {offsets = [10, 0], sizes = [46, 16], strides = [1, 1]} : vector<64x16xf32> to vector<46x16xf32>
    %72 = vector.extract_strided_slice %65 {offsets = [16, 0], sizes = [46, 16], strides = [1, 1]} : vector<64x16xf32> to vector<46x16xf32>
    %73 = vector.extract_strided_slice %65 {offsets = [17, 0], sizes = [46, 16], strides = [1, 1]} : vector<64x16xf32> to vector<46x16xf32>
    %74 = vector.extract_strided_slice %65 {offsets = [18, 0], sizes = [46, 16], strides = [1, 1]} : vector<64x16xf32> to vector<46x16xf32>
    %75 = tpu.concatenate %66, %67, %68, %69, %70, %71, %72, %73, %74 in 1 : vector<46x16xf32>, vector<46x16xf32>, vector<46x16xf32>, vector<46x16xf32>, vector<46x16xf32>, vector<46x16xf32>, vector<46x16xf32>, vector<46x16xf32>, vector<46x16xf32> -> vector<46x144xf32>
    %76 = arith.truncf %75 : vector<46x144xf32> to vector<46x144xbf16>
    %c0_35 = arith.constant 0 : index
    %c0_36 = arith.constant 0 : index
    %77 = vector.load %arg16[%c0_35, %c0_36] : memref<144x128xbf16, #tpu.memory_space<vmem>>, vector<144x128xbf16>
    %cst_37 = arith.constant dense<0.000000e+00> : vector<46x128xf32>
    %78 = tpu.matmul %76, %77, %cst_37 {dimension_numbers = #tpu.dot_dimension_numbers<[1], [0], [0], [1], [0, 0, 1, 1], [], []>} : vector<46x144xbf16>, vector<144x128xbf16>, vector<46x128xf32> -> vector<46x128xf32>
    %c0_38 = arith.constant 0 : index
    %c0_39 = arith.constant 0 : index
    %79 = vector.load %arg17[%c0_38, %c0_39] : memref<1x128xf32, #tpu.memory_space<vmem>>, vector<1x128xf32>
    %80 = vector.broadcast %79 : vector<1x128xf32> to vector<46x128xf32>
    %81 = arith.addf %78, %80 : vector<46x128xf32>
    %cst_40 = arith.constant 0.000000e+00 : f32
    %82 = vector.broadcast %cst_40 : f32 to vector<46x128xf32>
    %83 = arith.maximumf %81, %82 : vector<46x128xf32>
    %cst_41 = arith.constant 0.000000e+00 : f32
    %84 = vector.broadcast %cst_41 : f32 to vector<9x128xf32>
    %85 = tpu.concatenate %84, %83, %84 in 0 : vector<9x128xf32>, vector<46x128xf32>, vector<9x128xf32> -> vector<64x128xf32>
    %86 = vector.broadcast %21 : vector<64x1xf32> to vector<64x128xf32>
    %87 = arith.mulf %85, %86 : vector<64x128xf32>
    %88 = arith.addf %87, %55 : vector<64x128xf32>
    %89 = arith.truncf %88 : vector<64x128xf32> to vector<64x128xbf16>
    %c0_42 = arith.constant 0 : index
    %c0_43 = arith.constant 0 : index
    %90 = vector.load %arg18[%c0_42, %c0_43] : memref<128x32xbf16, #tpu.memory_space<vmem>>, vector<128x32xbf16>
    %cst_44 = arith.constant dense<0.000000e+00> : vector<64x32xf32>
    %91 = tpu.matmul %89, %90, %cst_44 {dimension_numbers = #tpu.dot_dimension_numbers<[1], [0], [0], [1], [0, 0, 1, 1], [], []>} : vector<64x128xbf16>, vector<128x32xbf16>, vector<64x32xf32> -> vector<64x32xf32>
    %c0_45 = arith.constant 0 : index
    %c0_46 = arith.constant 0 : index
    %92 = vector.load %arg19[%c0_45, %c0_46] : memref<1x32xf32, #tpu.memory_space<vmem>>, vector<1x32xf32>
    %93 = vector.broadcast %92 : vector<1x32xf32> to vector<64x32xf32>
    %94 = arith.addf %91, %93 : vector<64x32xf32>
    %cst_47 = arith.constant 0.000000e+00 : f32
    %95 = vector.broadcast %cst_47 : f32 to vector<64x32xf32>
    %96 = arith.maximumf %94, %95 : vector<64x32xf32>
    %97 = vector.broadcast %21 : vector<64x1xf32> to vector<64x32xf32>
    %98 = arith.mulf %96, %97 : vector<64x32xf32>
    %99 = vector.extract_strided_slice %98 {offsets = [0, 0], sizes = [46, 32], strides = [1, 1]} : vector<64x32xf32> to vector<46x32xf32>
    %100 = vector.extract_strided_slice %98 {offsets = [1, 0], sizes = [46, 32], strides = [1, 1]} : vector<64x32xf32> to vector<46x32xf32>
    %101 = vector.extract_strided_slice %98 {offsets = [2, 0], sizes = [46, 32], strides = [1, 1]} : vector<64x32xf32> to vector<46x32xf32>
    %102 = vector.extract_strided_slice %98 {offsets = [8, 0], sizes = [46, 32], strides = [1, 1]} : vector<64x32xf32> to vector<46x32xf32>
    %103 = vector.extract_strided_slice %98 {offsets = [9, 0], sizes = [46, 32], strides = [1, 1]} : vector<64x32xf32> to vector<46x32xf32>
    %104 = vector.extract_strided_slice %98 {offsets = [10, 0], sizes = [46, 32], strides = [1, 1]} : vector<64x32xf32> to vector<46x32xf32>
    %105 = vector.extract_strided_slice %98 {offsets = [16, 0], sizes = [46, 32], strides = [1, 1]} : vector<64x32xf32> to vector<46x32xf32>
    %106 = vector.extract_strided_slice %98 {offsets = [17, 0], sizes = [46, 32], strides = [1, 1]} : vector<64x32xf32> to vector<46x32xf32>
    %107 = vector.extract_strided_slice %98 {offsets = [18, 0], sizes = [46, 32], strides = [1, 1]} : vector<64x32xf32> to vector<46x32xf32>
    %108 = tpu.concatenate %99, %100, %101, %102, %103, %104, %105, %106, %107 in 1 : vector<46x32xf32>, vector<46x32xf32>, vector<46x32xf32>, vector<46x32xf32>, vector<46x32xf32>, vector<46x32xf32>, vector<46x32xf32>, vector<46x32xf32>, vector<46x32xf32> -> vector<46x288xf32>
    %109 = arith.truncf %108 : vector<46x288xf32> to vector<46x288xbf16>
    %c0_48 = arith.constant 0 : index
    %c0_49 = arith.constant 0 : index
    %110 = vector.load %arg20[%c0_48, %c0_49] : memref<288x256xbf16, #tpu.memory_space<vmem>>, vector<288x256xbf16>
    %cst_50 = arith.constant dense<0.000000e+00> : vector<46x256xf32>
    %111 = tpu.matmul %109, %110, %cst_50 {dimension_numbers = #tpu.dot_dimension_numbers<[1], [0], [0], [1], [0, 0, 1, 1], [], []>} : vector<46x288xbf16>, vector<288x256xbf16>, vector<46x256xf32> -> vector<46x256xf32>
    %c0_51 = arith.constant 0 : index
    %c0_52 = arith.constant 0 : index
    %112 = vector.load %arg21[%c0_51, %c0_52] : memref<1x256xf32, #tpu.memory_space<vmem>>, vector<1x256xf32>
    %113 = vector.broadcast %112 : vector<1x256xf32> to vector<46x256xf32>
    %114 = arith.addf %111, %113 : vector<46x256xf32>
    %cst_53 = arith.constant 0.000000e+00 : f32
    %115 = vector.broadcast %cst_53 : f32 to vector<46x256xf32>
    %116 = arith.maximumf %114, %115 : vector<46x256xf32>
    %cst_54 = arith.constant 0.000000e+00 : f32
    %117 = vector.broadcast %cst_54 : f32 to vector<9x256xf32>
    %118 = tpu.concatenate %117, %116, %117 in 0 : vector<9x256xf32>, vector<46x256xf32>, vector<9x256xf32> -> vector<64x256xf32>
    %119 = vector.broadcast %21 : vector<64x1xf32> to vector<64x256xf32>
    %120 = arith.mulf %118, %119 : vector<64x256xf32>
    %c0_55 = arith.constant 0 : index
    %c0_56 = arith.constant 0 : index
    %121 = vector.load %arg3[%c0_55, %c0_56] : memref<25x64xf32, #tpu.memory_space<vmem>>, vector<25x64xf32>
    %cst_57 = arith.constant dense<0.000000e+00> : vector<25x256xf32>
    %122 = tpu.matmul %121, %120, %cst_57 {dimension_numbers = #tpu.dot_dimension_numbers<[1], [0], [0], [1], [0, 0, 1, 1], [], []>} : vector<25x64xf32>, vector<64x256xf32>, vector<25x256xf32> -> vector<25x256xf32>
    %123 = arith.truncf %122 : vector<25x256xf32> to vector<25x256xbf16>
    %c0_58 = arith.constant 0 : index
    %c0_59 = arith.constant 0 : index
    %124 = vector.load %arg22[%c0_58, %c0_59] : memref<256x32xbf16, #tpu.memory_space<vmem>>, vector<256x32xbf16>
    %cst_60 = arith.constant dense<0.000000e+00> : vector<25x32xf32>
    %125 = tpu.matmul %123, %124, %cst_60 {dimension_numbers = #tpu.dot_dimension_numbers<[1], [0], [0], [1], [0, 0, 1, 1], [], []>} : vector<25x256xbf16>, vector<256x32xbf16>, vector<25x32xf32> -> vector<25x32xf32>
    %c0_61 = arith.constant 0 : index
    %c0_62 = arith.constant 0 : index
    %126 = vector.load %arg23[%c0_61, %c0_62] : memref<1x32xf32, #tpu.memory_space<vmem>>, vector<1x32xf32>
    %127 = vector.broadcast %126 : vector<1x32xf32> to vector<25x32xf32>
    %128 = arith.addf %125, %127 : vector<25x32xf32>
    %cst_63 = arith.constant 0.000000e+00 : f32
    %129 = vector.broadcast %cst_63 : f32 to vector<25x32xf32>
    %130 = arith.maximumf %128, %129 : vector<25x32xf32>
    %131 = vector.broadcast %22 : vector<25x1xf32> to vector<25x32xf32>
    %132 = arith.mulf %130, %131 : vector<25x32xf32>
    %133 = vector.extract_strided_slice %132 {offsets = [0, 0], sizes = [13, 32], strides = [1, 1]} : vector<25x32xf32> to vector<13x32xf32>
    %134 = vector.extract_strided_slice %132 {offsets = [1, 0], sizes = [13, 32], strides = [1, 1]} : vector<25x32xf32> to vector<13x32xf32>
    %135 = vector.extract_strided_slice %132 {offsets = [2, 0], sizes = [13, 32], strides = [1, 1]} : vector<25x32xf32> to vector<13x32xf32>
    %136 = vector.extract_strided_slice %132 {offsets = [5, 0], sizes = [13, 32], strides = [1, 1]} : vector<25x32xf32> to vector<13x32xf32>
    %137 = vector.extract_strided_slice %132 {offsets = [6, 0], sizes = [13, 32], strides = [1, 1]} : vector<25x32xf32> to vector<13x32xf32>
    %138 = vector.extract_strided_slice %132 {offsets = [7, 0], sizes = [13, 32], strides = [1, 1]} : vector<25x32xf32> to vector<13x32xf32>
    %139 = vector.extract_strided_slice %132 {offsets = [10, 0], sizes = [13, 32], strides = [1, 1]} : vector<25x32xf32> to vector<13x32xf32>
    %140 = vector.extract_strided_slice %132 {offsets = [11, 0], sizes = [13, 32], strides = [1, 1]} : vector<25x32xf32> to vector<13x32xf32>
    %141 = vector.extract_strided_slice %132 {offsets = [12, 0], sizes = [13, 32], strides = [1, 1]} : vector<25x32xf32> to vector<13x32xf32>
    %142 = tpu.concatenate %133, %134, %135, %136, %137, %138, %139, %140, %141 in 1 : vector<13x32xf32>, vector<13x32xf32>, vector<13x32xf32>, vector<13x32xf32>, vector<13x32xf32>, vector<13x32xf32>, vector<13x32xf32>, vector<13x32xf32>, vector<13x32xf32> -> vector<13x288xf32>
    %143 = arith.truncf %142 : vector<13x288xf32> to vector<13x288xbf16>
    %c0_64 = arith.constant 0 : index
    %c0_65 = arith.constant 0 : index
    %144 = vector.load %arg24[%c0_64, %c0_65] : memref<288x256xbf16, #tpu.memory_space<vmem>>, vector<288x256xbf16>
    %cst_66 = arith.constant dense<0.000000e+00> : vector<13x256xf32>
    %145 = tpu.matmul %143, %144, %cst_66 {dimension_numbers = #tpu.dot_dimension_numbers<[1], [0], [0], [1], [0, 0, 1, 1], [], []>} : vector<13x288xbf16>, vector<288x256xbf16>, vector<13x256xf32> -> vector<13x256xf32>
    %c0_67 = arith.constant 0 : index
    %c0_68 = arith.constant 0 : index
    %146 = vector.load %arg25[%c0_67, %c0_68] : memref<1x256xf32, #tpu.memory_space<vmem>>, vector<1x256xf32>
    %147 = vector.broadcast %146 : vector<1x256xf32> to vector<13x256xf32>
    %148 = arith.addf %145, %147 : vector<13x256xf32>
    %cst_69 = arith.constant 0.000000e+00 : f32
    %149 = vector.broadcast %cst_69 : f32 to vector<13x256xf32>
    %150 = arith.maximumf %148, %149 : vector<13x256xf32>
    %cst_70 = arith.constant 0.000000e+00 : f32
    %151 = vector.broadcast %cst_70 : f32 to vector<6x256xf32>
    %152 = tpu.concatenate %151, %150, %151 in 0 : vector<6x256xf32>, vector<13x256xf32>, vector<6x256xf32> -> vector<25x256xf32>
    %153 = vector.broadcast %22 : vector<25x1xf32> to vector<25x256xf32>
    %154 = arith.mulf %152, %153 : vector<25x256xf32>
    %155 = arith.addf %154, %122 : vector<25x256xf32>
    %156 = arith.truncf %155 : vector<25x256xf32> to vector<25x256xbf16>
    %c0_71 = arith.constant 0 : index
    %c0_72 = arith.constant 0 : index
    %157 = vector.load %arg26[%c0_71, %c0_72] : memref<256x48xbf16, #tpu.memory_space<vmem>>, vector<256x48xbf16>
    %cst_73 = arith.constant dense<0.000000e+00> : vector<25x48xf32>
    %158 = tpu.matmul %156, %157, %cst_73 {dimension_numbers = #tpu.dot_dimension_numbers<[1], [0], [0], [1], [0, 0, 1, 1], [], []>} : vector<25x256xbf16>, vector<256x48xbf16>, vector<25x48xf32> -> vector<25x48xf32>
    %c0_74 = arith.constant 0 : index
    %c0_75 = arith.constant 0 : index
    %159 = vector.load %arg27[%c0_74, %c0_75] : memref<1x48xf32, #tpu.memory_space<vmem>>, vector<1x48xf32>
    %160 = vector.broadcast %159 : vector<1x48xf32> to vector<25x48xf32>
    %161 = arith.addf %158, %160 : vector<25x48xf32>
    %cst_76 = arith.constant 0.000000e+00 : f32
    %162 = vector.broadcast %cst_76 : f32 to vector<25x48xf32>
    %163 = arith.maximumf %161, %162 : vector<25x48xf32>
    %164 = vector.broadcast %22 : vector<25x1xf32> to vector<25x48xf32>
    %165 = arith.mulf %163, %164 : vector<25x48xf32>
    %166 = vector.extract_strided_slice %165 {offsets = [0, 0], sizes = [13, 48], strides = [1, 1]} : vector<25x48xf32> to vector<13x48xf32>
    %167 = vector.extract_strided_slice %165 {offsets = [1, 0], sizes = [13, 48], strides = [1, 1]} : vector<25x48xf32> to vector<13x48xf32>
    %168 = vector.extract_strided_slice %165 {offsets = [2, 0], sizes = [13, 48], strides = [1, 1]} : vector<25x48xf32> to vector<13x48xf32>
    %169 = vector.extract_strided_slice %165 {offsets = [5, 0], sizes = [13, 48], strides = [1, 1]} : vector<25x48xf32> to vector<13x48xf32>
    %170 = vector.extract_strided_slice %165 {offsets = [6, 0], sizes = [13, 48], strides = [1, 1]} : vector<25x48xf32> to vector<13x48xf32>
    %171 = vector.extract_strided_slice %165 {offsets = [7, 0], sizes = [13, 48], strides = [1, 1]} : vector<25x48xf32> to vector<13x48xf32>
    %172 = vector.extract_strided_slice %165 {offsets = [10, 0], sizes = [13, 48], strides = [1, 1]} : vector<25x48xf32> to vector<13x48xf32>
    %173 = vector.extract_strided_slice %165 {offsets = [11, 0], sizes = [13, 48], strides = [1, 1]} : vector<25x48xf32> to vector<13x48xf32>
    %174 = vector.extract_strided_slice %165 {offsets = [12, 0], sizes = [13, 48], strides = [1, 1]} : vector<25x48xf32> to vector<13x48xf32>
    %175 = tpu.concatenate %166, %167, %168, %169, %170, %171, %172, %173, %174 in 1 : vector<13x48xf32>, vector<13x48xf32>, vector<13x48xf32>, vector<13x48xf32>, vector<13x48xf32>, vector<13x48xf32>, vector<13x48xf32>, vector<13x48xf32>, vector<13x48xf32> -> vector<13x432xf32>
    %176 = arith.truncf %175 : vector<13x432xf32> to vector<13x432xbf16>
    %c0_77 = arith.constant 0 : index
    %c0_78 = arith.constant 0 : index
    %177 = vector.load %arg28[%c0_77, %c0_78] : memref<432x384xbf16, #tpu.memory_space<vmem>>, vector<432x384xbf16>
    %cst_79 = arith.constant dense<0.000000e+00> : vector<13x384xf32>
    %178 = tpu.matmul %176, %177, %cst_79 {dimension_numbers = #tpu.dot_dimension_numbers<[1], [0], [0], [1], [0, 0, 1, 1], [], []>} : vector<13x432xbf16>, vector<432x384xbf16>, vector<13x384xf32> -> vector<13x384xf32>
    %c0_80 = arith.constant 0 : index
    %c0_81 = arith.constant 0 : index
    %179 = vector.load %arg29[%c0_80, %c0_81] : memref<1x384xf32, #tpu.memory_space<vmem>>, vector<1x384xf32>
    %180 = vector.broadcast %179 : vector<1x384xf32> to vector<13x384xf32>
    %181 = arith.addf %178, %180 : vector<13x384xf32>
    %cst_82 = arith.constant 0.000000e+00 : f32
    %182 = vector.broadcast %cst_82 : f32 to vector<13x384xf32>
    %183 = arith.maximumf %181, %182 : vector<13x384xf32>
    %cst_83 = arith.constant 0.000000e+00 : f32
    %184 = vector.broadcast %cst_83 : f32 to vector<6x384xf32>
    %185 = tpu.concatenate %184, %183, %184 in 0 : vector<6x384xf32>, vector<13x384xf32>, vector<6x384xf32> -> vector<25x384xf32>
    %186 = vector.broadcast %22 : vector<25x1xf32> to vector<25x384xf32>
    %187 = arith.mulf %185, %186 : vector<25x384xf32>
    %188 = arith.truncf %187 : vector<25x384xf32> to vector<25x384xbf16>
    %c0_84 = arith.constant 0 : index
    %c0_85 = arith.constant 0 : index
    %189 = vector.load %arg30[%c0_84, %c0_85] : memref<384x48xbf16, #tpu.memory_space<vmem>>, vector<384x48xbf16>
    %cst_86 = arith.constant dense<0.000000e+00> : vector<25x48xf32>
    %190 = tpu.matmul %188, %189, %cst_86 {dimension_numbers = #tpu.dot_dimension_numbers<[1], [0], [0], [1], [0, 0, 1, 1], [], []>} : vector<25x384xbf16>, vector<384x48xbf16>, vector<25x48xf32> -> vector<25x48xf32>
    %c0_87 = arith.constant 0 : index
    %c0_88 = arith.constant 0 : index
    %191 = vector.load %arg31[%c0_87, %c0_88] : memref<1x48xf32, #tpu.memory_space<vmem>>, vector<1x48xf32>
    %192 = vector.broadcast %191 : vector<1x48xf32> to vector<25x48xf32>
    %193 = arith.addf %190, %192 : vector<25x48xf32>
    %cst_89 = arith.constant 0.000000e+00 : f32
    %194 = vector.broadcast %cst_89 : f32 to vector<25x48xf32>
    %195 = arith.maximumf %193, %194 : vector<25x48xf32>
    %196 = vector.broadcast %22 : vector<25x1xf32> to vector<25x48xf32>
    %197 = arith.mulf %195, %196 : vector<25x48xf32>
    %198 = vector.extract_strided_slice %197 {offsets = [0, 0], sizes = [13, 48], strides = [1, 1]} : vector<25x48xf32> to vector<13x48xf32>
    %199 = vector.extract_strided_slice %197 {offsets = [1, 0], sizes = [13, 48], strides = [1, 1]} : vector<25x48xf32> to vector<13x48xf32>
    %200 = vector.extract_strided_slice %197 {offsets = [2, 0], sizes = [13, 48], strides = [1, 1]} : vector<25x48xf32> to vector<13x48xf32>
    %201 = vector.extract_strided_slice %197 {offsets = [5, 0], sizes = [13, 48], strides = [1, 1]} : vector<25x48xf32> to vector<13x48xf32>
    %202 = vector.extract_strided_slice %197 {offsets = [6, 0], sizes = [13, 48], strides = [1, 1]} : vector<25x48xf32> to vector<13x48xf32>
    %203 = vector.extract_strided_slice %197 {offsets = [7, 0], sizes = [13, 48], strides = [1, 1]} : vector<25x48xf32> to vector<13x48xf32>
    %204 = vector.extract_strided_slice %197 {offsets = [10, 0], sizes = [13, 48], strides = [1, 1]} : vector<25x48xf32> to vector<13x48xf32>
    %205 = vector.extract_strided_slice %197 {offsets = [11, 0], sizes = [13, 48], strides = [1, 1]} : vector<25x48xf32> to vector<13x48xf32>
    %206 = vector.extract_strided_slice %197 {offsets = [12, 0], sizes = [13, 48], strides = [1, 1]} : vector<25x48xf32> to vector<13x48xf32>
    %207 = tpu.concatenate %198, %199, %200, %201, %202, %203, %204, %205, %206 in 1 : vector<13x48xf32>, vector<13x48xf32>, vector<13x48xf32>, vector<13x48xf32>, vector<13x48xf32>, vector<13x48xf32>, vector<13x48xf32>, vector<13x48xf32>, vector<13x48xf32> -> vector<13x432xf32>
    %208 = arith.truncf %207 : vector<13x432xf32> to vector<13x432xbf16>
    %c0_90 = arith.constant 0 : index
    %c0_91 = arith.constant 0 : index
    %209 = vector.load %arg32[%c0_90, %c0_91] : memref<432x384xbf16, #tpu.memory_space<vmem>>, vector<432x384xbf16>
    %cst_92 = arith.constant dense<0.000000e+00> : vector<13x384xf32>
    %210 = tpu.matmul %208, %209, %cst_92 {dimension_numbers = #tpu.dot_dimension_numbers<[1], [0], [0], [1], [0, 0, 1, 1], [], []>} : vector<13x432xbf16>, vector<432x384xbf16>, vector<13x384xf32> -> vector<13x384xf32>
    %c0_93 = arith.constant 0 : index
    %c0_94 = arith.constant 0 : index
    %211 = vector.load %arg33[%c0_93, %c0_94] : memref<1x384xf32, #tpu.memory_space<vmem>>, vector<1x384xf32>
    %212 = vector.broadcast %211 : vector<1x384xf32> to vector<13x384xf32>
    %213 = arith.addf %210, %212 : vector<13x384xf32>
    %cst_95 = arith.constant 0.000000e+00 : f32
    %214 = vector.broadcast %cst_95 : f32 to vector<13x384xf32>
    %215 = arith.maximumf %213, %214 : vector<13x384xf32>
    %cst_96 = arith.constant 0.000000e+00 : f32
    %216 = vector.broadcast %cst_96 : f32 to vector<6x384xf32>
    %217 = tpu.concatenate %216, %215, %216 in 0 : vector<6x384xf32>, vector<13x384xf32>, vector<6x384xf32> -> vector<25x384xf32>
    %218 = vector.broadcast %22 : vector<25x1xf32> to vector<25x384xf32>
    %219 = arith.mulf %217, %218 : vector<25x384xf32>
    %220 = arith.addf %219, %187 : vector<25x384xf32>
    %221 = arith.truncf %220 : vector<25x384xf32> to vector<25x384xbf16>
    %c0_97 = arith.constant 0 : index
    %c0_98 = arith.constant 0 : index
    %222 = vector.load %arg34[%c0_97, %c0_98] : memref<384x64xbf16, #tpu.memory_space<vmem>>, vector<384x64xbf16>
    %cst_99 = arith.constant dense<0.000000e+00> : vector<25x64xf32>
    %223 = tpu.matmul %221, %222, %cst_99 {dimension_numbers = #tpu.dot_dimension_numbers<[1], [0], [0], [1], [0, 0, 1, 1], [], []>} : vector<25x384xbf16>, vector<384x64xbf16>, vector<25x64xf32> -> vector<25x64xf32>
    %c0_100 = arith.constant 0 : index
    %c0_101 = arith.constant 0 : index
    %224 = vector.load %arg35[%c0_100, %c0_101] : memref<1x64xf32, #tpu.memory_space<vmem>>, vector<1x64xf32>
    %225 = vector.broadcast %224 : vector<1x64xf32> to vector<25x64xf32>
    %226 = arith.addf %223, %225 : vector<25x64xf32>
    %cst_102 = arith.constant 0.000000e+00 : f32
    %227 = vector.broadcast %cst_102 : f32 to vector<25x64xf32>
    %228 = arith.maximumf %226, %227 : vector<25x64xf32>
    %229 = vector.broadcast %22 : vector<25x1xf32> to vector<25x64xf32>
    %230 = arith.mulf %228, %229 : vector<25x64xf32>
    %231 = vector.extract_strided_slice %230 {offsets = [0, 0], sizes = [13, 64], strides = [1, 1]} : vector<25x64xf32> to vector<13x64xf32>
    %232 = vector.extract_strided_slice %230 {offsets = [1, 0], sizes = [13, 64], strides = [1, 1]} : vector<25x64xf32> to vector<13x64xf32>
    %233 = vector.extract_strided_slice %230 {offsets = [2, 0], sizes = [13, 64], strides = [1, 1]} : vector<25x64xf32> to vector<13x64xf32>
    %234 = vector.extract_strided_slice %230 {offsets = [5, 0], sizes = [13, 64], strides = [1, 1]} : vector<25x64xf32> to vector<13x64xf32>
    %235 = vector.extract_strided_slice %230 {offsets = [6, 0], sizes = [13, 64], strides = [1, 1]} : vector<25x64xf32> to vector<13x64xf32>
    %236 = vector.extract_strided_slice %230 {offsets = [7, 0], sizes = [13, 64], strides = [1, 1]} : vector<25x64xf32> to vector<13x64xf32>
    %237 = vector.extract_strided_slice %230 {offsets = [10, 0], sizes = [13, 64], strides = [1, 1]} : vector<25x64xf32> to vector<13x64xf32>
    %238 = vector.extract_strided_slice %230 {offsets = [11, 0], sizes = [13, 64], strides = [1, 1]} : vector<25x64xf32> to vector<13x64xf32>
    %239 = vector.extract_strided_slice %230 {offsets = [12, 0], sizes = [13, 64], strides = [1, 1]} : vector<25x64xf32> to vector<13x64xf32>
    %240 = tpu.concatenate %231, %232, %233, %234, %235, %236, %237, %238, %239 in 1 : vector<13x64xf32>, vector<13x64xf32>, vector<13x64xf32>, vector<13x64xf32>, vector<13x64xf32>, vector<13x64xf32>, vector<13x64xf32>, vector<13x64xf32>, vector<13x64xf32> -> vector<13x576xf32>
    %241 = arith.truncf %240 : vector<13x576xf32> to vector<13x576xbf16>
    %c0_103 = arith.constant 0 : index
    %c0_104 = arith.constant 0 : index
    %242 = vector.load %arg36[%c0_103, %c0_104] : memref<576x512xbf16, #tpu.memory_space<vmem>>, vector<576x512xbf16>
    %cst_105 = arith.constant dense<0.000000e+00> : vector<13x512xf32>
    %243 = tpu.matmul %241, %242, %cst_105 {dimension_numbers = #tpu.dot_dimension_numbers<[1], [0], [0], [1], [0, 0, 1, 1], [], []>} : vector<13x576xbf16>, vector<576x512xbf16>, vector<13x512xf32> -> vector<13x512xf32>
    %c0_106 = arith.constant 0 : index
    %c0_107 = arith.constant 0 : index
    %244 = vector.load %arg37[%c0_106, %c0_107] : memref<1x512xf32, #tpu.memory_space<vmem>>, vector<1x512xf32>
    %245 = vector.broadcast %244 : vector<1x512xf32> to vector<13x512xf32>
    %246 = arith.addf %243, %245 : vector<13x512xf32>
    %cst_108 = arith.constant 0.000000e+00 : f32
    %247 = vector.broadcast %cst_108 : f32 to vector<13x512xf32>
    %248 = arith.maximumf %246, %247 : vector<13x512xf32>
    %cst_109 = arith.constant 0.000000e+00 : f32
    %249 = vector.broadcast %cst_109 : f32 to vector<6x512xf32>
    %250 = tpu.concatenate %249, %248, %249 in 0 : vector<6x512xf32>, vector<13x512xf32>, vector<6x512xf32> -> vector<25x512xf32>
    %251 = vector.broadcast %22 : vector<25x1xf32> to vector<25x512xf32>
    %252 = arith.mulf %250, %251 : vector<25x512xf32>
    %c0_110 = arith.constant 0 : index
    %c0_111 = arith.constant 0 : index
    %253 = vector.load %arg4[%c0_110, %c0_111] : memref<9x25xf32, #tpu.memory_space<vmem>>, vector<9x25xf32>
    %cst_112 = arith.constant dense<0.000000e+00> : vector<9x512xf32>
    %254 = tpu.matmul %253, %252, %cst_112 {dimension_numbers = #tpu.dot_dimension_numbers<[1], [0], [0], [1], [0, 0, 1, 1], [], []>} : vector<9x25xf32>, vector<25x512xf32>, vector<9x512xf32> -> vector<9x512xf32>
    %255 = arith.truncf %254 : vector<9x512xf32> to vector<9x512xbf16>
    %c0_113 = arith.constant 0 : index
    %c0_114 = arith.constant 0 : index
    %256 = vector.load %arg38[%c0_113, %c0_114] : memref<512x64xbf16, #tpu.memory_space<vmem>>, vector<512x64xbf16>
    %cst_115 = arith.constant dense<0.000000e+00> : vector<9x64xf32>
    %257 = tpu.matmul %255, %256, %cst_115 {dimension_numbers = #tpu.dot_dimension_numbers<[1], [0], [0], [1], [0, 0, 1, 1], [], []>} : vector<9x512xbf16>, vector<512x64xbf16>, vector<9x64xf32> -> vector<9x64xf32>
    %c0_116 = arith.constant 0 : index
    %c0_117 = arith.constant 0 : index
    %258 = vector.load %arg39[%c0_116, %c0_117] : memref<1x64xf32, #tpu.memory_space<vmem>>, vector<1x64xf32>
    %259 = vector.broadcast %258 : vector<1x64xf32> to vector<9x64xf32>
    %260 = arith.addf %257, %259 : vector<9x64xf32>
    %cst_118 = arith.constant 0.000000e+00 : f32
    %261 = vector.broadcast %cst_118 : f32 to vector<9x64xf32>
    %262 = arith.maximumf %260, %261 : vector<9x64xf32>
    %263 = vector.broadcast %23 : vector<9x1xf32> to vector<9x64xf32>
    %264 = arith.mulf %262, %263 : vector<9x64xf32>
    %265 = vector.extract_strided_slice %264 {offsets = [0, 0], sizes = [1, 64], strides = [1, 1]} : vector<9x64xf32> to vector<1x64xf32>
    %266 = vector.extract_strided_slice %264 {offsets = [1, 0], sizes = [1, 64], strides = [1, 1]} : vector<9x64xf32> to vector<1x64xf32>
    %267 = vector.extract_strided_slice %264 {offsets = [2, 0], sizes = [1, 64], strides = [1, 1]} : vector<9x64xf32> to vector<1x64xf32>
    %268 = vector.extract_strided_slice %264 {offsets = [3, 0], sizes = [1, 64], strides = [1, 1]} : vector<9x64xf32> to vector<1x64xf32>
    %269 = vector.extract_strided_slice %264 {offsets = [4, 0], sizes = [1, 64], strides = [1, 1]} : vector<9x64xf32> to vector<1x64xf32>
    %270 = vector.extract_strided_slice %264 {offsets = [5, 0], sizes = [1, 64], strides = [1, 1]} : vector<9x64xf32> to vector<1x64xf32>
    %271 = vector.extract_strided_slice %264 {offsets = [6, 0], sizes = [1, 64], strides = [1, 1]} : vector<9x64xf32> to vector<1x64xf32>
    %272 = vector.extract_strided_slice %264 {offsets = [7, 0], sizes = [1, 64], strides = [1, 1]} : vector<9x64xf32> to vector<1x64xf32>
    %273 = vector.extract_strided_slice %264 {offsets = [8, 0], sizes = [1, 64], strides = [1, 1]} : vector<9x64xf32> to vector<1x64xf32>
    %274 = tpu.concatenate %265, %266, %267, %268, %269, %270, %271, %272, %273 in 1 : vector<1x64xf32>, vector<1x64xf32>, vector<1x64xf32>, vector<1x64xf32>, vector<1x64xf32>, vector<1x64xf32>, vector<1x64xf32>, vector<1x64xf32>, vector<1x64xf32> -> vector<1x576xf32>
    %275 = arith.truncf %274 : vector<1x576xf32> to vector<1x576xbf16>
    %c0_119 = arith.constant 0 : index
    %c0_120 = arith.constant 0 : index
    %276 = vector.load %arg40[%c0_119, %c0_120] : memref<576x512xbf16, #tpu.memory_space<vmem>>, vector<576x512xbf16>
    %cst_121 = arith.constant dense<0.000000e+00> : vector<1x512xf32>
    %277 = tpu.matmul %275, %276, %cst_121 {dimension_numbers = #tpu.dot_dimension_numbers<[1], [0], [0], [1], [0, 0, 1, 1], [], []>} : vector<1x576xbf16>, vector<576x512xbf16>, vector<1x512xf32> -> vector<1x512xf32>
    %c0_122 = arith.constant 0 : index
    %c0_123 = arith.constant 0 : index
    %278 = vector.load %arg41[%c0_122, %c0_123] : memref<1x512xf32, #tpu.memory_space<vmem>>, vector<1x512xf32>
    %279 = arith.addf %277, %278 : vector<1x512xf32>
    %cst_124 = arith.constant 0.000000e+00 : f32
    %280 = vector.broadcast %cst_124 : f32 to vector<1x512xf32>
    %281 = arith.maximumf %279, %280 : vector<1x512xf32>
    %cst_125 = arith.constant 0.000000e+00 : f32
    %282 = vector.broadcast %cst_125 : f32 to vector<4x512xf32>
    %283 = tpu.concatenate %282, %281, %282 in 0 : vector<4x512xf32>, vector<1x512xf32>, vector<4x512xf32> -> vector<9x512xf32>
    %284 = vector.broadcast %23 : vector<9x1xf32> to vector<9x512xf32>
    %285 = arith.mulf %283, %284 : vector<9x512xf32>
    %286 = arith.addf %285, %254 : vector<9x512xf32>
    %287 = vector.broadcast %23 : vector<9x1xf32> to vector<9x512xf32>
    %288 = arith.mulf %286, %287 : vector<9x512xf32>
    %cst_126 = arith.constant dense<0.000000e+00> : vector<512xf32>
    %289 = vector.multi_reduction <add>, %288, %cst_126 [0] : vector<9x512xf32> to vector<512xf32>
    %290 = vector.shape_cast %289 : vector<512xf32> to vector<1x512xf32>
    %291 = arith.truncf %290 : vector<1x512xf32> to vector<1x512xbf16>
    %c0_127 = arith.constant 0 : index
    %c0_128 = arith.constant 0 : index
    %292 = vector.load %arg42[%c0_127, %c0_128] : memref<512x10xbf16, #tpu.memory_space<vmem>>, vector<512x10xbf16>
    %cst_129 = arith.constant dense<0.000000e+00> : vector<1x10xf32>
    %293 = tpu.matmul %291, %292, %cst_129 {dimension_numbers = #tpu.dot_dimension_numbers<[1], [0], [0], [1], [0, 0, 1, 1], [], []>} : vector<1x512xbf16>, vector<512x10xbf16>, vector<1x10xf32> -> vector<1x10xf32>
    %c0_130 = arith.constant 0 : index
    %c0_131 = arith.constant 0 : index
    %294 = vector.load %arg43[%c0_130, %c0_131] : memref<1x10xf32, #tpu.memory_space<vmem>>, vector<1x10xf32>
    %295 = arith.addf %293, %294 : vector<1x10xf32>
    %cst_132 = arith.constant 0.000000e+00 : f32
    %296 = vector.broadcast %cst_132 : f32 to vector<1x10xf32>
    %297 = arith.maximumf %295, %296 : vector<1x10xf32>
    %c0_133 = arith.constant 0 : index
    %c0_134 = arith.constant 0 : index
    %c0_135 = arith.constant 0 : index
    %298 = vector.load %arg44[%c0_133, %c0_134, %c0_135] : memref<1x1x10xf32, #tpu.memory_space<vmem>>, vector<1x1x10xf32>
    %299 = vector.shape_cast %298 : vector<1x1x10xf32> to vector<1x10xf32>
    %300 = vector.shape_cast %297 : vector<1x10xf32> to vector<1x1x10xf32>
    tpu.vector_store %arg44[%c0_133, %c0_134, %c0_135], %300 {strides = array<i32>} : memref<1x1x10xf32, #tpu.memory_space<vmem>>, vector<1x1x10xf32>,
    return
  }
  func.func @transform_0(%arg0: i32) -> (i32, i32, i32) {
    %c0_i32 = arith.constant 0 : i32
    %c0_i32_0 = arith.constant 0 : i32
    %c0_i32_1 = arith.constant 0 : i32
    return %arg0, %c0_i32, %c0_i32_0 : i32, i32, i32
  }
  func.func @transform_1(%arg0: i32) -> (i32, i32) {
    %c0_i32 = arith.constant 0 : i32
    %c0_i32_0 = arith.constant 0 : i32
    %c0_i32_1 = arith.constant 0 : i32
    return %c0_i32, %c0_i32_0 : i32, i32
  }
  func.func @transform_2(%arg0: i32) -> (i32, i32) {
    %c0_i32 = arith.constant 0 : i32
    %c0_i32_0 = arith.constant 0 : i32
    %c0_i32_1 = arith.constant 0 : i32
    return %c0_i32, %c0_i32_0 : i32, i32
  }
  func.func @transform_3(%arg0: i32) -> (i32, i32) {
    %c0_i32 = arith.constant 0 : i32
    %c0_i32_0 = arith.constant 0 : i32
    %c0_i32_1 = arith.constant 0 : i32
    return %c0_i32, %c0_i32_0 : i32, i32
  }
  func.func @transform_4(%arg0: i32) -> (i32, i32) {
    %c0_i32 = arith.constant 0 : i32
    %c0_i32_0 = arith.constant 0 : i32
    %c0_i32_1 = arith.constant 0 : i32
    return %c0_i32, %c0_i32_0 : i32, i32
  }
  func.func @transform_5(%arg0: i32) -> (i32, i32) {
    %c0_i32 = arith.constant 0 : i32
    %c0_i32_0 = arith.constant 0 : i32
    %c0_i32_1 = arith.constant 0 : i32
    return %c0_i32, %c0_i32_0 : i32, i32
  }
  func.func @transform_6(%arg0: i32) -> (i32, i32) {
    %c0_i32 = arith.constant 0 : i32
    %c0_i32_0 = arith.constant 0 : i32
    %c0_i32_1 = arith.constant 0 : i32
    return %c0_i32, %c0_i32_0 : i32, i32
  }
  func.func @transform_7(%arg0: i32) -> (i32, i32) {
    %c0_i32 = arith.constant 0 : i32
    %c0_i32_0 = arith.constant 0 : i32
    %c0_i32_1 = arith.constant 0 : i32
    return %c0_i32, %c0_i32_0 : i32, i32
  }
  func.func @transform_8(%arg0: i32) -> (i32, i32) {
    %c0_i32 = arith.constant 0 : i32
    %c0_i32_0 = arith.constant 0 : i32
    %c0_i32_1 = arith.constant 0 : i32
    return %c0_i32, %c0_i32_0 : i32, i32
  }
  func.func @transform_9(%arg0: i32) -> (i32, i32) {
    %c0_i32 = arith.constant 0 : i32
    %c0_i32_0 = arith.constant 0 : i32
    %c0_i32_1 = arith.constant 0 : i32
    return %c0_i32, %c0_i32_0 : i32, i32
  }
  func.func @transform_10(%arg0: i32) -> (i32, i32) {
    %c0_i32 = arith.constant 0 : i32
    %c0_i32_0 = arith.constant 0 : i32
    %c0_i32_1 = arith.constant 0 : i32
    return %c0_i32, %c0_i32_0 : i32, i32
  }
  func.func @transform_11(%arg0: i32) -> (i32, i32) {
    %c0_i32 = arith.constant 0 : i32
    %c0_i32_0 = arith.constant 0 : i32
    %c0_i32_1 = arith.constant 0 : i32
    return %c0_i32, %c0_i32_0 : i32, i32
  }
  func.func @transform_12(%arg0: i32) -> (i32, i32) {
    %c0_i32 = arith.constant 0 : i32
    %c0_i32_0 = arith.constant 0 : i32
    %c0_i32_1 = arith.constant 0 : i32
    return %c0_i32, %c0_i32_0 : i32, i32
  }
  func.func @transform_13(%arg0: i32) -> (i32, i32) {
    %c0_i32 = arith.constant 0 : i32
    %c0_i32_0 = arith.constant 0 : i32
    %c0_i32_1 = arith.constant 0 : i32
    return %c0_i32, %c0_i32_0 : i32, i32
  }
  func.func @transform_14(%arg0: i32) -> (i32, i32) {
    %c0_i32 = arith.constant 0 : i32
    %c0_i32_0 = arith.constant 0 : i32
    %c0_i32_1 = arith.constant 0 : i32
    return %c0_i32, %c0_i32_0 : i32, i32
  }
  func.func @transform_15(%arg0: i32) -> (i32, i32) {
    %c0_i32 = arith.constant 0 : i32
    %c0_i32_0 = arith.constant 0 : i32
    %c0_i32_1 = arith.constant 0 : i32
    return %c0_i32, %c0_i32_0 : i32, i32
  }
  func.func @transform_16(%arg0: i32) -> (i32, i32) {
    %c0_i32 = arith.constant 0 : i32
    %c0_i32_0 = arith.constant 0 : i32
    %c0_i32_1 = arith.constant 0 : i32
    return %c0_i32, %c0_i32_0 : i32, i32
  }
  func.func @transform_17(%arg0: i32) -> (i32, i32) {
    %c0_i32 = arith.constant 0 : i32
    %c0_i32_0 = arith.constant 0 : i32
    %c0_i32_1 = arith.constant 0 : i32
    return %c0_i32, %c0_i32_0 : i32, i32
  }
  func.func @transform_18(%arg0: i32) -> (i32, i32) {
    %c0_i32 = arith.constant 0 : i32
    %c0_i32_0 = arith.constant 0 : i32
    %c0_i32_1 = arith.constant 0 : i32
    return %c0_i32, %c0_i32_0 : i32, i32
  }
  func.func @transform_19(%arg0: i32) -> (i32, i32) {
    %c0_i32 = arith.constant 0 : i32
    %c0_i32_0 = arith.constant 0 : i32
    %c0_i32_1 = arith.constant 0 : i32
    return %c0_i32, %c0_i32_0 : i32, i32
  }
  func.func @transform_20(%arg0: i32) -> (i32, i32) {
    %c0_i32 = arith.constant 0 : i32
    %c0_i32_0 = arith.constant 0 : i32
    %c0_i32_1 = arith.constant 0 : i32
    return %c0_i32, %c0_i32_0 : i32, i32
  }
  func.func @transform_21(%arg0: i32) -> (i32, i32) {
    %c0_i32 = arith.constant 0 : i32
    %c0_i32_0 = arith.constant 0 : i32
    %c0_i32_1 = arith.constant 0 : i32
    return %c0_i32, %c0_i32_0 : i32, i32
  }
  func.func @transform_22(%arg0: i32) -> (i32, i32) {
    %c0_i32 = arith.constant 0 : i32
    %c0_i32_0 = arith.constant 0 : i32
    %c0_i32_1 = arith.constant 0 : i32
    return %c0_i32, %c0_i32_0 : i32, i32
  }
  func.func @transform_23(%arg0: i32) -> (i32, i32) {
    %c0_i32 = arith.constant 0 : i32
    %c0_i32_0 = arith.constant 0 : i32
    %c0_i32_1 = arith.constant 0 : i32
    return %c0_i32, %c0_i32_0 : i32, i32
  }
  func.func @transform_24(%arg0: i32) -> (i32, i32) {
    %c0_i32 = arith.constant 0 : i32
    %c0_i32_0 = arith.constant 0 : i32
    %c0_i32_1 = arith.constant 0 : i32
    return %c0_i32, %c0_i32_0 : i32, i32
  }
  func.func @transform_25(%arg0: i32) -> (i32, i32) {
    %c0_i32 = arith.constant 0 : i32
    %c0_i32_0 = arith.constant 0 : i32
    %c0_i32_1 = arith.constant 0 : i32
    return %c0_i32, %c0_i32_0 : i32, i32
  }
  func.func @transform_26(%arg0: i32) -> (i32, i32) {
    %c0_i32 = arith.constant 0 : i32
    %c0_i32_0 = arith.constant 0 : i32
    %c0_i32_1 = arith.constant 0 : i32
    return %c0_i32, %c0_i32_0 : i32, i32
  }
  func.func @transform_27(%arg0: i32) -> (i32, i32) {
    %c0_i32 = arith.constant 0 : i32
    %c0_i32_0 = arith.constant 0 : i32
    %c0_i32_1 = arith.constant 0 : i32
    return %c0_i32, %c0_i32_0 : i32, i32
  }
  func.func @transform_28(%arg0: i32) -> (i32, i32) {
    %c0_i32 = arith.constant 0 : i32
    %c0_i32_0 = arith.constant 0 : i32
    %c0_i32_1 = arith.constant 0 : i32
    return %c0_i32, %c0_i32_0 : i32, i32
  }
  func.func @transform_29(%arg0: i32) -> (i32, i32) {
    %c0_i32 = arith.constant 0 : i32
    %c0_i32_0 = arith.constant 0 : i32
    %c0_i32_1 = arith.constant 0 : i32
    return %c0_i32, %c0_i32_0 : i32, i32
  }
  func.func @transform_30(%arg0: i32) -> (i32, i32) {
    %c0_i32 = arith.constant 0 : i32
    %c0_i32_0 = arith.constant 0 : i32
    %c0_i32_1 = arith.constant 0 : i32
    return %c0_i32, %c0_i32_0 : i32, i32
  }
  func.func @transform_31(%arg0: i32) -> (i32, i32) {
    %c0_i32 = arith.constant 0 : i32
    %c0_i32_0 = arith.constant 0 : i32
    %c0_i32_1 = arith.constant 0 : i32
    return %c0_i32, %c0_i32_0 : i32, i32
  }
  func.func @transform_32(%arg0: i32) -> (i32, i32) {
    %c0_i32 = arith.constant 0 : i32
    %c0_i32_0 = arith.constant 0 : i32
    %c0_i32_1 = arith.constant 0 : i32
    return %c0_i32, %c0_i32_0 : i32, i32
  }
  func.func @transform_33(%arg0: i32) -> (i32, i32) {
    %c0_i32 = arith.constant 0 : i32
    %c0_i32_0 = arith.constant 0 : i32
    %c0_i32_1 = arith.constant 0 : i32
    return %c0_i32, %c0_i32_0 : i32, i32
  }
  func.func @transform_34(%arg0: i32) -> (i32, i32) {
    %c0_i32 = arith.constant 0 : i32
    %c0_i32_0 = arith.constant 0 : i32
    %c0_i32_1 = arith.constant 0 : i32
    return %c0_i32, %c0_i32_0 : i32, i32
  }
  func.func @transform_35(%arg0: i32) -> (i32, i32) {
    %c0_i32 = arith.constant 0 : i32
    %c0_i32_0 = arith.constant 0 : i32
    %c0_i32_1 = arith.constant 0 : i32
    return %c0_i32, %c0_i32_0 : i32, i32
  }
  func.func @transform_36(%arg0: i32) -> (i32, i32) {
    %c0_i32 = arith.constant 0 : i32
    %c0_i32_0 = arith.constant 0 : i32
    %c0_i32_1 = arith.constant 0 : i32
    return %c0_i32, %c0_i32_0 : i32, i32
  }
  func.func @transform_37(%arg0: i32) -> (i32, i32) {
    %c0_i32 = arith.constant 0 : i32
    %c0_i32_0 = arith.constant 0 : i32
    %c0_i32_1 = arith.constant 0 : i32
    return %c0_i32, %c0_i32_0 : i32, i32
  }
  func.func @transform_38(%arg0: i32) -> (i32, i32) {
    %c0_i32 = arith.constant 0 : i32
    %c0_i32_0 = arith.constant 0 : i32
    %c0_i32_1 = arith.constant 0 : i32
    return %c0_i32, %c0_i32_0 : i32, i32
  }
  func.func @transform_39(%arg0: i32) -> (i32, i32) {
    %c0_i32 = arith.constant 0 : i32
    %c0_i32_0 = arith.constant 0 : i32
    %c0_i32_1 = arith.constant 0 : i32
    return %c0_i32, %c0_i32_0 : i32, i32
  }
  func.func @transform_40(%arg0: i32) -> (i32, i32) {
    %c0_i32 = arith.constant 0 : i32
    %c0_i32_0 = arith.constant 0 : i32
    %c0_i32_1 = arith.constant 0 : i32
    return %c0_i32, %c0_i32_0 : i32, i32
  }
  func.func @transform_41(%arg0: i32) -> (i32, i32) {
    %c0_i32 = arith.constant 0 : i32
    %c0_i32_0 = arith.constant 0 : i32
    %c0_i32_1 = arith.constant 0 : i32
    return %c0_i32, %c0_i32_0 : i32, i32
  }
  func.func @transform_42(%arg0: i32) -> (i32, i32) {
    %c0_i32 = arith.constant 0 : i32
    %c0_i32_0 = arith.constant 0 : i32
    %c0_i32_1 = arith.constant 0 : i32
    return %c0_i32, %c0_i32_0 : i32, i32
  }
  func.func @transform_43(%arg0: i32) -> (i32, i32, i32) {
    %c0_i32 = arith.constant 0 : i32
    %c0_i32_0 = arith.constant 0 : i32
    %c0_i32_1 = arith.constant 0 : i32
    return %arg0, %c0_i32, %c0_i32_0 : i32, i32, i32
  }
}

</mosaic_0001>

<llo_original>
// kernel: squeezenet_forward.1
$region0: #{squeezenet_forward.1}
  #allocation0 [shape = 'u32[]', space=smem, size = 0x4, offset = 0x4, fixed_abs, tag = 'smem constant byte address 0x4 - core index']
  #allocation1 [shape = 'u32[72,128]{1,0:T(1,128)}', space=vmem, size = 0x9000, scoped, tag = 'internal scratch']
  %s0 = inlined_call_operand.smem [shape: u32[44], index: -1, kind: input, shape index: {}]
  %s1 = sld [smem:[%s0]]
  %s2 = scalar_lea.smem %s0, 1
  %s3 = sld [smem:[%s2]]
  %s4 = scalar_lea.smem %s0, 2
  %s5 = sld [smem:[%s4]]
  %s6 = scalar_lea.smem %s0, 3
  %s7 = sld [smem:[%s6]]
  %s8 = scalar_lea.smem %s0, 4
  %s9 = sld [smem:[%s8]]
  %s10 = scalar_lea.smem %s0, 5
  %s11 = sld [smem:[%s10]]
  %s12 = scalar_lea.smem %s0, 6
  %s13 = sld [smem:[%s12]]
  %s14 = scalar_lea.smem %s0, 7
  %s15 = sld [smem:[%s14]]
  %s16 = scalar_lea.smem %s0, 8
  %s17 = sld [smem:[%s16]]
  %s18 = scalar_lea.smem %s0, 9
  %s19 = sld [smem:[%s18]]
  %s20 = scalar_lea.smem %s0, 10
  %s21 = sld [smem:[%s20]]
  %s22 = scalar_lea.smem %s0, 11
  %s23 = sld [smem:[%s22]]
  %s24 = scalar_lea.smem %s0, 12
  %s25 = sld [smem:[%s24]]
  %s26 = scalar_lea.smem %s0, 13
  %s27 = sld [smem:[%s26]]
  %s28 = scalar_lea.smem %s0, 14
  %s29 = sld [smem:[%s28]]
  %s30 = scalar_lea.smem %s0, 15
  %s31 = sld [smem:[%s30]]
  %s32 = scalar_lea.smem %s0, 16
  %s33 = sld [smem:[%s32]]
  %s34 = scalar_lea.smem %s0, 17
  %s35 = sld [smem:[%s34]]
  %s36 = scalar_lea.smem %s0, 18
  %s37 = sld [smem:[%s36]]
  %s38 = scalar_lea.smem %s0, 19
  %s39 = sld [smem:[%s38]]
  %s40 = scalar_lea.smem %s0, 20
  %s41 = sld [smem:[%s40]]
  %s42 = scalar_lea.smem %s0, 21
  %s43 = sld [smem:[%s42]]
  %s44 = scalar_lea.smem %s0, 22
  %s45 = sld [smem:[%s44]]
  %s46 = scalar_lea.smem %s0, 23
  %s47 = sld [smem:[%s46]]
  %s48 = scalar_lea.smem %s0, 24
  %s49 = sld [smem:[%s48]]
  %s50 = scalar_lea.smem %s0, 25
  %s51 = sld [smem:[%s50]]
  %s52 = scalar_lea.smem %s0, 26
  %s53 = sld [smem:[%s52]]
  %s54 = scalar_lea.smem %s0, 27
  %s55 = sld [smem:[%s54]]
  %s56 = scalar_lea.smem %s0, 28
  %s57 = sld [smem:[%s56]]
  %s58 = scalar_lea.smem %s0, 29
  %s59 = sld [smem:[%s58]]
  %s60 = scalar_lea.smem %s0, 30
  %s61 = sld [smem:[%s60]]
  %s62 = scalar_lea.smem %s0, 31
  %s63 = sld [smem:[%s62]]
  %s64 = scalar_lea.smem %s0, 32
  %s65 = sld [smem:[%s64]]
  %s66 = scalar_lea.smem %s0, 33
  %s67 = sld [smem:[%s66]]
  %s68 = scalar_lea.smem %s0, 34
  %s69 = sld [smem:[%s68]]
  %s70 = scalar_lea.smem %s0, 35
  %s71 = sld [smem:[%s70]]
  %s72 = scalar_lea.smem %s0, 36
  %s73 = sld [smem:[%s72]]
  %s74 = scalar_lea.smem %s0, 37
  %s75 = sld [smem:[%s74]]
  %s76 = scalar_lea.smem %s0, 38
  %s77 = sld [smem:[%s76]]
  %s78 = scalar_lea.smem %s0, 39
  %s79 = sld [smem:[%s78]]
  %s80 = scalar_lea.smem %s0, 40
  %s81 = sld [smem:[%s80]]
  %s82 = scalar_lea.smem %s0, 41
  %s83 = sld [smem:[%s82]]
  %s84 = scalar_lea.smem %s0, 42
  %s85 = sld [smem:[%s84]]
  %s86 = scalar_lea.smem %s0, 43
  %s87 = sld [smem:[%s86]]
  %s88 = sld [smem:[#allocation0]]
  $region213: #{squeezenet_forward.1} parent=0
    _
  %s90 = ssub.s32 1, %s88
  %s91 = scalar_select 0, %s90, %s88
  $region1: #{squeezenet_forward.1} parent=0
    #allocation2 [shape = 'u8[512]{0}', space=vmem, size = 0x400, scoped, tag = 'input window, operand 38, single buffered']
    #allocation3 [shape = 's32[2]{0}', space=sflag, size = 0x8, scoped, tag = 'scoped memory for squeezenet_forward.1']
    #allocation4 [shape = 's32[2]{0}', space=sflag, size = 0x8, scoped, tag = 'scoped memory for squeezenet_forward.1']
    #allocation5 [shape = 'u8[512]{0}', space=vmem, size = 0x400, scoped, tag = 'input window, operand 42, single buffered']
    #allocation6 [shape = 's32[1]{0}', space=sflag, size = 0x4, scoped, tag = 'scoped memory for squeezenet_forward.1']
    #allocation7 [shape = 'u8[1024]{0}', space=vmem, size = 0x400, scoped, tag = 'output window, operand 0']
    %92 = vsyncpa [#allocation3], 0
    %93 = vsyncpa [#allocation6], 0
    %94 = vsyncpa [#allocation4], 0
    %s95 = scalar_lea.sflag [#allocation4], 1
    %96 = vsyncpa %s95, 0
    loop: start=0, step=1, limit=4
    $region2: #{squeezenet_forward.1} parent=1 // loop_pre_header
      _
    $region3: #{squeezenet_forward.1} parent=1 // loop_header
      %s98 = sphi 0, %s102
      %p99 = scmp.ge.s32.totalorder %s98, 4
      %s108 = sphi 0, %s110
      %s111 = sphi 0, %s108
      %s112 = sphi 0, %s111
      %s128 = sphi 0, %s112
      %s132 = sphi 0, %s132
      %s134 = sphi 0, %s132
      %s135 = sphi 0, %s134
      %s149 = sphi 0, %s135
      %s153 = sphi 0, %s153
      %s155 = sphi 0, %s153
      %s156 = sphi 0, %s155
      %s170 = sphi 0, %s156
      %s174 = sphi 0, %s174
      %s176 = sphi 0, %s174
      %s177 = sphi 0, %s176
      %s191 = sphi 0, %s177
      %s195 = sphi 0, %s195
      %s197 = sphi 0, %s195
      %s198 = sphi 0, %s197
      %s212 = sphi 0, %s198
      %s216 = sphi 0, %s216
      %s218 = sphi 0, %s216
      %s219 = sphi 0, %s218
      %s233 = sphi 0, %s219
      %s237 = sphi 0, %s237
      %s239 = sphi 0, %s237
      %s240 = sphi 0, %s239
      %s254 = sphi 0, %s240
      %s258 = sphi 0, %s258
      %s260 = sphi 0, %s258
      %s261 = sphi 0, %s260
      %s275 = sphi 0, %s261
      %s279 = sphi 0, %s279
      %s281 = sphi 0, %s279
      %s282 = sphi 0, %s281
      %s296 = sphi 0, %s282
      %s300 = sphi 0, %s300
      %s302 = sphi 0, %s300
      %s303 = sphi 0, %s302
      %s317 = sphi 0, %s303
      %s321 = sphi 0, %s321
      %s323 = sphi 0, %s321
      %s324 = sphi 0, %s323
      %s338 = sphi 0, %s324
      %s342 = sphi 0, %s342
      %s344 = sphi 0, %s342
      %s345 = sphi 0, %s344
      %s359 = sphi 0, %s345
      %s363 = sphi 0, %s363
      %s365 = sphi 0, %s363
      %s366 = sphi 0, %s365
      %s380 = sphi 0, %s366
      %s384 = sphi 0, %s384
      %s386 = sphi 0, %s384
      %s387 = sphi 0, %s386
      %s401 = sphi 0, %s387
      %s405 = sphi 0, %s405
      %s407 = sphi 0, %s405
      %s408 = sphi 0, %s407
      %s422 = sphi 0, %s408
      %s426 = sphi 0, %s426
      %s428 = sphi 0, %s426
      %s429 = sphi 0, %s428
      %s443 = sphi 0, %s429
      %s447 = sphi 0, %s447
      %s449 = sphi 0, %s447
      %s450 = sphi 0, %s449
      %s464 = sphi 0, %s450
      %s468 = sphi 0, %s468
      %s470 = sphi 0, %s468
      %s471 = sphi 0, %s470
      %s485 = sphi 0, %s471
      %s489 = sphi 0, %s489
      %s491 = sphi 0, %s489
      %s492 = sphi 0, %s491
      %s506 = sphi 0, %s492
      %s510 = sphi 0, %s510
      %s512 = sphi 0, %s510
      %s513 = sphi 0, %s512
      %s527 = sphi 0, %s513
      %s531 = sphi 0, %s531
      %s533 = sphi 0, %s531
      %s534 = sphi 0, %s533
      %s548 = sphi 0, %s534
      %s552 = sphi 0, %s552
      %s554 = sphi 0, %s552
      %s555 = sphi 0, %s554
      %s569 = sphi 0, %s555
      %s573 = sphi 0, %s573
      %s575 = sphi 0, %s573
      %s576 = sphi 0, %s575
      %s590 = sphi 0, %s576
      %s594 = sphi 0, %s594
      %s596 = sphi 0, %s594
      %s597 = sphi 0, %s596
      %s611 = sphi 0, %s597
      %s615 = sphi 0, %s615
      %s617 = sphi 0, %s615
      %s618 = sphi 0, %s617
      %s632 = sphi 0, %s618
      %s636 = sphi 0, %s636
      %s638 = sphi 0, %s636
      %s639 = sphi 0, %s638
      %s653 = sphi 0, %s639
      %s657 = sphi 0, %s657
      %s659 = sphi 0, %s657
      %s660 = sphi 0, %s659
      %s674 = sphi 0, %s660
      %s678 = sphi 0, %s678
      %s680 = sphi 0, %s678
      %s681 = sphi 0, %s680
      %s695 = sphi 0, %s681
      %s699 = sphi 0, %s699
      %s701 = sphi 0, %s699
      %s702 = sphi 0, %s701
      %s716 = sphi 0, %s702
      %s720 = sphi 0, %s720
      %s722 = sphi 0, %s720
      %s723 = sphi 0, %s722
      %s737 = sphi 0, %s723
      %s741 = sphi 0, %s741
      %s743 = sphi 0, %s741
      %s744 = sphi 0, %s743
      %s758 = sphi 0, %s744
      %s762 = sphi 0, %s762
      %s764 = sphi 0, %s762
      %s765 = sphi 0, %s764
      %s779 = sphi 0, %s765
      %s783 = sphi 0, %s783
      %s785 = sphi 0, %s783
      %s786 = sphi 0, %s785
      %s800 = sphi 0, %s786
      %s804 = sphi 0, %s804
      %s806 = sphi 0, %s804
      %s807 = sphi 0, %s806
      %s821 = sphi 0, %s807
      %s825 = sphi 0, %s825
      %s827 = sphi 0, %s825
      %s828 = sphi 0, %s827
      %s842 = sphi 0, %s828
      %s846 = sphi 0, %s846
      %s848 = sphi 0, %s846
      %s849 = sphi 0, %s848
      %s863 = sphi 0, %s849
      %s867 = sphi 0, %s867
      %s869 = sphi 0, %s867
      %s870 = sphi 0, %s869
      %s884 = sphi 0, %s870
      %s888 = sphi 0, %s888
      %s890 = sphi 0, %s888
      %s891 = sphi 0, %s890
      %s905 = sphi 0, %s891
      %s909 = sphi 0, %s909
      %s911 = sphi 0, %s909
      %s912 = sphi 0, %s911
      %s926 = sphi 0, %s912
      %s930 = sphi 0, %s930
      %s932 = sphi 0, %s930
      %s933 = sphi 0, %s932
      %s947 = sphi 0, %s933
      %s951 = sphi 0, %s951
      %s953 = sphi 0, %s951
      %s954 = sphi 0, %s953
      %s968 = sphi 0, %s954
      %s972 = sphi 0, %s972
      %s974 = sphi 0, %s972
      %s975 = sphi 0, %s974
      %s989 = sphi 0, %s975
      %s993 = sphi 0, %s993
      %s995 = sphi 0, %s993
      %s996 = sphi 0, %s995
      %s1010 = sphi 0, %s996
      %s1016 = sphi 0, %s1018
      %s1019 = sphi 0, %s1016
      %s1020 = sphi 0, %s1019
      %s1036 = sphi 0, %s1020
    $region4: #{squeezenet_forward.1} parent=1 // loop_header_branch
      %101 = sbr.rel (%p99) target = $region8
    $region5: #{squeezenet_forward.1} parent=1 // loop_body
      %s103 = ssub.s32 %s98, 1
      %s104 = ssub.s32 %s98, 2
      %s105 = sadd.s32 %s98, 1
      %s106 = ssub.s32 %s98, %s105
      %p107 = scmp.eq.s32.totalorder %s106, 0
      %s109 = sadd.s32 %s108, 1
      %s110 = scalar_select %p107, %s108, %s109
      %p113 = pneg %p107
      %p114 = scmp.eq.s32.totalorder %s98, 1
      %p115 = por %p113, %p114
      %p116 = scmp.ne.s32.totalorder %s108, %s111
      %p117 = scmp.eq.s32.totalorder %s98, 0
      %p118 = por %p116, %p117
      %p119 = scmp.ne.s32.totalorder %s108, %s111
      %p120 = scmp.eq.s32.totalorder %s103, 1
      %p121 = por %p119, %p120
      %p122 = scmp.ne.s32.totalorder %s111, %s112
      %p123 = scmp.eq.s32.totalorder %s103, 0
      %p124 = por %p122, %p123
      %p125 = scmp.ne.s32.totalorder %s111, %s112
      %p126 = scmp.eq.s32.totalorder %s104, 1
      %p127 = por %p125, %p126
      %p129 = scmp.ne.s32.totalorder %s112, %s128
      %p130 = scmp.eq.s32.totalorder %s104, 0
      %p131 = por %p129, %p130
      %s133 = sadd.s32 %s132, 1
      %p136 = scmp.eq.s32.totalorder %s98, 1
      %p137 = scmp.ne.s32.totalorder %s132, %s134
      %p138 = scmp.eq.s32.totalorder %s98, 0
      %p139 = por %p137, %p138
      %p140 = scmp.ne.s32.totalorder %s132, %s134
      %p141 = scmp.eq.s32.totalorder %s103, 1
      %p142 = por %p140, %p141
      %p143 = scmp.ne.s32.totalorder %s134, %s135
      %p144 = scmp.eq.s32.totalorder %s103, 0
      %p145 = por %p143, %p144
      %p146 = scmp.ne.s32.totalorder %s134, %s135
      %p147 = scmp.eq.s32.totalorder %s104, 1
      %p148 = por %p146, %p147
      %p150 = scmp.ne.s32.totalorder %s135, %s149
      %p151 = scmp.eq.s32.totalorder %s104, 0
      %p152 = por %p150, %p151
      %s154 = sadd.s32 %s153, 1
      %p157 = scmp.eq.s32.totalorder %s98, 1
      %p158 = scmp.ne.s32.totalorder %s153, %s155
      %p159 = scmp.eq.s32.totalorder %s98, 0
      %p160 = por %p158, %p159
      %p161 = scmp.ne.s32.totalorder %s153, %s155
      %p162 = scmp.eq.s32.totalorder %s103, 1
      %p163 = por %p161, %p162
      %p164 = scmp.ne.s32.totalorder %s155, %s156
      %p165 = scmp.eq.s32.totalorder %s103, 0
      %p166 = por %p164, %p165
      %p167 = scmp.ne.s32.totalorder %s155, %s156
      %p168 = scmp.eq.s32.totalorder %s104, 1
      %p169 = por %p167, %p168
      %p171 = scmp.ne.s32.totalorder %s156, %s170
      %p172 = scmp.eq.s32.totalorder %s104, 0
      %p173 = por %p171, %p172
      %s175 = sadd.s32 %s174, 1
      %p178 = scmp.eq.s32.totalorder %s98, 1
      %p179 = scmp.ne.s32.totalorder %s174, %s176
      %p180 = scmp.eq.s32.totalorder %s98, 0
      %p181 = por %p179, %p180
      %p182 = scmp.ne.s32.totalorder %s174, %s176
      %p183 = scmp.eq.s32.totalorder %s103, 1
      %p184 = por %p182, %p183
      %p185 = scmp.ne.s32.totalorder %s176, %s177
      %p186 = scmp.eq.s32.totalorder %s103, 0
      %p187 = por %p185, %p186
      %p188 = scmp.ne.s32.totalorder %s176, %s177
      %p189 = scmp.eq.s32.totalorder %s104, 1
      %p190 = por %p188, %p189
      %p192 = scmp.ne.s32.totalorder %s177, %s191
      %p193 = scmp.eq.s32.totalorder %s104, 0
      %p194 = por %p192, %p193
      %s196 = sadd.s32 %s195, 1
      %p199 = scmp.eq.s32.totalorder %s98, 1
      %p200 = scmp.ne.s32.totalorder %s195, %s197
      %p201 = scmp.eq.s32.totalorder %s98, 0
      %p202 = por %p200, %p201
      %p203 = scmp.ne.s32.totalorder %s195, %s197
      %p204 = scmp.eq.s32.totalorder %s103, 1
      %p205 = por %p203, %p204
      %p206 = scmp.ne.s32.totalorder %s197, %s198
      %p207 = scmp.eq.s32.totalorder %s103, 0
      %p208 = por %p206, %p207
      %p209 = scmp.ne.s32.totalorder %s197, %s198
      %p210 = scmp.eq.s32.totalorder %s104, 1
      %p211 = por %p209, %p210
      %p213 = scmp.ne.s32.totalorder %s198, %s212
      %p214 = scmp.eq.s32.totalorder %s104, 0
      %p215 = por %p213, %p214
      %s217 = sadd.s32 %s216, 1
      %p220 = scmp.eq.s32.totalorder %s98, 1
      %p221 = scmp.ne.s32.totalorder %s216, %s218
      %p222 = scmp.eq.s32.totalorder %s98, 0
      %p223 = por %p221, %p222
      %p224 = scmp.ne.s32.totalorder %s216, %s218
      %p225 = scmp.eq.s32.totalorder %s103, 1
      %p226 = por %p224, %p225
      %p227 = scmp.ne.s32.totalorder %s218, %s219
      %p228 = scmp.eq.s32.totalorder %s103, 0
      %p229 = por %p227, %p228
      %p230 = scmp.ne.s32.totalorder %s218, %s219
      %p231 = scmp.eq.s32.totalorder %s104, 1
      %p232 = por %p230, %p231
      %p234 = scmp.ne.s32.totalorder %s219, %s233
      %p235 = scmp.eq.s32.totalorder %s104, 0
      %p236 = por %p234, %p235
      %s238 = sadd.s32 %s237, 1
      %p241 = scmp.eq.s32.totalorder %s98, 1
      %p242 = scmp.ne.s32.totalorder %s237, %s239
      %p243 = scmp.eq.s32.totalorder %s98, 0
      %p244 = por %p242, %p243
      %p245 = scmp.ne.s32.totalorder %s237, %s239
      %p246 = scmp.eq.s32.totalorder %s103, 1
      %p247 = por %p245, %p246
      %p248 = scmp.ne.s32.totalorder %s239, %s240
      %p249 = scmp.eq.s32.totalorder %s103, 0
      %p250 = por %p248, %p249
      %p251 = scmp.ne.s32.totalorder %s239, %s240
      %p252 = scmp.eq.s32.totalorder %s104, 1
      %p253 = por %p251, %p252
      %p255 = scmp.ne.s32.totalorder %s240, %s254
      %p256 = scmp.eq.s32.totalorder %s104, 0
      %p257 = por %p255, %p256
      %s259 = sadd.s32 %s258, 1
      %p262 = scmp.eq.s32.totalorder %s98, 1
      %p263 = scmp.ne.s32.totalorder %s258, %s260
      %p264 = scmp.eq.s32.totalorder %s98, 0
      %p265 = por %p263, %p264
      %p266 = scmp.ne.s32.totalorder %s258, %s260
      %p267 = scmp.eq.s32.totalorder %s103, 1
      %p268 = por %p266, %p267
      %p269 = scmp.ne.s32.totalorder %s260, %s261
      %p270 = scmp.eq.s32.totalorder %s103, 0
      %p271 = por %p269, %p270
      %p272 = scmp.ne.s32.totalorder %s260, %s261
      %p273 = scmp.eq.s32.totalorder %s104, 1
      %p274 = por %p272, %p273
      %p276 = scmp.ne.s32.totalorder %s261, %s275
      %p277 = scmp.eq.s32.totalorder %s104, 0
      %p278 = por %p276, %p277
      %s280 = sadd.s32 %s279, 1
      %p283 = scmp.eq.s32.totalorder %s98, 1
      %p284 = scmp.ne.s32.totalorder %s279, %s281
      %p285 = scmp.eq.s32.totalorder %s98, 0
      %p286 = por %p284, %p285
      %p287 = scmp.ne.s32.totalorder %s279, %s281
      %p288 = scmp.eq.s32.totalorder %s103, 1
      %p289 = por %p287, %p288
      %p290 = scmp.ne.s32.totalorder %s281, %s282
      %p291 = scmp.eq.s32.totalorder %s103, 0
      %p292 = por %p290, %p291
      %p293 = scmp.ne.s32.totalorder %s281, %s282
      %p294 = scmp.eq.s32.totalorder %s104, 1
      %p295 = por %p293, %p294
      %p297 = scmp.ne.s32.totalorder %s282, %s296
      %p298 = scmp.eq.s32.totalorder %s104, 0
      %p299 = por %p297, %p298
      %s301 = sadd.s32 %s300, 1
      %p304 = scmp.eq.s32.totalorder %s98, 1
      %p305 = scmp.ne.s32.totalorder %s300, %s302
      %p306 = scmp.eq.s32.totalorder %s98, 0
      %p307 = por %p305, %p306
      %p308 = scmp.ne.s32.totalorder %s300, %s302
      %p309 = scmp.eq.s32.totalorder %s103, 1
      %p310 = por %p308, %p309
      %p311 = scmp.ne.s32.totalorder %s302, %s303
      %p312 = scmp.eq.s32.totalorder %s103, 0
      %p313 = por %p311, %p312
      %p314 = scmp.ne.s32.totalorder %s302, %s303
      %p315 = scmp.eq.s32.totalorder %s104, 1
      %p316 = por %p314, %p315
      %p318 = scmp.ne.s32.totalorder %s303, %s317
      %p319 = scmp.eq.s32.totalorder %s104, 0
      %p320 = por %p318, %p319
      %s322 = sadd.s32 %s321, 1
      %p325 = scmp.eq.s32.totalorder %s98, 1
      %p326 = scmp.ne.s32.totalorder %s321, %s323
      %p327 = scmp.eq.s32.totalorder %s98, 0
      %p328 = por %p326, %p327
      %p329 = scmp.ne.s32.totalorder %s321, %s323
      %p330 = scmp.eq.s32.totalorder %s103, 1
      %p331 = por %p329, %p330
      %p332 = scmp.ne.s32.totalorder %s323, %s324
      %p333 = scmp.eq.s32.totalorder %s103, 0
      %p334 = por %p332, %p333
      %p335 = scmp.ne.s32.totalorder %s323, %s324
      %p336 = scmp.eq.s32.totalorder %s104, 1
      %p337 = por %p335, %p336
      %p339 = scmp.ne.s32.totalorder %s324, %s338
      %p340 = scmp.eq.s32.totalorder %s104, 0
      %p341 = por %p339, %p340
      %s343 = sadd.s32 %s342, 1
      %p346 = scmp.eq.s32.totalorder %s98, 1
      %p347 = scmp.ne.s32.totalorder %s342, %s344
      %p348 = scmp.eq.s32.totalorder %s98, 0
      %p349 = por %p347, %p348
      %p350 = scmp.ne.s32.totalorder %s342, %s344
      %p351 = scmp.eq.s32.totalorder %s103, 1
      %p352 = por %p350, %p351
      %p353 = scmp.ne.s32.totalorder %s344, %s345
      %p354 = scmp.eq.s32.totalorder %s103, 0
      %p355 = por %p353, %p354
      %p356 = scmp.ne.s32.totalorder %s344, %s345
      %p357 = scmp.eq.s32.totalorder %s104, 1
      %p358 = por %p356, %p357
      %p360 = scmp.ne.s32.totalorder %s345, %s359
      %p361 = scmp.eq.s32.totalorder %s104, 0
      %p362 = por %p360, %p361
      %s364 = sadd.s32 %s363, 1
      %p367 = scmp.eq.s32.totalorder %s98, 1
      %p368 = scmp.ne.s32.totalorder %s363, %s365
      %p369 = scmp.eq.s32.totalorder %s98, 0
      %p370 = por %p368, %p369
      %p371 = scmp.ne.s32.totalorder %s363, %s365
      %p372 = scmp.eq.s32.totalorder %s103, 1
      %p373 = por %p371, %p372
      %p374 = scmp.ne.s32.totalorder %s365, %s366
      %p375 = scmp.eq.s32.totalorder %s103, 0
      %p376 = por %p374, %p375
      %p377 = scmp.ne.s32.totalorder %s365, %s366
      %p378 = scmp.eq.s32.totalorder %s104, 1
      %p379 = por %p377, %p378
      %p381 = scmp.ne.s32.totalorder %s366, %s380
      %p382 = scmp.eq.s32.totalorder %s104, 0
      %p383 = por %p381, %p382
      %s385 = sadd.s32 %s384, 1
      %p388 = scmp.eq.s32.totalorder %s98, 1
      %p389 = scmp.ne.s32.totalorder %s384, %s386
      %p390 = scmp.eq.s32.totalorder %s98, 0
      %p391 = por %p389, %p390
      %p392 = scmp.ne.s32.totalorder %s384, %s386
      %p393 = scmp.eq.s32.totalorder %s103, 1
      %p394 = por %p392, %p393
      %p395 = scmp.ne.s32.totalorder %s386, %s387
      %p396 = scmp.eq.s32.totalorder %s103, 0
      %p397 = por %p395, %p396
      %p398 = scmp.ne.s32.totalorder %s386, %s387
      %p399 = scmp.eq.s32.totalorder %s104, 1
      %p400 = por %p398, %p399
      %p402 = scmp.ne.s32.totalorder %s387, %s401
      %p403 = scmp.eq.s32.totalorder %s104, 0
      %p404 = por %p402, %p403
      %s406 = sadd.s32 %s405, 1
      %p409 = scmp.eq.s32.totalorder %s98, 1
      %p410 = scmp.ne.s32.totalorder %s405, %s407
      %p411 = scmp.eq.s32.totalorder %s98, 0
      %p412 = por %p410, %p411
      %p413 = scmp.ne.s32.totalorder %s405, %s407
      %p414 = scmp.eq.s32.totalorder %s103, 1
      %p415 = por %p413, %p414
      %p416 = scmp.ne.s32.totalorder %s407, %s408
      %p417 = scmp.eq.s32.totalorder %s103, 0
      %p418 = por %p416, %p417
      %p419 = scmp.ne.s32.totalorder %s407, %s408
      %p420 = scmp.eq.s32.totalorder %s104, 1
      %p421 = por %p419, %p420
      %p423 = scmp.ne.s32.totalorder %s408, %s422
      %p424 = scmp.eq.s32.totalorder %s104, 0
      %p425 = por %p423, %p424
      %s427 = sadd.s32 %s426, 1
      %p430 = scmp.eq.s32.totalorder %s98, 1
      %p431 = scmp.ne.s32.totalorder %s426, %s428
      %p432 = scmp.eq.s32.totalorder %s98, 0
      %p433 = por %p431, %p432
      %p434 = scmp.ne.s32.totalorder %s426, %s428
      %p435 = scmp.eq.s32.totalorder %s103, 1
      %p436 = por %p434, %p435
      %p437 = scmp.ne.s32.totalorder %s428, %s429
      %p438 = scmp.eq.s32.totalorder %s103, 0
      %p439 = por %p437, %p438
      %p440 = scmp.ne.s32.totalorder %s428, %s429
      %p441 = scmp.eq.s32.totalorder %s104, 1
      %p442 = por %p440, %p441
      %p444 = scmp.ne.s32.totalorder %s429, %s443
      %p445 = scmp.eq.s32.totalorder %s104, 0
      %p446 = por %p444, %p445
      %s448 = sadd.s32 %s447, 1
      %p451 = scmp.eq.s32.totalorder %s98, 1
      %p452 = scmp.ne.s32.totalorder %s447, %s449
      %p453 = scmp.eq.s32.totalorder %s98, 0
      %p454 = por %p452, %p453
      %p455 = scmp.ne.s32.totalorder %s447, %s449
      %p456 = scmp.eq.s32.totalorder %s103, 1
      %p457 = por %p455, %p456
      %p458 = scmp.ne.s32.totalorder %s449, %s450
      %p459 = scmp.eq.s32.totalorder %s103, 0
      %p460 = por %p458, %p459
      %p461 = scmp.ne.s32.totalorder %s449, %s450
      %p462 = scmp.eq.s32.totalorder %s104, 1
      %p463 = por %p461, %p462
      %p465 = scmp.ne.s32.totalorder %s450, %s464
      %p466 = scmp.eq.s32.totalorder %s104, 0
      %p467 = por %p465, %p466
      %s469 = sadd.s32 %s468, 1
      %p472 = scmp.eq.s32.totalorder %s98, 1
      %p473 = scmp.ne.s32.totalorder %s468, %s470
      %p474 = scmp.eq.s32.totalorder %s98, 0
      %p475 = por %p473, %p474
      %p476 = scmp.ne.s32.totalorder %s468, %s470
      %p477 = scmp.eq.s32.totalorder %s103, 1
      %p478 = por %p476, %p477
      %p479 = scmp.ne.s32.totalorder %s470, %s471
      %p480 = scmp.eq.s32.totalorder %s103, 0
      %p481 = por %p479, %p480
      %p482 = scmp.ne.s32.totalorder %s470, %s471
      %p483 = scmp.eq.s32.totalorder %s104, 1
      %p484 = por %p482, %p483
      %p486 = scmp.ne.s32.totalorder %s471, %s485
      %p487 = scmp.eq.s32.totalorder %s104, 0
      %p488 = por %p486, %p487
      %s490 = sadd.s32 %s489, 1
      %p493 = scmp.eq.s32.totalorder %s98, 1
      %p494 = scmp.ne.s32.totalorder %s489, %s491
      %p495 = scmp.eq.s32.totalorder %s98, 0
      %p496 = por %p494, %p495
      %p497 = scmp.ne.s32.totalorder %s489, %s491
      %p498 = scmp.eq.s32.totalorder %s103, 1
      %p499 = por %p497, %p498
      %p500 = scmp.ne.s32.totalorder %s491, %s492
      %p501 = scmp.eq.s32.totalorder %s103, 0
      %p502 = por %p500, %p501
      %p503 = scmp.ne.s32.totalorder %s491, %s492
      %p504 = scmp.eq.s32.totalorder %s104, 1
      %p505 = por %p503, %p504
      %p507 = scmp.ne.s32.totalorder %s492, %s506
      %p508 = scmp.eq.s32.totalorder %s104, 0
      %p509 = por %p507, %p508
      %s511 = sadd.s32 %s510, 1
      %p514 = scmp.eq.s32.totalorder %s98, 1
      %p515 = scmp.ne.s32.totalorder %s510, %s512
      %p516 = scmp.eq.s32.totalorder %s98, 0
      %p517 = por %p515, %p516
      %p518 = scmp.ne.s32.totalorder %s510, %s512
      %p519 = scmp.eq.s32.totalorder %s103, 1
      %p520 = por %p518, %p519
      %p521 = scmp.ne.s32.totalorder %s512, %s513
      %p522 = scmp.eq.s32.totalorder %s103, 0
      %p523 = por %p521, %p522
      %p524 = scmp.ne.s32.totalorder %s512, %s513
      %p525 = scmp.eq.s32.totalorder %s104, 1
      %p526 = por %p524, %p525
      %p528 = scmp.ne.s32.totalorder %s513, %s527
      %p529 = scmp.eq.s32.totalorder %s104, 0
      %p530 = por %p528, %p529
      %s532 = sadd.s32 %s531, 1
      %p535 = scmp.eq.s32.totalorder %s98, 1
      %p536 = scmp.ne.s32.totalorder %s531, %s533
      %p537 = scmp.eq.s32.totalorder %s98, 0
      %p538 = por %p536, %p537
      %p539 = scmp.ne.s32.totalorder %s531, %s533
      %p540 = scmp.eq.s32.totalorder %s103, 1
      %p541 = por %p539, %p540
      %p542 = scmp.ne.s32.totalorder %s533, %s534
      %p543 = scmp.eq.s32.totalorder %s103, 0
      %p544 = por %p542, %p543
      %p545 = scmp.ne.s32.totalorder %s533, %s534
      %p546 = scmp.eq.s32.totalorder %s104, 1
      %p547 = por %p545, %p546
      %p549 = scmp.ne.s32.totalorder %s534, %s548
      %p550 = scmp.eq.s32.totalorder %s104, 0
      %p551 = por %p549, %p550
      %s553 = sadd.s32 %s552, 1
      %p556 = scmp.eq.s32.totalorder %s98, 1
      %p557 = scmp.ne.s32.totalorder %s552, %s554
      %p558 = scmp.eq.s32.totalorder %s98, 0
      %p559 = por %p557, %p558
      %p560 = scmp.ne.s32.totalorder %s552, %s554
      %p561 = scmp.eq.s32.totalorder %s103, 1
      %p562 = por %p560, %p561
      %p563 = scmp.ne.s32.totalorder %s554, %s555
      %p564 = scmp.eq.s32.totalorder %s103, 0
      %p565 = por %p563, %p564
      %p566 = scmp.ne.s32.totalorder %s554, %s555
      %p567 = scmp.eq.s32.totalorder %s104, 1
      %p568 = por %p566, %p567
      %p570 = scmp.ne.s32.totalorder %s555, %s569
      %p571 = scmp.eq.s32.totalorder %s104, 0
      %p572 = por %p570, %p571
      %s574 = sadd.s32 %s573, 1
      %p577 = scmp.eq.s32.totalorder %s98, 1
      %p578 = scmp.ne.s32.totalorder %s573, %s575
      %p579 = scmp.eq.s32.totalorder %s98, 0
      %p580 = por %p578, %p579
      %p581 = scmp.ne.s32.totalorder %s573, %s575
      %p582 = scmp.eq.s32.totalorder %s103, 1
      %p583 = por %p581, %p582
      %p584 = scmp.ne.s32.totalorder %s575, %s576
      %p585 = scmp.eq.s32.totalorder %s103, 0
      %p586 = por %p584, %p585
      %p587 = scmp.ne.s32.totalorder %s575, %s576
      %p588 = scmp.eq.s32.totalorder %s104, 1
      %p589 = por %p587, %p588
      %p591 = scmp.ne.s32.totalorder %s576, %s590
      %p592 = scmp.eq.s32.totalorder %s104, 0
      %p593 = por %p591, %p592
      %s595 = sadd.s32 %s594, 1
      %p598 = scmp.eq.s32.totalorder %s98, 1
      %p599 = scmp.ne.s32.totalorder %s594, %s596
      %p600 = scmp.eq.s32.totalorder %s98, 0
      %p601 = por %p599, %p600
      %p602 = scmp.ne.s32.totalorder %s594, %s596
      %p603 = scmp.eq.s32.totalorder %s103, 1
      %p604 = por %p602, %p603
      %p605 = scmp.ne.s32.totalorder %s596, %s597
      %p606 = scmp.eq.s32.totalorder %s103, 0
      %p607 = por %p605, %p606
      %p608 = scmp.ne.s32.totalorder %s596, %s597
      %p609 = scmp.eq.s32.totalorder %s104, 1
      %p610 = por %p608, %p609
      %p612 = scmp.ne.s32.totalorder %s597, %s611
      %p613 = scmp.eq.s32.totalorder %s104, 0
      %p614 = por %p612, %p613
      %s616 = sadd.s32 %s615, 1
      %p619 = scmp.eq.s32.totalorder %s98, 1
      %p620 = scmp.ne.s32.totalorder %s615, %s617
      %p621 = scmp.eq.s32.totalorder %s98, 0
      %p622 = por %p620, %p621
      %p623 = scmp.ne.s32.totalorder %s615, %s617
      %p624 = scmp.eq.s32.totalorder %s103, 1
      %p625 = por %p623, %p624
      %p626 = scmp.ne.s32.totalorder %s617, %s618
      %p627 = scmp.eq.s32.totalorder %s103, 0
      %p628 = por %p626, %p627
      %p629 = scmp.ne.s32.totalorder %s617, %s618
      %p630 = scmp.eq.s32.totalorder %s104, 1
      %p631 = por %p629, %p630
      %p633 = scmp.ne.s32.totalorder %s618, %s632
      %p634 = scmp.eq.s32.totalorder %s104, 0
      %p635 = por %p633, %p634
      %s637 = sadd.s32 %s636, 1
      %p640 = scmp.eq.s32.totalorder %s98, 1
      %p641 = scmp.ne.s32.totalorder %s636, %s638
      %p642 = scmp.eq.s32.totalorder %s98, 0
      %p643 = por %p641, %p642
      %p644 = scmp.ne.s32.totalorder %s636, %s638
      %p645 = scmp.eq.s32.totalorder %s103, 1
      %p646 = por %p644, %p645
      %p647 = scmp.ne.s32.totalorder %s638, %s639
      %p648 = scmp.eq.s32.totalorder %s103, 0
      %p649 = por %p647, %p648
      %p650 = scmp.ne.s32.totalorder %s638, %s639
      %p651 = scmp.eq.s32.totalorder %s104, 1
      %p652 = por %p650, %p651
      %p654 = scmp.ne.s32.totalorder %s639, %s653
      %p655 = scmp.eq.s32.totalorder %s104, 0
      %p656 = por %p654, %p655
      %s658 = sadd.s32 %s657, 1
      %p661 = scmp.eq.s32.totalorder %s98, 1
      %p662 = scmp.ne.s32.totalorder %s657, %s659
      %p663 = scmp.eq.s32.totalorder %s98, 0
      %p664 = por %p662, %p663
      %p665 = scmp.ne.s32.totalorder %s657, %s659
      %p666 = scmp.eq.s32.totalorder %s103, 1
      %p667 = por %p665, %p666
      %p668 = scmp.ne.s32.totalorder %s659, %s660
      %p669 = scmp.eq.s32.totalorder %s103, 0
      %p670 = por %p668, %p669
      %p671 = scmp.ne.s32.totalorder %s659, %s660
      %p672 = scmp.eq.s32.totalorder %s104, 1
      %p673 = por %p671, %p672
      %p675 = scmp.ne.s32.totalorder %s660, %s674
      %p676 = scmp.eq.s32.totalorder %s104, 0
      %p677 = por %p675, %p676
      %s679 = sadd.s32 %s678, 1
      %p682 = scmp.eq.s32.totalorder %s98, 1
      %p683 = scmp.ne.s32.totalorder %s678, %s680
      %p684 = scmp.eq.s32.totalorder %s98, 0
      %p685 = por %p683, %p684
      %p686 = scmp.ne.s32.totalorder %s678, %s680
      %p687 = scmp.eq.s32.totalorder %s103, 1
      %p688 = por %p686, %p687
      %p689 = scmp.ne.s32.totalorder %s680, %s681
      %p690 = scmp.eq.s32.totalorder %s103, 0
      %p691 = por %p689, %p690
      %p692 = scmp.ne.s32.totalorder %s680, %s681
      %p693 = scmp.eq.s32.totalorder %s104, 1
      %p694 = por %p692, %p693
      %p696 = scmp.ne.s32.totalorder %s681, %s695
      %p697 = scmp.eq.s32.totalorder %s104, 0
      %p698 = por %p696, %p697
      %s700 = sadd.s32 %s699, 1
      %p703 = scmp.eq.s32.totalorder %s98, 1
      %p704 = scmp.ne.s32.totalorder %s699, %s701
      %p705 = scmp.eq.s32.totalorder %s98, 0
      %p706 = por %p704, %p705
      %p707 = scmp.ne.s32.totalorder %s699, %s701
      %p708 = scmp.eq.s32.totalorder %s103, 1
      %p709 = por %p707, %p708
      %p710 = scmp.ne.s32.totalorder %s701, %s702
      %p711 = scmp.eq.s32.totalorder %s103, 0
      %p712 = por %p710, %p711
      %p713 = scmp.ne.s32.totalorder %s701, %s702
      %p714 = scmp.eq.s32.totalorder %s104, 1
      %p715 = por %p713, %p714
      %p717 = scmp.ne.s32.totalorder %s702, %s716
      %p718 = scmp.eq.s32.totalorder %s104, 0
      %p719 = por %p717, %p718
      %s721 = sadd.s32 %s720, 1
      %p724 = scmp.eq.s32.totalorder %s98, 1
      %p725 = scmp.ne.s32.totalorder %s720, %s722
      %p726 = scmp.eq.s32.totalorder %s98, 0
      %p727 = por %p725, %p726
      %p728 = scmp.ne.s32.totalorder %s720, %s722
      %p729 = scmp.eq.s32.totalorder %s103, 1
      %p730 = por %p728, %p729
      %p731 = scmp.ne.s32.totalorder %s722, %s723
      %p732 = scmp.eq.s32.totalorder %s103, 0
      %p733 = por %p731, %p732
      %p734 = scmp.ne.s32.totalorder %s722, %s723
      %p735 = scmp.eq.s32.totalorder %s104, 1
      %p736 = por %p734, %p735
      %p738 = scmp.ne.s32.totalorder %s723, %s737
      %p739 = scmp.eq.s32.totalorder %s104, 0
      %p740 = por %p738, %p739
      %s742 = sadd.s32 %s741, 1
      %p745 = scmp.eq.s32.totalorder %s98, 1
      %p746 = scmp.ne.s32.totalorder %s741, %s743
      %p747 = scmp.eq.s32.totalorder %s98, 0
      %p748 = por %p746, %p747
      %p749 = scmp.ne.s32.totalorder %s741, %s743
      %p750 = scmp.eq.s32.totalorder %s103, 1
      %p751 = por %p749, %p750
      %p752 = scmp.ne.s32.totalorder %s743, %s744
      %p753 = scmp.eq.s32.totalorder %s103, 0
      %p754 = por %p752, %p753
      %p755 = scmp.ne.s32.totalorder %s743, %s744
      %p756 = scmp.eq.s32.totalorder %s104, 1
      %p757 = por %p755, %p756
      %p759 = scmp.ne.s32.totalorder %s744, %s758
      %p760 = scmp.eq.s32.totalorder %s104, 0
      %p761 = por %p759, %p760
      %s763 = sadd.s32 %s762, 1
      %p766 = scmp.eq.s32.totalorder %s98, 1
      %p767 = scmp.ne.s32.totalorder %s762, %s764
      %p768 = scmp.eq.s32.totalorder %s98, 0
      %p769 = por %p767, %p768
      %p770 = scmp.ne.s32.totalorder %s762, %s764
      %p771 = scmp.eq.s32.totalorder %s103, 1
      %p772 = por %p770, %p771
      %p773 = scmp.ne.s32.totalorder %s764, %s765
      %p774 = scmp.eq.s32.totalorder %s103, 0
      %p775 = por %p773, %p774
      %p776 = scmp.ne.s32.totalorder %s764, %s765
      %p777 = scmp.eq.s32.totalorder %s104, 1
      %p778 = por %p776, %p777
      %p780 = scmp.ne.s32.totalorder %s765, %s779
      %p781 = scmp.eq.s32.totalorder %s104, 0
      %p782 = por %p780, %p781
      %s784 = sadd.s32 %s783, 1
      %p787 = scmp.eq.s32.totalorder %s98, 1
      %p788 = scmp.ne.s32.totalorder %s783, %s785
      %p789 = scmp.eq.s32.totalorder %s98, 0
      %p790 = por %p788, %p789
      %p791 = scmp.ne.s32.totalorder %s783, %s785
      %p792 = scmp.eq.s32.totalorder %s103, 1
      %p793 = por %p791, %p792
      %p794 = scmp.ne.s32.totalorder %s785, %s786
      %p795 = scmp.eq.s32.totalorder %s103, 0
      %p796 = por %p794, %p795
      %p797 = scmp.ne.s32.totalorder %s785, %s786
      %p798 = scmp.eq.s32.totalorder %s104, 1
      %p799 = por %p797, %p798
      %p801 = scmp.ne.s32.totalorder %s786, %s800
      %p802 = scmp.eq.s32.totalorder %s104, 0
      %p803 = por %p801, %p802
      %s805 = sadd.s32 %s804, 1
      %p808 = scmp.eq.s32.totalorder %s98, 1
      %p809 = scmp.ne.s32.totalorder %s804, %s806
      %p810 = scmp.eq.s32.totalorder %s98, 0
      %p811 = por %p809, %p810
      %p812 = scmp.ne.s32.totalorder %s804, %s806
      %p813 = scmp.eq.s32.totalorder %s103, 1
      %p814 = por %p812, %p813
      %p815 = scmp.ne.s32.totalorder %s806, %s807
      %p816 = scmp.eq.s32.totalorder %s103, 0
      %p817 = por %p815, %p816
      %p818 = scmp.ne.s32.totalorder %s806, %s807
      %p819 = scmp.eq.s32.totalorder %s104, 1
      %p820 = por %p818, %p819
      %p822 = scmp.ne.s32.totalorder %s807, %s821
      %p823 = scmp.eq.s32.totalorder %s104, 0
      %p824 = por %p822, %p823
      %s826 = sadd.s32 %s825, 1
      %p829 = scmp.eq.s32.totalorder %s98, 1
      %p830 = scmp.ne.s32.totalorder %s825, %s827
      %p831 = scmp.eq.s32.totalorder %s98, 0
      %p832 = por %p830, %p831
      %p833 = scmp.ne.s32.totalorder %s825, %s827
      %p834 = scmp.eq.s32.totalorder %s103, 1
      %p835 = por %p833, %p834
      %p836 = scmp.ne.s32.totalorder %s827, %s828
      %p837 = scmp.eq.s32.totalorder %s103, 0
      %p838 = por %p836, %p837
      %p839 = scmp.ne.s32.totalorder %s827, %s828
      %p840 = scmp.eq.s32.totalorder %s104, 1
      %p841 = por %p839, %p840
      %p843 = scmp.ne.s32.totalorder %s828, %s842
      %p844 = scmp.eq.s32.totalorder %s104, 0
      %p845 = por %p843, %p844
      %s847 = sadd.s32 %s846, 1
      %p850 = scmp.eq.s32.totalorder %s98, 1
      %p851 = scmp.ne.s32.totalorder %s846, %s848
      %p852 = scmp.eq.s32.totalorder %s98, 0
      %p853 = por %p851, %p852
      %p854 = scmp.ne.s32.totalorder %s846, %s848
      %p855 = scmp.eq.s32.totalorder %s103, 1
      %p856 = por %p854, %p855
      %p857 = scmp.ne.s32.totalorder %s848, %s849
      %p858 = scmp.eq.s32.totalorder %s103, 0
      %p859 = por %p857, %p858
      %p860 = scmp.ne.s32.totalorder %s848, %s849
      %p861 = scmp.eq.s32.totalorder %s104, 1
      %p862 = por %p860, %p861
      %p864 = scmp.ne.s32.totalorder %s849, %s863
      %p865 = scmp.eq.s32.totalorder %s104, 0
      %p866 = por %p864, %p865
      %s868 = sadd.s32 %s867, 1
      %p871 = scmp.eq.s32.totalorder %s98, 1
      %p872 = scmp.ne.s32.totalorder %s867, %s869
      %p873 = scmp.eq.s32.totalorder %s98, 0
      %p874 = por %p872, %p873
      %p875 = scmp.ne.s32.totalorder %s867, %s869
      %p876 = scmp.eq.s32.totalorder %s103, 1
      %p877 = por %p875, %p876
      %p878 = scmp.ne.s32.totalorder %s869, %s870
      %p879 = scmp.eq.s32.totalorder %s103, 0
      %p880 = por %p878, %p879
      %p881 = scmp.ne.s32.totalorder %s869, %s870
      %p882 = scmp.eq.s32.totalorder %s104, 1
      %p883 = por %p881, %p882
      %p885 = scmp.ne.s32.totalorder %s870, %s884
      %p886 = scmp.eq.s32.totalorder %s104, 0
      %p887 = por %p885, %p886
      %s889 = sadd.s32 %s888, 1
      %p892 = scmp.eq.s32.totalorder %s98, 1
      %p893 = scmp.ne.s32.totalorder %s888, %s890
      %p894 = scmp.eq.s32.totalorder %s98, 0
      %p895 = por %p893, %p894
      %p896 = scmp.ne.s32.totalorder %s888, %s890
      %p897 = scmp.eq.s32.totalorder %s103, 1
      %p898 = por %p896, %p897
      %p899 = scmp.ne.s32.totalorder %s890, %s891
      %p900 = scmp.eq.s32.totalorder %s103, 0
      %p901 = por %p899, %p900
      %p902 = scmp.ne.s32.totalorder %s890, %s891
      %p903 = scmp.eq.s32.totalorder %s104, 1
      %p904 = por %p902, %p903
      %p906 = scmp.ne.s32.totalorder %s891, %s905
      %p907 = scmp.eq.s32.totalorder %s104, 0
      %p908 = por %p906, %p907
      %s910 = sadd.s32 %s909, 1
      %p913 = scmp.eq.s32.totalorder %s98, 1
      %p914 = scmp.ne.s32.totalorder %s909, %s911
      %p915 = scmp.eq.s32.totalorder %s98, 0
      %p916 = por %p914, %p915
      %p917 = scmp.ne.s32.totalorder %s909, %s911
      %p918 = scmp.eq.s32.totalorder %s103, 1
      %p919 = por %p917, %p918
      %p920 = scmp.ne.s32.totalorder %s911, %s912
      %p921 = scmp.eq.s32.totalorder %s103, 0
      %p922 = por %p920, %p921
      %p923 = scmp.ne.s32.totalorder %s911, %s912
      %p924 = scmp.eq.s32.totalorder %s104, 1
      %p925 = por %p923, %p924
      %p927 = scmp.ne.s32.totalorder %s912, %s926
      %p928 = scmp.eq.s32.totalorder %s104, 0
      %p929 = por %p927, %p928
      %s931 = sadd.s32 %s930, 1
      %p934 = scmp.eq.s32.totalorder %s98, 1
      %p935 = scmp.ne.s32.totalorder %s930, %s932
      %p936 = scmp.eq.s32.totalorder %s98, 0
      %p937 = por %p935, %p936
      %p938 = scmp.ne.s32.totalorder %s930, %s932
      %p939 = scmp.eq.s32.totalorder %s103, 1
      %p940 = por %p938, %p939
      %p941 = scmp.ne.s32.totalorder %s932, %s933
      %p942 = scmp.eq.s32.totalorder %s103, 0
      %p943 = por %p941, %p942
      %p944 = scmp.ne.s32.totalorder %s932, %s933
      %p945 = scmp.eq.s32.totalorder %s104, 1
      %p946 = por %p944, %p945
      %p948 = scmp.ne.s32.totalorder %s933, %s947
      %p949 = scmp.eq.s32.totalorder %s104, 0
      %p950 = por %p948, %p949
      %s952 = sadd.s32 %s951, 1
      %p955 = scmp.eq.s32.totalorder %s98, 1
      %p956 = scmp.ne.s32.totalorder %s951, %s953
      %p957 = scmp.eq.s32.totalorder %s98, 0
      %p958 = por %p956, %p957
      %p959 = scmp.ne.s32.totalorder %s951, %s953
      %p960 = scmp.eq.s32.totalorder %s103, 1
      %p961 = por %p959, %p960
      %p962 = scmp.ne.s32.totalorder %s953, %s954
      %p963 = scmp.eq.s32.totalorder %s103, 0
      %p964 = por %p962, %p963
      %p965 = scmp.ne.s32.totalorder %s953, %s954
      %p966 = scmp.eq.s32.totalorder %s104, 1
      %p967 = por %p965, %p966
      %p969 = scmp.ne.s32.totalorder %s954, %s968
      %p970 = scmp.eq.s32.totalorder %s104, 0
      %p971 = por %p969, %p970
      %s973 = sadd.s32 %s972, 1
      %p976 = scmp.eq.s32.totalorder %s98, 1
      %p977 = scmp.ne.s32.totalorder %s972, %s974
      %p978 = scmp.eq.s32.totalorder %s98, 0
      %p979 = por %p977, %p978
      %p980 = scmp.ne.s32.totalorder %s972, %s974
      %p981 = scmp.eq.s32.totalorder %s103, 1
      %p982 = por %p980, %p981
      %p983 = scmp.ne.s32.totalorder %s974, %s975
      %p984 = scmp.eq.s32.totalorder %s103, 0
      %p985 = por %p983, %p984
      %p986 = scmp.ne.s32.totalorder %s974, %s975
      %p987 = scmp.eq.s32.totalorder %s104, 1
      %p988 = por %p986, %p987
      %p990 = scmp.ne.s32.totalorder %s975, %s989
      %p991 = scmp.eq.s32.totalorder %s104, 0
      %p992 = por %p990, %p991
      %s994 = sadd.s32 %s993, 1
      %p997 = scmp.eq.s32.totalorder %s98, 1
      %p998 = scmp.ne.s32.totalorder %s993, %s995
      %p999 = scmp.eq.s32.totalorder %s98, 0
      %p1000 = por %p998, %p999
      %p1001 = scmp.ne.s32.totalorder %s993, %s995
      %p1002 = scmp.eq.s32.totalorder %s103, 1
      %p1003 = por %p1001, %p1002
      %p1004 = scmp.ne.s32.totalorder %s995, %s996
      %p1005 = scmp.eq.s32.totalorder %s103, 0
      %p1006 = por %p1004, %p1005
      %p1007 = scmp.ne.s32.totalorder %s995, %s996
      %p1008 = scmp.eq.s32.totalorder %s104, 1
      %p1009 = por %p1007, %p1008
      %p1011 = scmp.ne.s32.totalorder %s996, %s1010
      %p1012 = scmp.eq.s32.totalorder %s104, 0
      %p1013 = por %p1011, %p1012
      %s1014 = ssub.s32 %s98, %s105
      %p1015 = scmp.eq.s32.totalorder %s1014, 0
      %s1017 = sadd.s32 %s1016, 1
      %s1018 = scalar_select %p1015, %s1016, %s1017
      %p1021 = pneg %p1015
      %p1022 = scmp.eq.s32.totalorder %s98, 1
      %p1023 = por %p1021, %p1022
      %p1024 = scmp.ne.s32.totalorder %s1016, %s1019
      %p1025 = scmp.eq.s32.totalorder %s98, 0
      %p1026 = por %p1024, %p1025
      %p1027 = scmp.ne.s32.totalorder %s1016, %s1019
      %p1028 = scmp.eq.s32.totalorder %s103, 1
      %p1029 = por %p1027, %p1028
      %p1030 = scmp.ne.s32.totalorder %s1019, %s1020
      %p1031 = scmp.eq.s32.totalorder %s103, 0
      %p1032 = por %p1030, %p1031
      %p1033 = scmp.ne.s32.totalorder %s1019, %s1020
      %p1034 = scmp.eq.s32.totalorder %s104, 1
      %p1035 = por %p1033, %p1034
      %p1037 = scmp.ne.s32.totalorder %s1020, %s1036
      %p1038 = scmp.eq.s32.totalorder %s104, 0
      %p1039 = por %p1037, %p1038
      %p1040 = scmp.le.s32.totalorder 1, %s98
      %p1041 = scmp.lt.s32.totalorder %s98, 3
      %p1042 = pnand %p1040, %p1041
      %p1043 = pneg %p1042
      // Predicated region
      $region9: #{squeezenet_forward.1} parent=5 // pred_check
        _
      $region10: #{squeezenet_forward.1} parent=5 // pred_check_branch
        %1045 = sbr.rel (%p1042) target = $region12
      $region11: #{squeezenet_forward.1} parent=5 // pred_region
        %s1046 = ssub.s32 %s98, 1
        // Predicated region
        $region13: #{squeezenet_forward.1} parent=11 // pred_check
          %p1047 = pneg %p145
        $region14: #{squeezenet_forward.1} parent=11 // pred_check_branch
          %1049 = sbr.rel (%p1047) target = $region16
        $region15: #{squeezenet_forward.1} parent=11 // pred_region
          _
        $region16: #{squeezenet_forward.1} parent=11 // pred_fallthru
          _
        // Predicated region
        $region17: #{squeezenet_forward.1} parent=11 // pred_check
          %p1050 = pneg %p166
        $region18: #{squeezenet_forward.1} parent=11 // pred_check_branch
          %1052 = sbr.rel (%p1050) target = $region20
        $region19: #{squeezenet_forward.1} parent=11 // pred_region
          _
        $region20: #{squeezenet_forward.1} parent=11 // pred_fallthru
          _
        // Predicated region
        $region21: #{squeezenet_forward.1} parent=11 // pred_check
          %p1053 = pneg %p187
        $region22: #{squeezenet_forward.1} parent=11 // pred_check_branch
          %1055 = sbr.rel (%p1053) target = $region24
        $region23: #{squeezenet_forward.1} parent=11 // pred_region
          _
        $region24: #{squeezenet_forward.1} parent=11 // pred_fallthru
          _
        // Predicated region
        $region25: #{squeezenet_forward.1} parent=11 // pred_check
          %p1056 = pneg %p208
        $region26: #{squeezenet_forward.1} parent=11 // pred_check_branch
          %1058 = sbr.rel (%p1056) target = $region28
        $region27: #{squeezenet_forward.1} parent=11 // pred_region
          _
        $region28: #{squeezenet_forward.1} parent=11 // pred_fallthru
          _
        // Predicated region
        $region29: #{squeezenet_forward.1} parent=11 // pred_check
          %p1059 = pneg %p229
        $region30: #{squeezenet_forward.1} parent=11 // pred_check_branch
          %1061 = sbr.rel (%p1059) target = $region32
        $region31: #{squeezenet_forward.1} parent=11 // pred_region
          _
        $region32: #{squeezenet_forward.1} parent=11 // pred_fallthru
          _
        // Predicated region
        $region33: #{squeezenet_forward.1} parent=11 // pred_check
          %p1062 = pneg %p250
        $region34: #{squeezenet_forward.1} parent=11 // pred_check_branch
          %1064 = sbr.rel (%p1062) target = $region36
        $region35: #{squeezenet_forward.1} parent=11 // pred_region
          _
        $region36: #{squeezenet_forward.1} parent=11 // pred_fallthru
          _
        // Predicated region
        $region37: #{squeezenet_forward.1} parent=11 // pred_check
          %p1065 = pneg %p271
        $region38: #{squeezenet_forward.1} parent=11 // pred_check_branch
          %1067 = sbr.rel (%p1065) target = $region40
        $region39: #{squeezenet_forward.1} parent=11 // pred_region
          _
        $region40: #{squeezenet_forward.1} parent=11 // pred_fallthru
          _
        // Predicated region
        $region41: #{squeezenet_forward.1} parent=11 // pred_check
          %p1068 = pneg %p292
        $region42: #{squeezenet_forward.1} parent=11 // pred_check_branch
          %1070 = sbr.rel (%p1068) target = $region44
        $region43: #{squeezenet_forward.1} parent=11 // pred_region
          _
        $region44: #{squeezenet_forward.1} parent=11 // pred_fallthru
          _
        // Predicated region
        $region45: #{squeezenet_forward.1} parent=11 // pred_check
          %p1071 = pneg %p313
        $region46: #{squeezenet_forward.1} parent=11 // pred_check_branch
          %1073 = sbr.rel (%p1071) target = $region48
        $region47: #{squeezenet_forward.1} parent=11 // pred_region
          _
        $region48: #{squeezenet_forward.1} parent=11 // pred_fallthru
          _
        // Predicated region
        $region49: #{squeezenet_forward.1} parent=11 // pred_check
          %p1074 = pneg %p334
        $region50: #{squeezenet_forward.1} parent=11 // pred_check_branch
          %1076 = sbr.rel (%p1074) target = $region52
        $region51: #{squeezenet_forward.1} parent=11 // pred_region
          _
        $region52: #{squeezenet_forward.1} parent=11 // pred_fallthru
          _
        // Predicated region
        $region53: #{squeezenet_forward.1} parent=11 // pred_check
          %p1077 = pneg %p355
        $region54: #{squeezenet_forward.1} parent=11 // pred_check_branch
          %1079 = sbr.rel (%p1077) target = $region56
        $region55: #{squeezenet_forward.1} parent=11 // pred_region
          _
        $region56: #{squeezenet_forward.1} parent=11 // pred_fallthru
          _
        // Predicated region
        $region57: #{squeezenet_forward.1} parent=11 // pred_check
          %p1080 = pneg %p376
        $region58: #{squeezenet_forward.1} parent=11 // pred_check_branch
          %1082 = sbr.rel (%p1080) target = $region60
        $region59: #{squeezenet_forward.1} parent=11 // pred_region
          _
        $region60: #{squeezenet_forward.1} parent=11 // pred_fallthru
          _
        // Predicated region
        $region61: #{squeezenet_forward.1} parent=11 // pred_check
          %p1083 = pneg %p397
        $region62: #{squeezenet_forward.1} parent=11 // pred_check_branch
          %1085 = sbr.rel (%p1083) target = $region64
        $region63: #{squeezenet_forward.1} parent=11 // pred_region
          _
        $region64: #{squeezenet_forward.1} parent=11 // pred_fallthru
          _
        // Predicated region
        $region65: #{squeezenet_forward.1} parent=11 // pred_check
          %p1086 = pneg %p418
        $region66: #{squeezenet_forward.1} parent=11 // pred_check_branch
          %1088 = sbr.rel (%p1086) target = $region68
        $region67: #{squeezenet_forward.1} parent=11 // pred_region
          _
        $region68: #{squeezenet_forward.1} parent=11 // pred_fallthru
          _
        // Predicated region
        $region69: #{squeezenet_forward.1} parent=11 // pred_check
          %p1089 = pneg %p439
        $region70: #{squeezenet_forward.1} parent=11 // pred_check_branch
          %1091 = sbr.rel (%p1089) target = $region72
        $region71: #{squeezenet_forward.1} parent=11 // pred_region
          _
        $region72: #{squeezenet_forward.1} parent=11 // pred_fallthru
          _
        // Predicated region
        $region73: #{squeezenet_forward.1} parent=11 // pred_check
          %p1092 = pneg %p460
        $region74: #{squeezenet_forward.1} parent=11 // pred_check_branch
          %1094 = sbr.rel (%p1092) target = $region76
        $region75: #{squeezenet_forward.1} parent=11 // pred_region
          _
        $region76: #{squeezenet_forward.1} parent=11 // pred_fallthru
          _
        // Predicated region
        $region77: #{squeezenet_forward.1} parent=11 // pred_check
          %p1095 = pneg %p481
        $region78: #{squeezenet_forward.1} parent=11 // pred_check_branch
          %1097 = sbr.rel (%p1095) target = $region80
        $region79: #{squeezenet_forward.1} parent=11 // pred_region
          _
        $region80: #{squeezenet_forward.1} parent=11 // pred_fallthru
          _
        // Predicated region
        $region81: #{squeezenet_forward.1} parent=11 // pred_check
          %p1098 = pneg %p502
        $region82: #{squeezenet_forward.1} parent=11 // pred_check_branch
          %1100 = sbr.rel (%p1098) target = $region84
        $region83: #{squeezenet_forward.1} parent=11 // pred_region
          _
        $region84: #{squeezenet_forward.1} parent=11 // pred_fallthru
          _
        // Predicated region
        $region85: #{squeezenet_forward.1} parent=11 // pred_check
          %p1101 = pneg %p523
        $region86: #{squeezenet_forward.1} parent=11 // pred_check_branch
          %1103 = sbr.rel (%p1101) target = $region88
        $region87: #{squeezenet_forward.1} parent=11 // pred_region
          _
        $region88: #{squeezenet_forward.1} parent=11 // pred_fallthru
          _
        // Predicated region
        $region89: #{squeezenet_forward.1} parent=11 // pred_check
          %p1104 = pneg %p544
        $region90: #{squeezenet_forward.1} parent=11 // pred_check_branch
          %1106 = sbr.rel (%p1104) target = $region92
        $region91: #{squeezenet_forward.1} parent=11 // pred_region
          _
        $region92: #{squeezenet_forward.1} parent=11 // pred_fallthru
          _
        // Predicated region
        $region93: #{squeezenet_forward.1} parent=11 // pred_check
          %p1107 = pneg %p565
        $region94: #{squeezenet_forward.1} parent=11 // pred_check_branch
          %1109 = sbr.rel (%p1107) target = $region96
        $region95: #{squeezenet_forward.1} parent=11 // pred_region
          _
        $region96: #{squeezenet_forward.1} parent=11 // pred_fallthru
          _
        // Predicated region
        $region97: #{squeezenet_forward.1} parent=11 // pred_check
          %p1110 = pneg %p586
        $region98: #{squeezenet_forward.1} parent=11 // pred_check_branch
          %1112 = sbr.rel (%p1110) target = $region100
        $region99: #{squeezenet_forward.1} parent=11 // pred_region
          _
        $region100: #{squeezenet_forward.1} parent=11 // pred_fallthru
          _
        // Predicated region
        $region101: #{squeezenet_forward.1} parent=11 // pred_check
          %p1113 = pneg %p607
        $region102: #{squeezenet_forward.1} parent=11 // pred_check_branch
          %1115 = sbr.rel (%p1113) target = $region104
        $region103: #{squeezenet_forward.1} parent=11 // pred_region
          _
        $region104: #{squeezenet_forward.1} parent=11 // pred_fallthru
          _
        // Predicated region
        $region105: #{squeezenet_forward.1} parent=11 // pred_check
          %p1116 = pneg %p628
        $region106: #{squeezenet_forward.1} parent=11 // pred_check_branch
          %1118 = sbr.rel (%p1116) target = $region108
        $region107: #{squeezenet_forward.1} parent=11 // pred_region
          _
        $region108: #{squeezenet_forward.1} parent=11 // pred_fallthru
          _
        // Predicated region
        $region109: #{squeezenet_forward.1} parent=11 // pred_check
          %p1119 = pneg %p649
        $region110: #{squeezenet_forward.1} parent=11 // pred_check_branch
          %1121 = sbr.rel (%p1119) target = $region112
        $region111: #{squeezenet_forward.1} parent=11 // pred_region
          _
        $region112: #{squeezenet_forward.1} parent=11 // pred_fallthru
          _
        // Predicated region
        $region113: #{squeezenet_forward.1} parent=11 // pred_check
          %p1122 = pneg %p670
        $region114: #{squeezenet_forward.1} parent=11 // pred_check_branch
          %1124 = sbr.rel (%p1122) target = $region116
        $region115: #{squeezenet_forward.1} parent=11 // pred_region
          _
        $region116: #{squeezenet_forward.1} parent=11 // pred_fallthru
          _
        // Predicated region
        $region117: #{squeezenet_forward.1} parent=11 // pred_check
          %p1125 = pneg %p691
        $region118: #{squeezenet_forward.1} parent=11 // pred_check_branch
          %1127 = sbr.rel (%p1125) target = $region120
        $region119: #{squeezenet_forward.1} parent=11 // pred_region
          _
        $region120: #{squeezenet_forward.1} parent=11 // pred_fallthru
          _
        // Predicated region
        $region121: #{squeezenet_forward.1} parent=11 // pred_check
          %p1128 = pneg %p712
        $region122: #{squeezenet_forward.1} parent=11 // pred_check_branch
          %1130 = sbr.rel (%p1128) target = $region124
        $region123: #{squeezenet_forward.1} parent=11 // pred_region
          _
        $region124: #{squeezenet_forward.1} parent=11 // pred_fallthru
          _
        // Predicated region
        $region125: #{squeezenet_forward.1} parent=11 // pred_check
          %p1131 = pneg %p733
        $region126: #{squeezenet_forward.1} parent=11 // pred_check_branch
          %1133 = sbr.rel (%p1131) target = $region128
        $region127: #{squeezenet_forward.1} parent=11 // pred_region
          _
        $region128: #{squeezenet_forward.1} parent=11 // pred_fallthru
          _
        // Predicated region
        $region129: #{squeezenet_forward.1} parent=11 // pred_check
          %p1134 = pneg %p754
        $region130: #{squeezenet_forward.1} parent=11 // pred_check_branch
          %1136 = sbr.rel (%p1134) target = $region132
        $region131: #{squeezenet_forward.1} parent=11 // pred_region
          _
        $region132: #{squeezenet_forward.1} parent=11 // pred_fallthru
          _
        // Predicated region
        $region133: #{squeezenet_forward.1} parent=11 // pred_check
          %p1137 = pneg %p775
        $region134: #{squeezenet_forward.1} parent=11 // pred_check_branch
          %1139 = sbr.rel (%p1137) target = $region136
        $region135: #{squeezenet_forward.1} parent=11 // pred_region
          _
        $region136: #{squeezenet_forward.1} parent=11 // pred_fallthru
          _
        // Predicated region
        $region137: #{squeezenet_forward.1} parent=11 // pred_check
          %p1140 = pneg %p796
        $region138: #{squeezenet_forward.1} parent=11 // pred_check_branch
          %1142 = sbr.rel (%p1140) target = $region140
        $region139: #{squeezenet_forward.1} parent=11 // pred_region
          _
        $region140: #{squeezenet_forward.1} parent=11 // pred_fallthru
          _
        // Predicated region
        $region141: #{squeezenet_forward.1} parent=11 // pred_check
          %p1143 = pneg %p817
        $region142: #{squeezenet_forward.1} parent=11 // pred_check_branch
          %1145 = sbr.rel (%p1143) target = $region144
        $region143: #{squeezenet_forward.1} parent=11 // pred_region
          _
        $region144: #{squeezenet_forward.1} parent=11 // pred_fallthru
          _
        // Predicated region
        $region145: #{squeezenet_forward.1} parent=11 // pred_check
          %p1146 = pneg %p838
        $region146: #{squeezenet_forward.1} parent=11 // pred_check_branch
          %1148 = sbr.rel (%p1146) target = $region148
        $region147: #{squeezenet_forward.1} parent=11 // pred_region
          _
        $region148: #{squeezenet_forward.1} parent=11 // pred_fallthru
          _
        // Predicated region
        $region149: #{squeezenet_forward.1} parent=11 // pred_check
          %p1149 = pneg %p859
        $region150: #{squeezenet_forward.1} parent=11 // pred_check_branch
          %1151 = sbr.rel (%p1149) target = $region152
        $region151: #{squeezenet_forward.1} parent=11 // pred_region
          _
        $region152: #{squeezenet_forward.1} parent=11 // pred_fallthru
          _
        // Predicated region
        $region153: #{squeezenet_forward.1} parent=11 // pred_check
          %p1152 = pneg %p880
        $region154: #{squeezenet_forward.1} parent=11 // pred_check_branch
          %1154 = sbr.rel (%p1152) target = $region156
        $region155: #{squeezenet_forward.1} parent=11 // pred_region
          _
        $region156: #{squeezenet_forward.1} parent=11 // pred_fallthru
          _
        // Predicated region
        $region157: #{squeezenet_forward.1} parent=11 // pred_check
          %p1155 = pneg %p901
        $region158: #{squeezenet_forward.1} parent=11 // pred_check_branch
          %1157 = sbr.rel (%p1155) target = $region160
        $region159: #{squeezenet_forward.1} parent=11 // pred_region
          _
        $region160: #{squeezenet_forward.1} parent=11 // pred_fallthru
          _
        // Predicated region
        $region161: #{squeezenet_forward.1} parent=11 // pred_check
          %p1158 = pneg %p922
        $region162: #{squeezenet_forward.1} parent=11 // pred_check_branch
          %1160 = sbr.rel (%p1158) target = $region164
        $region163: #{squeezenet_forward.1} parent=11 // pred_region
          %1162 = vsyncadd [#allocation3], 0
          %s1164 = sshll.u32 %s77, 4
          %s1165 = int_to_ptr.hbm [resolvable:$true] %s1164
          %s1166 = sshll.u32 [#allocation2], 4
          %s1167 = int_to_ptr.vmem [resolvable:$true] %s1166
          %1169 = dma.hbm_to_vmem [thread:$0]  %s1165, 16, %s1167, [#allocation3]
        $region164: #{squeezenet_forward.1} parent=11 // pred_fallthru
          _
        // Predicated region
        $region165: #{squeezenet_forward.1} parent=11 // pred_check
          %p1170 = pneg %p943
        $region166: #{squeezenet_forward.1} parent=11 // pred_check_branch
          %1172 = sbr.rel (%p1170) target = $region168
        $region167: #{squeezenet_forward.1} parent=11 // pred_region
          _
        $region168: #{squeezenet_forward.1} parent=11 // pred_fallthru
          _
        // Predicated region
        $region169: #{squeezenet_forward.1} parent=11 // pred_check
          %p1173 = pneg %p964
        $region170: #{squeezenet_forward.1} parent=11 // pred_check_branch
          %1175 = sbr.rel (%p1173) target = $region172
        $region171: #{squeezenet_forward.1} parent=11 // pred_region
          _
        $region172: #{squeezenet_forward.1} parent=11 // pred_fallthru
          _
        // Predicated region
        $region173: #{squeezenet_forward.1} parent=11 // pred_check
          %p1176 = pneg %p985
        $region174: #{squeezenet_forward.1} parent=11 // pred_check_branch
          %1178 = sbr.rel (%p1176) target = $region176
        $region175: #{squeezenet_forward.1} parent=11 // pred_region
          _
        $region176: #{squeezenet_forward.1} parent=11 // pred_fallthru
          _
        // Predicated region
        $region177: #{squeezenet_forward.1} parent=11 // pred_check
          %p1179 = pneg %p1006
        $region178: #{squeezenet_forward.1} parent=11 // pred_check_branch
          %1181 = sbr.rel (%p1179) target = $region180
        $region179: #{squeezenet_forward.1} parent=11 // pred_region
          %1183 = vsyncadd [#allocation6], 0
          %s1185 = sshll.u32 %s85, 4
          %s1186 = int_to_ptr.hbm [resolvable:$true] %s1185
          %s1187 = sshll.u32 [#allocation5], 4
          %s1188 = int_to_ptr.vmem [resolvable:$true] %s1187
          %1190 = dma.hbm_to_vmem [thread:$0]  %s1186, 16, %s1188, [#allocation6]
        $region180: #{squeezenet_forward.1} parent=11 // pred_fallthru
          _
      $region12: #{squeezenet_forward.1} parent=5 // pred_fallthru
        _
      %p1191 = scmp.lt.s32.totalorder %s98, 2
      // Predicated region
      $region181: #{squeezenet_forward.1} parent=5 // pred_check
        %p1192 = pneg %p1191
      $region182: #{squeezenet_forward.1} parent=5 // pred_check_branch
        %1194 = sbr.rel (%p1192) target = $region184
      $region183: #{squeezenet_forward.1} parent=5 // pred_region
        // Predicated region
        $region185: #{squeezenet_forward.1} parent=183 // pred_check
          %p1195 = pneg %p118
        $region186: #{squeezenet_forward.1} parent=183 // pred_check_branch
          %1197 = sbr.rel (%p1195) target = $region188
        $region187: #{squeezenet_forward.1} parent=183 // pred_region
          %p1198 = scmp.lt.s32.totalorder %s98, 1
          %s1199 = scalar_select %p1198, %s98, 1
          %s1200 = smul.addr %s1199, 44
          %s1201 = smul.addr %s1200, 4
          %s1202 = scalar_lea.vmem %s1, %s1201
        $region188: #{squeezenet_forward.1} parent=183 // pred_fallthru
          _
      $region184: #{squeezenet_forward.1} parent=5 // pred_fallthru
        _
      %p1203 = scmp.le.s32.totalorder 1, %s98
      %p1204 = scmp.lt.s32.totalorder %s98, 3
      %p1205 = pnand %p1203, %p1204
      %p1206 = pneg %p1205
      // Predicated region
      $region189: #{squeezenet_forward.1} parent=5 // pred_check
        _
      $region190: #{squeezenet_forward.1} parent=5 // pred_check_branch
        %1208 = sbr.rel (%p1205) target = $region192
      $region191: #{squeezenet_forward.1} parent=5 // pred_region
        %s1209 = ssub.s32 %s98, 1
        // Predicated region
        $region193: #{squeezenet_forward.1} parent=191 // pred_check
          %p1210 = pneg %p922
        $region194: #{squeezenet_forward.1} parent=191 // pred_check_branch
          %1212 = sbr.rel (%p1210) target = $region196
        $region195: #{squeezenet_forward.1} parent=191 // pred_region
          %1214 = dma.done [#allocation3], 16
        $region196: #{squeezenet_forward.1} parent=191 // pred_fallthru
          _
        // Predicated region
        $region197: #{squeezenet_forward.1} parent=191 // pred_check
          %p1215 = pneg %p1006
        $region198: #{squeezenet_forward.1} parent=191 // pred_check_branch
          %1217 = sbr.rel (%p1215) target = $region200
        $region199: #{squeezenet_forward.1} parent=191 // pred_region
          %1219 = dma.done [#allocation6], 16
        $region200: #{squeezenet_forward.1} parent=191 // pred_fallthru
          _
        %p1220 = scmp.lt.s32.totalorder %s103, 1
        %s1221 = scalar_select %p1220, %s103, 1
        %s1222 = smul.addr %s1221, 44
        %s1223 = smul.addr %s1222, 4
        %s1224 = scalar_lea.vmem %s1, %s1223
        %p1225 = pneg %p124
        %p1226 = pneg %p121
        %p1227 = pneg %p145
        %p1228 = pneg %p142
        %p1229 = pneg %p166
        %p1230 = pneg %p163
        %p1231 = pneg %p187
        %p1232 = pneg %p184
        %p1233 = pneg %p208
        %p1234 = pneg %p205
        %p1235 = pneg %p229
        %p1236 = pneg %p226
        %p1237 = pneg %p250
        %p1238 = pneg %p247
        %p1239 = pneg %p271
        %p1240 = pneg %p268
        %p1241 = pneg %p292
        %p1242 = pneg %p289
        %p1243 = pneg %p313
        %p1244 = pneg %p310
        %p1245 = pneg %p334
        %p1246 = pneg %p331
        %p1247 = pneg %p355
        %p1248 = pneg %p352
        %p1249 = pneg %p376
        %p1250 = pneg %p373
        %p1251 = pneg %p397
        %p1252 = pneg %p394
        %p1253 = pneg %p418
        %p1254 = pneg %p415
        %p1255 = pneg %p439
        %p1256 = pneg %p436
        %p1257 = pneg %p460
        %p1258 = pneg %p457
        %p1259 = pneg %p481
        %p1260 = pneg %p478
        %p1261 = pneg %p502
        %p1262 = pneg %p499
        %p1263 = pneg %p523
        %p1264 = pneg %p520
        %p1265 = pneg %p544
        %p1266 = pneg %p541
        %p1267 = pneg %p565
        %p1268 = pneg %p562
        %p1269 = pneg %p586
        %p1270 = pneg %p583
        %p1271 = pneg %p607
        %p1272 = pneg %p604
        %p1273 = pneg %p628
        %p1274 = pneg %p625
        %p1275 = pneg %p649
        %p1276 = pneg %p646
        %p1277 = pneg %p670
        %p1278 = pneg %p667
        %p1279 = pneg %p691
        %p1280 = pneg %p688
        %p1281 = pneg %p712
        %p1282 = pneg %p709
        %p1283 = pneg %p733
        %p1284 = pneg %p730
        %p1285 = pneg %p754
        %p1286 = pneg %p751
        %p1287 = pneg %p775
        %p1288 = pneg %p772
        %p1289 = pneg %p796
        %p1290 = pneg %p793
        %p1291 = pneg %p817
        %p1292 = pneg %p814
        %p1293 = pneg %p838
        %p1294 = pneg %p835
        %p1295 = pneg %p859
        %p1296 = pneg %p856
        %p1297 = pneg %p880
        %p1298 = pneg %p877
        %p1299 = pneg %p901
        %p1300 = pneg %p898
        %p1301 = pneg %p922
        %p1302 = pneg %p919
        %p1303 = pneg %p943
        %p1304 = pneg %p940
        %p1305 = pneg %p964
        %p1306 = pneg %p961
        %p1307 = pneg %p985
        %p1308 = pneg %p982
        %p1309 = pneg %p1006
        %p1310 = pneg %p1003
        %p1311 = pneg %p1032
        %p1312 = pneg %p1029
        %s1313 = sand.u32 %s1019, 1
        %s1314 = scalar_lea.sflag [#allocation4], %s1313
        %s1315 = sand.u32 %s1019, 1
        %s1316 = scalar_lea.vmem [#allocation7], %s1315
        %p1317 = scmp.lt.s32.totalorder %s103, 1
        %s1318 = scalar_select %p1317, %s103, 1
        %s1319 = smul.addr %s1318, 44
        %s1320 = smul.addr %s1319, 4
        %s1321 = scalar_lea.vmem %s1, %s1320
        %v1323 = vld [vmem:[%s1321] sm:$0xff]
        %v1324 = vld [vmem:[%s1321 + $0x8] sm:$0xff]
        %v1325 = vld [vmem:[%s1321 + $0x10] sm:$0xff]
        %v1326 = vld [vmem:[%s1321 + $0x18] sm:$0xff]
        %v1327 = vld [vmem:[%s1321 + $0x20] sm:$0xff]
        %v1328 = vld [vmem:[%s1321 + $0x28] sm:$0xff]
        %v1329 = vld [vmem:[%s1321 + $0x30] sm:$0xff]
        %v1330 = vld [vmem:[%s1321 + $0x38] sm:$0xff]
        %v1331 = vld [vmem:[%s1321 + $0x40] sm:$0xff]
        %v1332 = vld [vmem:[%s1321 + $0x48] sm:$0xff]
        %v1333 = vld [vmem:[%s1321 + $0x50] sm:$0xff]
        %v1334 = vld [vmem:[%s1321 + $0x58] sm:$0xff]
        %v1335 = vld [vmem:[%s1321 + $0x60] sm:$0xff]
        %v1336 = vld [vmem:[%s1321 + $0x68] sm:$0xff]
        %v1337 = vld [vmem:[%s1321 + $0x70] sm:$0xff]
        %v1338 = vld [vmem:[%s1321 + $0x78] sm:$0xff]
        %v1339 = vld [vmem:[%s1321 + $0x80] sm:$0xff]
        %v1340 = vld [vmem:[%s1321 + $0x88] sm:$0xff]
        %v1341 = vld [vmem:[%s1321 + $0x90] sm:$0xff]
        %v1342 = vld [vmem:[%s1321 + $0x98] sm:$0xff]
        %v1343 = vld [vmem:[%s1321 + $0xa0] sm:$0xff]
        %v1344 = vld [vmem:[%s1321 + $0xa8] sm:$0x11]
        %v1345 = vld [vmem:[%s15] sm:$0xf]
        %v1346 = vld [vmem:[%s15 + $0x4] sm:$0xf]
        %v1347 = vld [vmem:[%s15 + $0x8] sm:$0xf]
        %v1348 = vld [vmem:[%s15 + $0xc] sm:$0xf]
        %v1349 = vld [vmem:[%s15 + $0x10] sm:$0xf]
        %v1350 = vld [vmem:[%s15 + $0x14] sm:$0xf]
        %v1351 = vld [vmem:[%s15 + $0x18] sm:$0xf]
        %v1352 = vld [vmem:[%s15 + $0x1c] sm:$0xf]
        %v1353 = vld [vmem:[%s15 + $0x20] sm:$0xf]
        %v1354 = vld [vmem:[%s15 + $0x24] sm:$0xf]
        %v1355 = vld [vmem:[%s15 + $0x28] sm:$0xf]
        %v1356 = vld [vmem:[%s15 + $0x2c] sm:$0xf]
        %v1357 = vld [vmem:[%s15 + $0x30] sm:$0xf]
        %v1358 = vld [vmem:[%s15 + $0x34] sm:$0xf]
        %v1359 = vld [vmem:[%s15 + $0x38] sm:$0xf]
        %v1360 = vld [vmem:[%s15 + $0x3c] sm:$0xf]
        %v1361 = vld [vmem:[%s15 + $0x40] sm:$0xf]
        %v1362 = vld [vmem:[%s15 + $0x44] sm:$0xf]
        %v1363 = vld [vmem:[%s15 + $0x48] sm:$0xf]
        %v1364 = vld [vmem:[%s15 + $0x4c] sm:$0xf]
        %v1365 = vld [vmem:[%s17] sm:$0x1]
        %v1367 = vperm.slane %v1365, 0
        %v1391 = vunpack.c.l.b16 %v1323
        %v1392 = vunpack.c.h.b16 %v1323
        %v1393 = vunpack.c.l.b16 %v1324
        %v1394 = vunpack.c.h.b16 %v1324
        %v1395 = vunpack.c.l.b16 %v1325
        %v1396 = vunpack.c.h.b16 %v1325
        %v1397 = vunpack.c.l.b16 %v1326
        %v1398 = vunpack.c.h.b16 %v1326
        %v1399 = vunpack.c.l.b16 %v1327
        %v1400 = vunpack.c.h.b16 %v1327
        %v1401 = vunpack.c.l.b16 %v1328
        %v1402 = vunpack.c.h.b16 %v1328
        %v1403 = vunpack.c.l.b16 %v1329
        %v1404 = vunpack.c.h.b16 %v1329
        %v1405 = vunpack.c.l.b16 %v1330
        %v1406 = vunpack.c.h.b16 %v1330
        %v1407 = vunpack.c.l.b16 %v1331
        %v1408 = vunpack.c.h.b16 %v1331
        %v1409 = vunpack.c.l.b16 %v1332
        %v1410 = vunpack.c.h.b16 %v1332
        %v1411 = vunpack.c.l.b16 %v1333
        %v1412 = vunpack.c.h.b16 %v1333
        %v1413 = vunpack.c.l.b16 %v1334
        %v1414 = vunpack.c.h.b16 %v1334
        %v1415 = vunpack.c.l.b16 %v1335
        %v1416 = vunpack.c.h.b16 %v1335
        %v1417 = vunpack.c.l.b16 %v1336
        %v1418 = vunpack.c.h.b16 %v1336
        %v1419 = vunpack.c.l.b16 %v1337
        %v1420 = vunpack.c.h.b16 %v1337
        %v1421 = vunpack.c.l.b16 %v1338
        %v1422 = vunpack.c.h.b16 %v1338
        %v1423 = vunpack.c.l.b16 %v1339
        %v1424 = vunpack.c.h.b16 %v1339
        %v1425 = vunpack.c.l.b16 %v1340
        %v1426 = vunpack.c.h.b16 %v1340
        %v1427 = vunpack.c.l.b16 %v1341
        %v1428 = vunpack.c.h.b16 %v1341
        %v1429 = vunpack.c.l.b16 %v1342
        %v1430 = vunpack.c.h.b16 %v1342
        %v1431 = vunpack.c.l.b16 %v1343
        %v1432 = vunpack.c.h.b16 %v1343
        %v1433 = vunpack.c.l.b16 %v1344
        %v1434 = vunpack.c.h.b16 %v1344
        %v1435 = vpack.c.b16 %v1393, %v1391
        %v1436 = vpack.c.b16 %v1394, %v1392
        %v1437 = vpack.c.b16 %v1397, %v1395
        %v1438 = vpack.c.b16 %v1398, %v1396
        %v1439 = vpack.c.b16 %v1401, %v1399
        %v1440 = vpack.c.b16 %v1402, %v1400
        %v1441 = vpack.c.b16 %v1405, %v1403
        %v1442 = vpack.c.b16 %v1406, %v1404
        %v1443 = vpack.c.b16 %v1409, %v1407
        %v1444 = vpack.c.b16 %v1410, %v1408
        %v1445 = vpack.c.b16 %v1413, %v1411
        %v1446 = vpack.c.b16 %v1414, %v1412
        %v1447 = vpack.c.b16 %v1417, %v1415
        %v1448 = vpack.c.b16 %v1418, %v1416
        %v1449 = vpack.c.b16 %v1421, %v1419
        %v1450 = vpack.c.b16 %v1422, %v1420
        %v1451 = vpack.c.b16 %v1425, %v1423
        %v1452 = vpack.c.b16 %v1426, %v1424
        %v1453 = vpack.c.b16 %v1429, %v1427
        %v1454 = vpack.c.b16 %v1430, %v1428
        %v1455 = vpack.c.b16 %v1433, %v1431
        %v1456 = vpack.c.b16 %v1434, %v1432
        %v1488 = vunpack.c.l.b16 %v1345
        %v1489 = vunpack.c.l.b16 %v1346
        %v1490 = vunpack.c.l.b16 %v1347
        %v1491 = vunpack.c.l.b16 %v1348
        %v1492 = vunpack.c.l.b16 %v1349
        %v1493 = vunpack.c.l.b16 %v1350
        %v1494 = vunpack.c.l.b16 %v1351
        %v1495 = vunpack.c.l.b16 %v1352
        %v1496 = vunpack.c.l.b16 %v1353
        %v1497 = vunpack.c.l.b16 %v1354
        %v1498 = vunpack.c.l.b16 %v1355
        %v1499 = vunpack.c.l.b16 %v1356
        %v1500 = vunpack.c.l.b16 %v1357
        %v1501 = vunpack.c.l.b16 %v1358
        %v1502 = vunpack.c.l.b16 %v1359
        %v1503 = vunpack.c.l.b16 %v1360
        %v1504 = vunpack.c.l.b16 %v1361
        %v1505 = vunpack.c.l.b16 %v1362
        %v1506 = vunpack.c.l.b16 %v1363
        %v1507 = vunpack.c.l.b16 %v1364
        %v1508 = vpack.c.b16 %v1489, %v1488
        %v1509 = vpack.c.b16 %v1491, %v1490
        %v1510 = vpack.c.b16 %v1493, %v1492
        %v1511 = vpack.c.b16 %v1495, %v1494
        %v1512 = vpack.c.b16 %v1497, %v1496
        %v1513 = vpack.c.b16 %v1499, %v1498
        %v1514 = vpack.c.b16 %v1501, %v1500
        %v1515 = vpack.c.b16 %v1503, %v1502
        %v1516 = vpack.c.b16 %v1505, %v1504
        %v1517 = vpack.c.b16 %v1507, %v1506
        %vm1528 = vcmask 261120
        %v1530 = vsel %vm1528, %v1436, 0
        %v1533 = vsel %vm1528, %v1438, 0
        %v1536 = vsel %vm1528, %v1440, 0
        %v1539 = vsel %vm1528, %v1442, 0
        %v1542 = vsel %vm1528, %v1444, 0
        %v1545 = vsel %vm1528, %v1446, 0
        %v1548 = vsel %vm1528, %v1448, 0
        %v1551 = vsel %vm1528, %v1450, 0
        %v1554 = vsel %vm1528, %v1452, 0
        %v1557 = vsel %vm1528, %v1454, 0
        %v1560 = vsel %vm1528, %v1456, 0
        %1562 = vmatpush.bf16.msra.mxu0 %v1515
        %1563 = vmatpush.bf16.msra.mxu0 %v1514
        %1564 = vmatpush.bf16.msra.mxu0 %v1513
        %1565 = vmatpush.bf16.msra.mxu0 %v1512
        %1566 = vmatpush.bf16.msra.mxu0 %v1511
        %1567 = vmatpush.bf16.msra.mxu0 %v1510
        %1568 = vmatpush.bf16.msra.mxu0 %v1509
        %1569 = vmatpush.bf16.msra.mxu0 %v1508
        %1570 = vmatmul.bf16.gmra.mxu0 %v1435
        %v1571 = vpop.f32.mrf.mxu0
        %v1572 = vadd.f32 %v1367, %v1571
        %v1573 = vpop.f32.mrf.mxu0
        %v1574 = vadd.f32 %v1367, %v1573
        %1575 = vmatmul.bf16.gmra.mxu0 %v1437
        %v1576 = vpop.f32.mrf.mxu0
        %v1577 = vadd.f32 %v1367, %v1576
        %v1578 = vpop.f32.mrf.mxu0
        %v1579 = vadd.f32 %v1367, %v1578
        %1580 = vmatmul.bf16.gmra.mxu0 %v1439
        %v1581 = vpop.f32.mrf.mxu0
        %v1582 = vadd.f32 %v1367, %v1581
        %v1583 = vpop.f32.mrf.mxu0
        %v1584 = vadd.f32 %v1367, %v1583
        %1585 = vmatmul.bf16.gmra.mxu0 %v1441
        %v1586 = vpop.f32.mrf.mxu0
        %v1587 = vadd.f32 %v1367, %v1586
        %v1588 = vpop.f32.mrf.mxu0
        %v1589 = vadd.f32 %v1367, %v1588
        %1590 = vmatmul.bf16.gmra.mxu0 %v1443
        %v1591 = vpop.f32.mrf.mxu0
        %v1592 = vadd.f32 %v1367, %v1591
        %v1593 = vpop.f32.mrf.mxu0
        %v1594 = vadd.f32 %v1367, %v1593
        %1595 = vmatmul.bf16.gmra.mxu0 %v1445
        %v1596 = vpop.f32.mrf.mxu0
        %v1597 = vadd.f32 %v1367, %v1596
        %v1598 = vpop.f32.mrf.mxu0
        %v1599 = vadd.f32 %v1367, %v1598
        %1600 = vmatmul.bf16.gmra.mxu0 %v1447
        %v1601 = vpop.f32.mrf.mxu0
        %v1602 = vadd.f32 %v1367, %v1601
        %v1603 = vpop.f32.mrf.mxu0
        %v1604 = vadd.f32 %v1367, %v1603
        %1605 = vmatmul.bf16.gmra.mxu0 %v1449
        %v1606 = vpop.f32.mrf.mxu0
        %v1607 = vadd.f32 %v1367, %v1606
        %v1608 = vpop.f32.mrf.mxu0
        %v1609 = vadd.f32 %v1367, %v1608
        %1610 = vmatmul.bf16.gmra.mxu0 %v1451
        %v1611 = vpop.f32.mrf.mxu0
        %v1612 = vadd.f32 %v1367, %v1611
        %v1613 = vpop.f32.mrf.mxu0
        %v1614 = vadd.f32 %v1367, %v1613
        %1615 = vmatmul.bf16.gmra.mxu0 %v1453
        %v1616 = vpop.f32.mrf.mxu0
        %v1617 = vadd.f32 %v1367, %v1616
        %v1618 = vpop.f32.mrf.mxu0
        %v1619 = vadd.f32 %v1367, %v1618
        %1620 = vmatmul.bf16.gmra.mxu0 %v1455
        %v1621 = vpop.f32.mrf.mxu0
        %v1622 = vadd.f32 %v1367, %v1621
        %v1623 = vpop.f32.mrf.mxu0
        %v1624 = vadd.f32 %v1367, %v1623
        %1625 = vdwg.mxu0
        %1626 = vmatpush.bf16.msra.mxu0 0
        %1627 = vmatpush.bf16.msra.mxu0 0
        %1628 = vmatpush.bf16.msra.mxu0 0
        %1629 = vmatpush.bf16.msra.mxu0 0
        %1630 = vmatpush.bf16.msra.mxu0 0
        %1631 = vmatpush.bf16.msra.mxu0 0
        %1632 = vmatpush.bf16.msra.mxu0 %v1517
        %1633 = vmatpush.bf16.msra.mxu0 %v1516
        %1634 = vmatmul.bf16.gmra.mxu0 %v1530
        %v1635 = vpop.f32.mrf.mxu0
        %v1636 = vadd.f32 %v1572, %v1635
        %v1637 = vpop.f32.mrf.mxu0
        %v1638 = vadd.f32 %v1574, %v1637
        %1639 = vmatmul.bf16.gmra.mxu0 %v1533
        %v1640 = vpop.f32.mrf.mxu0
        %v1641 = vadd.f32 %v1577, %v1640
        %v1642 = vpop.f32.mrf.mxu0
        %v1643 = vadd.f32 %v1579, %v1642
        %1644 = vmatmul.bf16.gmra.mxu0 %v1536
        %v1645 = vpop.f32.mrf.mxu0
        %v1646 = vadd.f32 %v1582, %v1645
        %v1647 = vpop.f32.mrf.mxu0
        %v1648 = vadd.f32 %v1584, %v1647
        %1649 = vmatmul.bf16.gmra.mxu0 %v1539
        %v1650 = vpop.f32.mrf.mxu0
        %v1651 = vadd.f32 %v1587, %v1650
        %v1652 = vpop.f32.mrf.mxu0
        %v1653 = vadd.f32 %v1589, %v1652
        %1654 = vmatmul.bf16.gmra.mxu0 %v1542
        %v1655 = vpop.f32.mrf.mxu0
        %v1656 = vadd.f32 %v1592, %v1655
        %v1657 = vpop.f32.mrf.mxu0
        %v1658 = vadd.f32 %v1594, %v1657
        %1659 = vmatmul.bf16.gmra.mxu0 %v1545
        %v1660 = vpop.f32.mrf.mxu0
        %v1661 = vadd.f32 %v1597, %v1660
        %v1662 = vpop.f32.mrf.mxu0
        %v1663 = vadd.f32 %v1599, %v1662
        %1664 = vmatmul.bf16.gmra.mxu0 %v1548
        %v1665 = vpop.f32.mrf.mxu0
        %v1666 = vadd.f32 %v1602, %v1665
        %v1667 = vpop.f32.mrf.mxu0
        %v1668 = vadd.f32 %v1604, %v1667
        %1669 = vmatmul.bf16.gmra.mxu0 %v1551
        %v1670 = vpop.f32.mrf.mxu0
        %v1671 = vadd.f32 %v1607, %v1670
        %v1672 = vpop.f32.mrf.mxu0
        %v1673 = vadd.f32 %v1609, %v1672
        %1674 = vmatmul.bf16.gmra.mxu0 %v1554
        %v1675 = vpop.f32.mrf.mxu0
        %v1676 = vadd.f32 %v1612, %v1675
        %v1677 = vpop.f32.mrf.mxu0
        %v1678 = vadd.f32 %v1614, %v1677
        %1679 = vmatmul.bf16.gmra.mxu0 %v1557
        %v1680 = vpop.f32.mrf.mxu0
        %v1681 = vadd.f32 %v1617, %v1680
        %v1682 = vpop.f32.mrf.mxu0
        %v1683 = vadd.f32 %v1619, %v1682
        %1684 = vmatmul.bf16.gmra.mxu0 %v1560
        %v1685 = vpop.f32.mrf.mxu0
        %v1686 = vadd.f32 %v1622, %v1685
        %v1687 = vpop.f32.mrf.mxu0
        %v1688 = vadd.f32 %v1624, %v1687
        %1689 = vdwg.mxu0
        %v1690 = vmax.f32 %v1636, 0.0
        %v1691 = vmax.f32 %v1638, 0.0
        %v1692 = vmax.f32 %v1641, 0.0
        %v1693 = vmax.f32 %v1643, 0.0
        %v1694 = vmax.f32 %v1646, 0.0
        %v1695 = vmax.f32 %v1648, 0.0
        %v1696 = vmax.f32 %v1651, 0.0
        %v1697 = vmax.f32 %v1653, 0.0
        %v1698 = vmax.f32 %v1656, 0.0
        %v1699 = vmax.f32 %v1658, 0.0
        %v1700 = vmax.f32 %v1661, 0.0
        %v1701 = vmax.f32 %v1663, 0.0
        %v1702 = vmax.f32 %v1666, 0.0
        %v1703 = vmax.f32 %v1668, 0.0
        %v1704 = vmax.f32 %v1671, 0.0
        %v1705 = vmax.f32 %v1673, 0.0
        %v1706 = vmax.f32 %v1676, 0.0
        %v1707 = vmax.f32 %v1678, 0.0
        %v1708 = vmax.f32 %v1681, 0.0
        %v1709 = vmax.f32 %v1683, 0.0
        %v1710 = vmax.f32 %v1686, 0.0
        %v1711 = vmax.f32 %v1688, 0.0
        %vm1731 = vcmask 1042432
        %v1732 = vrot.slane %v1691, 5
        %v1733 = vrot.slane %v1692, 5
        %v1734 = vsel %vm1731, %v1732, %v1733
        %v1735 = vrot.slane %v1693, 5
        %v1736 = vsel %vm1731, %v1733, %v1735
        %v1737 = vrot.slane %v1694, 5
        %v1738 = vsel %vm1731, %v1735, %v1737
        %v1739 = vrot.slane %v1695, 5
        %v1740 = vsel %vm1731, %v1737, %v1739
        %v1741 = vrot.slane %v1696, 5
        %v1742 = vsel %vm1731, %v1739, %v1741
        %v1743 = vrot.slane %v1697, 5
        %v1744 = vsel %vm1731, %v1741, %v1743
        %v1745 = vrot.slane %v1698, 5
        %v1746 = vsel %vm1731, %v1743, %v1745
        %v1747 = vrot.slane %v1699, 5
        %v1748 = vsel %vm1731, %v1745, %v1747
        %v1749 = vrot.slane %v1700, 5
        %v1750 = vsel %vm1731, %v1747, %v1749
        %v1751 = vrot.slane %v1701, 5
        %v1752 = vsel %vm1731, %v1749, %v1751
        %v1753 = vrot.slane %v1702, 5
        %v1754 = vsel %vm1731, %v1751, %v1753
        %v1755 = vrot.slane %v1703, 5
        %v1756 = vsel %vm1731, %v1753, %v1755
        %v1757 = vrot.slane %v1704, 5
        %v1758 = vsel %vm1731, %v1755, %v1757
        %v1759 = vrot.slane %v1705, 5
        %v1760 = vsel %vm1731, %v1757, %v1759
        %v1761 = vrot.slane %v1706, 5
        %v1762 = vsel %vm1731, %v1759, %v1761
        %v1763 = vrot.slane %v1707, 5
        %v1764 = vsel %vm1731, %v1761, %v1763
        %v1765 = vrot.slane %v1708, 5
        %v1766 = vsel %vm1731, %v1763, %v1765
        %v1767 = vrot.slane %v1709, 5
        %v1768 = vsel %vm1731, %v1765, %v1767
        %v1787 = vmax.f32 %v1690, %v1734
        %v1788 = vmax.f32 %v1691, %v1736
        %v1789 = vmax.f32 %v1692, %v1738
        %v1790 = vmax.f32 %v1693, %v1740
        %v1791 = vmax.f32 %v1694, %v1742
        %v1792 = vmax.f32 %v1695, %v1744
        %v1793 = vmax.f32 %v1696, %v1746
        %v1794 = vmax.f32 %v1697, %v1748
        %v1795 = vmax.f32 %v1698, %v1750
        %v1796 = vmax.f32 %v1699, %v1752
        %v1797 = vmax.f32 %v1700, %v1754
        %v1798 = vmax.f32 %v1701, %v1756
        %v1799 = vmax.f32 %v1702, %v1758
        %v1800 = vmax.f32 %v1703, %v1760
        %v1801 = vmax.f32 %v1704, %v1762
        %v1802 = vmax.f32 %v1705, %v1764
        %v1803 = vmax.f32 %v1706, %v1766
        %v1804 = vmax.f32 %v1707, %v1768
        %vm1807 = vcmask 1045504
        %v1808 = vrot.slane %v1693, 2
        %v1809 = vrot.slane %v1694, 2
        %v1810 = vsel %vm1807, %v1808, %v1809
        %v1811 = vrot.slane %v1695, 2
        %v1812 = vsel %vm1807, %v1809, %v1811
        %v1813 = vrot.slane %v1696, 2
        %v1814 = vsel %vm1807, %v1811, %v1813
        %v1815 = vrot.slane %v1697, 2
        %v1816 = vsel %vm1807, %v1813, %v1815
        %v1817 = vrot.slane %v1698, 2
        %v1818 = vsel %vm1807, %v1815, %v1817
        %v1819 = vrot.slane %v1699, 2
        %v1820 = vsel %vm1807, %v1817, %v1819
        %v1821 = vrot.slane %v1700, 2
        %v1822 = vsel %vm1807, %v1819, %v1821
        %v1823 = vrot.slane %v1701, 2
        %v1824 = vsel %vm1807, %v1821, %v1823
        %v1825 = vrot.slane %v1702, 2
        %v1826 = vsel %vm1807, %v1823, %v1825
        %v1827 = vrot.slane %v1703, 2
        %v1828 = vsel %vm1807, %v1825, %v1827
        %v1829 = vrot.slane %v1704, 2
        %v1830 = vsel %vm1807, %v1827, %v1829
        %v1831 = vrot.slane %v1705, 2
        %v1832 = vsel %vm1807, %v1829, %v1831
        %v1833 = vrot.slane %v1706, 2
        %v1834 = vsel %vm1807, %v1831, %v1833
        %v1835 = vrot.slane %v1707, 2
        %v1836 = vsel %vm1807, %v1833, %v1835
        %v1837 = vrot.slane %v1708, 2
        %v1838 = vsel %vm1807, %v1835, %v1837
        %v1839 = vrot.slane %v1709, 2
        %v1840 = vsel %vm1807, %v1837, %v1839
        %v1841 = vrot.slane %v1710, 2
        %v1842 = vsel %vm1807, %v1839, %v1841
        %v1843 = vrot.slane %v1711, 2
        %v1844 = vsel %vm1807, %v1841, %v1843
        %v1863 = vmax.f32 %v1787, %v1810
        %v1864 = vmax.f32 %v1788, %v1812
        %v1865 = vmax.f32 %v1789, %v1814
        %v1866 = vmax.f32 %v1790, %v1816
        %v1867 = vmax.f32 %v1791, %v1818
        %v1868 = vmax.f32 %v1792, %v1820
        %v1869 = vmax.f32 %v1793, %v1822
        %v1870 = vmax.f32 %v1794, %v1824
        %v1871 = vmax.f32 %v1795, %v1826
        %v1872 = vmax.f32 %v1796, %v1828
        %v1873 = vmax.f32 %v1797, %v1830
        %v1874 = vmax.f32 %v1798, %v1832
        %v1875 = vmax.f32 %v1799, %v1834
        %v1876 = vmax.f32 %v1800, %v1836
        %v1877 = vmax.f32 %v1801, %v1838
        %v1878 = vmax.f32 %v1802, %v1840
        %v1879 = vmax.f32 %v1803, %v1842
        %v1880 = vmax.f32 %v1804, %v1844
        %vm1899 = vcmask 1046528
        %v1900 = vrot.slane %v1863, 1
        %v1901 = vrot.slane %v1864, 1
        %v1902 = vsel %vm1899, %v1900, %v1901
        %v1903 = vrot.slane %v1865, 1
        %v1904 = vsel %vm1899, %v1901, %v1903
        %v1905 = vrot.slane %v1866, 1
        %v1906 = vsel %vm1899, %v1903, %v1905
        %v1907 = vrot.slane %v1867, 1
        %v1908 = vsel %vm1899, %v1905, %v1907
        %v1909 = vrot.slane %v1868, 1
        %v1910 = vsel %vm1899, %v1907, %v1909
        %v1911 = vrot.slane %v1869, 1
        %v1912 = vsel %vm1899, %v1909, %v1911
        %v1913 = vrot.slane %v1870, 1
        %v1914 = vsel %vm1899, %v1911, %v1913
        %v1915 = vrot.slane %v1871, 1
        %v1916 = vsel %vm1899, %v1913, %v1915
        %v1917 = vrot.slane %v1872, 1
        %v1918 = vsel %vm1899, %v1915, %v1917
        %v1919 = vrot.slane %v1873, 1
        %v1920 = vsel %vm1899, %v1917, %v1919
        %v1921 = vrot.slane %v1874, 1
        %v1922 = vsel %vm1899, %v1919, %v1921
        %v1923 = vrot.slane %v1875, 1
        %v1924 = vsel %vm1899, %v1921, %v1923
        %v1925 = vrot.slane %v1876, 1
        %v1926 = vsel %vm1899, %v1923, %v1925
        %v1927 = vrot.slane %v1877, 1
        %v1928 = vsel %vm1899, %v1925, %v1927
        %v1929 = vrot.slane %v1878, 1
        %v1930 = vsel %vm1899, %v1927, %v1929
        %v1931 = vrot.slane %v1879, 1
        %v1932 = vsel %vm1899, %v1929, %v1931
        %v1933 = vrot.slane %v1880, 1
        %v1934 = vsel %vm1899, %v1931, %v1933
        %v1953 = vmax.f32 %v1863, %v1902
        %v1954 = vmax.f32 %v1864, %v1904
        %v1955 = vmax.f32 %v1865, %v1906
        %v1956 = vmax.f32 %v1866, %v1908
        %v1957 = vmax.f32 %v1867, %v1910
        %v1958 = vmax.f32 %v1868, %v1912
        %v1959 = vmax.f32 %v1869, %v1914
        %v1960 = vmax.f32 %v1870, %v1916
        %v1961 = vmax.f32 %v1871, %v1918
        %v1962 = vmax.f32 %v1872, %v1920
        %v1963 = vmax.f32 %v1873, %v1922
        %v1964 = vmax.f32 %v1874, %v1924
        %v1965 = vmax.f32 %v1875, %v1926
        %v1966 = vmax.f32 %v1876, %v1928
        %v1967 = vmax.f32 %v1877, %v1930
        %v1968 = vmax.f32 %v1878, %v1932
        %v1969 = vmax.f32 %v1879, %v1934
        %v1970 = vmax.f32 %v1880, %v1933
        %v1971 = vrot.slane %v1863, 2
        %v1972 = vrot.slane %v1864, 2
        %v1973 = vsel %vm1807, %v1971, %v1972
        %v1974 = vrot.slane %v1865, 2
        %v1975 = vsel %vm1807, %v1972, %v1974
        %v1976 = vrot.slane %v1866, 2
        %v1977 = vsel %vm1807, %v1974, %v1976
        %v1978 = vrot.slane %v1867, 2
        %v1979 = vsel %vm1807, %v1976, %v1978
        %v1980 = vrot.slane %v1868, 2
        %v1981 = vsel %vm1807, %v1978, %v1980
        %v1982 = vrot.slane %v1869, 2
        %v1983 = vsel %vm1807, %v1980, %v1982
        %v1984 = vrot.slane %v1870, 2
        %v1985 = vsel %vm1807, %v1982, %v1984
        %v1986 = vrot.slane %v1871, 2
        %v1987 = vsel %vm1807, %v1984, %v1986
        %v1988 = vrot.slane %v1872, 2
        %v1989 = vsel %vm1807, %v1986, %v1988
        %v1990 = vrot.slane %v1873, 2
        %v1991 = vsel %vm1807, %v1988, %v1990
        %v1992 = vrot.slane %v1874, 2
        %v1993 = vsel %vm1807, %v1990, %v1992
        %v1994 = vrot.slane %v1875, 2
        %v1995 = vsel %vm1807, %v1992, %v1994
        %v1996 = vrot.slane %v1876, 2
        %v1997 = vsel %vm1807, %v1994, %v1996
        %v1998 = vrot.slane %v1877, 2
        %v1999 = vsel %vm1807, %v1996, %v1998
        %v2000 = vrot.slane %v1878, 2
        %v2001 = vsel %vm1807, %v1998, %v2000
        %v2002 = vrot.slane %v1879, 2
        %v2003 = vsel %vm1807, %v2000, %v2002
        %v2004 = vrot.slane %v1880, 2
        %v2005 = vsel %vm1807, %v2002, %v2004
        %v2024 = vmax.f32 %v1953, %v1973
        %v2025 = vmax.f32 %v1954, %v1975
        %v2026 = vmax.f32 %v1955, %v1977
        %v2027 = vmax.f32 %v1956, %v1979
        %v2028 = vmax.f32 %v1957, %v1981
        %v2029 = vmax.f32 %v1958, %v1983
        %v2030 = vmax.f32 %v1959, %v1985
        %v2031 = vmax.f32 %v1960, %v1987
        %v2032 = vmax.f32 %v1961, %v1989
        %v2033 = vmax.f32 %v1962, %v1991
        %v2034 = vmax.f32 %v1963, %v1993
        %v2035 = vmax.f32 %v1964, %v1995
        %v2036 = vmax.f32 %v1965, %v1997
        %v2037 = vmax.f32 %v1966, %v1999
        %v2038 = vmax.f32 %v1967, %v2001
        %v2039 = vmax.f32 %v1968, %v2003
        %v2040 = vmax.f32 %v1969, %v2005
        %v2041 = vmax.f32 %v1970, %v2004
        %v2042 = vld [vmem:[%s3] sm:$0xff]
        %v2043 = vld [vmem:[%s3 + $0x8] sm:$0xff]
        %v2044 = vld [vmem:[%s3 + $0x10] sm:$0xff]
        %v2045 = vld [vmem:[%s3 + $0x18] sm:$0xff]
        %v2046 = vld [vmem:[%s3 + $0x20] sm:$0xff]
        %v2047 = vld [vmem:[%s3 + $0x28] sm:$0xff]
        %v2048 = vld [vmem:[%s3 + $0x30] sm:$0xff]
        %v2049 = vld [vmem:[%s3 + $0x38] sm:$0xff]
        %v2050 = vld [vmem:[%s3 + $0x40] sm:$0xff]
        %v2051 = vld [vmem:[%s3 + $0x48] sm:$0xff]
        %v2052 = vld [vmem:[%s3 + $0x50] sm:$0xff]
        %v2053 = vld [vmem:[%s3 + $0x58] sm:$0xff]
        %v2054 = vld [vmem:[%s3 + $0x60] sm:$0xff]
        %v2055 = vld [vmem:[%s3 + $0x68] sm:$0xff]
        %v2056 = vld [vmem:[%s3 + $0x70] sm:$0xff]
        %v2057 = vld [vmem:[%s3 + $0x78] sm:$0xff]
        %vm2058 = vcmask 105472
        %v2060 = vsel %vm2058, %v2043, 0
        %v2063 = vsel %vm2058, %v2045, 0
        %v2066 = vsel %vm2058, %v2047, 0
        %v2069 = vsel %vm2058, %v2049, 0
        %v2072 = vsel %vm2058, %v2051, 0
        %v2075 = vsel %vm2058, %v2053, 0
        %v2078 = vsel %vm2058, %v2055, 0
        %v2081 = vsel %vm2058, %v2057, 0
        %vm2083 = vcmask 1044480
        %v2085 = vsel %vm2083, %v2041, 0
        %2087 = vmatpush.msra.mxu0 %v2039
        %2088 = vmatpush.msra.mxu0 %v2038
        %2089 = vmatpush.msra.mxu0 %v2037
        %2090 = vmatpush.msra.mxu0 %v2036
        %2091 = vmatpush.msra.mxu0 %v2035
        %2092 = vmatpush.msra.mxu0 %v2034
        %2093 = vmatpush.msra.mxu0 %v2033
        %2094 = vmatpush.msra.mxu0 %v2032
        %2095 = vmatpush.msra.mxu0 %v2031
        %2096 = vmatpush.msra.mxu0 %v2030
        %2097 = vmatpush.msra.mxu0 %v2029
        %2098 = vmatpush.msra.mxu0 %v2028
        %2099 = vmatpush.msra.mxu0 %v2027
        %2100 = vmatpush.msra.mxu0 %v2026
        %2101 = vmatpush.msra.mxu0 %v2025
        %2102 = vmatpush.msra.mxu0 %v2024
        %2103 = vmatmul.f32.gmra.mxu0 %v2042
        %v2104 = vpop.f32.mrf.mxu0
        %v2105 = vadd.f32 0.0, %v2104
        %2106 = vmatmul.f32.gmra.mxu0 %v2044
        %v2107 = vpop.f32.mrf.mxu0
        %v2108 = vadd.f32 0.0, %v2107
        %2109 = vmatmul.f32.gmra.mxu0 %v2046
        %v2110 = vpop.f32.mrf.mxu0
        %v2111 = vadd.f32 0.0, %v2110
        %2112 = vmatmul.f32.gmra.mxu0 %v2048
        %v2113 = vpop.f32.mrf.mxu0
        %v2114 = vadd.f32 0.0, %v2113
        %2115 = vmatmul.f32.gmra.mxu0 %v2050
        %v2116 = vpop.f32.mrf.mxu0
        %v2117 = vadd.f32 0.0, %v2116
        %2118 = vmatmul.f32.gmra.mxu0 %v2052
        %v2119 = vpop.f32.mrf.mxu0
        %v2120 = vadd.f32 0.0, %v2119
        %2121 = vmatmul.f32.gmra.mxu0 %v2054
        %v2122 = vpop.f32.mrf.mxu0
        %v2123 = vadd.f32 0.0, %v2122
        %2124 = vmatmul.f32.gmra.mxu0 %v2056
        %v2125 = vpop.f32.mrf.mxu0
        %v2126 = vadd.f32 0.0, %v2125
        %2127 = vdwg.mxu0
        %2128 = vmatpush.msra.mxu0 0.0
        %2129 = vmatpush.msra.mxu0 0.0
        %2130 = vmatpush.msra.mxu0 0.0
        %2131 = vmatpush.msra.mxu0 0.0
        %2132 = vmatpush.msra.mxu0 0.0
        %2133 = vmatpush.msra.mxu0 0.0
        %2134 = vmatpush.msra.mxu0 0.0
        %2135 = vmatpush.msra.mxu0 0.0
        %2136 = vmatpush.msra.mxu0 0.0
        %2137 = vmatpush.msra.mxu0 0.0
        %2138 = vmatpush.msra.mxu0 0.0
        %2139 = vmatpush.msra.mxu0 0.0
        %2140 = vmatpush.msra.mxu0 0.0
        %2141 = vmatpush.msra.mxu0 0.0
        %2142 = vmatpush.msra.mxu0 %v2085
        %2143 = vmatpush.msra.mxu0 %v2040
        %2144 = vmatmul.f32.gmra.mxu0 %v2060
        %v2145 = vpop.f32.mrf.mxu0
        %v2146 = vadd.f32 %v2105, %v2145
        %2147 = vmatmul.f32.gmra.mxu0 %v2063
        %v2148 = vpop.f32.mrf.mxu0
        %v2149 = vadd.f32 %v2108, %v2148
        %2150 = vmatmul.f32.gmra.mxu0 %v2066
        %v2151 = vpop.f32.mrf.mxu0
        %v2152 = vadd.f32 %v2111, %v2151
        %2153 = vmatmul.f32.gmra.mxu0 %v2069
        %v2154 = vpop.f32.mrf.mxu0
        %v2155 = vadd.f32 %v2114, %v2154
        %2156 = vmatmul.f32.gmra.mxu0 %v2072
        %v2157 = vpop.f32.mrf.mxu0
        %v2158 = vadd.f32 %v2117, %v2157
        %2159 = vmatmul.f32.gmra.mxu0 %v2075
        %v2160 = vpop.f32.mrf.mxu0
        %v2161 = vadd.f32 %v2120, %v2160
        %2162 = vmatmul.f32.gmra.mxu0 %v2078
        %v2163 = vpop.f32.mrf.mxu0
        %v2164 = vadd.f32 %v2123, %v2163
        %2165 = vmatmul.f32.gmra.mxu0 %v2081
        %v2166 = vpop.f32.mrf.mxu0
        %v2167 = vadd.f32 %v2126, %v2166
        %2168 = vdwg.mxu0
        %v2169 = vld [vmem:[%s9] sm:$0xff]
        %v2170 = vld [vmem:[%s9 + $0x8] sm:$0xff]
        %v2171 = vld [vmem:[%s9 + $0x10] sm:$0xff]
        %v2172 = vld [vmem:[%s9 + $0x18] sm:$0xff]
        %v2173 = vld [vmem:[%s9 + $0x20] sm:$0xff]
        %v2174 = vld [vmem:[%s9 + $0x28] sm:$0xff]
        %v2175 = vld [vmem:[%s9 + $0x30] sm:$0xff]
        %v2176 = vld [vmem:[%s9 + $0x38] sm:$0xff]
        %v2177 = vld [vmem:[%s11] sm:$0xff]
        %v2178 = vld [vmem:[%s11 + $0x8] sm:$0xff]
        %v2179 = vld [vmem:[%s11 + $0x10] sm:$0xff]
        %v2180 = vld [vmem:[%s11 + $0x18] sm:$0x1]
        %v2181 = vld [vmem:[%s13] sm:$0xff]
        %v2182 = vld [vmem:[%s13 + $0x8] sm:$0x1]
        %v2183 = vpack.c.bf16 %v2149, %v2146
        %v2184 = vpack.c.bf16 %v2155, %v2152
        %v2185 = vpack.c.bf16 %v2161, %v2158
        %v2186 = vpack.c.bf16 %v2167, %v2164
        %v2187 = vld [vmem:[%s19] sm:$0xf]
        %v2188 = vld [vmem:[%s19 + $0x4] sm:$0xf]
        %v2189 = vld [vmem:[%s19 + $0x8] sm:$0xf]
        %v2190 = vld [vmem:[%s19 + $0xc] sm:$0xf]
        %v2191 = vld [vmem:[%s19 + $0x10] sm:$0xf]
        %v2192 = vld [vmem:[%s19 + $0x14] sm:$0xf]
        %v2193 = vld [vmem:[%s19 + $0x18] sm:$0xf]
        %v2194 = vld [vmem:[%s19 + $0x1c] sm:$0xf]
        %v2195 = vld [vmem:[%s19 + $0x20] sm:$0xf]
        %v2196 = vld [vmem:[%s19 + $0x24] sm:$0xf]
        %v2197 = vld [vmem:[%s19 + $0x28] sm:$0xf]
        %v2198 = vld [vmem:[%s19 + $0x2c] sm:$0xf]
        %v2199 = vld [vmem:[%s21] sm:$0x1]
        %v2201 = vperm.slane %v2199, 0
        %v2215 = vunpack.c.l.b16 %v2187
        %v2216 = vunpack.c.l.b16 %v2188
        %v2217 = vunpack.c.l.b16 %v2189
        %v2218 = vunpack.c.l.b16 %v2190
        %v2219 = vunpack.c.l.b16 %v2191
        %v2220 = vunpack.c.l.b16 %v2192
        %v2221 = vunpack.c.l.b16 %v2193
        %v2222 = vunpack.c.l.b16 %v2194
        %v2223 = vunpack.c.l.b16 %v2195
        %v2224 = vunpack.c.l.b16 %v2196
        %v2225 = vunpack.c.l.b16 %v2197
        %v2226 = vunpack.c.l.b16 %v2198
        %v2227 = vpack.c.b16 %v2216, %v2215
        %v2228 = vpack.c.b16 %v2218, %v2217
        %v2229 = vpack.c.b16 %v2220, %v2219
        %v2230 = vpack.c.b16 %v2222, %v2221
        %v2231 = vpack.c.b16 %v2224, %v2223
        %v2232 = vpack.c.b16 %v2226, %v2225
        %vm2239 = vcmask 785408
        %v2241 = vsel %vm2239, %v2183, 0
        %v2244 = vsel %vm2239, %v2184, 0
        %v2247 = vsel %vm2239, %v2185, 0
        %v2250 = vsel %vm2239, %v2186, 0
        %2252 = vmatpush.bf16.msra.mxu0 0
        %2253 = vmatpush.bf16.msra.mxu0 0
        %2254 = vmatpush.bf16.msra.mxu0 %v2232
        %2255 = vmatpush.bf16.msra.mxu0 %v2231
        %2256 = vmatpush.bf16.msra.mxu0 %v2230
        %2257 = vmatpush.bf16.msra.mxu0 %v2229
        %2258 = vmatpush.bf16.msra.mxu0 %v2228
        %2259 = vmatpush.bf16.msra.mxu0 %v2227
        %2260 = vmatmul.bf16.gmra.mxu0 %v2241
        %v2261 = vpop.f32.mrf.mxu0
        %v2262 = vadd.f32 %v2201, %v2261
        %v2263 = vpop.f32.mrf.mxu0
        %v2264 = vadd.f32 %v2201, %v2263
        %2265 = vmatmul.bf16.gmra.mxu0 %v2244
        %v2266 = vpop.f32.mrf.mxu0
        %v2267 = vadd.f32 %v2201, %v2266
        %v2268 = vpop.f32.mrf.mxu0
        %v2269 = vadd.f32 %v2201, %v2268
        %2270 = vmatmul.bf16.gmra.mxu0 %v2247
        %v2271 = vpop.f32.mrf.mxu0
        %v2272 = vadd.f32 %v2201, %v2271
        %v2273 = vpop.f32.mrf.mxu0
        %v2274 = vadd.f32 %v2201, %v2273
        %2275 = vmatmul.bf16.gmra.mxu0 %v2250
        %v2276 = vpop.f32.mrf.mxu0
        %v2277 = vadd.f32 %v2201, %v2276
        %v2278 = vpop.f32.mrf.mxu0
        %v2279 = vadd.f32 %v2201, %v2278
        %2280 = vdwg.mxu0
        %v2281 = vmax.f32 %v2262, 0.0
        %v2282 = vmax.f32 %v2264, 0.0
        %v2283 = vmax.f32 %v2267, 0.0
        %v2284 = vmax.f32 %v2269, 0.0
        %v2285 = vmax.f32 %v2272, 0.0
        %v2286 = vmax.f32 %v2274, 0.0
        %v2287 = vmax.f32 %v2277, 0.0
        %v2288 = vmax.f32 %v2279, 0.0
        %2290 = vset.pattern.permute.xlu0 0
        %2291 = vperm.xlu0 %2290, %v2169
        %v2292 = vpop.permute.xlu0 %2291
        %2295 = vset.pattern.permute.xlu0 0
        %2296 = vperm.xlu0 %2295, %v2170
        %v2297 = vpop.permute.xlu0 %2296
        %2300 = vset.pattern.permute.xlu0 0
        %2301 = vperm.xlu0 %2300, %v2171
        %v2302 = vpop.permute.xlu0 %2301
        %2305 = vset.pattern.permute.xlu0 0
        %2306 = vperm.xlu0 %2305, %v2172
        %v2307 = vpop.permute.xlu0 %2306
        %2310 = vset.pattern.permute.xlu0 0
        %2311 = vperm.xlu0 %2310, %v2173
        %v2312 = vpop.permute.xlu0 %2311
        %2315 = vset.pattern.permute.xlu0 0
        %2316 = vperm.xlu0 %2315, %v2174
        %v2317 = vpop.permute.xlu0 %2316
        %2320 = vset.pattern.permute.xlu0 0
        %2321 = vperm.xlu0 %2320, %v2175
        %v2322 = vpop.permute.xlu0 %2321
        %2325 = vset.pattern.permute.xlu0 0
        %2326 = vperm.xlu0 %2325, %v2176
        %v2327 = vpop.permute.xlu0 %2326
        %v2329 = vmul.f32 %v2281, %v2292
        %v2330 = vmul.f32 %v2282, %v2297
        %v2331 = vmul.f32 %v2283, %v2302
        %v2332 = vmul.f32 %v2284, %v2307
        %v2333 = vmul.f32 %v2285, %v2312
        %v2334 = vmul.f32 %v2286, %v2317
        %v2335 = vmul.f32 %v2287, %v2322
        %v2336 = vmul.f32 %v2288, %v2327
        %v2343 = vrot.slane %v2329, 1
        %v2344 = vrot.slane %v2330, 1
        %v2345 = vsel %vm1899, %v2343, %v2344
        %v2346 = vrot.slane %v2331, 1
        %v2347 = vsel %vm1899, %v2344, %v2346
        %v2348 = vrot.slane %v2332, 1
        %v2349 = vsel %vm1899, %v2346, %v2348
        %v2350 = vrot.slane %v2333, 1
        %v2351 = vsel %vm1899, %v2348, %v2350
        %v2352 = vrot.slane %v2334, 1
        %v2353 = vsel %vm1899, %v2350, %v2352
        %2354 = vrot.lane.b32.xlu0 %v2345, 16
        %v2355 = vpop.permute.xlu0 %2354
        %2356 = vrot.lane.b32.xlu0 %v2347, 16
        %v2357 = vpop.permute.xlu0 %2356
        %2358 = vrot.lane.b32.xlu0 %v2349, 16
        %v2359 = vpop.permute.xlu0 %2358
        %2360 = vrot.lane.b32.xlu0 %v2351, 16
        %v2361 = vpop.permute.xlu0 %2360
        %2362 = vrot.lane.b32.xlu0 %v2353, 16
        %v2363 = vpop.permute.xlu0 %2362
        %2364 = vrot.lane.b32.xlu0 %v2352, 16
        %v2365 = vpop.permute.xlu0 %2364
        %v2372 = vrot.slane %v2329, 2
        %v2373 = vrot.slane %v2330, 2
        %v2374 = vsel %vm1807, %v2372, %v2373
        %v2375 = vrot.slane %v2331, 2
        %v2376 = vsel %vm1807, %v2373, %v2375
        %v2377 = vrot.slane %v2332, 2
        %v2378 = vsel %vm1807, %v2375, %v2377
        %v2379 = vrot.slane %v2333, 2
        %v2380 = vsel %vm1807, %v2377, %v2379
        %v2381 = vrot.slane %v2334, 2
        %v2382 = vsel %vm1807, %v2379, %v2381
        %2383 = vrot.lane.b32.xlu0 %v2374, 32
        %v2384 = vpop.permute.xlu0 %2383
        %2385 = vrot.lane.b32.xlu0 %v2376, 32
        %v2386 = vpop.permute.xlu0 %2385
        %2387 = vrot.lane.b32.xlu0 %v2378, 32
        %v2388 = vpop.permute.xlu0 %2387
        %2389 = vrot.lane.b32.xlu0 %v2380, 32
        %v2390 = vpop.permute.xlu0 %2389
        %2391 = vrot.lane.b32.xlu0 %v2382, 32
        %v2392 = vpop.permute.xlu0 %2391
        %2393 = vrot.lane.b32.xlu0 %v2381, 32
        %v2394 = vpop.permute.xlu0 %2393
        %2402 = vrot.lane.b32.xlu0 %v2330, 48
        %v2403 = vpop.permute.xlu0 %2402
        %2404 = vrot.lane.b32.xlu0 %v2331, 48
        %v2405 = vpop.permute.xlu0 %2404
        %2406 = vrot.lane.b32.xlu0 %v2332, 48
        %v2407 = vpop.permute.xlu0 %2406
        %2408 = vrot.lane.b32.xlu0 %v2333, 48
        %v2409 = vpop.permute.xlu0 %2408
        %2410 = vrot.lane.b32.xlu0 %v2334, 48
        %v2411 = vpop.permute.xlu0 %2410
        %2412 = vrot.lane.b32.xlu0 %v2335, 48
        %v2413 = vpop.permute.xlu0 %2412
        %v2420 = vrot.slane %v2335, 1
        %v2421 = vsel %vm1899, %v2352, %v2420
        %2422 = vrot.lane.b32.xlu0 %v2347, 64
        %v2423 = vpop.permute.xlu0 %2422
        %2424 = vrot.lane.b32.xlu0 %v2349, 64
        %v2425 = vpop.permute.xlu0 %2424
        %2426 = vrot.lane.b32.xlu0 %v2351, 64
        %v2427 = vpop.permute.xlu0 %2426
        %2428 = vrot.lane.b32.xlu0 %v2353, 64
        %v2429 = vpop.permute.xlu0 %2428
        %2430 = vrot.lane.b32.xlu0 %v2421, 64
        %v2431 = vpop.permute.xlu0 %2430
        %2432 = vrot.lane.b32.xlu0 %v2420, 64
        %v2433 = vpop.permute.xlu0 %2432
        %v2440 = vrot.slane %v2335, 2
        %v2441 = vsel %vm1807, %v2381, %v2440
        %2442 = vrot.lane.b32.xlu0 %v2376, 80
        %v2443 = vpop.permute.xlu0 %2442
        %2444 = vrot.lane.b32.xlu0 %v2378, 80
        %v2445 = vpop.permute.xlu0 %2444
        %2446 = vrot.lane.b32.xlu0 %v2380, 80
        %v2447 = vpop.permute.xlu0 %2446
        %2448 = vrot.lane.b32.xlu0 %v2382, 80
        %v2449 = vpop.permute.xlu0 %2448
        %2450 = vrot.lane.b32.xlu0 %v2441, 80
        %v2451 = vpop.permute.xlu0 %2450
        %2452 = vrot.lane.b32.xlu0 %v2440, 80
        %v2453 = vpop.permute.xlu0 %2452
        %2461 = vrot.lane.b32.xlu0 %v2331, 96
        %v2462 = vpop.permute.xlu0 %2461
        %2463 = vrot.lane.b32.xlu0 %v2332, 96
        %v2464 = vpop.permute.xlu0 %2463
        %2465 = vrot.lane.b32.xlu0 %v2333, 96
        %v2466 = vpop.permute.xlu0 %2465
        %2467 = vrot.lane.b32.xlu0 %v2334, 96
        %v2468 = vpop.permute.xlu0 %2467
        %2469 = vrot.lane.b32.xlu0 %v2335, 96
        %v2470 = vpop.permute.xlu0 %2469
        %2471 = vrot.lane.b32.xlu0 %v2336, 96
        %v2472 = vpop.permute.xlu0 %2471
        %v2479 = vrot.slane %v2336, 1
        %v2480 = vsel %vm1899, %v2420, %v2479
        %2481 = vrot.lane.b32.xlu0 %v2349, 112
        %v2482 = vpop.permute.xlu0 %2481
        %2483 = vrot.lane.b32.xlu0 %v2351, 112
        %v2484 = vpop.permute.xlu0 %2483
        %2485 = vrot.lane.b32.xlu0 %v2353, 112
        %v2486 = vpop.permute.xlu0 %2485
        %2487 = vrot.lane.b32.xlu0 %v2421, 112
        %v2488 = vpop.permute.xlu0 %2487
        %2489 = vrot.lane.b32.xlu0 %v2480, 112
        %v2490 = vpop.permute.xlu0 %2489
        %2491 = vrot.lane.b32.xlu0 %v2479, 112
        %v2492 = vpop.permute.xlu0 %2491
        %v2499 = vrot.slane %v2336, 2
        %v2500 = vsel %vm1807, %v2440, %v2499
        %vm2507 = vcmask 130048
        %v2508 = vsel %vm2507, %v2329, %v2355
        %v2509 = vsel %vm2507, %v2330, %v2357
        %v2510 = vsel %vm2507, %v2331, %v2359
        %v2511 = vsel %vm2507, %v2332, %v2361
        %v2512 = vsel %vm2507, %v2333, %v2363
        %v2513 = vsel %vm2507, %v2334, %v2365
        %v2514 = vsel %vm1528, %v2508, %v2384
        %v2515 = vsel %vm1528, %v2509, %v2386
        %v2516 = vsel %vm1528, %v2510, %v2388
        %v2517 = vsel %vm1528, %v2511, %v2390
        %v2518 = vsel %vm1528, %v2512, %v2392
        %v2519 = vsel %vm1528, %v2513, %v2394
        %vm2520 = vcmask 392192
        %v2521 = vsel %vm2520, %v2514, %v2403
        %v2522 = vsel %vm2520, %v2515, %v2405
        %v2523 = vsel %vm2520, %v2516, %v2407
        %v2524 = vsel %vm2520, %v2517, %v2409
        %v2525 = vsel %vm2520, %v2518, %v2411
        %v2526 = vsel %vm2520, %v2519, %v2413
        %vm2527 = vcmask 523264
        %v2528 = vsel %vm2527, %v2521, %v2423
        %v2529 = vsel %vm2527, %v2522, %v2425
        %v2530 = vsel %vm2527, %v2523, %v2427
        %v2531 = vsel %vm2527, %v2524, %v2429
        %v2532 = vsel %vm2527, %v2525, %v2431
        %v2533 = vsel %vm2527, %v2526, %v2433
        %vm2534 = vcmask 654336
        %v2535 = vsel %vm2534, %v2528, %v2443
        %v2536 = vsel %vm2534, %v2529, %v2445
        %v2537 = vsel %vm2534, %v2530, %v2447
        %v2538 = vsel %vm2534, %v2531, %v2449
        %v2539 = vsel %vm2534, %v2532, %v2451
        %v2540 = vsel %vm2534, %v2533, %v2453
        %v2541 = vsel %vm2239, %v2535, %v2462
        %v2542 = vsel %vm2239, %v2536, %v2464
        %v2543 = vsel %vm2239, %v2537, %v2466
        %v2544 = vsel %vm2239, %v2538, %v2468
        %v2545 = vsel %vm2239, %v2539, %v2470
        %v2546 = vsel %vm2239, %v2540, %v2472
        %vm2547 = vcmask 916480
        %v2548 = vsel %vm2547, %v2541, %v2482
        %v2549 = vsel %vm2547, %v2542, %v2484
        %v2550 = vsel %vm2547, %v2543, %v2486
        %v2551 = vsel %vm2547, %v2544, %v2488
        %v2552 = vsel %vm2547, %v2545, %v2490
        %v2553 = vsel %vm2547, %v2546, %v2492
        %v2554 = vpack.c.bf16 %v2549, %v2548
        %v2555 = vpack.c.bf16 %v2380, %v2378
        %v2556 = vpack.c.bf16 %v2551, %v2550
        %v2557 = vpack.c.bf16 %v2441, %v2382
        %v2558 = vpack.c.bf16 %v2553, %v2552
        %v2559 = vpack.c.bf16 %v2499, %v2500
        %v2560 = vld [vmem:[%s23] sm:$0xf]
        %v2561 = vld [vmem:[%s23 + $0x4] sm:$0xf]
        %v2562 = vld [vmem:[%s23 + $0x8] sm:$0xf]
        %v2563 = vld [vmem:[%s23 + $0xc] sm:$0xf]
        %v2564 = vld [vmem:[%s23 + $0x10] sm:$0xf]
        %v2565 = vld [vmem:[%s23 + $0x14] sm:$0xf]
        %v2566 = vld [vmem:[%s23 + $0x18] sm:$0xf]
        %v2567 = vld [vmem:[%s23 + $0x1c] sm:$0xf]
        %v2568 = vld [vmem:[%s23 + $0x20] sm:$0xf]
        %v2569 = vld [vmem:[%s23 + $0x24] sm:$0xf]
        %v2570 = vld [vmem:[%s23 + $0x28] sm:$0xf]
        %v2571 = vld [vmem:[%s23 + $0x2c] sm:$0xf]
        %v2572 = vld [vmem:[%s23 + $0x30] sm:$0xf]
        %v2573 = vld [vmem:[%s23 + $0x34] sm:$0xf]
        %v2574 = vld [vmem:[%s23 + $0x38] sm:$0xf]
        %v2575 = vld [vmem:[%s23 + $0x3c] sm:$0xf]
        %v2576 = vld [vmem:[%s23 + $0x40] sm:$0xf]
        %v2577 = vld [vmem:[%s23 + $0x44] sm:$0xf]
        %v2578 = vld [vmem:[%s25] sm:$0x1]
        %v2580 = vperm.slane %v2578, 0
        %v2600 = vunpack.c.l.b16 %v2560
        %v2601 = vunpack.c.l.b16 %v2561
        %v2602 = vunpack.c.l.b16 %v2562
        %v2603 = vunpack.c.l.b16 %v2563
        %v2604 = vunpack.c.l.b16 %v2564
        %v2605 = vunpack.c.l.b16 %v2565
        %v2606 = vunpack.c.l.b16 %v2566
        %v2607 = vunpack.c.l.b16 %v2567
        %v2608 = vunpack.c.l.b16 %v2568
        %v2609 = vunpack.c.l.b16 %v2569
        %v2610 = vunpack.c.l.b16 %v2570
        %v2611 = vunpack.c.l.b16 %v2571
        %v2612 = vunpack.c.l.b16 %v2572
        %v2613 = vunpack.c.l.b16 %v2573
        %v2614 = vunpack.c.l.b16 %v2574
        %v2615 = vunpack.c.l.b16 %v2575
        %v2616 = vunpack.c.l.b16 %v2576
        %v2617 = vunpack.c.l.b16 %v2577
        %v2618 = vpack.c.b16 %v2601, %v2600
        %v2619 = vpack.c.b16 %v2603, %v2602
        %v2620 = vpack.c.b16 %v2605, %v2604
        %v2621 = vpack.c.b16 %v2607, %v2606
        %v2622 = vpack.c.b16 %v2609, %v2608
        %v2623 = vpack.c.b16 %v2611, %v2610
        %v2624 = vpack.c.b16 %v2613, %v2612
        %v2625 = vpack.c.b16 %v2615, %v2614
        %v2626 = vpack.c.b16 %v2617, %v2616
        %v2637 = vsel %vm2507, %v2555, 0
        %v2640 = vsel %vm2507, %v2557, 0
        %v2643 = vsel %vm2507, %v2559, 0
        %2645 = vmatpush.bf16.msra.mxu0 %v2625
        %2646 = vmatpush.bf16.msra.mxu0 %v2624
        %2647 = vmatpush.bf16.msra.mxu0 %v2623
        %2648 = vmatpush.bf16.msra.mxu0 %v2622
        %2649 = vmatpush.bf16.msra.mxu0 %v2621
        %2650 = vmatpush.bf16.msra.mxu0 %v2620
        %2651 = vmatpush.bf16.msra.mxu0 %v2619
        %2652 = vmatpush.bf16.msra.mxu0 %v2618
        %2653 = vmatmul.bf16.gmra.mxu0 %v2554
        %v2654 = vpop.f32.mrf.mxu0
        %v2655 = vadd.f32 %v2580, %v2654
        %v2656 = vpop.f32.mrf.mxu0
        %v2657 = vadd.f32 %v2580, %v2656
        %2658 = vmatmul.bf16.gmra.mxu0 %v2556
        %v2659 = vpop.f32.mrf.mxu0
        %v2660 = vadd.f32 %v2580, %v2659
        %v2661 = vpop.f32.mrf.mxu0
        %v2662 = vadd.f32 %v2580, %v2661
        %2663 = vmatmul.bf16.gmra.mxu0 %v2558
        %v2664 = vpop.f32.mrf.mxu0
        %v2665 = vadd.f32 %v2580, %v2664
        %v2666 = vpop.f32.mrf.mxu0
        %v2667 = vadd.f32 %v2580, %v2666
        %2668 = vdwg.mxu0
        %2669 = vmatpush.bf16.msra.mxu0 0
        %2670 = vmatpush.bf16.msra.mxu0 0
        %2671 = vmatpush.bf16.msra.mxu0 0
        %2672 = vmatpush.bf16.msra.mxu0 0
        %2673 = vmatpush.bf16.msra.mxu0 0
        %2674 = vmatpush.bf16.msra.mxu0 0
        %2675 = vmatpush.bf16.msra.mxu0 0
        %2676 = vmatpush.bf16.msra.mxu0 %v2626
        %2677 = vmatmul.bf16.gmra.mxu0 %v2637
        %v2678 = vpop.f32.mrf.mxu0
        %v2679 = vadd.f32 %v2655, %v2678
        %v2680 = vpop.f32.mrf.mxu0
        %v2681 = vadd.f32 %v2657, %v2680
        %2682 = vmatmul.bf16.gmra.mxu0 %v2640
        %v2683 = vpop.f32.mrf.mxu0
        %v2684 = vadd.f32 %v2660, %v2683
        %v2685 = vpop.f32.mrf.mxu0
        %v2686 = vadd.f32 %v2662, %v2685
        %2687 = vmatmul.bf16.gmra.mxu0 %v2643
        %v2688 = vpop.f32.mrf.mxu0
        %v2689 = vadd.f32 %v2665, %v2688
        %v2690 = vpop.f32.mrf.mxu0
        %v2691 = vadd.f32 %v2667, %v2690
        %2692 = vdwg.mxu0
        %v2693 = vmax.f32 %v2679, 0.0
        %v2694 = vmax.f32 %v2681, 0.0
        %v2695 = vmax.f32 %v2684, 0.0
        %v2696 = vmax.f32 %v2686, 0.0
        %v2697 = vmax.f32 %v2689, 0.0
        %v2698 = vmax.f32 %v2691, 0.0
        %vm2705 = vcmask 1040384
        %v2706 = vrot.slane %v2693, 7
        %v2707 = vrot.slane %v2694, 7
        %v2708 = vsel %vm2705, %v2706, %v2707
        %v2709 = vrot.slane %v2695, 7
        %v2710 = vsel %vm2705, %v2707, %v2709
        %v2711 = vrot.slane %v2696, 7
        %v2712 = vsel %vm2705, %v2709, %v2711
        %v2713 = vrot.slane %v2697, 7
        %v2714 = vsel %vm2705, %v2711, %v2713
        %v2715 = vrot.slane %v2698, 7
        %v2716 = vsel %vm2705, %v2713, %v2715
        %v2723 = vsel %vm2705, 0.0, %v2706
        %v2724 = vsel %vm1899, %v2716, 0.0
        %v2725 = vmul.f32 %v2292, 0.0
        %v2726 = vmul.f32 %v2723, %v2297
        %v2727 = vmul.f32 %v2708, %v2302
        %v2728 = vmul.f32 %v2710, %v2307
        %v2729 = vmul.f32 %v2712, %v2312
        %v2730 = vmul.f32 %v2714, %v2317
        %v2731 = vmul.f32 %v2724, %v2322
        %v2732 = vmul.f32 %v2327, 0.0
        %v2733 = vpack.c.bf16 %v2726, %v2725
        %v2734 = vpack.c.bf16 %v2728, %v2727
        %v2735 = vpack.c.bf16 %v2730, %v2729
        %v2736 = vpack.c.bf16 %v2732, %v2731
        %v2737 = vld [vmem:[%s27] sm:$0xf]
        %v2738 = vld [vmem:[%s27 + $0x4] sm:$0xf]
        %v2739 = vld [vmem:[%s27 + $0x8] sm:$0xf]
        %v2740 = vld [vmem:[%s27 + $0xc] sm:$0xf]
        %v2741 = vld [vmem:[%s27 + $0x10] sm:$0xf]
        %v2742 = vld [vmem:[%s27 + $0x14] sm:$0xf]
        %v2743 = vld [vmem:[%s27 + $0x18] sm:$0xf]
        %v2744 = vld [vmem:[%s27 + $0x1c] sm:$0xf]
        %v2745 = vld [vmem:[%s27 + $0x20] sm:$0xf]
        %v2746 = vld [vmem:[%s27 + $0x24] sm:$0xf]
        %v2747 = vld [vmem:[%s27 + $0x28] sm:$0xf]
        %v2748 = vld [vmem:[%s27 + $0x2c] sm:$0xf]
        %v2749 = vld [vmem:[%s27 + $0x30] sm:$0xf]
        %v2750 = vld [vmem:[%s27 + $0x34] sm:$0xf]
        %v2751 = vld [vmem:[%s27 + $0x38] sm:$0xf]
        %v2752 = vld [vmem:[%s27 + $0x3c] sm:$0xf]
        %v2753 = vld [vmem:[%s29] sm:$0x1]
        %v2755 = vperm.slane %v2753, 0
        %v2773 = vunpack.c.l.b16 %v2737
        %v2774 = vunpack.c.l.b16 %v2738
        %v2775 = vunpack.c.l.b16 %v2739
        %v2776 = vunpack.c.l.b16 %v2740
        %v2777 = vunpack.c.l.b16 %v2741
        %v2778 = vunpack.c.l.b16 %v2742
        %v2779 = vunpack.c.l.b16 %v2743
        %v2780 = vunpack.c.l.b16 %v2744
        %v2781 = vunpack.c.l.b16 %v2745
        %v2782 = vunpack.c.l.b16 %v2746
        %v2783 = vunpack.c.l.b16 %v2747
        %v2784 = vunpack.c.l.b16 %v2748
        %v2785 = vunpack.c.l.b16 %v2749
        %v2786 = vunpack.c.l.b16 %v2750
        %v2787 = vunpack.c.l.b16 %v2751
        %v2788 = vunpack.c.l.b16 %v2752
        %v2789 = vpack.c.b16 %v2774, %v2773
        %v2790 = vpack.c.b16 %v2776, %v2775
        %v2791 = vpack.c.b16 %v2778, %v2777
        %v2792 = vpack.c.b16 %v2780, %v2779
        %v2793 = vpack.c.b16 %v2782, %v2781
        %v2794 = vpack.c.b16 %v2784, %v2783
        %v2795 = vpack.c.b16 %v2786, %v2785
        %v2796 = vpack.c.b16 %v2788, %v2787
        %2805 = vmatpush.bf16.msra.mxu0 %v2796
        %2806 = vmatpush.bf16.msra.mxu0 %v2795
        %2807 = vmatpush.bf16.msra.mxu0 %v2794
        %2808 = vmatpush.bf16.msra.mxu0 %v2793
        %2809 = vmatpush.bf16.msra.mxu0 %v2792
        %2810 = vmatpush.bf16.msra.mxu0 %v2791
        %2811 = vmatpush.bf16.msra.mxu0 %v2790
        %2812 = vmatpush.bf16.msra.mxu0 %v2789
        %2813 = vmatmul.bf16.gmra.mxu0 %v2733
        %v2814 = vpop.f32.mrf.mxu0
        %v2815 = vadd.f32 %v2755, %v2814
        %v2816 = vpop.f32.mrf.mxu0
        %v2817 = vadd.f32 %v2755, %v2816
        %2818 = vmatmul.bf16.gmra.mxu0 %v2734
        %v2819 = vpop.f32.mrf.mxu0
        %v2820 = vadd.f32 %v2755, %v2819
        %v2821 = vpop.f32.mrf.mxu0
        %v2822 = vadd.f32 %v2755, %v2821
        %2823 = vmatmul.bf16.gmra.mxu0 %v2735
        %v2824 = vpop.f32.mrf.mxu0
        %v2825 = vadd.f32 %v2755, %v2824
        %v2826 = vpop.f32.mrf.mxu0
        %v2827 = vadd.f32 %v2755, %v2826
        %2828 = vmatmul.bf16.gmra.mxu0 %v2736
        %v2829 = vpop.f32.mrf.mxu0
        %v2830 = vadd.f32 %v2755, %v2829
        %v2831 = vpop.f32.mrf.mxu0
        %v2832 = vadd.f32 %v2755, %v2831
        %2833 = vdwg.mxu0
        %v2834 = vmax.f32 %v2815, 0.0
        %v2835 = vmax.f32 %v2817, 0.0
        %v2836 = vmax.f32 %v2820, 0.0
        %v2837 = vmax.f32 %v2822, 0.0
        %v2838 = vmax.f32 %v2825, 0.0
        %v2839 = vmax.f32 %v2827, 0.0
        %v2840 = vmax.f32 %v2830, 0.0
        %v2841 = vmax.f32 %v2832, 0.0
        %v2842 = vmul.f32 %v2834, %v2292
        %v2843 = vmul.f32 %v2835, %v2297
        %v2844 = vmul.f32 %v2836, %v2302
        %v2845 = vmul.f32 %v2837, %v2307
        %v2846 = vmul.f32 %v2838, %v2312
        %v2847 = vmul.f32 %v2839, %v2317
        %v2848 = vmul.f32 %v2840, %v2322
        %v2849 = vmul.f32 %v2841, %v2327
        %v2856 = vrot.slane %v2842, 1
        %v2857 = vrot.slane %v2843, 1
        %v2858 = vsel %vm1899, %v2856, %v2857
        %v2859 = vrot.slane %v2844, 1
        %v2860 = vsel %vm1899, %v2857, %v2859
        %v2861 = vrot.slane %v2845, 1
        %v2862 = vsel %vm1899, %v2859, %v2861
        %v2863 = vrot.slane %v2846, 1
        %v2864 = vsel %vm1899, %v2861, %v2863
        %v2865 = vrot.slane %v2847, 1
        %v2866 = vsel %vm1899, %v2863, %v2865
        %2867 = vrot.lane.b32.xlu0 %v2858, 16
        %v2868 = vpop.permute.xlu0 %2867
        %2869 = vrot.lane.b32.xlu0 %v2860, 16
        %v2870 = vpop.permute.xlu0 %2869
        %2871 = vrot.lane.b32.xlu0 %v2862, 16
        %v2872 = vpop.permute.xlu0 %2871
        %2873 = vrot.lane.b32.xlu0 %v2864, 16
        %v2874 = vpop.permute.xlu0 %2873
        %2875 = vrot.lane.b32.xlu0 %v2866, 16
        %v2876 = vpop.permute.xlu0 %2875
        %2877 = vrot.lane.b32.xlu0 %v2865, 16
        %v2878 = vpop.permute.xlu0 %2877
        %v2885 = vrot.slane %v2842, 2
        %v2886 = vrot.slane %v2843, 2
        %v2887 = vsel %vm1807, %v2885, %v2886
        %v2888 = vrot.slane %v2844, 2
        %v2889 = vsel %vm1807, %v2886, %v2888
        %v2890 = vrot.slane %v2845, 2
        %v2891 = vsel %vm1807, %v2888, %v2890
        %v2892 = vrot.slane %v2846, 2
        %v2893 = vsel %vm1807, %v2890, %v2892
        %v2894 = vrot.slane %v2847, 2
        %v2895 = vsel %vm1807, %v2892, %v2894
        %2896 = vrot.lane.b32.xlu0 %v2887, 32
        %v2897 = vpop.permute.xlu0 %2896
        %2898 = vrot.lane.b32.xlu0 %v2889, 32
        %v2899 = vpop.permute.xlu0 %2898
        %2900 = vrot.lane.b32.xlu0 %v2891, 32
        %v2901 = vpop.permute.xlu0 %2900
        %2902 = vrot.lane.b32.xlu0 %v2893, 32
        %v2903 = vpop.permute.xlu0 %2902
        %2904 = vrot.lane.b32.xlu0 %v2895, 32
        %v2905 = vpop.permute.xlu0 %2904
        %2906 = vrot.lane.b32.xlu0 %v2894, 32
        %v2907 = vpop.permute.xlu0 %2906
        %2915 = vrot.lane.b32.xlu0 %v2843, 48
        %v2916 = vpop.permute.xlu0 %2915
        %2917 = vrot.lane.b32.xlu0 %v2844, 48
        %v2918 = vpop.permute.xlu0 %2917
        %2919 = vrot.lane.b32.xlu0 %v2845, 48
        %v2920 = vpop.permute.xlu0 %2919
        %2921 = vrot.lane.b32.xlu0 %v2846, 48
        %v2922 = vpop.permute.xlu0 %2921
        %2923 = vrot.lane.b32.xlu0 %v2847, 48
        %v2924 = vpop.permute.xlu0 %2923
        %2925 = vrot.lane.b32.xlu0 %v2848, 48
        %v2926 = vpop.permute.xlu0 %2925
        %v2933 = vrot.slane %v2848, 1
        %v2934 = vsel %vm1899, %v2865, %v2933
        %2935 = vrot.lane.b32.xlu0 %v2860, 64
        %v2936 = vpop.permute.xlu0 %2935
        %2937 = vrot.lane.b32.xlu0 %v2862, 64
        %v2938 = vpop.permute.xlu0 %2937
        %2939 = vrot.lane.b32.xlu0 %v2864, 64
        %v2940 = vpop.permute.xlu0 %2939
        %2941 = vrot.lane.b32.xlu0 %v2866, 64
        %v2942 = vpop.permute.xlu0 %2941
        %2943 = vrot.lane.b32.xlu0 %v2934, 64
        %v2944 = vpop.permute.xlu0 %2943
        %2945 = vrot.lane.b32.xlu0 %v2933, 64
        %v2946 = vpop.permute.xlu0 %2945
        %v2953 = vrot.slane %v2848, 2
        %v2954 = vsel %vm1807, %v2894, %v2953
        %2955 = vrot.lane.b32.xlu0 %v2889, 80
        %v2956 = vpop.permute.xlu0 %2955
        %2957 = vrot.lane.b32.xlu0 %v2891, 80
        %v2958 = vpop.permute.xlu0 %2957
        %2959 = vrot.lane.b32.xlu0 %v2893, 80
        %v2960 = vpop.permute.xlu0 %2959
        %2961 = vrot.lane.b32.xlu0 %v2895, 80
        %v2962 = vpop.permute.xlu0 %2961
        %2963 = vrot.lane.b32.xlu0 %v2954, 80
        %v2964 = vpop.permute.xlu0 %2963
        %2965 = vrot.lane.b32.xlu0 %v2953, 80
        %v2966 = vpop.permute.xlu0 %2965
        %2974 = vrot.lane.b32.xlu0 %v2844, 96
        %v2975 = vpop.permute.xlu0 %2974
        %2976 = vrot.lane.b32.xlu0 %v2845, 96
        %v2977 = vpop.permute.xlu0 %2976
        %2978 = vrot.lane.b32.xlu0 %v2846, 96
        %v2979 = vpop.permute.xlu0 %2978
        %2980 = vrot.lane.b32.xlu0 %v2847, 96
        %v2981 = vpop.permute.xlu0 %2980
        %2982 = vrot.lane.b32.xlu0 %v2848, 96
        %v2983 = vpop.permute.xlu0 %2982
        %2984 = vrot.lane.b32.xlu0 %v2849, 96
        %v2985 = vpop.permute.xlu0 %2984
        %v2992 = vrot.slane %v2849, 1
        %v2993 = vsel %vm1899, %v2933, %v2992
        %2994 = vrot.lane.b32.xlu0 %v2862, 112
        %v2995 = vpop.permute.xlu0 %2994
        %2996 = vrot.lane.b32.xlu0 %v2864, 112
        %v2997 = vpop.permute.xlu0 %2996
        %2998 = vrot.lane.b32.xlu0 %v2866, 112
        %v2999 = vpop.permute.xlu0 %2998
        %3000 = vrot.lane.b32.xlu0 %v2934, 112
        %v3001 = vpop.permute.xlu0 %3000
        %3002 = vrot.lane.b32.xlu0 %v2993, 112
        %v3003 = vpop.permute.xlu0 %3002
        %3004 = vrot.lane.b32.xlu0 %v2992, 112
        %v3005 = vpop.permute.xlu0 %3004
        %v3012 = vrot.slane %v2849, 2
        %v3013 = vsel %vm1807, %v2953, %v3012
        %v3020 = vsel %vm2507, %v2842, %v2868
        %v3021 = vsel %vm2507, %v2843, %v2870
        %v3022 = vsel %vm2507, %v2844, %v2872
        %v3023 = vsel %vm2507, %v2845, %v2874
        %v3024 = vsel %vm2507, %v2846, %v2876
        %v3025 = vsel %vm2507, %v2847, %v2878
        %v3026 = vsel %vm1528, %v3020, %v2897
        %v3027 = vsel %vm1528, %v3021, %v2899
        %v3028 = vsel %vm1528, %v3022, %v2901
        %v3029 = vsel %vm1528, %v3023, %v2903
        %v3030 = vsel %vm1528, %v3024, %v2905
        %v3031 = vsel %vm1528, %v3025, %v2907
        %v3032 = vsel %vm2520, %v3026, %v2916
        %v3033 = vsel %vm2520, %v3027, %v2918
        %v3034 = vsel %vm2520, %v3028, %v2920
        %v3035 = vsel %vm2520, %v3029, %v2922
        %v3036 = vsel %vm2520, %v3030, %v2924
        %v3037 = vsel %vm2520, %v3031, %v2926
        %v3038 = vsel %vm2527, %v3032, %v2936
        %v3039 = vsel %vm2527, %v3033, %v2938
        %v3040 = vsel %vm2527, %v3034, %v2940
        %v3041 = vsel %vm2527, %v3035, %v2942
        %v3042 = vsel %vm2527, %v3036, %v2944
        %v3043 = vsel %vm2527, %v3037, %v2946
        %v3044 = vsel %vm2534, %v3038, %v2956
        %v3045 = vsel %vm2534, %v3039, %v2958
        %v3046 = vsel %vm2534, %v3040, %v2960
        %v3047 = vsel %vm2534, %v3041, %v2962
        %v3048 = vsel %vm2534, %v3042, %v2964
        %v3049 = vsel %vm2534, %v3043, %v2966
        %v3050 = vsel %vm2239, %v3044, %v2975
        %v3051 = vsel %vm2239, %v3045, %v2977
        %v3052 = vsel %vm2239, %v3046, %v2979
        %v3053 = vsel %vm2239, %v3047, %v2981
        %v3054 = vsel %vm2239, %v3048, %v2983
        %v3055 = vsel %vm2239, %v3049, %v2985
        %v3056 = vsel %vm2547, %v3050, %v2995
        %v3057 = vsel %vm2547, %v3051, %v2997
        %v3058 = vsel %vm2547, %v3052, %v2999
        %v3059 = vsel %vm2547, %v3053, %v3001
        %v3060 = vsel %vm2547, %v3054, %v3003
        %v3061 = vsel %vm2547, %v3055, %v3005
        %v3062 = vpack.c.bf16 %v3057, %v3056
        %v3063 = vpack.c.bf16 %v2893, %v2891
        %v3064 = vpack.c.bf16 %v3059, %v3058
        %v3065 = vpack.c.bf16 %v2954, %v2895
        %v3066 = vpack.c.bf16 %v3061, %v3060
        %v3067 = vpack.c.bf16 %v3012, %v3013
        %v3068 = vld [vmem:[%s31] sm:$0xf]
        %v3069 = vld [vmem:[%s31 + $0x4] sm:$0xf]
        %v3070 = vld [vmem:[%s31 + $0x8] sm:$0xf]
        %v3071 = vld [vmem:[%s31 + $0xc] sm:$0xf]
        %v3072 = vld [vmem:[%s31 + $0x10] sm:$0xf]
        %v3073 = vld [vmem:[%s31 + $0x14] sm:$0xf]
        %v3074 = vld [vmem:[%s31 + $0x18] sm:$0xf]
        %v3075 = vld [vmem:[%s31 + $0x1c] sm:$0xf]
        %v3076 = vld [vmem:[%s31 + $0x20] sm:$0xf]
        %v3077 = vld [vmem:[%s31 + $0x24] sm:$0xf]
        %v3078 = vld [vmem:[%s31 + $0x28] sm:$0xf]
        %v3079 = vld [vmem:[%s31 + $0x2c] sm:$0xf]
        %v3080 = vld [vmem:[%s31 + $0x30] sm:$0xf]
        %v3081 = vld [vmem:[%s31 + $0x34] sm:$0xf]
        %v3082 = vld [vmem:[%s31 + $0x38] sm:$0xf]
        %v3083 = vld [vmem:[%s31 + $0x3c] sm:$0xf]
        %v3084 = vld [vmem:[%s31 + $0x40] sm:$0xf]
        %v3085 = vld [vmem:[%s31 + $0x44] sm:$0xf]
        %v3086 = vld [vmem:[%s33] sm:$0x1]
        %v3088 = vperm.slane %v3086, 0
        %v3108 = vunpack.c.l.b16 %v3068
        %v3109 = vunpack.c.l.b16 %v3069
        %v3110 = vunpack.c.l.b16 %v3070
        %v3111 = vunpack.c.l.b16 %v3071
        %v3112 = vunpack.c.l.b16 %v3072
        %v3113 = vunpack.c.l.b16 %v3073
        %v3114 = vunpack.c.l.b16 %v3074
        %v3115 = vunpack.c.l.b16 %v3075
        %v3116 = vunpack.c.l.b16 %v3076
        %v3117 = vunpack.c.l.b16 %v3077
        %v3118 = vunpack.c.l.b16 %v3078
        %v3119 = vunpack.c.l.b16 %v3079
        %v3120 = vunpack.c.l.b16 %v3080
        %v3121 = vunpack.c.l.b16 %v3081
        %v3122 = vunpack.c.l.b16 %v3082
        %v3123 = vunpack.c.l.b16 %v3083
        %v3124 = vunpack.c.l.b16 %v3084
        %v3125 = vunpack.c.l.b16 %v3085
        %v3126 = vpack.c.b16 %v3109, %v3108
        %v3127 = vpack.c.b16 %v3111, %v3110
        %v3128 = vpack.c.b16 %v3113, %v3112
        %v3129 = vpack.c.b16 %v3115, %v3114
        %v3130 = vpack.c.b16 %v3117, %v3116
        %v3131 = vpack.c.b16 %v3119, %v3118
        %v3132 = vpack.c.b16 %v3121, %v3120
        %v3133 = vpack.c.b16 %v3123, %v3122
        %v3134 = vpack.c.b16 %v3125, %v3124
        %v3145 = vsel %vm2507, %v3063, 0
        %v3148 = vsel %vm2507, %v3065, 0
        %v3151 = vsel %vm2507, %v3067, 0
        %3153 = vmatpush.bf16.msra.mxu0 %v3133
        %3154 = vmatpush.bf16.msra.mxu0 %v3132
        %3155 = vmatpush.bf16.msra.mxu0 %v3131
        %3156 = vmatpush.bf16.msra.mxu0 %v3130
        %3157 = vmatpush.bf16.msra.mxu0 %v3129
        %3158 = vmatpush.bf16.msra.mxu0 %v3128
        %3159 = vmatpush.bf16.msra.mxu0 %v3127
        %3160 = vmatpush.bf16.msra.mxu0 %v3126
        %3161 = vmatmul.bf16.gmra.mxu0 %v3062
        %v3162 = vpop.f32.mrf.mxu0
        %v3163 = vadd.f32 %v3088, %v3162
        %v3164 = vpop.f32.mrf.mxu0
        %v3165 = vadd.f32 %v3088, %v3164
        %3166 = vmatmul.bf16.gmra.mxu0 %v3064
        %v3167 = vpop.f32.mrf.mxu0
        %v3168 = vadd.f32 %v3088, %v3167
        %v3169 = vpop.f32.mrf.mxu0
        %v3170 = vadd.f32 %v3088, %v3169
        %3171 = vmatmul.bf16.gmra.mxu0 %v3066
        %v3172 = vpop.f32.mrf.mxu0
        %v3173 = vadd.f32 %v3088, %v3172
        %v3174 = vpop.f32.mrf.mxu0
        %v3175 = vadd.f32 %v3088, %v3174
        %3176 = vdwg.mxu0
        %3177 = vmatpush.bf16.msra.mxu0 0
        %3178 = vmatpush.bf16.msra.mxu0 0
        %3179 = vmatpush.bf16.msra.mxu0 0
        %3180 = vmatpush.bf16.msra.mxu0 0
        %3181 = vmatpush.bf16.msra.mxu0 0
        %3182 = vmatpush.bf16.msra.mxu0 0
        %3183 = vmatpush.bf16.msra.mxu0 0
        %3184 = vmatpush.bf16.msra.mxu0 %v3134
        %3185 = vmatmul.bf16.gmra.mxu0 %v3145
        %v3186 = vpop.f32.mrf.mxu0
        %v3187 = vadd.f32 %v3163, %v3186
        %v3188 = vpop.f32.mrf.mxu0
        %v3189 = vadd.f32 %v3165, %v3188
        %3190 = vmatmul.bf16.gmra.mxu0 %v3148
        %v3191 = vpop.f32.mrf.mxu0
        %v3192 = vadd.f32 %v3168, %v3191
        %v3193 = vpop.f32.mrf.mxu0
        %v3194 = vadd.f32 %v3170, %v3193
        %3195 = vmatmul.bf16.gmra.mxu0 %v3151
        %v3196 = vpop.f32.mrf.mxu0
        %v3197 = vadd.f32 %v3173, %v3196
        %v3198 = vpop.f32.mrf.mxu0
        %v3199 = vadd.f32 %v3175, %v3198
        %3200 = vdwg.mxu0
        %v3201 = vmax.f32 %v3187, 0.0
        %v3202 = vmax.f32 %v3189, 0.0
        %v3203 = vmax.f32 %v3192, 0.0
        %v3204 = vmax.f32 %v3194, 0.0
        %v3205 = vmax.f32 %v3197, 0.0
        %v3206 = vmax.f32 %v3199, 0.0
        %v3213 = vrot.slane %v3201, 7
        %v3214 = vrot.slane %v3202, 7
        %v3215 = vsel %vm2705, %v3213, %v3214
        %v3216 = vrot.slane %v3203, 7
        %v3217 = vsel %vm2705, %v3214, %v3216
        %v3218 = vrot.slane %v3204, 7
        %v3219 = vsel %vm2705, %v3216, %v3218
        %v3220 = vrot.slane %v3205, 7
        %v3221 = vsel %vm2705, %v3218, %v3220
        %v3222 = vrot.slane %v3206, 7
        %v3223 = vsel %vm2705, %v3220, %v3222
        %v3230 = vsel %vm2705, 0.0, %v3213
        %v3231 = vsel %vm1899, %v3223, 0.0
        %v3232 = vmul.f32 %v3230, %v2297
        %v3233 = vmul.f32 %v3215, %v2302
        %v3234 = vmul.f32 %v3217, %v2307
        %v3235 = vmul.f32 %v3219, %v2312
        %v3236 = vmul.f32 %v3221, %v2317
        %v3237 = vmul.f32 %v3231, %v2322
        %v3238 = vadd.f32 %v2725, %v2725
        %v3239 = vadd.f32 %v3232, %v2726
        %v3240 = vadd.f32 %v3233, %v2727
        %v3241 = vadd.f32 %v3234, %v2728
        %v3242 = vadd.f32 %v3235, %v2729
        %v3243 = vadd.f32 %v3236, %v2730
        %v3244 = vadd.f32 %v3237, %v2731
        %v3245 = vadd.f32 %v2732, %v2732
        %v3246 = vpack.c.bf16 %v3239, %v3238
        %v3247 = vpack.c.bf16 %v3241, %v3240
        %v3248 = vpack.c.bf16 %v3243, %v3242
        %v3249 = vpack.c.bf16 %v3245, %v3244
        %v3250 = vld [vmem:[%s35] sm:$0xf]
        %v3251 = vld [vmem:[%s35 + $0x4] sm:$0xf]
        %v3252 = vld [vmem:[%s35 + $0x8] sm:$0xf]
        %v3253 = vld [vmem:[%s35 + $0xc] sm:$0xf]
        %v3254 = vld [vmem:[%s35 + $0x10] sm:$0xf]
        %v3255 = vld [vmem:[%s35 + $0x14] sm:$0xf]
        %v3256 = vld [vmem:[%s35 + $0x18] sm:$0xf]
        %v3257 = vld [vmem:[%s35 + $0x1c] sm:$0xf]
        %v3258 = vld [vmem:[%s35 + $0x20] sm:$0xf]
        %v3259 = vld [vmem:[%s35 + $0x24] sm:$0xf]
        %v3260 = vld [vmem:[%s35 + $0x28] sm:$0xf]
        %v3261 = vld [vmem:[%s35 + $0x2c] sm:$0xf]
        %v3262 = vld [vmem:[%s35 + $0x30] sm:$0xf]
        %v3263 = vld [vmem:[%s35 + $0x34] sm:$0xf]
        %v3264 = vld [vmem:[%s35 + $0x38] sm:$0xf]
        %v3265 = vld [vmem:[%s35 + $0x3c] sm:$0xf]
        %v3266 = vld [vmem:[%s37] sm:$0x1]
        %v3268 = vperm.slane %v3266, 0
        %v3286 = vunpack.c.l.b16 %v3250
        %v3287 = vunpack.c.l.b16 %v3251
        %v3288 = vunpack.c.l.b16 %v3252
        %v3289 = vunpack.c.l.b16 %v3253
        %v3290 = vunpack.c.l.b16 %v3254
        %v3291 = vunpack.c.l.b16 %v3255
        %v3292 = vunpack.c.l.b16 %v3256
        %v3293 = vunpack.c.l.b16 %v3257
        %v3294 = vunpack.c.l.b16 %v3258
        %v3295 = vunpack.c.l.b16 %v3259
        %v3296 = vunpack.c.l.b16 %v3260
        %v3297 = vunpack.c.l.b16 %v3261
        %v3298 = vunpack.c.l.b16 %v3262
        %v3299 = vunpack.c.l.b16 %v3263
        %v3300 = vunpack.c.l.b16 %v3264
        %v3301 = vunpack.c.l.b16 %v3265
        %v3302 = vpack.c.b16 %v3287, %v3286
        %v3303 = vpack.c.b16 %v3289, %v3288
        %v3304 = vpack.c.b16 %v3291, %v3290
        %v3305 = vpack.c.b16 %v3293, %v3292
        %v3306 = vpack.c.b16 %v3295, %v3294
        %v3307 = vpack.c.b16 %v3297, %v3296
        %v3308 = vpack.c.b16 %v3299, %v3298
        %v3309 = vpack.c.b16 %v3301, %v3300
        %3318 = vmatpush.bf16.msra.mxu0 %v3309
        %3319 = vmatpush.bf16.msra.mxu0 %v3308
        %3320 = vmatpush.bf16.msra.mxu0 %v3307
        %3321 = vmatpush.bf16.msra.mxu0 %v3306
        %3322 = vmatpush.bf16.msra.mxu0 %v3305
        %3323 = vmatpush.bf16.msra.mxu0 %v3304
        %3324 = vmatpush.bf16.msra.mxu0 %v3303
        %3325 = vmatpush.bf16.msra.mxu0 %v3302
        %3326 = vmatmul.bf16.gmra.mxu0 %v3246
        %v3327 = vpop.f32.mrf.mxu0
        %v3328 = vadd.f32 %v3268, %v3327
        %v3329 = vpop.f32.mrf.mxu0
        %v3330 = vadd.f32 %v3268, %v3329
        %3331 = vmatmul.bf16.gmra.mxu0 %v3247
        %v3332 = vpop.f32.mrf.mxu0
        %v3333 = vadd.f32 %v3268, %v3332
        %v3334 = vpop.f32.mrf.mxu0
        %v3335 = vadd.f32 %v3268, %v3334
        %3336 = vmatmul.bf16.gmra.mxu0 %v3248
        %v3337 = vpop.f32.mrf.mxu0
        %v3338 = vadd.f32 %v3268, %v3337
        %v3339 = vpop.f32.mrf.mxu0
        %v3340 = vadd.f32 %v3268, %v3339
        %3341 = vmatmul.bf16.gmra.mxu0 %v3249
        %v3342 = vpop.f32.mrf.mxu0
        %v3343 = vadd.f32 %v3268, %v3342
        %v3344 = vpop.f32.mrf.mxu0
        %v3345 = vadd.f32 %v3268, %v3344
        %3346 = vdwg.mxu0
        %v3347 = vmax.f32 %v3328, 0.0
        %v3348 = vmax.f32 %v3330, 0.0
        %v3349 = vmax.f32 %v3333, 0.0
        %v3350 = vmax.f32 %v3335, 0.0
        %v3351 = vmax.f32 %v3338, 0.0
        %v3352 = vmax.f32 %v3340, 0.0
        %v3353 = vmax.f32 %v3343, 0.0
        %v3354 = vmax.f32 %v3345, 0.0
        %v3355 = vmul.f32 %v3347, %v2292
        %v3356 = vmul.f32 %v3348, %v2297
        %v3357 = vmul.f32 %v3349, %v2302
        %v3358 = vmul.f32 %v3350, %v2307
        %v3359 = vmul.f32 %v3351, %v2312
        %v3360 = vmul.f32 %v3352, %v2317
        %v3361 = vmul.f32 %v3353, %v2322
        %v3362 = vmul.f32 %v3354, %v2327
        %v3369 = vrot.slane %v3355, 1
        %v3370 = vrot.slane %v3356, 1
        %v3371 = vsel %vm1899, %v3369, %v3370
        %v3372 = vrot.slane %v3357, 1
        %v3373 = vsel %vm1899, %v3370, %v3372
        %v3374 = vrot.slane %v3358, 1
        %v3375 = vsel %vm1899, %v3372, %v3374
        %v3376 = vrot.slane %v3359, 1
        %v3377 = vsel %vm1899, %v3374, %v3376
        %v3378 = vrot.slane %v3360, 1
        %v3379 = vsel %vm1899, %v3376, %v3378
        %3380 = vrot.lane.b32.xlu0 %v3371, 32
        %v3381 = vpop.permute.xlu0 %3380
        %3382 = vrot.lane.b32.xlu0 %v3373, 32
        %v3383 = vpop.permute.xlu0 %3382
        %3384 = vrot.lane.b32.xlu0 %v3375, 32
        %v3385 = vpop.permute.xlu0 %3384
        %3386 = vrot.lane.b32.xlu0 %v3377, 32
        %v3387 = vpop.permute.xlu0 %3386
        %3388 = vrot.lane.b32.xlu0 %v3379, 32
        %v3389 = vpop.permute.xlu0 %3388
        %3390 = vrot.lane.b32.xlu0 %v3378, 32
        %v3391 = vpop.permute.xlu0 %3390
        %v3398 = vrot.slane %v3355, 2
        %v3399 = vrot.slane %v3356, 2
        %v3400 = vsel %vm1807, %v3398, %v3399
        %v3401 = vrot.slane %v3357, 2
        %v3402 = vsel %vm1807, %v3399, %v3401
        %v3403 = vrot.slane %v3358, 2
        %v3404 = vsel %vm1807, %v3401, %v3403
        %v3405 = vrot.slane %v3359, 2
        %v3406 = vsel %vm1807, %v3403, %v3405
        %v3407 = vrot.slane %v3360, 2
        %v3408 = vsel %vm1807, %v3405, %v3407
        %3409 = vrot.lane.b32.xlu0 %v3400, 64
        %v3410 = vpop.permute.xlu0 %3409
        %3411 = vrot.lane.b32.xlu0 %v3402, 64
        %v3412 = vpop.permute.xlu0 %3411
        %3413 = vrot.lane.b32.xlu0 %v3404, 64
        %v3414 = vpop.permute.xlu0 %3413
        %3415 = vrot.lane.b32.xlu0 %v3406, 64
        %v3416 = vpop.permute.xlu0 %3415
        %3417 = vrot.lane.b32.xlu0 %v3408, 64
        %v3418 = vpop.permute.xlu0 %3417
        %3419 = vrot.lane.b32.xlu0 %v3407, 64
        %v3420 = vpop.permute.xlu0 %3419
        %3428 = vrot.lane.b32.xlu0 %v3356, 96
        %v3429 = vpop.permute.xlu0 %3428
        %3430 = vrot.lane.b32.xlu0 %v3357, 96
        %v3431 = vpop.permute.xlu0 %3430
        %3432 = vrot.lane.b32.xlu0 %v3358, 96
        %v3433 = vpop.permute.xlu0 %3432
        %3434 = vrot.lane.b32.xlu0 %v3359, 96
        %v3435 = vpop.permute.xlu0 %3434
        %3436 = vrot.lane.b32.xlu0 %v3360, 96
        %v3437 = vpop.permute.xlu0 %3436
        %3438 = vrot.lane.b32.xlu0 %v3361, 96
        %v3439 = vpop.permute.xlu0 %3438
        %v3446 = vrot.slane %v3361, 1
        %v3447 = vsel %vm1899, %v3378, %v3446
        %v3454 = vrot.slane %v3361, 2
        %v3455 = vsel %vm1807, %v3407, %v3454
        %3456 = vrot.lane.b32.xlu0 %v3402, 32
        %v3457 = vpop.permute.xlu0 %3456
        %3458 = vrot.lane.b32.xlu0 %v3404, 32
        %v3459 = vpop.permute.xlu0 %3458
        %3460 = vrot.lane.b32.xlu0 %v3406, 32
        %v3461 = vpop.permute.xlu0 %3460
        %3462 = vrot.lane.b32.xlu0 %v3408, 32
        %v3463 = vpop.permute.xlu0 %3462
        %3464 = vrot.lane.b32.xlu0 %v3455, 32
        %v3465 = vpop.permute.xlu0 %3464
        %3466 = vrot.lane.b32.xlu0 %v3454, 32
        %v3467 = vpop.permute.xlu0 %3466
        %3475 = vrot.lane.b32.xlu0 %v3357, 64
        %v3476 = vpop.permute.xlu0 %3475
        %3477 = vrot.lane.b32.xlu0 %v3358, 64
        %v3478 = vpop.permute.xlu0 %3477
        %3479 = vrot.lane.b32.xlu0 %v3359, 64
        %v3480 = vpop.permute.xlu0 %3479
        %3481 = vrot.lane.b32.xlu0 %v3360, 64
        %v3482 = vpop.permute.xlu0 %3481
        %3483 = vrot.lane.b32.xlu0 %v3361, 64
        %v3484 = vpop.permute.xlu0 %3483
        %3485 = vrot.lane.b32.xlu0 %v3362, 64
        %v3486 = vpop.permute.xlu0 %3485
        %v3493 = vrot.slane %v3362, 1
        %v3494 = vsel %vm1899, %v3446, %v3493
        %3495 = vrot.lane.b32.xlu0 %v3375, 96
        %v3496 = vpop.permute.xlu0 %3495
        %3497 = vrot.lane.b32.xlu0 %v3377, 96
        %v3498 = vpop.permute.xlu0 %3497
        %3499 = vrot.lane.b32.xlu0 %v3379, 96
        %v3500 = vpop.permute.xlu0 %3499
        %3501 = vrot.lane.b32.xlu0 %v3447, 96
        %v3502 = vpop.permute.xlu0 %3501
        %3503 = vrot.lane.b32.xlu0 %v3494, 96
        %v3504 = vpop.permute.xlu0 %3503
        %3505 = vrot.lane.b32.xlu0 %v3493, 96
        %v3506 = vpop.permute.xlu0 %3505
        %v3513 = vrot.slane %v3362, 2
        %v3514 = vsel %vm1807, %v3454, %v3513
        %v3521 = vsel %vm1528, %v3355, %v3381
        %v3522 = vsel %vm1528, %v3356, %v3383
        %v3523 = vsel %vm1528, %v3357, %v3385
        %v3524 = vsel %vm1528, %v3358, %v3387
        %v3525 = vsel %vm1528, %v3359, %v3389
        %v3526 = vsel %vm1528, %v3360, %v3391
        %v3527 = vsel %vm2527, %v3521, %v3410
        %v3528 = vsel %vm2527, %v3522, %v3412
        %v3529 = vsel %vm2527, %v3523, %v3414
        %v3530 = vsel %vm2527, %v3524, %v3416
        %v3531 = vsel %vm2527, %v3525, %v3418
        %v3532 = vsel %vm2527, %v3526, %v3420
        %v3533 = vsel %vm2239, %v3527, %v3429
        %v3534 = vsel %vm2239, %v3528, %v3431
        %v3535 = vsel %vm2239, %v3529, %v3433
        %v3536 = vsel %vm2239, %v3530, %v3435
        %v3537 = vsel %vm2239, %v3531, %v3437
        %v3538 = vsel %vm2239, %v3532, %v3439
        %v3539 = vsel %vm1528, %v3373, %v3457
        %v3540 = vsel %vm1528, %v3375, %v3459
        %v3541 = vsel %vm1528, %v3377, %v3461
        %v3542 = vsel %vm1528, %v3379, %v3463
        %v3543 = vsel %vm1528, %v3447, %v3465
        %v3544 = vsel %vm1528, %v3446, %v3467
        %v3545 = vsel %vm2527, %v3539, %v3476
        %v3546 = vsel %vm2527, %v3540, %v3478
        %v3547 = vsel %vm2527, %v3541, %v3480
        %v3548 = vsel %vm2527, %v3542, %v3482
        %v3549 = vsel %vm2527, %v3543, %v3484
        %v3550 = vsel %vm2527, %v3544, %v3486
        %v3551 = vsel %vm2239, %v3545, %v3496
        %v3552 = vsel %vm2239, %v3546, %v3498
        %v3553 = vsel %vm2239, %v3547, %v3500
        %v3554 = vsel %vm2239, %v3548, %v3502
        %v3555 = vsel %vm2239, %v3549, %v3504
        %v3556 = vsel %vm2239, %v3550, %v3506
        %v3557 = vpack.c.bf16 %v3534, %v3533
        %v3558 = vpack.c.bf16 %v3552, %v3551
        %v3559 = vpack.c.bf16 %v3406, %v3404
        %v3560 = vpack.c.bf16 %v3536, %v3535
        %v3561 = vpack.c.bf16 %v3554, %v3553
        %v3562 = vpack.c.bf16 %v3455, %v3408
        %v3563 = vpack.c.bf16 %v3538, %v3537
        %v3564 = vpack.c.bf16 %v3556, %v3555
        %v3565 = vpack.c.bf16 %v3513, %v3514
        %v3566 = vld [vmem:[%s39] sm:$0xff]
        %v3567 = vld [vmem:[%s39 + $0x8] sm:$0xff]
        %v3568 = vld [vmem:[%s39 + $0x10] sm:$0xff]
        %v3569 = vld [vmem:[%s39 + $0x18] sm:$0xff]
        %v3570 = vld [vmem:[%s39 + $0x20] sm:$0xff]
        %v3571 = vld [vmem:[%s39 + $0x28] sm:$0xff]
        %v3572 = vld [vmem:[%s39 + $0x30] sm:$0xff]
        %v3573 = vld [vmem:[%s39 + $0x38] sm:$0xff]
        %v3574 = vld [vmem:[%s39 + $0x40] sm:$0xff]
        %v3575 = vld [vmem:[%s39 + $0x48] sm:$0xff]
        %v3576 = vld [vmem:[%s39 + $0x50] sm:$0xff]
        %v3577 = vld [vmem:[%s39 + $0x58] sm:$0xff]
        %v3578 = vld [vmem:[%s39 + $0x60] sm:$0xff]
        %v3579 = vld [vmem:[%s39 + $0x68] sm:$0xff]
        %v3580 = vld [vmem:[%s39 + $0x70] sm:$0xff]
        %v3581 = vld [vmem:[%s39 + $0x78] sm:$0xff]
        %v3582 = vld [vmem:[%s39 + $0x80] sm:$0xff]
        %v3583 = vld [vmem:[%s39 + $0x88] sm:$0xff]
        %v3584 = vld [vmem:[%s39 + $0x90] sm:$0xff]
        %v3585 = vld [vmem:[%s39 + $0x98] sm:$0xff]
        %v3586 = vld [vmem:[%s39 + $0xa0] sm:$0xff]
        %v3587 = vld [vmem:[%s39 + $0xa8] sm:$0xff]
        %v3588 = vld [vmem:[%s39 + $0xb0] sm:$0xff]
        %v3589 = vld [vmem:[%s39 + $0xb8] sm:$0xff]
        %v3590 = vld [vmem:[%s39 + $0xc0] sm:$0xff]
        %v3591 = vld [vmem:[%s39 + $0xc8] sm:$0xff]
        %v3592 = vld [vmem:[%s39 + $0xd0] sm:$0xff]
        %v3593 = vld [vmem:[%s39 + $0xd8] sm:$0xff]
        %v3594 = vld [vmem:[%s39 + $0xe0] sm:$0xff]
        %v3595 = vld [vmem:[%s39 + $0xe8] sm:$0xff]
        %v3596 = vld [vmem:[%s39 + $0xf0] sm:$0xff]
        %v3597 = vld [vmem:[%s39 + $0xf8] sm:$0xff]
        %v3598 = vld [vmem:[%s39 + $0x100] sm:$0xff]
        %v3599 = vld [vmem:[%s39 + $0x108] sm:$0xff]
        %v3600 = vld [vmem:[%s39 + $0x110] sm:$0xff]
        %v3601 = vld [vmem:[%s39 + $0x118] sm:$0xff]
        %v3602 = vld [vmem:[%s41] sm:$0x3]
        %v3604 = vperm.slane %v3602, 0
        %v3605 = vperm.slane %v3602, 1
        %v3644 = vunpack.c.l.b16 %v3566
        %v3645 = vunpack.c.h.b16 %v3566
        %v3646 = vunpack.c.l.b16 %v3567
        %v3647 = vunpack.c.h.b16 %v3567
        %v3648 = vunpack.c.l.b16 %v3568
        %v3649 = vunpack.c.h.b16 %v3568
        %v3650 = vunpack.c.l.b16 %v3569
        %v3651 = vunpack.c.h.b16 %v3569
        %v3652 = vunpack.c.l.b16 %v3570
        %v3653 = vunpack.c.h.b16 %v3570
        %v3654 = vunpack.c.l.b16 %v3571
        %v3655 = vunpack.c.h.b16 %v3571
        %v3656 = vunpack.c.l.b16 %v3572
        %v3657 = vunpack.c.h.b16 %v3572
        %v3658 = vunpack.c.l.b16 %v3573
        %v3659 = vunpack.c.h.b16 %v3573
        %v3660 = vunpack.c.l.b16 %v3574
        %v3661 = vunpack.c.h.b16 %v3574
        %v3662 = vunpack.c.l.b16 %v3575
        %v3663 = vunpack.c.h.b16 %v3575
        %v3664 = vunpack.c.l.b16 %v3576
        %v3665 = vunpack.c.h.b16 %v3576
        %v3666 = vunpack.c.l.b16 %v3577
        %v3667 = vunpack.c.h.b16 %v3577
        %v3668 = vunpack.c.l.b16 %v3578
        %v3669 = vunpack.c.h.b16 %v3578
        %v3670 = vunpack.c.l.b16 %v3579
        %v3671 = vunpack.c.h.b16 %v3579
        %v3672 = vunpack.c.l.b16 %v3580
        %v3673 = vunpack.c.h.b16 %v3580
        %v3674 = vunpack.c.l.b16 %v3581
        %v3675 = vunpack.c.h.b16 %v3581
        %v3676 = vunpack.c.l.b16 %v3582
        %v3677 = vunpack.c.h.b16 %v3582
        %v3678 = vunpack.c.l.b16 %v3583
        %v3679 = vunpack.c.h.b16 %v3583
        %v3680 = vunpack.c.l.b16 %v3584
        %v3681 = vunpack.c.h.b16 %v3584
        %v3682 = vunpack.c.l.b16 %v3585
        %v3683 = vunpack.c.h.b16 %v3585
        %v3684 = vunpack.c.l.b16 %v3586
        %v3685 = vunpack.c.h.b16 %v3586
        %v3686 = vunpack.c.l.b16 %v3587
        %v3687 = vunpack.c.h.b16 %v3587
        %v3688 = vunpack.c.l.b16 %v3588
        %v3689 = vunpack.c.h.b16 %v3588
        %v3690 = vunpack.c.l.b16 %v3589
        %v3691 = vunpack.c.h.b16 %v3589
        %v3692 = vunpack.c.l.b16 %v3590
        %v3693 = vunpack.c.h.b16 %v3590
        %v3694 = vunpack.c.l.b16 %v3591
        %v3695 = vunpack.c.h.b16 %v3591
        %v3696 = vunpack.c.l.b16 %v3592
        %v3697 = vunpack.c.h.b16 %v3592
        %v3698 = vunpack.c.l.b16 %v3593
        %v3699 = vunpack.c.h.b16 %v3593
        %v3700 = vunpack.c.l.b16 %v3594
        %v3701 = vunpack.c.h.b16 %v3594
        %v3702 = vunpack.c.l.b16 %v3595
        %v3703 = vunpack.c.h.b16 %v3595
        %v3704 = vunpack.c.l.b16 %v3596
        %v3705 = vunpack.c.h.b16 %v3596
        %v3706 = vunpack.c.l.b16 %v3597
        %v3707 = vunpack.c.h.b16 %v3597
        %v3708 = vunpack.c.l.b16 %v3598
        %v3709 = vunpack.c.h.b16 %v3598
        %v3710 = vunpack.c.l.b16 %v3599
        %v3711 = vunpack.c.h.b16 %v3599
        %v3712 = vunpack.c.l.b16 %v3600
        %v3713 = vunpack.c.h.b16 %v3600
        %v3714 = vunpack.c.l.b16 %v3601
        %v3715 = vunpack.c.h.b16 %v3601
        %v3716 = vpack.c.b16 %v3646, %v3644
        %v3717 = vpack.c.b16 %v3647, %v3645
        %v3718 = vpack.c.b16 %v3650, %v3648
        %v3719 = vpack.c.b16 %v3651, %v3649
        %v3720 = vpack.c.b16 %v3654, %v3652
        %v3721 = vpack.c.b16 %v3655, %v3653
        %v3722 = vpack.c.b16 %v3658, %v3656
        %v3723 = vpack.c.b16 %v3659, %v3657
        %v3724 = vpack.c.b16 %v3662, %v3660
        %v3725 = vpack.c.b16 %v3663, %v3661
        %v3726 = vpack.c.b16 %v3666, %v3664
        %v3727 = vpack.c.b16 %v3667, %v3665
        %v3728 = vpack.c.b16 %v3670, %v3668
        %v3729 = vpack.c.b16 %v3671, %v3669
        %v3730 = vpack.c.b16 %v3674, %v3672
        %v3731 = vpack.c.b16 %v3675, %v3673
        %v3732 = vpack.c.b16 %v3678, %v3676
        %v3733 = vpack.c.b16 %v3679, %v3677
        %v3734 = vpack.c.b16 %v3682, %v3680
        %v3735 = vpack.c.b16 %v3683, %v3681
        %v3736 = vpack.c.b16 %v3686, %v3684
        %v3737 = vpack.c.b16 %v3687, %v3685
        %v3738 = vpack.c.b16 %v3690, %v3688
        %v3739 = vpack.c.b16 %v3691, %v3689
        %v3740 = vpack.c.b16 %v3694, %v3692
        %v3741 = vpack.c.b16 %v3695, %v3693
        %v3742 = vpack.c.b16 %v3698, %v3696
        %v3743 = vpack.c.b16 %v3699, %v3697
        %v3744 = vpack.c.b16 %v3702, %v3700
        %v3745 = vpack.c.b16 %v3703, %v3701
        %v3746 = vpack.c.b16 %v3706, %v3704
        %v3747 = vpack.c.b16 %v3707, %v3705
        %v3748 = vpack.c.b16 %v3710, %v3708
        %v3749 = vpack.c.b16 %v3711, %v3709
        %v3750 = vpack.c.b16 %v3714, %v3712
        %v3751 = vpack.c.b16 %v3715, %v3713
        %v3789 = vsel %vm1528, %v3559, 0
        %v3792 = vsel %vm1528, %v3562, 0
        %v3795 = vsel %vm1528, %v3565, 0
        %3797 = vmatpush.bf16.msra.mxu0 %v3730
        %3798 = vmatpush.bf16.msra.mxu0 %v3728
        %3799 = vmatpush.bf16.msra.mxu0 %v3726
        %3800 = vmatpush.bf16.msra.mxu0 %v3724
        %3801 = vmatpush.bf16.msra.mxu0 %v3722
        %3802 = vmatpush.bf16.msra.mxu0 %v3720
        %3803 = vmatpush.bf16.msra.mxu0 %v3718
        %3804 = vmatpush.bf16.msra.mxu0 %v3716
        %3805 = vmatmul.bf16.gmra.mxu0 %v3557
        %v3806 = vpop.f32.mrf.mxu0
        %v3807 = vadd.f32 %v3604, %v3806
        %v3808 = vpop.f32.mrf.mxu0
        %v3809 = vadd.f32 %v3604, %v3808
        %3810 = vmatmul.bf16.gmra.mxu0 %v3560
        %v3811 = vpop.f32.mrf.mxu0
        %v3812 = vadd.f32 %v3604, %v3811
        %v3813 = vpop.f32.mrf.mxu0
        %v3814 = vadd.f32 %v3604, %v3813
        %3815 = vmatmul.bf16.gmra.mxu0 %v3563
        %v3816 = vpop.f32.mrf.mxu0
        %v3817 = vadd.f32 %v3604, %v3816
        %v3818 = vpop.f32.mrf.mxu0
        %v3819 = vadd.f32 %v3604, %v3818
        %3820 = vdwg.mxu0
        %3821 = vmatpush.bf16.msra.mxu0 %v3746
        %3822 = vmatpush.bf16.msra.mxu0 %v3744
        %3823 = vmatpush.bf16.msra.mxu0 %v3742
        %3824 = vmatpush.bf16.msra.mxu0 %v3740
        %3825 = vmatpush.bf16.msra.mxu0 %v3738
        %3826 = vmatpush.bf16.msra.mxu0 %v3736
        %3827 = vmatpush.bf16.msra.mxu0 %v3734
        %3828 = vmatpush.bf16.msra.mxu0 %v3732
        %3829 = vmatmul.bf16.gmra.mxu0 %v3558
        %v3830 = vpop.f32.mrf.mxu0
        %v3831 = vadd.f32 %v3807, %v3830
        %v3832 = vpop.f32.mrf.mxu0
        %v3833 = vadd.f32 %v3809, %v3832
        %3834 = vmatmul.bf16.gmra.mxu0 %v3561
        %v3835 = vpop.f32.mrf.mxu0
        %v3836 = vadd.f32 %v3812, %v3835
        %v3837 = vpop.f32.mrf.mxu0
        %v3838 = vadd.f32 %v3814, %v3837
        %3839 = vmatmul.bf16.gmra.mxu0 %v3564
        %v3840 = vpop.f32.mrf.mxu0
        %v3841 = vadd.f32 %v3817, %v3840
        %v3842 = vpop.f32.mrf.mxu0
        %v3843 = vadd.f32 %v3819, %v3842
        %3844 = vdwg.mxu0
        %3845 = vmatpush.bf16.msra.mxu0 0
        %3846 = vmatpush.bf16.msra.mxu0 0
        %3847 = vmatpush.bf16.msra.mxu0 0
        %3848 = vmatpush.bf16.msra.mxu0 0
        %3849 = vmatpush.bf16.msra.mxu0 0
        %3850 = vmatpush.bf16.msra.mxu0 0
        %3851 = vmatpush.bf16.msra.mxu0 %v3750
        %3852 = vmatpush.bf16.msra.mxu0 %v3748
        %3853 = vmatmul.bf16.gmra.mxu0 %v3789
        %v3854 = vpop.f32.mrf.mxu0
        %v3855 = vadd.f32 %v3831, %v3854
        %v3856 = vpop.f32.mrf.mxu0
        %v3857 = vadd.f32 %v3833, %v3856
        %3858 = vmatmul.bf16.gmra.mxu0 %v3792
        %v3859 = vpop.f32.mrf.mxu0
        %v3860 = vadd.f32 %v3836, %v3859
        %v3861 = vpop.f32.mrf.mxu0
        %v3862 = vadd.f32 %v3838, %v3861
        %3863 = vmatmul.bf16.gmra.mxu0 %v3795
        %v3864 = vpop.f32.mrf.mxu0
        %v3865 = vadd.f32 %v3841, %v3864
        %v3866 = vpop.f32.mrf.mxu0
        %v3867 = vadd.f32 %v3843, %v3866
        %3868 = vdwg.mxu0
        %3869 = vmatpush.bf16.msra.mxu0 %v3731
        %3870 = vmatpush.bf16.msra.mxu0 %v3729
        %3871 = vmatpush.bf16.msra.mxu0 %v3727
        %3872 = vmatpush.bf16.msra.mxu0 %v3725
        %3873 = vmatpush.bf16.msra.mxu0 %v3723
        %3874 = vmatpush.bf16.msra.mxu0 %v3721
        %3875 = vmatpush.bf16.msra.mxu0 %v3719
        %3876 = vmatpush.bf16.msra.mxu0 %v3717
        %3877 = vmatmul.bf16.gmra.mxu0 %v3557
        %v3878 = vpop.f32.mrf.mxu0
        %v3879 = vadd.f32 %v3605, %v3878
        %v3880 = vpop.f32.mrf.mxu0
        %v3881 = vadd.f32 %v3605, %v3880
        %3882 = vmatmul.bf16.gmra.mxu0 %v3560
        %v3883 = vpop.f32.mrf.mxu0
        %v3884 = vadd.f32 %v3605, %v3883
        %v3885 = vpop.f32.mrf.mxu0
        %v3886 = vadd.f32 %v3605, %v3885
        %3887 = vmatmul.bf16.gmra.mxu0 %v3563
        %v3888 = vpop.f32.mrf.mxu0
        %v3889 = vadd.f32 %v3605, %v3888
        %v3890 = vpop.f32.mrf.mxu0
        %v3891 = vadd.f32 %v3605, %v3890
        %3892 = vdwg.mxu0
        %3893 = vmatpush.bf16.msra.mxu0 %v3747
        %3894 = vmatpush.bf16.msra.mxu0 %v3745
        %3895 = vmatpush.bf16.msra.mxu0 %v3743
        %3896 = vmatpush.bf16.msra.mxu0 %v3741
        %3897 = vmatpush.bf16.msra.mxu0 %v3739
        %3898 = vmatpush.bf16.msra.mxu0 %v3737
        %3899 = vmatpush.bf16.msra.mxu0 %v3735
        %3900 = vmatpush.bf16.msra.mxu0 %v3733
        %3901 = vmatmul.bf16.gmra.mxu0 %v3558
        %v3902 = vpop.f32.mrf.mxu0
        %v3903 = vadd.f32 %v3879, %v3902
        %v3904 = vpop.f32.mrf.mxu0
        %v3905 = vadd.f32 %v3881, %v3904
        %3906 = vmatmul.bf16.gmra.mxu0 %v3561
        %v3907 = vpop.f32.mrf.mxu0
        %v3908 = vadd.f32 %v3884, %v3907
        %v3909 = vpop.f32.mrf.mxu0
        %v3910 = vadd.f32 %v3886, %v3909
        %3911 = vmatmul.bf16.gmra.mxu0 %v3564
        %v3912 = vpop.f32.mrf.mxu0
        %v3913 = vadd.f32 %v3889, %v3912
        %v3914 = vpop.f32.mrf.mxu0
        %v3915 = vadd.f32 %v3891, %v3914
        %3916 = vdwg.mxu0
        %3917 = vmatpush.bf16.msra.mxu0 0
        %3918 = vmatpush.bf16.msra.mxu0 0
        %3919 = vmatpush.bf16.msra.mxu0 0
        %3920 = vmatpush.bf16.msra.mxu0 0
        %3921 = vmatpush.bf16.msra.mxu0 0
        %3922 = vmatpush.bf16.msra.mxu0 0
        %3923 = vmatpush.bf16.msra.mxu0 %v3751
        %3924 = vmatpush.bf16.msra.mxu0 %v3749
        %3925 = vmatmul.bf16.gmra.mxu0 %v3789
        %v3926 = vpop.f32.mrf.mxu0
        %v3927 = vadd.f32 %v3903, %v3926
        %v3928 = vpop.f32.mrf.mxu0
        %v3929 = vadd.f32 %v3905, %v3928
        %3930 = vmatmul.bf16.gmra.mxu0 %v3792
        %v3931 = vpop.f32.mrf.mxu0
        %v3932 = vadd.f32 %v3908, %v3931
        %v3933 = vpop.f32.mrf.mxu0
        %v3934 = vadd.f32 %v3910, %v3933
        %3935 = vmatmul.bf16.gmra.mxu0 %v3795
        %v3936 = vpop.f32.mrf.mxu0
        %v3937 = vadd.f32 %v3913, %v3936
        %v3938 = vpop.f32.mrf.mxu0
        %v3939 = vadd.f32 %v3915, %v3938
        %3940 = vdwg.mxu0
        %v3941 = vmax.f32 %v3855, 0.0
        %v3942 = vmax.f32 %v3927, 0.0
        %v3943 = vmax.f32 %v3857, 0.0
        %v3944 = vmax.f32 %v3929, 0.0
        %v3945 = vmax.f32 %v3860, 0.0
        %v3946 = vmax.f32 %v3932, 0.0
        %v3947 = vmax.f32 %v3862, 0.0
        %v3948 = vmax.f32 %v3934, 0.0
        %v3949 = vmax.f32 %v3865, 0.0
        %v3950 = vmax.f32 %v3937, 0.0
        %v3951 = vmax.f32 %v3867, 0.0
        %v3952 = vmax.f32 %v3939, 0.0
        %v3965 = vrot.slane %v3941, 7
        %v3966 = vrot.slane %v3942, 7
        %v3967 = vrot.slane %v3943, 7
        %v3968 = vsel %vm2705, %v3965, %v3967
        %v3969 = vrot.slane %v3944, 7
        %v3970 = vsel %vm2705, %v3966, %v3969
        %v3971 = vrot.slane %v3945, 7
        %v3972 = vsel %vm2705, %v3967, %v3971
        %v3973 = vrot.slane %v3946, 7
        %v3974 = vsel %vm2705, %v3969, %v3973
        %v3975 = vrot.slane %v3947, 7
        %v3976 = vsel %vm2705, %v3971, %v3975
        %v3977 = vrot.slane %v3948, 7
        %v3978 = vsel %vm2705, %v3973, %v3977
        %v3979 = vrot.slane %v3949, 7
        %v3980 = vsel %vm2705, %v3975, %v3979
        %v3981 = vrot.slane %v3950, 7
        %v3982 = vsel %vm2705, %v3977, %v3981
        %v3983 = vrot.slane %v3951, 7
        %v3984 = vsel %vm2705, %v3979, %v3983
        %v3985 = vrot.slane %v3952, 7
        %v3986 = vsel %vm2705, %v3981, %v3985
        %v3999 = vsel %vm2705, 0.0, %v3965
        %v4000 = vsel %vm2705, 0.0, %v3966
        %v4001 = vsel %vm1899, %v3984, 0.0
        %v4002 = vsel %vm1899, %v3986, 0.0
        %v4003 = vmul.f32 %v3999, %v2297
        %v4004 = vmul.f32 %v4000, %v2297
        %v4005 = vmul.f32 %v3968, %v2302
        %v4006 = vmul.f32 %v3970, %v2302
        %v4007 = vmul.f32 %v3972, %v2307
        %v4008 = vmul.f32 %v3974, %v2307
        %v4009 = vmul.f32 %v3976, %v2312
        %v4010 = vmul.f32 %v3978, %v2312
        %v4011 = vmul.f32 %v3980, %v2317
        %v4012 = vmul.f32 %v3982, %v2317
        %v4013 = vmul.f32 %v4001, %v2322
        %v4014 = vmul.f32 %v4002, %v2322
        %v4015 = vld [vmem:[%s5] sm:$0xff]
        %v4016 = vld [vmem:[%s5 + $0x8] sm:$0xff]
        %v4017 = vld [vmem:[%s5 + $0x10] sm:$0xff]
        %v4018 = vld [vmem:[%s5 + $0x18] sm:$0x1]
        %v4020 = vsel %vm2527, %v4015, 0
        %v4023 = vsel %vm2527, %v4016, 0
        %v4026 = vsel %vm2527, %v4017, 0
        %v4029 = vsel %vm2527, %v4018, 0
        %4031 = vmatpush.msra.mxu0 0.0
        %4032 = vmatpush.msra.mxu0 0.0
        %4033 = vmatpush.msra.mxu0 0.0
        %4034 = vmatpush.msra.mxu0 0.0
        %4035 = vmatpush.msra.mxu0 0.0
        %4036 = vmatpush.msra.mxu0 0.0
        %4037 = vmatpush.msra.mxu0 0.0
        %4038 = vmatpush.msra.mxu0 0.0
        %4039 = vmatpush.msra.mxu0 %v2732
        %4040 = vmatpush.msra.mxu0 %v4013
        %4041 = vmatpush.msra.mxu0 %v4011
        %4042 = vmatpush.msra.mxu0 %v4009
        %4043 = vmatpush.msra.mxu0 %v4007
        %4044 = vmatpush.msra.mxu0 %v4005
        %4045 = vmatpush.msra.mxu0 %v4003
        %4046 = vmatpush.msra.mxu0 %v2725
        %4047 = vmatmul.f32.gmra.mxu0 %v4020
        %v4048 = vpop.f32.mrf.mxu0
        %v4049 = vadd.f32 0.0, %v4048
        %4050 = vmatmul.f32.gmra.mxu0 %v4023
        %v4051 = vpop.f32.mrf.mxu0
        %v4052 = vadd.f32 0.0, %v4051
        %4053 = vmatmul.f32.gmra.mxu0 %v4026
        %v4054 = vpop.f32.mrf.mxu0
        %v4055 = vadd.f32 0.0, %v4054
        %4056 = vmatmul.f32.gmra.mxu0 %v4029
        %v4057 = vpop.f32.mrf.mxu0
        %v4058 = vadd.f32 0.0, %v4057
        %4059 = vdwg.mxu0
        %4060 = vmatpush.msra.mxu0 0.0
        %4061 = vmatpush.msra.mxu0 0.0
        %4062 = vmatpush.msra.mxu0 0.0
        %4063 = vmatpush.msra.mxu0 0.0
        %4064 = vmatpush.msra.mxu0 0.0
        %4065 = vmatpush.msra.mxu0 0.0
        %4066 = vmatpush.msra.mxu0 0.0
        %4067 = vmatpush.msra.mxu0 0.0
        %4068 = vmatpush.msra.mxu0 %v2732
        %4069 = vmatpush.msra.mxu0 %v4014
        %4070 = vmatpush.msra.mxu0 %v4012
        %4071 = vmatpush.msra.mxu0 %v4010
        %4072 = vmatpush.msra.mxu0 %v4008
        %4073 = vmatpush.msra.mxu0 %v4006
        %4074 = vmatpush.msra.mxu0 %v4004
        %4075 = vmatpush.msra.mxu0 %v2725
        %4076 = vmatmul.f32.gmra.mxu0 %v4020
        %v4077 = vpop.f32.mrf.mxu0
        %v4078 = vadd.f32 0.0, %v4077
        %4079 = vmatmul.f32.gmra.mxu0 %v4023
        %v4080 = vpop.f32.mrf.mxu0
        %v4081 = vadd.f32 0.0, %v4080
        %4082 = vmatmul.f32.gmra.mxu0 %v4026
        %v4083 = vpop.f32.mrf.mxu0
        %v4084 = vadd.f32 0.0, %v4083
        %4085 = vmatmul.f32.gmra.mxu0 %v4029
        %v4086 = vpop.f32.mrf.mxu0
        %v4087 = vadd.f32 0.0, %v4086
        %4088 = vdwg.mxu0
        %v4089 = vpack.c.bf16 %v4052, %v4049
        %v4090 = vpack.c.bf16 %v4081, %v4078
        %v4091 = vpack.c.bf16 %v4058, %v4055
        %v4092 = vpack.c.bf16 %v4087, %v4084
        %v4093 = vld [vmem:[%s43] sm:$0xf]
        %v4094 = vld [vmem:[%s43 + $0x4] sm:$0xf]
        %v4095 = vld [vmem:[%s43 + $0x8] sm:$0xf]
        %v4096 = vld [vmem:[%s43 + $0xc] sm:$0xf]
        %v4097 = vld [vmem:[%s43 + $0x10] sm:$0xf]
        %v4098 = vld [vmem:[%s43 + $0x14] sm:$0xf]
        %v4099 = vld [vmem:[%s43 + $0x18] sm:$0xf]
        %v4100 = vld [vmem:[%s43 + $0x1c] sm:$0xf]
        %v4101 = vld [vmem:[%s43 + $0x20] sm:$0xf]
        %v4102 = vld [vmem:[%s43 + $0x24] sm:$0xf]
        %v4103 = vld [vmem:[%s43 + $0x28] sm:$0xf]
        %v4104 = vld [vmem:[%s43 + $0x2c] sm:$0xf]
        %v4105 = vld [vmem:[%s43 + $0x30] sm:$0xf]
        %v4106 = vld [vmem:[%s43 + $0x34] sm:$0xf]
        %v4107 = vld [vmem:[%s43 + $0x38] sm:$0xf]
        %v4108 = vld [vmem:[%s43 + $0x3c] sm:$0xf]
        %v4109 = vld [vmem:[%s43 + $0x40] sm:$0xf]
        %v4110 = vld [vmem:[%s43 + $0x44] sm:$0xf]
        %v4111 = vld [vmem:[%s43 + $0x48] sm:$0xf]
        %v4112 = vld [vmem:[%s43 + $0x4c] sm:$0xf]
        %v4113 = vld [vmem:[%s43 + $0x50] sm:$0xf]
        %v4114 = vld [vmem:[%s43 + $0x54] sm:$0xf]
        %v4115 = vld [vmem:[%s43 + $0x58] sm:$0xf]
        %v4116 = vld [vmem:[%s43 + $0x5c] sm:$0xf]
        %v4117 = vld [vmem:[%s43 + $0x60] sm:$0xf]
        %v4118 = vld [vmem:[%s43 + $0x64] sm:$0xf]
        %v4119 = vld [vmem:[%s43 + $0x68] sm:$0xf]
        %v4120 = vld [vmem:[%s43 + $0x6c] sm:$0xf]
        %v4121 = vld [vmem:[%s43 + $0x70] sm:$0xf]
        %v4122 = vld [vmem:[%s43 + $0x74] sm:$0xf]
        %v4123 = vld [vmem:[%s43 + $0x78] sm:$0xf]
        %v4124 = vld [vmem:[%s43 + $0x7c] sm:$0xf]
        %v4125 = vld [vmem:[%s45] sm:$0x1]
        %v4127 = vperm.slane %v4125, 0
        %v4161 = vunpack.c.l.b16 %v4093
        %v4162 = vunpack.c.l.b16 %v4094
        %v4163 = vunpack.c.l.b16 %v4095
        %v4164 = vunpack.c.l.b16 %v4096
        %v4165 = vunpack.c.l.b16 %v4097
        %v4166 = vunpack.c.l.b16 %v4098
        %v4167 = vunpack.c.l.b16 %v4099
        %v4168 = vunpack.c.l.b16 %v4100
        %v4169 = vunpack.c.l.b16 %v4101
        %v4170 = vunpack.c.l.b16 %v4102
        %v4171 = vunpack.c.l.b16 %v4103
        %v4172 = vunpack.c.l.b16 %v4104
        %v4173 = vunpack.c.l.b16 %v4105
        %v4174 = vunpack.c.l.b16 %v4106
        %v4175 = vunpack.c.l.b16 %v4107
        %v4176 = vunpack.c.l.b16 %v4108
        %v4177 = vunpack.c.l.b16 %v4109
        %v4178 = vunpack.c.l.b16 %v4110
        %v4179 = vunpack.c.l.b16 %v4111
        %v4180 = vunpack.c.l.b16 %v4112
        %v4181 = vunpack.c.l.b16 %v4113
        %v4182 = vunpack.c.l.b16 %v4114
        %v4183 = vunpack.c.l.b16 %v4115
        %v4184 = vunpack.c.l.b16 %v4116
        %v4185 = vunpack.c.l.b16 %v4117
        %v4186 = vunpack.c.l.b16 %v4118
        %v4187 = vunpack.c.l.b16 %v4119
        %v4188 = vunpack.c.l.b16 %v4120
        %v4189 = vunpack.c.l.b16 %v4121
        %v4190 = vunpack.c.l.b16 %v4122
        %v4191 = vunpack.c.l.b16 %v4123
        %v4192 = vunpack.c.l.b16 %v4124
        %v4193 = vpack.c.b16 %v4162, %v4161
        %v4194 = vpack.c.b16 %v4164, %v4163
        %v4195 = vpack.c.b16 %v4166, %v4165
        %v4196 = vpack.c.b16 %v4168, %v4167
        %v4197 = vpack.c.b16 %v4170, %v4169
        %v4198 = vpack.c.b16 %v4172, %v4171
        %v4199 = vpack.c.b16 %v4174, %v4173
        %v4200 = vpack.c.b16 %v4176, %v4175
        %v4201 = vpack.c.b16 %v4178, %v4177
        %v4202 = vpack.c.b16 %v4180, %v4179
        %v4203 = vpack.c.b16 %v4182, %v4181
        %v4204 = vpack.c.b16 %v4184, %v4183
        %v4205 = vpack.c.b16 %v4186, %v4185
        %v4206 = vpack.c.b16 %v4188, %v4187
        %v4207 = vpack.c.b16 %v4190, %v4189
        %v4208 = vpack.c.b16 %v4192, %v4191
        %4225 = vmatpush.bf16.msra.mxu0 %v4200
        %4226 = vmatpush.bf16.msra.mxu0 %v4199
        %4227 = vmatpush.bf16.msra.mxu0 %v4198
        %4228 = vmatpush.bf16.msra.mxu0 %v4197
        %4229 = vmatpush.bf16.msra.mxu0 %v4196
        %4230 = vmatpush.bf16.msra.mxu0 %v4195
        %4231 = vmatpush.bf16.msra.mxu0 %v4194
        %4232 = vmatpush.bf16.msra.mxu0 %v4193
        %4233 = vmatmul.bf16.gmra.mxu0 %v4089
        %v4234 = vpop.f32.mrf.mxu0
        %v4235 = vadd.f32 %v4127, %v4234
        %v4236 = vpop.f32.mrf.mxu0
        %v4237 = vadd.f32 %v4127, %v4236
        %4238 = vmatmul.bf16.gmra.mxu0 %v4091
        %v4239 = vpop.f32.mrf.mxu0
        %v4240 = vadd.f32 %v4127, %v4239
        %v4241 = vpop.f32.mrf.mxu0
        %v4242 = vadd.f32 %v4127, %v4241
        %4243 = vdwg.mxu0
        %4244 = vmatpush.bf16.msra.mxu0 %v4208
        %4245 = vmatpush.bf16.msra.mxu0 %v4207
        %4246 = vmatpush.bf16.msra.mxu0 %v4206
        %4247 = vmatpush.bf16.msra.mxu0 %v4205
        %4248 = vmatpush.bf16.msra.mxu0 %v4204
        %4249 = vmatpush.bf16.msra.mxu0 %v4203
        %4250 = vmatpush.bf16.msra.mxu0 %v4202
        %4251 = vmatpush.bf16.msra.mxu0 %v4201
        %4252 = vmatmul.bf16.gmra.mxu0 %v4090
        %v4253 = vpop.f32.mrf.mxu0
        %v4254 = vadd.f32 %v4235, %v4253
        %v4255 = vpop.f32.mrf.mxu0
        %v4256 = vadd.f32 %v4237, %v4255
        %4257 = vmatmul.bf16.gmra.mxu0 %v4092
        %v4258 = vpop.f32.mrf.mxu0
        %v4259 = vadd.f32 %v4240, %v4258
        %v4260 = vpop.f32.mrf.mxu0
        %v4261 = vadd.f32 %v4242, %v4260
        %4262 = vdwg.mxu0
        %v4263 = vmax.f32 %v4254, 0.0
        %v4264 = vmax.f32 %v4256, 0.0
        %v4265 = vmax.f32 %v4259, 0.0
        %v4266 = vmax.f32 %v4261, 0.0
        %4268 = vset.pattern.permute.xlu0 0
        %4269 = vperm.xlu0 %4268, %v2177
        %v4270 = vpop.permute.xlu0 %4269
        %4273 = vset.pattern.permute.xlu0 0
        %4274 = vperm.xlu0 %4273, %v2178
        %v4275 = vpop.permute.xlu0 %4274
        %4278 = vset.pattern.permute.xlu0 0
        %4279 = vperm.xlu0 %4278, %v2179
        %v4280 = vpop.permute.xlu0 %4279
        %4283 = vset.pattern.permute.xlu0 0
        %4284 = vperm.xlu0 %4283, %v2180
        %v4285 = vpop.permute.xlu0 %4284
        %v4287 = vmul.f32 %v4263, %v4270
        %v4288 = vmul.f32 %v4264, %v4275
        %v4289 = vmul.f32 %v4265, %v4280
        %v4290 = vmul.f32 %v4266, %v4285
        %v4293 = vrot.slane %v4287, 1
        %v4294 = vrot.slane %v4288, 1
        %v4295 = vsel %vm1899, %v4293, %v4294
        %4296 = vrot.lane.b32.xlu0 %v4295, 32
        %v4297 = vpop.permute.xlu0 %4296
        %4298 = vrot.lane.b32.xlu0 %v4294, 32
        %v4299 = vpop.permute.xlu0 %4298
        %v4302 = vrot.slane %v4287, 2
        %v4303 = vrot.slane %v4288, 2
        %v4304 = vsel %vm1807, %v4302, %v4303
        %4305 = vrot.lane.b32.xlu0 %v4304, 64
        %v4306 = vpop.permute.xlu0 %4305
        %4307 = vrot.lane.b32.xlu0 %v4303, 64
        %v4308 = vpop.permute.xlu0 %4307
        %v4312 = vrot.slane %v4287, 5
        %v4313 = vrot.slane %v4288, 5
        %v4314 = vsel %vm1731, %v4312, %v4313
        %v4315 = vrot.slane %v4289, 5
        %v4316 = vsel %vm1731, %v4313, %v4315
        %4317 = vrot.lane.b32.xlu0 %v4314, 96
        %v4318 = vpop.permute.xlu0 %4317
        %4319 = vrot.lane.b32.xlu0 %v4316, 96
        %v4320 = vpop.permute.xlu0 %4319
        %vm4323 = vcmask 1041408
        %v4324 = vrot.slane %v4287, 6
        %v4325 = vrot.slane %v4288, 6
        %v4326 = vsel %vm4323, %v4324, %v4325
        %v4327 = vrot.slane %v4289, 6
        %v4328 = vsel %vm4323, %v4325, %v4327
        %v4331 = vrot.slane %v4287, 7
        %v4332 = vrot.slane %v4288, 7
        %v4333 = vsel %vm2705, %v4331, %v4332
        %v4334 = vrot.slane %v4289, 7
        %v4335 = vsel %vm2705, %v4332, %v4334
        %4336 = vrot.lane.b32.xlu0 %v4333, 32
        %v4337 = vpop.permute.xlu0 %4336
        %4338 = vrot.lane.b32.xlu0 %v4335, 32
        %v4339 = vpop.permute.xlu0 %4338
        %v4342 = vrot.slane %v4289, 2
        %v4343 = vsel %vm1807, %v4303, %v4342
        %4344 = vrot.lane.b32.xlu0 %v4343, 64
        %v4345 = vpop.permute.xlu0 %4344
        %4346 = vrot.lane.b32.xlu0 %v4342, 64
        %v4347 = vpop.permute.xlu0 %4346
        %v4350 = vrot.slane %v4288, 3
        %v4351 = vrot.slane %v4289, 3
        %v4352 = vsel %vm2083, %v4350, %v4351
        %4353 = vrot.lane.b32.xlu0 %v4352, 96
        %v4354 = vpop.permute.xlu0 %4353
        %4355 = vrot.lane.b32.xlu0 %v4351, 96
        %v4356 = vpop.permute.xlu0 %4355
        %vm4360 = vcmask 1043456
        %v4361 = vrot.slane %v4288, 4
        %v4362 = vrot.slane %v4289, 4
        %v4363 = vsel %vm4360, %v4361, %v4362
        %v4364 = vrot.slane %v4290, 4
        %v4365 = vsel %vm4360, %v4362, %v4364
        %v4368 = vsel %vm1528, %v4287, %v4297
        %v4369 = vsel %vm1528, %v4288, %v4299
        %v4370 = vsel %vm2527, %v4368, %v4306
        %v4371 = vsel %vm2527, %v4369, %v4308
        %v4372 = vsel %vm2239, %v4370, %v4318
        %v4373 = vsel %vm2239, %v4371, %v4320
        %v4374 = vsel %vm1528, %v4326, %v4337
        %v4375 = vsel %vm1528, %v4328, %v4339
        %v4376 = vsel %vm2527, %v4374, %v4345
        %v4377 = vsel %vm2527, %v4375, %v4347
        %v4378 = vsel %vm2239, %v4376, %v4354
        %v4379 = vsel %vm2239, %v4377, %v4356
        %v4380 = vpack.c.bf16 %v4373, %v4372
        %v4381 = vpack.c.bf16 %v4379, %v4378
        %v4382 = vpack.c.bf16 %v4365, %v4363
        %v4383 = vld [vmem:[%s47] sm:$0xff]
        %v4384 = vld [vmem:[%s47 + $0x8] sm:$0xff]
        %v4385 = vld [vmem:[%s47 + $0x10] sm:$0xff]
        %v4386 = vld [vmem:[%s47 + $0x18] sm:$0xff]
        %v4387 = vld [vmem:[%s47 + $0x20] sm:$0xff]
        %v4388 = vld [vmem:[%s47 + $0x28] sm:$0xff]
        %v4389 = vld [vmem:[%s47 + $0x30] sm:$0xff]
        %v4390 = vld [vmem:[%s47 + $0x38] sm:$0xff]
        %v4391 = vld [vmem:[%s47 + $0x40] sm:$0xff]
        %v4392 = vld [vmem:[%s47 + $0x48] sm:$0xff]
        %v4393 = vld [vmem:[%s47 + $0x50] sm:$0xff]
        %v4394 = vld [vmem:[%s47 + $0x58] sm:$0xff]
        %v4395 = vld [vmem:[%s47 + $0x60] sm:$0xff]
        %v4396 = vld [vmem:[%s47 + $0x68] sm:$0xff]
        %v4397 = vld [vmem:[%s47 + $0x70] sm:$0xff]
        %v4398 = vld [vmem:[%s47 + $0x78] sm:$0xff]
        %v4399 = vld [vmem:[%s47 + $0x80] sm:$0xff]
        %v4400 = vld [vmem:[%s47 + $0x88] sm:$0xff]
        %v4401 = vld [vmem:[%s47 + $0x90] sm:$0xff]
        %v4402 = vld [vmem:[%s47 + $0x98] sm:$0xff]
        %v4403 = vld [vmem:[%s47 + $0xa0] sm:$0xff]
        %v4404 = vld [vmem:[%s47 + $0xa8] sm:$0xff]
        %v4405 = vld [vmem:[%s47 + $0xb0] sm:$0xff]
        %v4406 = vld [vmem:[%s47 + $0xb8] sm:$0xff]
        %v4407 = vld [vmem:[%s47 + $0xc0] sm:$0xff]
        %v4408 = vld [vmem:[%s47 + $0xc8] sm:$0xff]
        %v4409 = vld [vmem:[%s47 + $0xd0] sm:$0xff]
        %v4410 = vld [vmem:[%s47 + $0xd8] sm:$0xff]
        %v4411 = vld [vmem:[%s47 + $0xe0] sm:$0xff]
        %v4412 = vld [vmem:[%s47 + $0xe8] sm:$0xff]
        %v4413 = vld [vmem:[%s47 + $0xf0] sm:$0xff]
        %v4414 = vld [vmem:[%s47 + $0xf8] sm:$0xff]
        %v4415 = vld [vmem:[%s47 + $0x100] sm:$0xff]
        %v4416 = vld [vmem:[%s47 + $0x108] sm:$0xff]
        %v4417 = vld [vmem:[%s47 + $0x110] sm:$0xff]
        %v4418 = vld [vmem:[%s47 + $0x118] sm:$0xff]
        %v4419 = vld [vmem:[%s49] sm:$0x3]
        %v4421 = vperm.slane %v4419, 0
        %v4422 = vperm.slane %v4419, 1
        %v4461 = vunpack.c.l.b16 %v4383
        %v4462 = vunpack.c.h.b16 %v4383
        %v4463 = vunpack.c.l.b16 %v4384
        %v4464 = vunpack.c.h.b16 %v4384
        %v4465 = vunpack.c.l.b16 %v4385
        %v4466 = vunpack.c.h.b16 %v4385
        %v4467 = vunpack.c.l.b16 %v4386
        %v4468 = vunpack.c.h.b16 %v4386
        %v4469 = vunpack.c.l.b16 %v4387
        %v4470 = vunpack.c.h.b16 %v4387
        %v4471 = vunpack.c.l.b16 %v4388
        %v4472 = vunpack.c.h.b16 %v4388
        %v4473 = vunpack.c.l.b16 %v4389
        %v4474 = vunpack.c.h.b16 %v4389
        %v4475 = vunpack.c.l.b16 %v4390
        %v4476 = vunpack.c.h.b16 %v4390
        %v4477 = vunpack.c.l.b16 %v4391
        %v4478 = vunpack.c.h.b16 %v4391
        %v4479 = vunpack.c.l.b16 %v4392
        %v4480 = vunpack.c.h.b16 %v4392
        %v4481 = vunpack.c.l.b16 %v4393
        %v4482 = vunpack.c.h.b16 %v4393
        %v4483 = vunpack.c.l.b16 %v4394
        %v4484 = vunpack.c.h.b16 %v4394
        %v4485 = vunpack.c.l.b16 %v4395
        %v4486 = vunpack.c.h.b16 %v4395
        %v4487 = vunpack.c.l.b16 %v4396
        %v4488 = vunpack.c.h.b16 %v4396
        %v4489 = vunpack.c.l.b16 %v4397
        %v4490 = vunpack.c.h.b16 %v4397
        %v4491 = vunpack.c.l.b16 %v4398
        %v4492 = vunpack.c.h.b16 %v4398
        %v4493 = vunpack.c.l.b16 %v4399
        %v4494 = vunpack.c.h.b16 %v4399
        %v4495 = vunpack.c.l.b16 %v4400
        %v4496 = vunpack.c.h.b16 %v4400
        %v4497 = vunpack.c.l.b16 %v4401
        %v4498 = vunpack.c.h.b16 %v4401
        %v4499 = vunpack.c.l.b16 %v4402
        %v4500 = vunpack.c.h.b16 %v4402
        %v4501 = vunpack.c.l.b16 %v4403
        %v4502 = vunpack.c.h.b16 %v4403
        %v4503 = vunpack.c.l.b16 %v4404
        %v4504 = vunpack.c.h.b16 %v4404
        %v4505 = vunpack.c.l.b16 %v4405
        %v4506 = vunpack.c.h.b16 %v4405
        %v4507 = vunpack.c.l.b16 %v4406
        %v4508 = vunpack.c.h.b16 %v4406
        %v4509 = vunpack.c.l.b16 %v4407
        %v4510 = vunpack.c.h.b16 %v4407
        %v4511 = vunpack.c.l.b16 %v4408
        %v4512 = vunpack.c.h.b16 %v4408
        %v4513 = vunpack.c.l.b16 %v4409
        %v4514 = vunpack.c.h.b16 %v4409
        %v4515 = vunpack.c.l.b16 %v4410
        %v4516 = vunpack.c.h.b16 %v4410
        %v4517 = vunpack.c.l.b16 %v4411
        %v4518 = vunpack.c.h.b16 %v4411
        %v4519 = vunpack.c.l.b16 %v4412
        %v4520 = vunpack.c.h.b16 %v4412
        %v4521 = vunpack.c.l.b16 %v4413
        %v4522 = vunpack.c.h.b16 %v4413
        %v4523 = vunpack.c.l.b16 %v4414
        %v4524 = vunpack.c.h.b16 %v4414
        %v4525 = vunpack.c.l.b16 %v4415
        %v4526 = vunpack.c.h.b16 %v4415
        %v4527 = vunpack.c.l.b16 %v4416
        %v4528 = vunpack.c.h.b16 %v4416
        %v4529 = vunpack.c.l.b16 %v4417
        %v4530 = vunpack.c.h.b16 %v4417
        %v4531 = vunpack.c.l.b16 %v4418
        %v4532 = vunpack.c.h.b16 %v4418
        %v4533 = vpack.c.b16 %v4463, %v4461
        %v4534 = vpack.c.b16 %v4464, %v4462
        %v4535 = vpack.c.b16 %v4467, %v4465
        %v4536 = vpack.c.b16 %v4468, %v4466
        %v4537 = vpack.c.b16 %v4471, %v4469
        %v4538 = vpack.c.b16 %v4472, %v4470
        %v4539 = vpack.c.b16 %v4475, %v4473
        %v4540 = vpack.c.b16 %v4476, %v4474
        %v4541 = vpack.c.b16 %v4479, %v4477
        %v4542 = vpack.c.b16 %v4480, %v4478
        %v4543 = vpack.c.b16 %v4483, %v4481
        %v4544 = vpack.c.b16 %v4484, %v4482
        %v4545 = vpack.c.b16 %v4487, %v4485
        %v4546 = vpack.c.b16 %v4488, %v4486
        %v4547 = vpack.c.b16 %v4491, %v4489
        %v4548 = vpack.c.b16 %v4492, %v4490
        %v4549 = vpack.c.b16 %v4495, %v4493
        %v4550 = vpack.c.b16 %v4496, %v4494
        %v4551 = vpack.c.b16 %v4499, %v4497
        %v4552 = vpack.c.b16 %v4500, %v4498
        %v4553 = vpack.c.b16 %v4503, %v4501
        %v4554 = vpack.c.b16 %v4504, %v4502
        %v4555 = vpack.c.b16 %v4507, %v4505
        %v4556 = vpack.c.b16 %v4508, %v4506
        %v4557 = vpack.c.b16 %v4511, %v4509
        %v4558 = vpack.c.b16 %v4512, %v4510
        %v4559 = vpack.c.b16 %v4515, %v4513
        %v4560 = vpack.c.b16 %v4516, %v4514
        %v4561 = vpack.c.b16 %v4519, %v4517
        %v4562 = vpack.c.b16 %v4520, %v4518
        %v4563 = vpack.c.b16 %v4523, %v4521
        %v4564 = vpack.c.b16 %v4524, %v4522
        %v4565 = vpack.c.b16 %v4527, %v4525
        %v4566 = vpack.c.b16 %v4528, %v4526
        %v4567 = vpack.c.b16 %v4531, %v4529
        %v4568 = vpack.c.b16 %v4532, %v4530
        %v4606 = vsel %vm1528, %v4382, 0
        %4608 = vmatpush.bf16.msra.mxu0 %v4547
        %4609 = vmatpush.bf16.msra.mxu0 %v4545
        %4610 = vmatpush.bf16.msra.mxu0 %v4543
        %4611 = vmatpush.bf16.msra.mxu0 %v4541
        %4612 = vmatpush.bf16.msra.mxu0 %v4539
        %4613 = vmatpush.bf16.msra.mxu0 %v4537
        %4614 = vmatpush.bf16.msra.mxu0 %v4535
        %4615 = vmatpush.bf16.msra.mxu0 %v4533
        %4616 = vmatmul.bf16.gmra.mxu0 %v4380
        %v4617 = vpop.f32.mrf.mxu0
        %v4618 = vadd.f32 %v4421, %v4617
        %v4619 = vpop.f32.mrf.mxu0
        %v4620 = vadd.f32 %v4421, %v4619
        %4621 = vdwg.mxu0
        %4622 = vmatpush.bf16.msra.mxu0 %v4563
        %4623 = vmatpush.bf16.msra.mxu0 %v4561
        %4624 = vmatpush.bf16.msra.mxu0 %v4559
        %4625 = vmatpush.bf16.msra.mxu0 %v4557
        %4626 = vmatpush.bf16.msra.mxu0 %v4555
        %4627 = vmatpush.bf16.msra.mxu0 %v4553
        %4628 = vmatpush.bf16.msra.mxu0 %v4551
        %4629 = vmatpush.bf16.msra.mxu0 %v4549
        %4630 = vmatmul.bf16.gmra.mxu0 %v4381
        %v4631 = vpop.f32.mrf.mxu0
        %v4632 = vadd.f32 %v4618, %v4631
        %v4633 = vpop.f32.mrf.mxu0
        %v4634 = vadd.f32 %v4620, %v4633
        %4635 = vdwg.mxu0
        %4636 = vmatpush.bf16.msra.mxu0 0
        %4637 = vmatpush.bf16.msra.mxu0 0
        %4638 = vmatpush.bf16.msra.mxu0 0
        %4639 = vmatpush.bf16.msra.mxu0 0
        %4640 = vmatpush.bf16.msra.mxu0 0
        %4641 = vmatpush.bf16.msra.mxu0 0
        %4642 = vmatpush.bf16.msra.mxu0 %v4567
        %4643 = vmatpush.bf16.msra.mxu0 %v4565
        %4644 = vmatmul.bf16.gmra.mxu0 %v4606
        %v4645 = vpop.f32.mrf.mxu0
        %v4646 = vadd.f32 %v4632, %v4645
        %v4647 = vpop.f32.mrf.mxu0
        %v4648 = vadd.f32 %v4634, %v4647
        %4649 = vdwg.mxu0
        %4650 = vmatpush.bf16.msra.mxu0 %v4548
        %4651 = vmatpush.bf16.msra.mxu0 %v4546
        %4652 = vmatpush.bf16.msra.mxu0 %v4544
        %4653 = vmatpush.bf16.msra.mxu0 %v4542
        %4654 = vmatpush.bf16.msra.mxu0 %v4540
        %4655 = vmatpush.bf16.msra.mxu0 %v4538
        %4656 = vmatpush.bf16.msra.mxu0 %v4536
        %4657 = vmatpush.bf16.msra.mxu0 %v4534
        %4658 = vmatmul.bf16.gmra.mxu0 %v4380
        %v4659 = vpop.f32.mrf.mxu0
        %v4660 = vadd.f32 %v4422, %v4659
        %v4661 = vpop.f32.mrf.mxu0
        %v4662 = vadd.f32 %v4422, %v4661
        %4663 = vdwg.mxu0
        %4664 = vmatpush.bf16.msra.mxu0 %v4564
        %4665 = vmatpush.bf16.msra.mxu0 %v4562
        %4666 = vmatpush.bf16.msra.mxu0 %v4560
        %4667 = vmatpush.bf16.msra.mxu0 %v4558
        %4668 = vmatpush.bf16.msra.mxu0 %v4556
        %4669 = vmatpush.bf16.msra.mxu0 %v4554
        %4670 = vmatpush.bf16.msra.mxu0 %v4552
        %4671 = vmatpush.bf16.msra.mxu0 %v4550
        %4672 = vmatmul.bf16.gmra.mxu0 %v4381
        %v4673 = vpop.f32.mrf.mxu0
        %v4674 = vadd.f32 %v4660, %v4673
        %v4675 = vpop.f32.mrf.mxu0
        %v4676 = vadd.f32 %v4662, %v4675
        %4677 = vdwg.mxu0
        %4678 = vmatpush.bf16.msra.mxu0 0
        %4679 = vmatpush.bf16.msra.mxu0 0
        %4680 = vmatpush.bf16.msra.mxu0 0
        %4681 = vmatpush.bf16.msra.mxu0 0
        %4682 = vmatpush.bf16.msra.mxu0 0
        %4683 = vmatpush.bf16.msra.mxu0 0
        %4684 = vmatpush.bf16.msra.mxu0 %v4568
        %4685 = vmatpush.bf16.msra.mxu0 %v4566
        %4686 = vmatmul.bf16.gmra.mxu0 %v4606
        %v4687 = vpop.f32.mrf.mxu0
        %v4688 = vadd.f32 %v4674, %v4687
        %v4689 = vpop.f32.mrf.mxu0
        %v4690 = vadd.f32 %v4676, %v4689
        %4691 = vdwg.mxu0
        %v4692 = vmax.f32 %v4646, 0.0
        %v4693 = vmax.f32 %v4688, 0.0
        %v4694 = vmax.f32 %v4648, 0.0
        %v4695 = vmax.f32 %v4690, 0.0
        %v4700 = vrot.slane %v4692, 2
        %v4701 = vrot.slane %v4693, 2
        %v4702 = vrot.slane %v4694, 2
        %v4703 = vsel %vm1807, %v4700, %v4702
        %v4704 = vrot.slane %v4695, 2
        %v4705 = vsel %vm1807, %v4701, %v4704
        %v4712 = vsel %vm1807, 0.0, %v4700
        %v4713 = vsel %vm1807, 0.0, %v4701
        %v4714 = vsel %vm1731, %v4702, 0.0
        %v4715 = vsel %vm1731, %v4704, 0.0
        %v4716 = vmul.f32 %v4712, %v4270
        %v4717 = vmul.f32 %v4713, %v4270
        %v4718 = vmul.f32 %v4703, %v4275
        %v4719 = vmul.f32 %v4705, %v4275
        %v4720 = vmul.f32 %v4714, %v4280
        %v4721 = vmul.f32 %v4715, %v4280
        %v4722 = vmul.f32 %v4285, 0.0
        %v4723 = vadd.f32 %v4716, %v4049
        %v4724 = vadd.f32 %v4717, %v4078
        %v4725 = vadd.f32 %v4718, %v4052
        %v4726 = vadd.f32 %v4719, %v4081
        %v4727 = vadd.f32 %v4720, %v4055
        %v4728 = vadd.f32 %v4721, %v4084
        %v4729 = vadd.f32 %v4722, %v4058
        %v4730 = vadd.f32 %v4722, %v4087
        %v4731 = vpack.c.bf16 %v4725, %v4723
        %v4732 = vpack.c.bf16 %v4726, %v4724
        %v4733 = vpack.c.bf16 %v4729, %v4727
        %v4734 = vpack.c.bf16 %v4730, %v4728
        %v4735 = vld [vmem:[%s51] sm:$0xf]
        %v4736 = vld [vmem:[%s51 + $0x4] sm:$0xf]
        %v4737 = vld [vmem:[%s51 + $0x8] sm:$0xf]
        %v4738 = vld [vmem:[%s51 + $0xc] sm:$0xf]
        %v4739 = vld [vmem:[%s51 + $0x10] sm:$0xf]
        %v4740 = vld [vmem:[%s51 + $0x14] sm:$0xf]
        %v4741 = vld [vmem:[%s51 + $0x18] sm:$0xf]
        %v4742 = vld [vmem:[%s51 + $0x1c] sm:$0xf]
        %v4743 = vld [vmem:[%s51 + $0x20] sm:$0xf]
        %v4744 = vld [vmem:[%s51 + $0x24] sm:$0xf]
        %v4745 = vld [vmem:[%s51 + $0x28] sm:$0xf]
        %v4746 = vld [vmem:[%s51 + $0x2c] sm:$0xf]
        %v4747 = vld [vmem:[%s51 + $0x30] sm:$0xf]
        %v4748 = vld [vmem:[%s51 + $0x34] sm:$0xf]
        %v4749 = vld [vmem:[%s51 + $0x38] sm:$0xf]
        %v4750 = vld [vmem:[%s51 + $0x3c] sm:$0xf]
        %v4751 = vld [vmem:[%s51 + $0x40] sm:$0xf]
        %v4752 = vld [vmem:[%s51 + $0x44] sm:$0xf]
        %v4753 = vld [vmem:[%s51 + $0x48] sm:$0xf]
        %v4754 = vld [vmem:[%s51 + $0x4c] sm:$0xf]
        %v4755 = vld [vmem:[%s51 + $0x50] sm:$0xf]
        %v4756 = vld [vmem:[%s51 + $0x54] sm:$0xf]
        %v4757 = vld [vmem:[%s51 + $0x58] sm:$0xf]
        %v4758 = vld [vmem:[%s51 + $0x5c] sm:$0xf]
        %v4759 = vld [vmem:[%s51 + $0x60] sm:$0xf]
        %v4760 = vld [vmem:[%s51 + $0x64] sm:$0xf]
        %v4761 = vld [vmem:[%s51 + $0x68] sm:$0xf]
        %v4762 = vld [vmem:[%s51 + $0x6c] sm:$0xf]
        %v4763 = vld [vmem:[%s51 + $0x70] sm:$0xf]
        %v4764 = vld [vmem:[%s51 + $0x74] sm:$0xf]
        %v4765 = vld [vmem:[%s51 + $0x78] sm:$0xf]
        %v4766 = vld [vmem:[%s51 + $0x7c] sm:$0xf]
        %v4767 = vld [vmem:[%s53] sm:$0x1]
        %v4769 = vperm.slane %v4767, 0
        %v4803 = vunpack.c.l.b16 %v4735
        %v4804 = vunpack.c.l.b16 %v4736
        %v4805 = vunpack.c.l.b16 %v4737
        %v4806 = vunpack.c.l.b16 %v4738
        %v4807 = vunpack.c.l.b16 %v4739
        %v4808 = vunpack.c.l.b16 %v4740
        %v4809 = vunpack.c.l.b16 %v4741
        %v4810 = vunpack.c.l.b16 %v4742
        %v4811 = vunpack.c.l.b16 %v4743
        %v4812 = vunpack.c.l.b16 %v4744
        %v4813 = vunpack.c.l.b16 %v4745
        %v4814 = vunpack.c.l.b16 %v4746
        %v4815 = vunpack.c.l.b16 %v4747
        %v4816 = vunpack.c.l.b16 %v4748
        %v4817 = vunpack.c.l.b16 %v4749
        %v4818 = vunpack.c.l.b16 %v4750
        %v4819 = vunpack.c.l.b16 %v4751
        %v4820 = vunpack.c.l.b16 %v4752
        %v4821 = vunpack.c.l.b16 %v4753
        %v4822 = vunpack.c.l.b16 %v4754
        %v4823 = vunpack.c.l.b16 %v4755
        %v4824 = vunpack.c.l.b16 %v4756
        %v4825 = vunpack.c.l.b16 %v4757
        %v4826 = vunpack.c.l.b16 %v4758
        %v4827 = vunpack.c.l.b16 %v4759
        %v4828 = vunpack.c.l.b16 %v4760
        %v4829 = vunpack.c.l.b16 %v4761
        %v4830 = vunpack.c.l.b16 %v4762
        %v4831 = vunpack.c.l.b16 %v4763
        %v4832 = vunpack.c.l.b16 %v4764
        %v4833 = vunpack.c.l.b16 %v4765
        %v4834 = vunpack.c.l.b16 %v4766
        %v4835 = vpack.c.b16 %v4804, %v4803
        %v4836 = vpack.c.b16 %v4806, %v4805
        %v4837 = vpack.c.b16 %v4808, %v4807
        %v4838 = vpack.c.b16 %v4810, %v4809
        %v4839 = vpack.c.b16 %v4812, %v4811
        %v4840 = vpack.c.b16 %v4814, %v4813
        %v4841 = vpack.c.b16 %v4816, %v4815
        %v4842 = vpack.c.b16 %v4818, %v4817
        %v4843 = vpack.c.b16 %v4820, %v4819
        %v4844 = vpack.c.b16 %v4822, %v4821
        %v4845 = vpack.c.b16 %v4824, %v4823
        %v4846 = vpack.c.b16 %v4826, %v4825
        %v4847 = vpack.c.b16 %v4828, %v4827
        %v4848 = vpack.c.b16 %v4830, %v4829
        %v4849 = vpack.c.b16 %v4832, %v4831
        %v4850 = vpack.c.b16 %v4834, %v4833
        %4867 = vmatpush.bf16.msra.mxu0 %v4842
        %4868 = vmatpush.bf16.msra.mxu0 %v4841
        %4869 = vmatpush.bf16.msra.mxu0 %v4840
        %4870 = vmatpush.bf16.msra.mxu0 %v4839
        %4871 = vmatpush.bf16.msra.mxu0 %v4838
        %4872 = vmatpush.bf16.msra.mxu0 %v4837
        %4873 = vmatpush.bf16.msra.mxu0 %v4836
        %4874 = vmatpush.bf16.msra.mxu0 %v4835
        %4875 = vmatmul.bf16.gmra.mxu0 %v4731
        %v4876 = vpop.f32.mrf.mxu0
        %v4877 = vadd.f32 %v4769, %v4876
        %v4878 = vpop.f32.mrf.mxu0
        %v4879 = vadd.f32 %v4769, %v4878
        %4880 = vmatmul.bf16.gmra.mxu0 %v4733
        %v4881 = vpop.f32.mrf.mxu0
        %v4882 = vadd.f32 %v4769, %v4881
        %v4883 = vpop.f32.mrf.mxu0
        %v4884 = vadd.f32 %v4769, %v4883
        %4885 = vdwg.mxu0
        %4886 = vmatpush.bf16.msra.mxu0 %v4850
        %4887 = vmatpush.bf16.msra.mxu0 %v4849
        %4888 = vmatpush.bf16.msra.mxu0 %v4848
        %4889 = vmatpush.bf16.msra.mxu0 %v4847
        %4890 = vmatpush.bf16.msra.mxu0 %v4846
        %4891 = vmatpush.bf16.msra.mxu0 %v4845
        %4892 = vmatpush.bf16.msra.mxu0 %v4844
        %4893 = vmatpush.bf16.msra.mxu0 %v4843
        %4894 = vmatmul.bf16.gmra.mxu0 %v4732
        %v4895 = vpop.f32.mrf.mxu0
        %v4896 = vadd.f32 %v4877, %v4895
        %v4897 = vpop.f32.mrf.mxu0
        %v4898 = vadd.f32 %v4879, %v4897
        %4899 = vmatmul.bf16.gmra.mxu0 %v4734
        %v4900 = vpop.f32.mrf.mxu0
        %v4901 = vadd.f32 %v4882, %v4900
        %v4902 = vpop.f32.mrf.mxu0
        %v4903 = vadd.f32 %v4884, %v4902
        %4904 = vdwg.mxu0
        %v4905 = vmax.f32 %v4896, 0.0
        %v4906 = vmax.f32 %v4898, 0.0
        %v4907 = vmax.f32 %v4901, 0.0
        %v4908 = vmax.f32 %v4903, 0.0
        %v4909 = vmul.f32 %v4905, %v4270
        %v4910 = vmul.f32 %v4906, %v4275
        %v4911 = vmul.f32 %v4907, %v4280
        %v4912 = vmul.f32 %v4908, %v4285
        %v4915 = vrot.slane %v4909, 1
        %v4916 = vrot.slane %v4910, 1
        %v4917 = vsel %vm1899, %v4915, %v4916
        %4918 = vrot.lane.b32.xlu0 %v4917, 48
        %v4919 = vpop.permute.xlu0 %4918
        %4920 = vrot.lane.b32.xlu0 %v4916, 48
        %v4921 = vpop.permute.xlu0 %4920
        %v4924 = vrot.slane %v4909, 2
        %v4925 = vrot.slane %v4910, 2
        %v4926 = vsel %vm1807, %v4924, %v4925
        %4927 = vrot.lane.b32.xlu0 %v4926, 96
        %v4928 = vpop.permute.xlu0 %4927
        %4929 = vrot.lane.b32.xlu0 %v4925, 96
        %v4930 = vpop.permute.xlu0 %4929
        %v4934 = vrot.slane %v4909, 5
        %v4935 = vrot.slane %v4910, 5
        %v4936 = vsel %vm1731, %v4934, %v4935
        %v4937 = vrot.slane %v4911, 5
        %v4938 = vsel %vm1731, %v4935, %v4937
        %4939 = vrot.lane.b32.xlu0 %v4936, 16
        %v4940 = vpop.permute.xlu0 %4939
        %4941 = vrot.lane.b32.xlu0 %v4938, 16
        %v4942 = vpop.permute.xlu0 %4941
        %v4945 = vrot.slane %v4909, 6
        %v4946 = vrot.slane %v4910, 6
        %v4947 = vsel %vm4323, %v4945, %v4946
        %v4948 = vrot.slane %v4911, 6
        %v4949 = vsel %vm4323, %v4946, %v4948
        %4950 = vrot.lane.b32.xlu0 %v4947, 64
        %v4951 = vpop.permute.xlu0 %4950
        %4952 = vrot.lane.b32.xlu0 %v4949, 64
        %v4953 = vpop.permute.xlu0 %4952
        %v4956 = vrot.slane %v4909, 7
        %v4957 = vrot.slane %v4910, 7
        %v4958 = vsel %vm2705, %v4956, %v4957
        %v4959 = vrot.slane %v4911, 7
        %v4960 = vsel %vm2705, %v4957, %v4959
        %4961 = vrot.lane.b32.xlu0 %v4958, 112
        %v4962 = vpop.permute.xlu0 %4961
        %4963 = vrot.lane.b32.xlu0 %v4960, 112
        %v4964 = vpop.permute.xlu0 %4963
        %v4967 = vrot.slane %v4911, 2
        %v4968 = vsel %vm1807, %v4925, %v4967
        %4969 = vrot.lane.b32.xlu0 %v4968, 32
        %v4970 = vpop.permute.xlu0 %4969
        %4971 = vrot.lane.b32.xlu0 %v4967, 32
        %v4972 = vpop.permute.xlu0 %4971
        %v4975 = vrot.slane %v4910, 3
        %v4976 = vrot.slane %v4911, 3
        %v4977 = vsel %vm2083, %v4975, %v4976
        %4978 = vrot.lane.b32.xlu0 %v4977, 80
        %v4979 = vpop.permute.xlu0 %4978
        %4980 = vrot.lane.b32.xlu0 %v4976, 80
        %v4981 = vpop.permute.xlu0 %4980
        %v4985 = vrot.slane %v4910, 4
        %v4986 = vrot.slane %v4911, 4
        %v4987 = vsel %vm4360, %v4985, %v4986
        %v4988 = vrot.slane %v4912, 4
        %v4989 = vsel %vm4360, %v4986, %v4988
        %v4992 = vsel %vm2520, %v4909, %v4919
        %v4993 = vsel %vm2520, %v4910, %v4921
        %v4994 = vsel %vm2239, %v4992, %v4928
        %v4995 = vsel %vm2239, %v4993, %v4930
        %v4996 = vsel %vm2507, %v4928, %v4940
        %v4997 = vsel %vm2507, %v4930, %v4942
        %v4998 = vsel %vm2527, %v4996, %v4951
        %v4999 = vsel %vm2527, %v4997, %v4953
        %v5000 = vsel %vm2547, %v4998, %v4962
        %v5001 = vsel %vm2547, %v4999, %v4964
        %v5002 = vsel %vm1528, %v4962, %v4970
        %v5003 = vsel %vm1528, %v4964, %v4972
        %v5004 = vsel %vm2534, %v5002, %v4979
        %v5005 = vsel %vm2534, %v5003, %v4981
        %v5006 = vpack.c.bf16 %v4995, %v4994
        %v5007 = vpack.c.bf16 %v5001, %v5000
        %v5008 = vpack.c.bf16 %v5005, %v5004
        %v5009 = vpack.c.bf16 %v4989, %v4987
        %v5010 = vld [vmem:[%s55] sm:$0xff]
        %v5011 = vld [vmem:[%s55 + $0x8] sm:$0xf]
        %v5012 = vld [vmem:[%s55 + $0xc] sm:$0xff]
        %v5013 = vld [vmem:[%s55 + $0x14] sm:$0xf]
        %v5014 = vld [vmem:[%s55 + $0x18] sm:$0xff]
        %v5015 = vld [vmem:[%s55 + $0x20] sm:$0xf]
        %v5016 = vld [vmem:[%s55 + $0x24] sm:$0xff]
        %v5017 = vld [vmem:[%s55 + $0x2c] sm:$0xf]
        %v5018 = vld [vmem:[%s55 + $0x30] sm:$0xff]
        %v5019 = vld [vmem:[%s55 + $0x38] sm:$0xf]
        %v5020 = vld [vmem:[%s55 + $0x3c] sm:$0xff]
        %v5021 = vld [vmem:[%s55 + $0x44] sm:$0xf]
        %v5022 = vld [vmem:[%s55 + $0x48] sm:$0xff]
        %v5023 = vld [vmem:[%s55 + $0x50] sm:$0xf]
        %v5024 = vld [vmem:[%s55 + $0x54] sm:$0xff]
        %v5025 = vld [vmem:[%s55 + $0x5c] sm:$0xf]
        %v5026 = vld [vmem:[%s55 + $0x60] sm:$0xff]
        %v5027 = vld [vmem:[%s55 + $0x68] sm:$0xf]
        %v5028 = vld [vmem:[%s55 + $0x6c] sm:$0xff]
        %v5029 = vld [vmem:[%s55 + $0x74] sm:$0xf]
        %v5030 = vld [vmem:[%s55 + $0x78] sm:$0xff]
        %v5031 = vld [vmem:[%s55 + $0x80] sm:$0xf]
        %v5032 = vld [vmem:[%s55 + $0x84] sm:$0xff]
        %v5033 = vld [vmem:[%s55 + $0x8c] sm:$0xf]
        %v5034 = vld [vmem:[%s55 + $0x90] sm:$0xff]
        %v5035 = vld [vmem:[%s55 + $0x98] sm:$0xf]
        %v5036 = vld [vmem:[%s55 + $0x9c] sm:$0xff]
        %v5037 = vld [vmem:[%s55 + $0xa4] sm:$0xf]
        %v5038 = vld [vmem:[%s55 + $0xa8] sm:$0xff]
        %v5039 = vld [vmem:[%s55 + $0xb0] sm:$0xf]
        %v5040 = vld [vmem:[%s55 + $0xb4] sm:$0xff]
        %v5041 = vld [vmem:[%s55 + $0xbc] sm:$0xf]
        %v5042 = vld [vmem:[%s55 + $0xc0] sm:$0xff]
        %v5043 = vld [vmem:[%s55 + $0xc8] sm:$0xf]
        %v5044 = vld [vmem:[%s55 + $0xcc] sm:$0xff]
        %v5045 = vld [vmem:[%s55 + $0xd4] sm:$0xf]
        %v5046 = vld [vmem:[%s55 + $0xd8] sm:$0xff]
        %v5047 = vld [vmem:[%s55 + $0xe0] sm:$0xf]
        %v5048 = vld [vmem:[%s55 + $0xe4] sm:$0xff]
        %v5049 = vld [vmem:[%s55 + $0xec] sm:$0xf]
        %v5050 = vld [vmem:[%s55 + $0xf0] sm:$0xff]
        %v5051 = vld [vmem:[%s55 + $0xf8] sm:$0xf]
        %v5052 = vld [vmem:[%s55 + $0xfc] sm:$0xff]
        %v5053 = vld [vmem:[%s55 + $0x104] sm:$0xf]
        %v5054 = vld [vmem:[%s55 + $0x108] sm:$0xff]
        %v5055 = vld [vmem:[%s55 + $0x110] sm:$0xf]
        %v5056 = vld [vmem:[%s55 + $0x114] sm:$0xff]
        %v5057 = vld [vmem:[%s55 + $0x11c] sm:$0xf]
        %v5058 = vld [vmem:[%s55 + $0x120] sm:$0xff]
        %v5059 = vld [vmem:[%s55 + $0x128] sm:$0xf]
        %v5060 = vld [vmem:[%s55 + $0x12c] sm:$0xff]
        %v5061 = vld [vmem:[%s55 + $0x134] sm:$0xf]
        %v5062 = vld [vmem:[%s55 + $0x138] sm:$0xff]
        %v5063 = vld [vmem:[%s55 + $0x140] sm:$0xf]
        %v5064 = vld [vmem:[%s55 + $0x144] sm:$0xff]
        %v5065 = vld [vmem:[%s55 + $0x14c] sm:$0xf]
        %v5066 = vld [vmem:[%s55 + $0x150] sm:$0xff]
        %v5067 = vld [vmem:[%s55 + $0x158] sm:$0xf]
        %v5068 = vld [vmem:[%s55 + $0x15c] sm:$0xff]
        %v5069 = vld [vmem:[%s55 + $0x164] sm:$0xf]
        %v5070 = vld [vmem:[%s55 + $0x168] sm:$0xff]
        %v5071 = vld [vmem:[%s55 + $0x170] sm:$0xf]
        %v5072 = vld [vmem:[%s55 + $0x174] sm:$0xff]
        %v5073 = vld [vmem:[%s55 + $0x17c] sm:$0xf]
        %v5074 = vld [vmem:[%s55 + $0x180] sm:$0xff]
        %v5075 = vld [vmem:[%s55 + $0x188] sm:$0xf]
        %v5076 = vld [vmem:[%s55 + $0x18c] sm:$0xff]
        %v5077 = vld [vmem:[%s55 + $0x194] sm:$0xf]
        %v5078 = vld [vmem:[%s55 + $0x198] sm:$0xff]
        %v5079 = vld [vmem:[%s55 + $0x1a0] sm:$0xf]
        %v5080 = vld [vmem:[%s55 + $0x1a4] sm:$0xff]
        %v5081 = vld [vmem:[%s55 + $0x1ac] sm:$0xf]
        %v5082 = vld [vmem:[%s55 + $0x1b0] sm:$0xff]
        %v5083 = vld [vmem:[%s55 + $0x1b8] sm:$0xf]
        %v5084 = vld [vmem:[%s55 + $0x1bc] sm:$0xff]
        %v5085 = vld [vmem:[%s55 + $0x1c4] sm:$0xf]
        %v5086 = vld [vmem:[%s55 + $0x1c8] sm:$0xff]
        %v5087 = vld [vmem:[%s55 + $0x1d0] sm:$0xf]
        %v5088 = vld [vmem:[%s55 + $0x1d4] sm:$0xff]
        %v5089 = vld [vmem:[%s55 + $0x1dc] sm:$0xf]
        %v5090 = vld [vmem:[%s55 + $0x1e0] sm:$0xff]
        %v5091 = vld [vmem:[%s55 + $0x1e8] sm:$0xf]
        %v5092 = vld [vmem:[%s55 + $0x1ec] sm:$0xff]
        %v5093 = vld [vmem:[%s55 + $0x1f4] sm:$0xf]
        %v5094 = vld [vmem:[%s55 + $0x1f8] sm:$0xff]
        %v5095 = vld [vmem:[%s55 + $0x200] sm:$0xf]
        %v5096 = vld [vmem:[%s55 + $0x204] sm:$0xff]
        %v5097 = vld [vmem:[%s55 + $0x20c] sm:$0xf]
        %v5098 = vld [vmem:[%s55 + $0x210] sm:$0xff]
        %v5099 = vld [vmem:[%s55 + $0x218] sm:$0xf]
        %v5100 = vld [vmem:[%s55 + $0x21c] sm:$0xff]
        %v5101 = vld [vmem:[%s55 + $0x224] sm:$0xf]
        %v5102 = vld [vmem:[%s55 + $0x228] sm:$0xff]
        %v5103 = vld [vmem:[%s55 + $0x230] sm:$0xf]
        %v5104 = vld [vmem:[%s55 + $0x234] sm:$0xff]
        %v5105 = vld [vmem:[%s55 + $0x23c] sm:$0xf]
        %v5106 = vld [vmem:[%s55 + $0x240] sm:$0xff]
        %v5107 = vld [vmem:[%s55 + $0x248] sm:$0xf]
        %v5108 = vld [vmem:[%s55 + $0x24c] sm:$0xff]
        %v5109 = vld [vmem:[%s55 + $0x254] sm:$0xf]
        %v5110 = vld [vmem:[%s55 + $0x258] sm:$0xff]
        %v5111 = vld [vmem:[%s55 + $0x260] sm:$0xf]
        %v5112 = vld [vmem:[%s55 + $0x264] sm:$0xff]
        %v5113 = vld [vmem:[%s55 + $0x26c] sm:$0xf]
        %v5114 = vld [vmem:[%s55 + $0x270] sm:$0xff]
        %v5115 = vld [vmem:[%s55 + $0x278] sm:$0xf]
        %v5116 = vld [vmem:[%s55 + $0x27c] sm:$0xff]
        %v5117 = vld [vmem:[%s55 + $0x284] sm:$0xf]
        %v5118 = vld [vmem:[%s57] sm:$0x7]
        %v5120 = vperm.slane %v5118, 0
        %v5121 = vperm.slane %v5118, 1
        %v5122 = vperm.slane %v5118, 2
        %v5234 = vunpack.c.l.b16 %v5010
        %v5235 = vunpack.c.h.b16 %v5010
        %v5236 = vunpack.c.l.b16 %v5011
        %v5237 = vunpack.c.l.b16 %v5012
        %v5238 = vunpack.c.h.b16 %v5012
        %v5239 = vunpack.c.l.b16 %v5013
        %v5240 = vunpack.c.l.b16 %v5014
        %v5241 = vunpack.c.h.b16 %v5014
        %v5242 = vunpack.c.l.b16 %v5015
        %v5243 = vunpack.c.l.b16 %v5016
        %v5244 = vunpack.c.h.b16 %v5016
        %v5245 = vunpack.c.l.b16 %v5017
        %v5246 = vunpack.c.l.b16 %v5018
        %v5247 = vunpack.c.h.b16 %v5018
        %v5248 = vunpack.c.l.b16 %v5019
        %v5249 = vunpack.c.l.b16 %v5020
        %v5250 = vunpack.c.h.b16 %v5020
        %v5251 = vunpack.c.l.b16 %v5021
        %v5252 = vunpack.c.l.b16 %v5022
        %v5253 = vunpack.c.h.b16 %v5022
        %v5254 = vunpack.c.l.b16 %v5023
        %v5255 = vunpack.c.l.b16 %v5024
        %v5256 = vunpack.c.h.b16 %v5024
        %v5257 = vunpack.c.l.b16 %v5025
        %v5258 = vunpack.c.l.b16 %v5026
        %v5259 = vunpack.c.h.b16 %v5026
        %v5260 = vunpack.c.l.b16 %v5027
        %v5261 = vunpack.c.l.b16 %v5028
        %v5262 = vunpack.c.h.b16 %v5028
        %v5263 = vunpack.c.l.b16 %v5029
        %v5264 = vunpack.c.l.b16 %v5030
        %v5265 = vunpack.c.h.b16 %v5030
        %v5266 = vunpack.c.l.b16 %v5031
        %v5267 = vunpack.c.l.b16 %v5032
        %v5268 = vunpack.c.h.b16 %v5032
        %v5269 = vunpack.c.l.b16 %v5033
        %v5270 = vunpack.c.l.b16 %v5034
        %v5271 = vunpack.c.h.b16 %v5034
        %v5272 = vunpack.c.l.b16 %v5035
        %v5273 = vunpack.c.l.b16 %v5036
        %v5274 = vunpack.c.h.b16 %v5036
        %v5275 = vunpack.c.l.b16 %v5037
        %v5276 = vunpack.c.l.b16 %v5038
        %v5277 = vunpack.c.h.b16 %v5038
        %v5278 = vunpack.c.l.b16 %v5039
        %v5279 = vunpack.c.l.b16 %v5040
        %v5280 = vunpack.c.h.b16 %v5040
        %v5281 = vunpack.c.l.b16 %v5041
        %v5282 = vunpack.c.l.b16 %v5042
        %v5283 = vunpack.c.h.b16 %v5042
        %v5284 = vunpack.c.l.b16 %v5043
        %v5285 = vunpack.c.l.b16 %v5044
        %v5286 = vunpack.c.h.b16 %v5044
        %v5287 = vunpack.c.l.b16 %v5045
        %v5288 = vunpack.c.l.b16 %v5046
        %v5289 = vunpack.c.h.b16 %v5046
        %v5290 = vunpack.c.l.b16 %v5047
        %v5291 = vunpack.c.l.b16 %v5048
        %v5292 = vunpack.c.h.b16 %v5048
        %v5293 = vunpack.c.l.b16 %v5049
        %v5294 = vunpack.c.l.b16 %v5050
        %v5295 = vunpack.c.h.b16 %v5050
        %v5296 = vunpack.c.l.b16 %v5051
        %v5297 = vunpack.c.l.b16 %v5052
        %v5298 = vunpack.c.h.b16 %v5052
        %v5299 = vunpack.c.l.b16 %v5053
        %v5300 = vunpack.c.l.b16 %v5054
        %v5301 = vunpack.c.h.b16 %v5054
        %v5302 = vunpack.c.l.b16 %v5055
        %v5303 = vunpack.c.l.b16 %v5056
        %v5304 = vunpack.c.h.b16 %v5056
        %v5305 = vunpack.c.l.b16 %v5057
        %v5306 = vunpack.c.l.b16 %v5058
        %v5307 = vunpack.c.h.b16 %v5058
        %v5308 = vunpack.c.l.b16 %v5059
        %v5309 = vunpack.c.l.b16 %v5060
        %v5310 = vunpack.c.h.b16 %v5060
        %v5311 = vunpack.c.l.b16 %v5061
        %v5312 = vunpack.c.l.b16 %v5062
        %v5313 = vunpack.c.h.b16 %v5062
        %v5314 = vunpack.c.l.b16 %v5063
        %v5315 = vunpack.c.l.b16 %v5064
        %v5316 = vunpack.c.h.b16 %v5064
        %v5317 = vunpack.c.l.b16 %v5065
        %v5318 = vunpack.c.l.b16 %v5066
        %v5319 = vunpack.c.h.b16 %v5066
        %v5320 = vunpack.c.l.b16 %v5067
        %v5321 = vunpack.c.l.b16 %v5068
        %v5322 = vunpack.c.h.b16 %v5068
        %v5323 = vunpack.c.l.b16 %v5069
        %v5324 = vunpack.c.l.b16 %v5070
        %v5325 = vunpack.c.h.b16 %v5070
        %v5326 = vunpack.c.l.b16 %v5071
        %v5327 = vunpack.c.l.b16 %v5072
        %v5328 = vunpack.c.h.b16 %v5072
        %v5329 = vunpack.c.l.b16 %v5073
        %v5330 = vunpack.c.l.b16 %v5074
        %v5331 = vunpack.c.h.b16 %v5074
        %v5332 = vunpack.c.l.b16 %v5075
        %v5333 = vunpack.c.l.b16 %v5076
        %v5334 = vunpack.c.h.b16 %v5076
        %v5335 = vunpack.c.l.b16 %v5077
        %v5336 = vunpack.c.l.b16 %v5078
        %v5337 = vunpack.c.h.b16 %v5078
        %v5338 = vunpack.c.l.b16 %v5079
        %v5339 = vunpack.c.l.b16 %v5080
        %v5340 = vunpack.c.h.b16 %v5080
        %v5341 = vunpack.c.l.b16 %v5081
        %v5342 = vunpack.c.l.b16 %v5082
        %v5343 = vunpack.c.h.b16 %v5082
        %v5344 = vunpack.c.l.b16 %v5083
        %v5345 = vunpack.c.l.b16 %v5084
        %v5346 = vunpack.c.h.b16 %v5084
        %v5347 = vunpack.c.l.b16 %v5085
        %v5348 = vunpack.c.l.b16 %v5086
        %v5349 = vunpack.c.h.b16 %v5086
        %v5350 = vunpack.c.l.b16 %v5087
        %v5351 = vunpack.c.l.b16 %v5088
        %v5352 = vunpack.c.h.b16 %v5088
        %v5353 = vunpack.c.l.b16 %v5089
        %v5354 = vunpack.c.l.b16 %v5090
        %v5355 = vunpack.c.h.b16 %v5090
        %v5356 = vunpack.c.l.b16 %v5091
        %v5357 = vunpack.c.l.b16 %v5092
        %v5358 = vunpack.c.h.b16 %v5092
        %v5359 = vunpack.c.l.b16 %v5093
        %v5360 = vunpack.c.l.b16 %v5094
        %v5361 = vunpack.c.h.b16 %v5094
        %v5362 = vunpack.c.l.b16 %v5095
        %v5363 = vunpack.c.l.b16 %v5096
        %v5364 = vunpack.c.h.b16 %v5096
        %v5365 = vunpack.c.l.b16 %v5097
        %v5366 = vunpack.c.l.b16 %v5098
        %v5367 = vunpack.c.h.b16 %v5098
        %v5368 = vunpack.c.l.b16 %v5099
        %v5369 = vunpack.c.l.b16 %v5100
        %v5370 = vunpack.c.h.b16 %v5100
        %v5371 = vunpack.c.l.b16 %v5101
        %v5372 = vunpack.c.l.b16 %v5102
        %v5373 = vunpack.c.h.b16 %v5102
        %v5374 = vunpack.c.l.b16 %v5103
        %v5375 = vunpack.c.l.b16 %v5104
        %v5376 = vunpack.c.h.b16 %v5104
        %v5377 = vunpack.c.l.b16 %v5105
        %v5378 = vunpack.c.l.b16 %v5106
        %v5379 = vunpack.c.h.b16 %v5106
        %v5380 = vunpack.c.l.b16 %v5107
        %v5381 = vunpack.c.l.b16 %v5108
        %v5382 = vunpack.c.h.b16 %v5108
        %v5383 = vunpack.c.l.b16 %v5109
        %v5384 = vunpack.c.l.b16 %v5110
        %v5385 = vunpack.c.h.b16 %v5110
        %v5386 = vunpack.c.l.b16 %v5111
        %v5387 = vunpack.c.l.b16 %v5112
        %v5388 = vunpack.c.h.b16 %v5112
        %v5389 = vunpack.c.l.b16 %v5113
        %v5390 = vunpack.c.l.b16 %v5114
        %v5391 = vunpack.c.h.b16 %v5114
        %v5392 = vunpack.c.l.b16 %v5115
        %v5393 = vunpack.c.l.b16 %v5116
        %v5394 = vunpack.c.h.b16 %v5116
        %v5395 = vunpack.c.l.b16 %v5117
        %v5396 = vpack.c.b16 %v5237, %v5234
        %v5397 = vpack.c.b16 %v5238, %v5235
        %v5398 = vpack.c.b16 %v5239, %v5236
        %v5399 = vpack.c.b16 %v5243, %v5240
        %v5400 = vpack.c.b16 %v5244, %v5241
        %v5401 = vpack.c.b16 %v5245, %v5242
        %v5402 = vpack.c.b16 %v5249, %v5246
        %v5403 = vpack.c.b16 %v5250, %v5247
        %v5404 = vpack.c.b16 %v5251, %v5248
        %v5405 = vpack.c.b16 %v5255, %v5252
        %v5406 = vpack.c.b16 %v5256, %v5253
        %v5407 = vpack.c.b16 %v5257, %v5254
        %v5408 = vpack.c.b16 %v5261, %v5258
        %v5409 = vpack.c.b16 %v5262, %v5259
        %v5410 = vpack.c.b16 %v5263, %v5260
        %v5411 = vpack.c.b16 %v5267, %v5264
        %v5412 = vpack.c.b16 %v5268, %v5265
        %v5413 = vpack.c.b16 %v5269, %v5266
        %v5414 = vpack.c.b16 %v5273, %v5270
        %v5415 = vpack.c.b16 %v5274, %v5271
        %v5416 = vpack.c.b16 %v5275, %v5272
        %v5417 = vpack.c.b16 %v5279, %v5276
        %v5418 = vpack.c.b16 %v5280, %v5277
        %v5419 = vpack.c.b16 %v5281, %v5278
        %v5420 = vpack.c.b16 %v5285, %v5282
        %v5421 = vpack.c.b16 %v5286, %v5283
        %v5422 = vpack.c.b16 %v5287, %v5284
        %v5423 = vpack.c.b16 %v5291, %v5288
        %v5424 = vpack.c.b16 %v5292, %v5289
        %v5425 = vpack.c.b16 %v5293, %v5290
        %v5426 = vpack.c.b16 %v5297, %v5294
        %v5427 = vpack.c.b16 %v5298, %v5295
        %v5428 = vpack.c.b16 %v5299, %v5296
        %v5429 = vpack.c.b16 %v5303, %v5300
        %v5430 = vpack.c.b16 %v5304, %v5301
        %v5431 = vpack.c.b16 %v5305, %v5302
        %v5432 = vpack.c.b16 %v5309, %v5306
        %v5433 = vpack.c.b16 %v5310, %v5307
        %v5434 = vpack.c.b16 %v5311, %v5308
        %v5435 = vpack.c.b16 %v5315, %v5312
        %v5436 = vpack.c.b16 %v5316, %v5313
        %v5437 = vpack.c.b16 %v5317, %v5314
        %v5438 = vpack.c.b16 %v5321, %v5318
        %v5439 = vpack.c.b16 %v5322, %v5319
        %v5440 = vpack.c.b16 %v5323, %v5320
        %v5441 = vpack.c.b16 %v5327, %v5324
        %v5442 = vpack.c.b16 %v5328, %v5325
        %v5443 = vpack.c.b16 %v5329, %v5326
        %v5444 = vpack.c.b16 %v5333, %v5330
        %v5445 = vpack.c.b16 %v5334, %v5331
        %v5446 = vpack.c.b16 %v5335, %v5332
        %v5447 = vpack.c.b16 %v5339, %v5336
        %v5448 = vpack.c.b16 %v5340, %v5337
        %v5449 = vpack.c.b16 %v5341, %v5338
        %v5450 = vpack.c.b16 %v5345, %v5342
        %v5451 = vpack.c.b16 %v5346, %v5343
        %v5452 = vpack.c.b16 %v5347, %v5344
        %v5453 = vpack.c.b16 %v5351, %v5348
        %v5454 = vpack.c.b16 %v5352, %v5349
        %v5455 = vpack.c.b16 %v5353, %v5350
        %v5456 = vpack.c.b16 %v5357, %v5354
        %v5457 = vpack.c.b16 %v5358, %v5355
        %v5458 = vpack.c.b16 %v5359, %v5356
        %v5459 = vpack.c.b16 %v5363, %v5360
        %v5460 = vpack.c.b16 %v5364, %v5361
        %v5461 = vpack.c.b16 %v5365, %v5362
        %v5462 = vpack.c.b16 %v5369, %v5366
        %v5463 = vpack.c.b16 %v5370, %v5367
        %v5464 = vpack.c.b16 %v5371, %v5368
        %v5465 = vpack.c.b16 %v5375, %v5372
        %v5466 = vpack.c.b16 %v5376, %v5373
        %v5467 = vpack.c.b16 %v5377, %v5374
        %v5468 = vpack.c.b16 %v5381, %v5378
        %v5469 = vpack.c.b16 %v5382, %v5379
        %v5470 = vpack.c.b16 %v5383, %v5380
        %v5471 = vpack.c.b16 %v5387, %v5384
        %v5472 = vpack.c.b16 %v5388, %v5385
        %v5473 = vpack.c.b16 %v5389, %v5386
        %v5474 = vpack.c.b16 %v5393, %v5390
        %v5475 = vpack.c.b16 %v5394, %v5391
        %v5476 = vpack.c.b16 %v5395, %v5392
        %v5559 = vsel %vm2520, %v5009, 0
        %5561 = vmatpush.bf16.msra.mxu0 %v5417
        %5562 = vmatpush.bf16.msra.mxu0 %v5414
        %5563 = vmatpush.bf16.msra.mxu0 %v5411
        %5564 = vmatpush.bf16.msra.mxu0 %v5408
        %5565 = vmatpush.bf16.msra.mxu0 %v5405
        %5566 = vmatpush.bf16.msra.mxu0 %v5402
        %5567 = vmatpush.bf16.msra.mxu0 %v5399
        %5568 = vmatpush.bf16.msra.mxu0 %v5396
        %5569 = vmatmul.bf16.gmra.mxu0 %v5006
        %v5570 = vpop.f32.mrf.mxu0
        %v5571 = vadd.f32 %v5120, %v5570
        %v5572 = vpop.f32.mrf.mxu0
        %v5573 = vadd.f32 %v5120, %v5572
        %5574 = vdwg.mxu0
        %5575 = vmatpush.bf16.msra.mxu0 %v5441
        %5576 = vmatpush.bf16.msra.mxu0 %v5438
        %5577 = vmatpush.bf16.msra.mxu0 %v5435
        %5578 = vmatpush.bf16.msra.mxu0 %v5432
        %5579 = vmatpush.bf16.msra.mxu0 %v5429
        %5580 = vmatpush.bf16.msra.mxu0 %v5426
        %5581 = vmatpush.bf16.msra.mxu0 %v5423
        %5582 = vmatpush.bf16.msra.mxu0 %v5420
        %5583 = vmatmul.bf16.gmra.mxu0 %v5007
        %v5584 = vpop.f32.mrf.mxu0
        %v5585 = vadd.f32 %v5571, %v5584
        %v5586 = vpop.f32.mrf.mxu0
        %v5587 = vadd.f32 %v5573, %v5586
        %5588 = vdwg.mxu0
        %5589 = vmatpush.bf16.msra.mxu0 %v5465
        %5590 = vmatpush.bf16.msra.mxu0 %v5462
        %5591 = vmatpush.bf16.msra.mxu0 %v5459
        %5592 = vmatpush.bf16.msra.mxu0 %v5456
        %5593 = vmatpush.bf16.msra.mxu0 %v5453
        %5594 = vmatpush.bf16.msra.mxu0 %v5450
        %5595 = vmatpush.bf16.msra.mxu0 %v5447
        %5596 = vmatpush.bf16.msra.mxu0 %v5444
        %5597 = vmatmul.bf16.gmra.mxu0 %v5008
        %v5598 = vpop.f32.mrf.mxu0
        %v5599 = vadd.f32 %v5585, %v5598
        %v5600 = vpop.f32.mrf.mxu0
        %v5601 = vadd.f32 %v5587, %v5600
        %5602 = vdwg.mxu0
        %5603 = vmatpush.bf16.msra.mxu0 0
        %5604 = vmatpush.bf16.msra.mxu0 0
        %5605 = vmatpush.bf16.msra.mxu0 0
        %5606 = vmatpush.bf16.msra.mxu0 0
        %5607 = vmatpush.bf16.msra.mxu0 0
        %5608 = vmatpush.bf16.msra.mxu0 %v5474
        %5609 = vmatpush.bf16.msra.mxu0 %v5471
        %5610 = vmatpush.bf16.msra.mxu0 %v5468
        %5611 = vmatmul.bf16.gmra.mxu0 %v5559
        %v5612 = vpop.f32.mrf.mxu0
        %v5613 = vadd.f32 %v5599, %v5612
        %v5614 = vpop.f32.mrf.mxu0
        %v5615 = vadd.f32 %v5601, %v5614
        %5616 = vdwg.mxu0
        %5617 = vmatpush.bf16.msra.mxu0 %v5418
        %5618 = vmatpush.bf16.msra.mxu0 %v5415
        %5619 = vmatpush.bf16.msra.mxu0 %v5412
        %5620 = vmatpush.bf16.msra.mxu0 %v5409
        %5621 = vmatpush.bf16.msra.mxu0 %v5406
        %5622 = vmatpush.bf16.msra.mxu0 %v5403
        %5623 = vmatpush.bf16.msra.mxu0 %v5400
        %5624 = vmatpush.bf16.msra.mxu0 %v5397
        %5625 = vmatmul.bf16.gmra.mxu0 %v5006
        %v5626 = vpop.f32.mrf.mxu0
        %v5627 = vadd.f32 %v5121, %v5626
        %v5628 = vpop.f32.mrf.mxu0
        %v5629 = vadd.f32 %v5121, %v5628
        %5630 = vdwg.mxu0
        %5631 = vmatpush.bf16.msra.mxu0 %v5442
        %5632 = vmatpush.bf16.msra.mxu0 %v5439
        %5633 = vmatpush.bf16.msra.mxu0 %v5436
        %5634 = vmatpush.bf16.msra.mxu0 %v5433
        %5635 = vmatpush.bf16.msra.mxu0 %v5430
        %5636 = vmatpush.bf16.msra.mxu0 %v5427
        %5637 = vmatpush.bf16.msra.mxu0 %v5424
        %5638 = vmatpush.bf16.msra.mxu0 %v5421
        %5639 = vmatmul.bf16.gmra.mxu0 %v5007
        %v5640 = vpop.f32.mrf.mxu0
        %v5641 = vadd.f32 %v5627, %v5640
        %v5642 = vpop.f32.mrf.mxu0
        %v5643 = vadd.f32 %v5629, %v5642
        %5644 = vdwg.mxu0
        %5645 = vmatpush.bf16.msra.mxu0 %v5466
        %5646 = vmatpush.bf16.msra.mxu0 %v5463
        %5647 = vmatpush.bf16.msra.mxu0 %v5460
        %5648 = vmatpush.bf16.msra.mxu0 %v5457
        %5649 = vmatpush.bf16.msra.mxu0 %v5454
        %5650 = vmatpush.bf16.msra.mxu0 %v5451
        %5651 = vmatpush.bf16.msra.mxu0 %v5448
        %5652 = vmatpush.bf16.msra.mxu0 %v5445
        %5653 = vmatmul.bf16.gmra.mxu0 %v5008
        %v5654 = vpop.f32.mrf.mxu0
        %v5655 = vadd.f32 %v5641, %v5654
        %v5656 = vpop.f32.mrf.mxu0
        %v5657 = vadd.f32 %v5643, %v5656
        %5658 = vdwg.mxu0
        %5659 = vmatpush.bf16.msra.mxu0 0
        %5660 = vmatpush.bf16.msra.mxu0 0
        %5661 = vmatpush.bf16.msra.mxu0 0
        %5662 = vmatpush.bf16.msra.mxu0 0
        %5663 = vmatpush.bf16.msra.mxu0 0
        %5664 = vmatpush.bf16.msra.mxu0 %v5475
        %5665 = vmatpush.bf16.msra.mxu0 %v5472
        %5666 = vmatpush.bf16.msra.mxu0 %v5469
        %5667 = vmatmul.bf16.gmra.mxu0 %v5559
        %v5668 = vpop.f32.mrf.mxu0
        %v5669 = vadd.f32 %v5655, %v5668
        %v5670 = vpop.f32.mrf.mxu0
        %v5671 = vadd.f32 %v5657, %v5670
        %5672 = vdwg.mxu0
        %5673 = vmatpush.bf16.msra.mxu0 %v5419
        %5674 = vmatpush.bf16.msra.mxu0 %v5416
        %5675 = vmatpush.bf16.msra.mxu0 %v5413
        %5676 = vmatpush.bf16.msra.mxu0 %v5410
        %5677 = vmatpush.bf16.msra.mxu0 %v5407
        %5678 = vmatpush.bf16.msra.mxu0 %v5404
        %5679 = vmatpush.bf16.msra.mxu0 %v5401
        %5680 = vmatpush.bf16.msra.mxu0 %v5398
        %5681 = vmatmul.bf16.gmra.mxu0 %v5006
        %v5682 = vpop.f32.mrf.mxu0
        %v5683 = vadd.f32 %v5122, %v5682
        %v5684 = vpop.f32.mrf.mxu0
        %v5685 = vadd.f32 %v5122, %v5684
        %5686 = vdwg.mxu0
        %5687 = vmatpush.bf16.msra.mxu0 %v5443
        %5688 = vmatpush.bf16.msra.mxu0 %v5440
        %5689 = vmatpush.bf16.msra.mxu0 %v5437
        %5690 = vmatpush.bf16.msra.mxu0 %v5434
        %5691 = vmatpush.bf16.msra.mxu0 %v5431
        %5692 = vmatpush.bf16.msra.mxu0 %v5428
        %5693 = vmatpush.bf16.msra.mxu0 %v5425
        %5694 = vmatpush.bf16.msra.mxu0 %v5422
        %5695 = vmatmul.bf16.gmra.mxu0 %v5007
        %v5696 = vpop.f32.mrf.mxu0
        %v5697 = vadd.f32 %v5683, %v5696
        %v5698 = vpop.f32.mrf.mxu0
        %v5699 = vadd.f32 %v5685, %v5698
        %5700 = vdwg.mxu0
        %5701 = vmatpush.bf16.msra.mxu0 %v5467
        %5702 = vmatpush.bf16.msra.mxu0 %v5464
        %5703 = vmatpush.bf16.msra.mxu0 %v5461
        %5704 = vmatpush.bf16.msra.mxu0 %v5458
        %5705 = vmatpush.bf16.msra.mxu0 %v5455
        %5706 = vmatpush.bf16.msra.mxu0 %v5452
        %5707 = vmatpush.bf16.msra.mxu0 %v5449
        %5708 = vmatpush.bf16.msra.mxu0 %v5446
        %5709 = vmatmul.bf16.gmra.mxu0 %v5008
        %v5710 = vpop.f32.mrf.mxu0
        %v5711 = vadd.f32 %v5697, %v5710
        %v5712 = vpop.f32.mrf.mxu0
        %v5713 = vadd.f32 %v5699, %v5712
        %5714 = vdwg.mxu0
        %5715 = vmatpush.bf16.msra.mxu0 0
        %5716 = vmatpush.bf16.msra.mxu0 0
        %5717 = vmatpush.bf16.msra.mxu0 0
        %5718 = vmatpush.bf16.msra.mxu0 0
        %5719 = vmatpush.bf16.msra.mxu0 0
        %5720 = vmatpush.bf16.msra.mxu0 %v5476
        %5721 = vmatpush.bf16.msra.mxu0 %v5473
        %5722 = vmatpush.bf16.msra.mxu0 %v5470
        %5723 = vmatmul.bf16.gmra.mxu0 %v5559
        %v5724 = vpop.f32.mrf.mxu0
        %v5725 = vadd.f32 %v5711, %v5724
        %v5726 = vpop.f32.mrf.mxu0
        %v5727 = vadd.f32 %v5713, %v5726
        %5728 = vdwg.mxu0
        %v5729 = vmax.f32 %v5613, 0.0
        %v5730 = vmax.f32 %v5669, 0.0
        %v5731 = vmax.f32 %v5725, 0.0
        %v5732 = vmax.f32 %v5615, 0.0
        %v5733 = vmax.f32 %v5671, 0.0
        %v5734 = vmax.f32 %v5727, 0.0
        %v5741 = vrot.slane %v5729, 2
        %v5742 = vrot.slane %v5730, 2
        %v5743 = vrot.slane %v5731, 2
        %v5744 = vrot.slane %v5732, 2
        %v5745 = vsel %vm1807, %v5741, %v5744
        %v5746 = vrot.slane %v5733, 2
        %v5747 = vsel %vm1807, %v5742, %v5746
        %v5748 = vrot.slane %v5734, 2
        %v5749 = vsel %vm1807, %v5743, %v5748
        %v5759 = vsel %vm1807, 0.0, %v5741
        %v5760 = vsel %vm1807, 0.0, %v5742
        %v5761 = vsel %vm1807, 0.0, %v5743
        %v5762 = vsel %vm1731, %v5744, 0.0
        %v5763 = vsel %vm1731, %v5746, 0.0
        %v5764 = vsel %vm1731, %v5748, 0.0
        %v5765 = vmul.f32 %v5759, %v4270
        %v5766 = vmul.f32 %v5760, %v4270
        %v5767 = vmul.f32 %v5761, %v4270
        %v5768 = vmul.f32 %v5745, %v4275
        %v5769 = vmul.f32 %v5747, %v4275
        %v5770 = vmul.f32 %v5749, %v4275
        %v5771 = vmul.f32 %v5762, %v4280
        %v5772 = vmul.f32 %v5763, %v4280
        %v5773 = vmul.f32 %v5764, %v4280
        %v5774 = vpack.c.bf16 %v5768, %v5765
        %v5775 = vpack.c.bf16 %v5769, %v5766
        %v5776 = vpack.c.bf16 %v5770, %v5767
        %v5777 = vpack.c.bf16 %v4722, %v5771
        %v5778 = vpack.c.bf16 %v4722, %v5772
        %v5779 = vpack.c.bf16 %v4722, %v5773
        %v5780 = vld [vmem:[%s59] sm:$0xf]
        %v5781 = vld [vmem:[%s59 + $0x4] sm:$0xf]
        %v5782 = vld [vmem:[%s59 + $0x8] sm:$0xf]
        %v5783 = vld [vmem:[%s59 + $0xc] sm:$0xf]
        %v5784 = vld [vmem:[%s59 + $0x10] sm:$0xf]
        %v5785 = vld [vmem:[%s59 + $0x14] sm:$0xf]
        %v5786 = vld [vmem:[%s59 + $0x18] sm:$0xf]
        %v5787 = vld [vmem:[%s59 + $0x1c] sm:$0xf]
        %v5788 = vld [vmem:[%s59 + $0x20] sm:$0xf]
        %v5789 = vld [vmem:[%s59 + $0x24] sm:$0xf]
        %v5790 = vld [vmem:[%s59 + $0x28] sm:$0xf]
        %v5791 = vld [vmem:[%s59 + $0x2c] sm:$0xf]
        %v5792 = vld [vmem:[%s59 + $0x30] sm:$0xf]
        %v5793 = vld [vmem:[%s59 + $0x34] sm:$0xf]
        %v5794 = vld [vmem:[%s59 + $0x38] sm:$0xf]
        %v5795 = vld [vmem:[%s59 + $0x3c] sm:$0xf]
        %v5796 = vld [vmem:[%s59 + $0x40] sm:$0xf]
        %v5797 = vld [vmem:[%s59 + $0x44] sm:$0xf]
        %v5798 = vld [vmem:[%s59 + $0x48] sm:$0xf]
        %v5799 = vld [vmem:[%s59 + $0x4c] sm:$0xf]
        %v5800 = vld [vmem:[%s59 + $0x50] sm:$0xf]
        %v5801 = vld [vmem:[%s59 + $0x54] sm:$0xf]
        %v5802 = vld [vmem:[%s59 + $0x58] sm:$0xf]
        %v5803 = vld [vmem:[%s59 + $0x5c] sm:$0xf]
        %v5804 = vld [vmem:[%s59 + $0x60] sm:$0xf]
        %v5805 = vld [vmem:[%s59 + $0x64] sm:$0xf]
        %v5806 = vld [vmem:[%s59 + $0x68] sm:$0xf]
        %v5807 = vld [vmem:[%s59 + $0x6c] sm:$0xf]
        %v5808 = vld [vmem:[%s59 + $0x70] sm:$0xf]
        %v5809 = vld [vmem:[%s59 + $0x74] sm:$0xf]
        %v5810 = vld [vmem:[%s59 + $0x78] sm:$0xf]
        %v5811 = vld [vmem:[%s59 + $0x7c] sm:$0xf]
        %v5812 = vld [vmem:[%s59 + $0x80] sm:$0xf]
        %v5813 = vld [vmem:[%s59 + $0x84] sm:$0xf]
        %v5814 = vld [vmem:[%s59 + $0x88] sm:$0xf]
        %v5815 = vld [vmem:[%s59 + $0x8c] sm:$0xf]
        %v5816 = vld [vmem:[%s59 + $0x90] sm:$0xf]
        %v5817 = vld [vmem:[%s59 + $0x94] sm:$0xf]
        %v5818 = vld [vmem:[%s59 + $0x98] sm:$0xf]
        %v5819 = vld [vmem:[%s59 + $0x9c] sm:$0xf]
        %v5820 = vld [vmem:[%s59 + $0xa0] sm:$0xf]
        %v5821 = vld [vmem:[%s59 + $0xa4] sm:$0xf]
        %v5822 = vld [vmem:[%s59 + $0xa8] sm:$0xf]
        %v5823 = vld [vmem:[%s59 + $0xac] sm:$0xf]
        %v5824 = vld [vmem:[%s59 + $0xb0] sm:$0xf]
        %v5825 = vld [vmem:[%s59 + $0xb4] sm:$0xf]
        %v5826 = vld [vmem:[%s59 + $0xb8] sm:$0xf]
        %v5827 = vld [vmem:[%s59 + $0xbc] sm:$0xf]
        %v5828 = vld [vmem:[%s61] sm:$0x1]
        %v5830 = vperm.slane %v5828, 0
        %v5880 = vunpack.c.l.b16 %v5780
        %v5881 = vunpack.c.l.b16 %v5781
        %v5882 = vunpack.c.l.b16 %v5782
        %v5883 = vunpack.c.l.b16 %v5783
        %v5884 = vunpack.c.l.b16 %v5784
        %v5885 = vunpack.c.l.b16 %v5785
        %v5886 = vunpack.c.l.b16 %v5786
        %v5887 = vunpack.c.l.b16 %v5787
        %v5888 = vunpack.c.l.b16 %v5788
        %v5889 = vunpack.c.l.b16 %v5789
        %v5890 = vunpack.c.l.b16 %v5790
        %v5891 = vunpack.c.l.b16 %v5791
        %v5892 = vunpack.c.l.b16 %v5792
        %v5893 = vunpack.c.l.b16 %v5793
        %v5894 = vunpack.c.l.b16 %v5794
        %v5895 = vunpack.c.l.b16 %v5795
        %v5896 = vunpack.c.l.b16 %v5796
        %v5897 = vunpack.c.l.b16 %v5797
        %v5898 = vunpack.c.l.b16 %v5798
        %v5899 = vunpack.c.l.b16 %v5799
        %v5900 = vunpack.c.l.b16 %v5800
        %v5901 = vunpack.c.l.b16 %v5801
        %v5902 = vunpack.c.l.b16 %v5802
        %v5903 = vunpack.c.l.b16 %v5803
        %v5904 = vunpack.c.l.b16 %v5804
        %v5905 = vunpack.c.l.b16 %v5805
        %v5906 = vunpack.c.l.b16 %v5806
        %v5907 = vunpack.c.l.b16 %v5807
        %v5908 = vunpack.c.l.b16 %v5808
        %v5909 = vunpack.c.l.b16 %v5809
        %v5910 = vunpack.c.l.b16 %v5810
        %v5911 = vunpack.c.l.b16 %v5811
        %v5912 = vunpack.c.l.b16 %v5812
        %v5913 = vunpack.c.l.b16 %v5813
        %v5914 = vunpack.c.l.b16 %v5814
        %v5915 = vunpack.c.l.b16 %v5815
        %v5916 = vunpack.c.l.b16 %v5816
        %v5917 = vunpack.c.l.b16 %v5817
        %v5918 = vunpack.c.l.b16 %v5818
        %v5919 = vunpack.c.l.b16 %v5819
        %v5920 = vunpack.c.l.b16 %v5820
        %v5921 = vunpack.c.l.b16 %v5821
        %v5922 = vunpack.c.l.b16 %v5822
        %v5923 = vunpack.c.l.b16 %v5823
        %v5924 = vunpack.c.l.b16 %v5824
        %v5925 = vunpack.c.l.b16 %v5825
        %v5926 = vunpack.c.l.b16 %v5826
        %v5927 = vunpack.c.l.b16 %v5827
        %v5928 = vpack.c.b16 %v5881, %v5880
        %v5929 = vpack.c.b16 %v5883, %v5882
        %v5930 = vpack.c.b16 %v5885, %v5884
        %v5931 = vpack.c.b16 %v5887, %v5886
        %v5932 = vpack.c.b16 %v5889, %v5888
        %v5933 = vpack.c.b16 %v5891, %v5890
        %v5934 = vpack.c.b16 %v5893, %v5892
        %v5935 = vpack.c.b16 %v5895, %v5894
        %v5936 = vpack.c.b16 %v5897, %v5896
        %v5937 = vpack.c.b16 %v5899, %v5898
        %v5938 = vpack.c.b16 %v5901, %v5900
        %v5939 = vpack.c.b16 %v5903, %v5902
        %v5940 = vpack.c.b16 %v5905, %v5904
        %v5941 = vpack.c.b16 %v5907, %v5906
        %v5942 = vpack.c.b16 %v5909, %v5908
        %v5943 = vpack.c.b16 %v5911, %v5910
        %v5944 = vpack.c.b16 %v5913, %v5912
        %v5945 = vpack.c.b16 %v5915, %v5914
        %v5946 = vpack.c.b16 %v5917, %v5916
        %v5947 = vpack.c.b16 %v5919, %v5918
        %v5948 = vpack.c.b16 %v5921, %v5920
        %v5949 = vpack.c.b16 %v5923, %v5922
        %v5950 = vpack.c.b16 %v5925, %v5924
        %v5951 = vpack.c.b16 %v5927, %v5926
        %5976 = vmatpush.bf16.msra.mxu0 %v5935
        %5977 = vmatpush.bf16.msra.mxu0 %v5934
        %5978 = vmatpush.bf16.msra.mxu0 %v5933
        %5979 = vmatpush.bf16.msra.mxu0 %v5932
        %5980 = vmatpush.bf16.msra.mxu0 %v5931
        %5981 = vmatpush.bf16.msra.mxu0 %v5930
        %5982 = vmatpush.bf16.msra.mxu0 %v5929
        %5983 = vmatpush.bf16.msra.mxu0 %v5928
        %5984 = vmatmul.bf16.gmra.mxu0 %v5774
        %v5985 = vpop.f32.mrf.mxu0
        %v5986 = vadd.f32 %v5830, %v5985
        %v5987 = vpop.f32.mrf.mxu0
        %v5988 = vadd.f32 %v5830, %v5987
        %5989 = vmatmul.bf16.gmra.mxu0 %v5777
        %v5990 = vpop.f32.mrf.mxu0
        %v5991 = vadd.f32 %v5830, %v5990
        %v5992 = vpop.f32.mrf.mxu0
        %v5993 = vadd.f32 %v5830, %v5992
        %5994 = vdwg.mxu0
        %5995 = vmatpush.bf16.msra.mxu0 %v5943
        %5996 = vmatpush.bf16.msra.mxu0 %v5942
        %5997 = vmatpush.bf16.msra.mxu0 %v5941
        %5998 = vmatpush.bf16.msra.mxu0 %v5940
        %5999 = vmatpush.bf16.msra.mxu0 %v5939
        %6000 = vmatpush.bf16.msra.mxu0 %v5938
        %6001 = vmatpush.bf16.msra.mxu0 %v5937
        %6002 = vmatpush.bf16.msra.mxu0 %v5936
        %6003 = vmatmul.bf16.gmra.mxu0 %v5775
        %v6004 = vpop.f32.mrf.mxu0
        %v6005 = vadd.f32 %v5986, %v6004
        %v6006 = vpop.f32.mrf.mxu0
        %v6007 = vadd.f32 %v5988, %v6006
        %6008 = vmatmul.bf16.gmra.mxu0 %v5778
        %v6009 = vpop.f32.mrf.mxu0
        %v6010 = vadd.f32 %v5991, %v6009
        %v6011 = vpop.f32.mrf.mxu0
        %v6012 = vadd.f32 %v5993, %v6011
        %6013 = vdwg.mxu0
        %6014 = vmatpush.bf16.msra.mxu0 %v5951
        %6015 = vmatpush.bf16.msra.mxu0 %v5950
        %6016 = vmatpush.bf16.msra.mxu0 %v5949
        %6017 = vmatpush.bf16.msra.mxu0 %v5948
        %6018 = vmatpush.bf16.msra.mxu0 %v5947
        %6019 = vmatpush.bf16.msra.mxu0 %v5946
        %6020 = vmatpush.bf16.msra.mxu0 %v5945
        %6021 = vmatpush.bf16.msra.mxu0 %v5944
        %6022 = vmatmul.bf16.gmra.mxu0 %v5776
        %v6023 = vpop.f32.mrf.mxu0
        %v6024 = vadd.f32 %v6005, %v6023
        %v6025 = vpop.f32.mrf.mxu0
        %v6026 = vadd.f32 %v6007, %v6025
        %6027 = vmatmul.bf16.gmra.mxu0 %v5779
        %v6028 = vpop.f32.mrf.mxu0
        %v6029 = vadd.f32 %v6010, %v6028
        %v6030 = vpop.f32.mrf.mxu0
        %v6031 = vadd.f32 %v6012, %v6030
        %6032 = vdwg.mxu0
        %v6033 = vmax.f32 %v6024, 0.0
        %v6034 = vmax.f32 %v6026, 0.0
        %v6035 = vmax.f32 %v6029, 0.0
        %v6036 = vmax.f32 %v6031, 0.0
        %v6037 = vmul.f32 %v6033, %v4270
        %v6038 = vmul.f32 %v6034, %v4275
        %v6039 = vmul.f32 %v6035, %v4280
        %v6040 = vmul.f32 %v6036, %v4285
        %v6043 = vrot.slane %v6037, 1
        %v6044 = vrot.slane %v6038, 1
        %v6045 = vsel %vm1899, %v6043, %v6044
        %6046 = vrot.lane.b32.xlu0 %v6045, 48
        %v6047 = vpop.permute.xlu0 %6046
        %6048 = vrot.lane.b32.xlu0 %v6044, 48
        %v6049 = vpop.permute.xlu0 %6048
        %v6052 = vrot.slane %v6037, 2
        %v6053 = vrot.slane %v6038, 2
        %v6054 = vsel %vm1807, %v6052, %v6053
        %6055 = vrot.lane.b32.xlu0 %v6054, 96
        %v6056 = vpop.permute.xlu0 %6055
        %6057 = vrot.lane.b32.xlu0 %v6053, 96
        %v6058 = vpop.permute.xlu0 %6057
        %v6062 = vrot.slane %v6037, 5
        %v6063 = vrot.slane %v6038, 5
        %v6064 = vsel %vm1731, %v6062, %v6063
        %v6065 = vrot.slane %v6039, 5
        %v6066 = vsel %vm1731, %v6063, %v6065
        %6067 = vrot.lane.b32.xlu0 %v6064, 16
        %v6068 = vpop.permute.xlu0 %6067
        %6069 = vrot.lane.b32.xlu0 %v6066, 16
        %v6070 = vpop.permute.xlu0 %6069
        %v6073 = vrot.slane %v6037, 6
        %v6074 = vrot.slane %v6038, 6
        %v6075 = vsel %vm4323, %v6073, %v6074
        %v6076 = vrot.slane %v6039, 6
        %v6077 = vsel %vm4323, %v6074, %v6076
        %6078 = vrot.lane.b32.xlu0 %v6075, 64
        %v6079 = vpop.permute.xlu0 %6078
        %6080 = vrot.lane.b32.xlu0 %v6077, 64
        %v6081 = vpop.permute.xlu0 %6080
        %v6084 = vrot.slane %v6037, 7
        %v6085 = vrot.slane %v6038, 7
        %v6086 = vsel %vm2705, %v6084, %v6085
        %v6087 = vrot.slane %v6039, 7
        %v6088 = vsel %vm2705, %v6085, %v6087
        %6089 = vrot.lane.b32.xlu0 %v6086, 112
        %v6090 = vpop.permute.xlu0 %6089
        %6091 = vrot.lane.b32.xlu0 %v6088, 112
        %v6092 = vpop.permute.xlu0 %6091
        %v6095 = vrot.slane %v6039, 2
        %v6096 = vsel %vm1807, %v6053, %v6095
        %6097 = vrot.lane.b32.xlu0 %v6096, 32
        %v6098 = vpop.permute.xlu0 %6097
        %6099 = vrot.lane.b32.xlu0 %v6095, 32
        %v6100 = vpop.permute.xlu0 %6099
        %v6103 = vrot.slane %v6038, 3
        %v6104 = vrot.slane %v6039, 3
        %v6105 = vsel %vm2083, %v6103, %v6104
        %6106 = vrot.lane.b32.xlu0 %v6105, 80
        %v6107 = vpop.permute.xlu0 %6106
        %6108 = vrot.lane.b32.xlu0 %v6104, 80
        %v6109 = vpop.permute.xlu0 %6108
        %v6113 = vrot.slane %v6038, 4
        %v6114 = vrot.slane %v6039, 4
        %v6115 = vsel %vm4360, %v6113, %v6114
        %v6116 = vrot.slane %v6040, 4
        %v6117 = vsel %vm4360, %v6114, %v6116
        %v6120 = vsel %vm2520, %v6037, %v6047
        %v6121 = vsel %vm2520, %v6038, %v6049
        %v6122 = vsel %vm2239, %v6120, %v6056
        %v6123 = vsel %vm2239, %v6121, %v6058
        %v6124 = vsel %vm2507, %v6056, %v6068
        %v6125 = vsel %vm2507, %v6058, %v6070
        %v6126 = vsel %vm2527, %v6124, %v6079
        %v6127 = vsel %vm2527, %v6125, %v6081
        %v6128 = vsel %vm2547, %v6126, %v6090
        %v6129 = vsel %vm2547, %v6127, %v6092
        %v6130 = vsel %vm1528, %v6090, %v6098
        %v6131 = vsel %vm1528, %v6092, %v6100
        %v6132 = vsel %vm2534, %v6130, %v6107
        %v6133 = vsel %vm2534, %v6131, %v6109
        %v6134 = vpack.c.bf16 %v6123, %v6122
        %v6135 = vpack.c.bf16 %v6129, %v6128
        %v6136 = vpack.c.bf16 %v6133, %v6132
        %v6137 = vpack.c.bf16 %v6117, %v6115
        %v6138 = vld [vmem:[%s63] sm:$0xff]
        %v6139 = vld [vmem:[%s63 + $0x8] sm:$0xf]
        %v6140 = vld [vmem:[%s63 + $0xc] sm:$0xff]
        %v6141 = vld [vmem:[%s63 + $0x14] sm:$0xf]
        %v6142 = vld [vmem:[%s63 + $0x18] sm:$0xff]
        %v6143 = vld [vmem:[%s63 + $0x20] sm:$0xf]
        %v6144 = vld [vmem:[%s63 + $0x24] sm:$0xff]
        %v6145 = vld [vmem:[%s63 + $0x2c] sm:$0xf]
        %v6146 = vld [vmem:[%s63 + $0x30] sm:$0xff]
        %v6147 = vld [vmem:[%s63 + $0x38] sm:$0xf]
        %v6148 = vld [vmem:[%s63 + $0x3c] sm:$0xff]
        %v6149 = vld [vmem:[%s63 + $0x44] sm:$0xf]
        %v6150 = vld [vmem:[%s63 + $0x48] sm:$0xff]
        %v6151 = vld [vmem:[%s63 + $0x50] sm:$0xf]
        %v6152 = vld [vmem:[%s63 + $0x54] sm:$0xff]
        %v6153 = vld [vmem:[%s63 + $0x5c] sm:$0xf]
        %v6154 = vld [vmem:[%s63 + $0x60] sm:$0xff]
        %v6155 = vld [vmem:[%s63 + $0x68] sm:$0xf]
        %v6156 = vld [vmem:[%s63 + $0x6c] sm:$0xff]
        %v6157 = vld [vmem:[%s63 + $0x74] sm:$0xf]
        %v6158 = vld [vmem:[%s63 + $0x78] sm:$0xff]
        %v6159 = vld [vmem:[%s63 + $0x80] sm:$0xf]
        %v6160 = vld [vmem:[%s63 + $0x84] sm:$0xff]
        %v6161 = vld [vmem:[%s63 + $0x8c] sm:$0xf]
        %v6162 = vld [vmem:[%s63 + $0x90] sm:$0xff]
        %v6163 = vld [vmem:[%s63 + $0x98] sm:$0xf]
        %v6164 = vld [vmem:[%s63 + $0x9c] sm:$0xff]
        %v6165 = vld [vmem:[%s63 + $0xa4] sm:$0xf]
        %v6166 = vld [vmem:[%s63 + $0xa8] sm:$0xff]
        %v6167 = vld [vmem:[%s63 + $0xb0] sm:$0xf]
        %v6168 = vld [vmem:[%s63 + $0xb4] sm:$0xff]
        %v6169 = vld [vmem:[%s63 + $0xbc] sm:$0xf]
        %v6170 = vld [vmem:[%s63 + $0xc0] sm:$0xff]
        %v6171 = vld [vmem:[%s63 + $0xc8] sm:$0xf]
        %v6172 = vld [vmem:[%s63 + $0xcc] sm:$0xff]
        %v6173 = vld [vmem:[%s63 + $0xd4] sm:$0xf]
        %v6174 = vld [vmem:[%s63 + $0xd8] sm:$0xff]
        %v6175 = vld [vmem:[%s63 + $0xe0] sm:$0xf]
        %v6176 = vld [vmem:[%s63 + $0xe4] sm:$0xff]
        %v6177 = vld [vmem:[%s63 + $0xec] sm:$0xf]
        %v6178 = vld [vmem:[%s63 + $0xf0] sm:$0xff]
        %v6179 = vld [vmem:[%s63 + $0xf8] sm:$0xf]
        %v6180 = vld [vmem:[%s63 + $0xfc] sm:$0xff]
        %v6181 = vld [vmem:[%s63 + $0x104] sm:$0xf]
        %v6182 = vld [vmem:[%s63 + $0x108] sm:$0xff]
        %v6183 = vld [vmem:[%s63 + $0x110] sm:$0xf]
        %v6184 = vld [vmem:[%s63 + $0x114] sm:$0xff]
        %v6185 = vld [vmem:[%s63 + $0x11c] sm:$0xf]
        %v6186 = vld [vmem:[%s63 + $0x120] sm:$0xff]
        %v6187 = vld [vmem:[%s63 + $0x128] sm:$0xf]
        %v6188 = vld [vmem:[%s63 + $0x12c] sm:$0xff]
        %v6189 = vld [vmem:[%s63 + $0x134] sm:$0xf]
        %v6190 = vld [vmem:[%s63 + $0x138] sm:$0xff]
        %v6191 = vld [vmem:[%s63 + $0x140] sm:$0xf]
        %v6192 = vld [vmem:[%s63 + $0x144] sm:$0xff]
        %v6193 = vld [vmem:[%s63 + $0x14c] sm:$0xf]
        %v6194 = vld [vmem:[%s63 + $0x150] sm:$0xff]
        %v6195 = vld [vmem:[%s63 + $0x158] sm:$0xf]
        %v6196 = vld [vmem:[%s63 + $0x15c] sm:$0xff]
        %v6197 = vld [vmem:[%s63 + $0x164] sm:$0xf]
        %v6198 = vld [vmem:[%s63 + $0x168] sm:$0xff]
        %v6199 = vld [vmem:[%s63 + $0x170] sm:$0xf]
        %v6200 = vld [vmem:[%s63 + $0x174] sm:$0xff]
        %v6201 = vld [vmem:[%s63 + $0x17c] sm:$0xf]
        %v6202 = vld [vmem:[%s63 + $0x180] sm:$0xff]
        %v6203 = vld [vmem:[%s63 + $0x188] sm:$0xf]
        %v6204 = vld [vmem:[%s63 + $0x18c] sm:$0xff]
        %v6205 = vld [vmem:[%s63 + $0x194] sm:$0xf]
        %v6206 = vld [vmem:[%s63 + $0x198] sm:$0xff]
        %v6207 = vld [vmem:[%s63 + $0x1a0] sm:$0xf]
        %v6208 = vld [vmem:[%s63 + $0x1a4] sm:$0xff]
        %v6209 = vld [vmem:[%s63 + $0x1ac] sm:$0xf]
        %v6210 = vld [vmem:[%s63 + $0x1b0] sm:$0xff]
        %v6211 = vld [vmem:[%s63 + $0x1b8] sm:$0xf]
        %v6212 = vld [vmem:[%s63 + $0x1bc] sm:$0xff]
        %v6213 = vld [vmem:[%s63 + $0x1c4] sm:$0xf]
        %v6214 = vld [vmem:[%s63 + $0x1c8] sm:$0xff]
        %v6215 = vld [vmem:[%s63 + $0x1d0] sm:$0xf]
        %v6216 = vld [vmem:[%s63 + $0x1d4] sm:$0xff]
        %v6217 = vld [vmem:[%s63 + $0x1dc] sm:$0xf]
        %v6218 = vld [vmem:[%s63 + $0x1e0] sm:$0xff]
        %v6219 = vld [vmem:[%s63 + $0x1e8] sm:$0xf]
        %v6220 = vld [vmem:[%s63 + $0x1ec] sm:$0xff]
        %v6221 = vld [vmem:[%s63 + $0x1f4] sm:$0xf]
        %v6222 = vld [vmem:[%s63 + $0x1f8] sm:$0xff]
        %v6223 = vld [vmem:[%s63 + $0x200] sm:$0xf]
        %v6224 = vld [vmem:[%s63 + $0x204] sm:$0xff]
        %v6225 = vld [vmem:[%s63 + $0x20c] sm:$0xf]
        %v6226 = vld [vmem:[%s63 + $0x210] sm:$0xff]
        %v6227 = vld [vmem:[%s63 + $0x218] sm:$0xf]
        %v6228 = vld [vmem:[%s63 + $0x21c] sm:$0xff]
        %v6229 = vld [vmem:[%s63 + $0x224] sm:$0xf]
        %v6230 = vld [vmem:[%s63 + $0x228] sm:$0xff]
        %v6231 = vld [vmem:[%s63 + $0x230] sm:$0xf]
        %v6232 = vld [vmem:[%s63 + $0x234] sm:$0xff]
        %v6233 = vld [vmem:[%s63 + $0x23c] sm:$0xf]
        %v6234 = vld [vmem:[%s63 + $0x240] sm:$0xff]
        %v6235 = vld [vmem:[%s63 + $0x248] sm:$0xf]
        %v6236 = vld [vmem:[%s63 + $0x24c] sm:$0xff]
        %v6237 = vld [vmem:[%s63 + $0x254] sm:$0xf]
        %v6238 = vld [vmem:[%s63 + $0x258] sm:$0xff]
        %v6239 = vld [vmem:[%s63 + $0x260] sm:$0xf]
        %v6240 = vld [vmem:[%s63 + $0x264] sm:$0xff]
        %v6241 = vld [vmem:[%s63 + $0x26c] sm:$0xf]
        %v6242 = vld [vmem:[%s63 + $0x270] sm:$0xff]
        %v6243 = vld [vmem:[%s63 + $0x278] sm:$0xf]
        %v6244 = vld [vmem:[%s63 + $0x27c] sm:$0xff]
        %v6245 = vld [vmem:[%s63 + $0x284] sm:$0xf]
        %v6246 = vld [vmem:[%s65] sm:$0x7]
        %v6248 = vperm.slane %v6246, 0
        %v6249 = vperm.slane %v6246, 1
        %v6250 = vperm.slane %v6246, 2
        %v6362 = vunpack.c.l.b16 %v6138
        %v6363 = vunpack.c.h.b16 %v6138
        %v6364 = vunpack.c.l.b16 %v6139
        %v6365 = vunpack.c.l.b16 %v6140
        %v6366 = vunpack.c.h.b16 %v6140
        %v6367 = vunpack.c.l.b16 %v6141
        %v6368 = vunpack.c.l.b16 %v6142
        %v6369 = vunpack.c.h.b16 %v6142
        %v6370 = vunpack.c.l.b16 %v6143
        %v6371 = vunpack.c.l.b16 %v6144
        %v6372 = vunpack.c.h.b16 %v6144
        %v6373 = vunpack.c.l.b16 %v6145
        %v6374 = vunpack.c.l.b16 %v6146
        %v6375 = vunpack.c.h.b16 %v6146
        %v6376 = vunpack.c.l.b16 %v6147
        %v6377 = vunpack.c.l.b16 %v6148
        %v6378 = vunpack.c.h.b16 %v6148
        %v6379 = vunpack.c.l.b16 %v6149
        %v6380 = vunpack.c.l.b16 %v6150
        %v6381 = vunpack.c.h.b16 %v6150
        %v6382 = vunpack.c.l.b16 %v6151
        %v6383 = vunpack.c.l.b16 %v6152
        %v6384 = vunpack.c.h.b16 %v6152
        %v6385 = vunpack.c.l.b16 %v6153
        %v6386 = vunpack.c.l.b16 %v6154
        %v6387 = vunpack.c.h.b16 %v6154
        %v6388 = vunpack.c.l.b16 %v6155
        %v6389 = vunpack.c.l.b16 %v6156
        %v6390 = vunpack.c.h.b16 %v6156
        %v6391 = vunpack.c.l.b16 %v6157
        %v6392 = vunpack.c.l.b16 %v6158
        %v6393 = vunpack.c.h.b16 %v6158
        %v6394 = vunpack.c.l.b16 %v6159
        %v6395 = vunpack.c.l.b16 %v6160
        %v6396 = vunpack.c.h.b16 %v6160
        %v6397 = vunpack.c.l.b16 %v6161
        %v6398 = vunpack.c.l.b16 %v6162
        %v6399 = vunpack.c.h.b16 %v6162
        %v6400 = vunpack.c.l.b16 %v6163
        %v6401 = vunpack.c.l.b16 %v6164
        %v6402 = vunpack.c.h.b16 %v6164
        %v6403 = vunpack.c.l.b16 %v6165
        %v6404 = vunpack.c.l.b16 %v6166
        %v6405 = vunpack.c.h.b16 %v6166
        %v6406 = vunpack.c.l.b16 %v6167
        %v6407 = vunpack.c.l.b16 %v6168
        %v6408 = vunpack.c.h.b16 %v6168
        %v6409 = vunpack.c.l.b16 %v6169
        %v6410 = vunpack.c.l.b16 %v6170
        %v6411 = vunpack.c.h.b16 %v6170
        %v6412 = vunpack.c.l.b16 %v6171
        %v6413 = vunpack.c.l.b16 %v6172
        %v6414 = vunpack.c.h.b16 %v6172
        %v6415 = vunpack.c.l.b16 %v6173
        %v6416 = vunpack.c.l.b16 %v6174
        %v6417 = vunpack.c.h.b16 %v6174
        %v6418 = vunpack.c.l.b16 %v6175
        %v6419 = vunpack.c.l.b16 %v6176
        %v6420 = vunpack.c.h.b16 %v6176
        %v6421 = vunpack.c.l.b16 %v6177
        %v6422 = vunpack.c.l.b16 %v6178
        %v6423 = vunpack.c.h.b16 %v6178
        %v6424 = vunpack.c.l.b16 %v6179
        %v6425 = vunpack.c.l.b16 %v6180
        %v6426 = vunpack.c.h.b16 %v6180
        %v6427 = vunpack.c.l.b16 %v6181
        %v6428 = vunpack.c.l.b16 %v6182
        %v6429 = vunpack.c.h.b16 %v6182
        %v6430 = vunpack.c.l.b16 %v6183
        %v6431 = vunpack.c.l.b16 %v6184
        %v6432 = vunpack.c.h.b16 %v6184
        %v6433 = vunpack.c.l.b16 %v6185
        %v6434 = vunpack.c.l.b16 %v6186
        %v6435 = vunpack.c.h.b16 %v6186
        %v6436 = vunpack.c.l.b16 %v6187
        %v6437 = vunpack.c.l.b16 %v6188
        %v6438 = vunpack.c.h.b16 %v6188
        %v6439 = vunpack.c.l.b16 %v6189
        %v6440 = vunpack.c.l.b16 %v6190
        %v6441 = vunpack.c.h.b16 %v6190
        %v6442 = vunpack.c.l.b16 %v6191
        %v6443 = vunpack.c.l.b16 %v6192
        %v6444 = vunpack.c.h.b16 %v6192
        %v6445 = vunpack.c.l.b16 %v6193
        %v6446 = vunpack.c.l.b16 %v6194
        %v6447 = vunpack.c.h.b16 %v6194
        %v6448 = vunpack.c.l.b16 %v6195
        %v6449 = vunpack.c.l.b16 %v6196
        %v6450 = vunpack.c.h.b16 %v6196
        %v6451 = vunpack.c.l.b16 %v6197
        %v6452 = vunpack.c.l.b16 %v6198
        %v6453 = vunpack.c.h.b16 %v6198
        %v6454 = vunpack.c.l.b16 %v6199
        %v6455 = vunpack.c.l.b16 %v6200
        %v6456 = vunpack.c.h.b16 %v6200
        %v6457 = vunpack.c.l.b16 %v6201
        %v6458 = vunpack.c.l.b16 %v6202
        %v6459 = vunpack.c.h.b16 %v6202
        %v6460 = vunpack.c.l.b16 %v6203
        %v6461 = vunpack.c.l.b16 %v6204
        %v6462 = vunpack.c.h.b16 %v6204
        %v6463 = vunpack.c.l.b16 %v6205
        %v6464 = vunpack.c.l.b16 %v6206
        %v6465 = vunpack.c.h.b16 %v6206
        %v6466 = vunpack.c.l.b16 %v6207
        %v6467 = vunpack.c.l.b16 %v6208
        %v6468 = vunpack.c.h.b16 %v6208
        %v6469 = vunpack.c.l.b16 %v6209
        %v6470 = vunpack.c.l.b16 %v6210
        %v6471 = vunpack.c.h.b16 %v6210
        %v6472 = vunpack.c.l.b16 %v6211
        %v6473 = vunpack.c.l.b16 %v6212
        %v6474 = vunpack.c.h.b16 %v6212
        %v6475 = vunpack.c.l.b16 %v6213
        %v6476 = vunpack.c.l.b16 %v6214
        %v6477 = vunpack.c.h.b16 %v6214
        %v6478 = vunpack.c.l.b16 %v6215
        %v6479 = vunpack.c.l.b16 %v6216
        %v6480 = vunpack.c.h.b16 %v6216
        %v6481 = vunpack.c.l.b16 %v6217
        %v6482 = vunpack.c.l.b16 %v6218
        %v6483 = vunpack.c.h.b16 %v6218
        %v6484 = vunpack.c.l.b16 %v6219
        %v6485 = vunpack.c.l.b16 %v6220
        %v6486 = vunpack.c.h.b16 %v6220
        %v6487 = vunpack.c.l.b16 %v6221
        %v6488 = vunpack.c.l.b16 %v6222
        %v6489 = vunpack.c.h.b16 %v6222
        %v6490 = vunpack.c.l.b16 %v6223
        %v6491 = vunpack.c.l.b16 %v6224
        %v6492 = vunpack.c.h.b16 %v6224
        %v6493 = vunpack.c.l.b16 %v6225
        %v6494 = vunpack.c.l.b16 %v6226
        %v6495 = vunpack.c.h.b16 %v6226
        %v6496 = vunpack.c.l.b16 %v6227
        %v6497 = vunpack.c.l.b16 %v6228
        %v6498 = vunpack.c.h.b16 %v6228
        %v6499 = vunpack.c.l.b16 %v6229
        %v6500 = vunpack.c.l.b16 %v6230
        %v6501 = vunpack.c.h.b16 %v6230
        %v6502 = vunpack.c.l.b16 %v6231
        %v6503 = vunpack.c.l.b16 %v6232
        %v6504 = vunpack.c.h.b16 %v6232
        %v6505 = vunpack.c.l.b16 %v6233
        %v6506 = vunpack.c.l.b16 %v6234
        %v6507 = vunpack.c.h.b16 %v6234
        %v6508 = vunpack.c.l.b16 %v6235
        %v6509 = vunpack.c.l.b16 %v6236
        %v6510 = vunpack.c.h.b16 %v6236
        %v6511 = vunpack.c.l.b16 %v6237
        %v6512 = vunpack.c.l.b16 %v6238
        %v6513 = vunpack.c.h.b16 %v6238
        %v6514 = vunpack.c.l.b16 %v6239
        %v6515 = vunpack.c.l.b16 %v6240
        %v6516 = vunpack.c.h.b16 %v6240
        %v6517 = vunpack.c.l.b16 %v6241
        %v6518 = vunpack.c.l.b16 %v6242
        %v6519 = vunpack.c.h.b16 %v6242
        %v6520 = vunpack.c.l.b16 %v6243
        %v6521 = vunpack.c.l.b16 %v6244
        %v6522 = vunpack.c.h.b16 %v6244
        %v6523 = vunpack.c.l.b16 %v6245
        %v6524 = vpack.c.b16 %v6365, %v6362
        %v6525 = vpack.c.b16 %v6366, %v6363
        %v6526 = vpack.c.b16 %v6367, %v6364
        %v6527 = vpack.c.b16 %v6371, %v6368
        %v6528 = vpack.c.b16 %v6372, %v6369
        %v6529 = vpack.c.b16 %v6373, %v6370
        %v6530 = vpack.c.b16 %v6377, %v6374
        %v6531 = vpack.c.b16 %v6378, %v6375
        %v6532 = vpack.c.b16 %v6379, %v6376
        %v6533 = vpack.c.b16 %v6383, %v6380
        %v6534 = vpack.c.b16 %v6384, %v6381
        %v6535 = vpack.c.b16 %v6385, %v6382
        %v6536 = vpack.c.b16 %v6389, %v6386
        %v6537 = vpack.c.b16 %v6390, %v6387
        %v6538 = vpack.c.b16 %v6391, %v6388
        %v6539 = vpack.c.b16 %v6395, %v6392
        %v6540 = vpack.c.b16 %v6396, %v6393
        %v6541 = vpack.c.b16 %v6397, %v6394
        %v6542 = vpack.c.b16 %v6401, %v6398
        %v6543 = vpack.c.b16 %v6402, %v6399
        %v6544 = vpack.c.b16 %v6403, %v6400
        %v6545 = vpack.c.b16 %v6407, %v6404
        %v6546 = vpack.c.b16 %v6408, %v6405
        %v6547 = vpack.c.b16 %v6409, %v6406
        %v6548 = vpack.c.b16 %v6413, %v6410
        %v6549 = vpack.c.b16 %v6414, %v6411
        %v6550 = vpack.c.b16 %v6415, %v6412
        %v6551 = vpack.c.b16 %v6419, %v6416
        %v6552 = vpack.c.b16 %v6420, %v6417
        %v6553 = vpack.c.b16 %v6421, %v6418
        %v6554 = vpack.c.b16 %v6425, %v6422
        %v6555 = vpack.c.b16 %v6426, %v6423
        %v6556 = vpack.c.b16 %v6427, %v6424
        %v6557 = vpack.c.b16 %v6431, %v6428
        %v6558 = vpack.c.b16 %v6432, %v6429
        %v6559 = vpack.c.b16 %v6433, %v6430
        %v6560 = vpack.c.b16 %v6437, %v6434
        %v6561 = vpack.c.b16 %v6438, %v6435
        %v6562 = vpack.c.b16 %v6439, %v6436
        %v6563 = vpack.c.b16 %v6443, %v6440
        %v6564 = vpack.c.b16 %v6444, %v6441
        %v6565 = vpack.c.b16 %v6445, %v6442
        %v6566 = vpack.c.b16 %v6449, %v6446
        %v6567 = vpack.c.b16 %v6450, %v6447
        %v6568 = vpack.c.b16 %v6451, %v6448
        %v6569 = vpack.c.b16 %v6455, %v6452
        %v6570 = vpack.c.b16 %v6456, %v6453
        %v6571 = vpack.c.b16 %v6457, %v6454
        %v6572 = vpack.c.b16 %v6461, %v6458
        %v6573 = vpack.c.b16 %v6462, %v6459
        %v6574 = vpack.c.b16 %v6463, %v6460
        %v6575 = vpack.c.b16 %v6467, %v6464
        %v6576 = vpack.c.b16 %v6468, %v6465
        %v6577 = vpack.c.b16 %v6469, %v6466
        %v6578 = vpack.c.b16 %v6473, %v6470
        %v6579 = vpack.c.b16 %v6474, %v6471
        %v6580 = vpack.c.b16 %v6475, %v6472
        %v6581 = vpack.c.b16 %v6479, %v6476
        %v6582 = vpack.c.b16 %v6480, %v6477
        %v6583 = vpack.c.b16 %v6481, %v6478
        %v6584 = vpack.c.b16 %v6485, %v6482
        %v6585 = vpack.c.b16 %v6486, %v6483
        %v6586 = vpack.c.b16 %v6487, %v6484
        %v6587 = vpack.c.b16 %v6491, %v6488
        %v6588 = vpack.c.b16 %v6492, %v6489
        %v6589 = vpack.c.b16 %v6493, %v6490
        %v6590 = vpack.c.b16 %v6497, %v6494
        %v6591 = vpack.c.b16 %v6498, %v6495
        %v6592 = vpack.c.b16 %v6499, %v6496
        %v6593 = vpack.c.b16 %v6503, %v6500
        %v6594 = vpack.c.b16 %v6504, %v6501
        %v6595 = vpack.c.b16 %v6505, %v6502
        %v6596 = vpack.c.b16 %v6509, %v6506
        %v6597 = vpack.c.b16 %v6510, %v6507
        %v6598 = vpack.c.b16 %v6511, %v6508
        %v6599 = vpack.c.b16 %v6515, %v6512
        %v6600 = vpack.c.b16 %v6516, %v6513
        %v6601 = vpack.c.b16 %v6517, %v6514
        %v6602 = vpack.c.b16 %v6521, %v6518
        %v6603 = vpack.c.b16 %v6522, %v6519
        %v6604 = vpack.c.b16 %v6523, %v6520
        %v6687 = vsel %vm2520, %v6137, 0
        %6689 = vmatpush.bf16.msra.mxu0 %v6545
        %6690 = vmatpush.bf16.msra.mxu0 %v6542
        %6691 = vmatpush.bf16.msra.mxu0 %v6539
        %6692 = vmatpush.bf16.msra.mxu0 %v6536
        %6693 = vmatpush.bf16.msra.mxu0 %v6533
        %6694 = vmatpush.bf16.msra.mxu0 %v6530
        %6695 = vmatpush.bf16.msra.mxu0 %v6527
        %6696 = vmatpush.bf16.msra.mxu0 %v6524
        %6697 = vmatmul.bf16.gmra.mxu0 %v6134
        %v6698 = vpop.f32.mrf.mxu0
        %v6699 = vadd.f32 %v6248, %v6698
        %v6700 = vpop.f32.mrf.mxu0
        %v6701 = vadd.f32 %v6248, %v6700
        %6702 = vdwg.mxu0
        %6703 = vmatpush.bf16.msra.mxu0 %v6569
        %6704 = vmatpush.bf16.msra.mxu0 %v6566
        %6705 = vmatpush.bf16.msra.mxu0 %v6563
        %6706 = vmatpush.bf16.msra.mxu0 %v6560
        %6707 = vmatpush.bf16.msra.mxu0 %v6557
        %6708 = vmatpush.bf16.msra.mxu0 %v6554
        %6709 = vmatpush.bf16.msra.mxu0 %v6551
        %6710 = vmatpush.bf16.msra.mxu0 %v6548
        %6711 = vmatmul.bf16.gmra.mxu0 %v6135
        %v6712 = vpop.f32.mrf.mxu0
        %v6713 = vadd.f32 %v6699, %v6712
        %v6714 = vpop.f32.mrf.mxu0
        %v6715 = vadd.f32 %v6701, %v6714
        %6716 = vdwg.mxu0
        %6717 = vmatpush.bf16.msra.mxu0 %v6593
        %6718 = vmatpush.bf16.msra.mxu0 %v6590
        %6719 = vmatpush.bf16.msra.mxu0 %v6587
        %6720 = vmatpush.bf16.msra.mxu0 %v6584
        %6721 = vmatpush.bf16.msra.mxu0 %v6581
        %6722 = vmatpush.bf16.msra.mxu0 %v6578
        %6723 = vmatpush.bf16.msra.mxu0 %v6575
        %6724 = vmatpush.bf16.msra.mxu0 %v6572
        %6725 = vmatmul.bf16.gmra.mxu0 %v6136
        %v6726 = vpop.f32.mrf.mxu0
        %v6727 = vadd.f32 %v6713, %v6726
        %v6728 = vpop.f32.mrf.mxu0
        %v6729 = vadd.f32 %v6715, %v6728
        %6730 = vdwg.mxu0
        %6731 = vmatpush.bf16.msra.mxu0 0
        %6732 = vmatpush.bf16.msra.mxu0 0
        %6733 = vmatpush.bf16.msra.mxu0 0
        %6734 = vmatpush.bf16.msra.mxu0 0
        %6735 = vmatpush.bf16.msra.mxu0 0
        %6736 = vmatpush.bf16.msra.mxu0 %v6602
        %6737 = vmatpush.bf16.msra.mxu0 %v6599
        %6738 = vmatpush.bf16.msra.mxu0 %v6596
        %6739 = vmatmul.bf16.gmra.mxu0 %v6687
        %v6740 = vpop.f32.mrf.mxu0
        %v6741 = vadd.f32 %v6727, %v6740
        %v6742 = vpop.f32.mrf.mxu0
        %v6743 = vadd.f32 %v6729, %v6742
        %6744 = vdwg.mxu0
        %6745 = vmatpush.bf16.msra.mxu0 %v6546
        %6746 = vmatpush.bf16.msra.mxu0 %v6543
        %6747 = vmatpush.bf16.msra.mxu0 %v6540
        %6748 = vmatpush.bf16.msra.mxu0 %v6537
        %6749 = vmatpush.bf16.msra.mxu0 %v6534
        %6750 = vmatpush.bf16.msra.mxu0 %v6531
        %6751 = vmatpush.bf16.msra.mxu0 %v6528
        %6752 = vmatpush.bf16.msra.mxu0 %v6525
        %6753 = vmatmul.bf16.gmra.mxu0 %v6134
        %v6754 = vpop.f32.mrf.mxu0
        %v6755 = vadd.f32 %v6249, %v6754
        %v6756 = vpop.f32.mrf.mxu0
        %v6757 = vadd.f32 %v6249, %v6756
        %6758 = vdwg.mxu0
        %6759 = vmatpush.bf16.msra.mxu0 %v6570
        %6760 = vmatpush.bf16.msra.mxu0 %v6567
        %6761 = vmatpush.bf16.msra.mxu0 %v6564
        %6762 = vmatpush.bf16.msra.mxu0 %v6561
        %6763 = vmatpush.bf16.msra.mxu0 %v6558
        %6764 = vmatpush.bf16.msra.mxu0 %v6555
        %6765 = vmatpush.bf16.msra.mxu0 %v6552
        %6766 = vmatpush.bf16.msra.mxu0 %v6549
        %6767 = vmatmul.bf16.gmra.mxu0 %v6135
        %v6768 = vpop.f32.mrf.mxu0
        %v6769 = vadd.f32 %v6755, %v6768
        %v6770 = vpop.f32.mrf.mxu0
        %v6771 = vadd.f32 %v6757, %v6770
        %6772 = vdwg.mxu0
        %6773 = vmatpush.bf16.msra.mxu0 %v6594
        %6774 = vmatpush.bf16.msra.mxu0 %v6591
        %6775 = vmatpush.bf16.msra.mxu0 %v6588
        %6776 = vmatpush.bf16.msra.mxu0 %v6585
        %6777 = vmatpush.bf16.msra.mxu0 %v6582
        %6778 = vmatpush.bf16.msra.mxu0 %v6579
        %6779 = vmatpush.bf16.msra.mxu0 %v6576
        %6780 = vmatpush.bf16.msra.mxu0 %v6573
        %6781 = vmatmul.bf16.gmra.mxu0 %v6136
        %v6782 = vpop.f32.mrf.mxu0
        %v6783 = vadd.f32 %v6769, %v6782
        %v6784 = vpop.f32.mrf.mxu0
        %v6785 = vadd.f32 %v6771, %v6784
        %6786 = vdwg.mxu0
        %6787 = vmatpush.bf16.msra.mxu0 0
        %6788 = vmatpush.bf16.msra.mxu0 0
        %6789 = vmatpush.bf16.msra.mxu0 0
        %6790 = vmatpush.bf16.msra.mxu0 0
        %6791 = vmatpush.bf16.msra.mxu0 0
        %6792 = vmatpush.bf16.msra.mxu0 %v6603
        %6793 = vmatpush.bf16.msra.mxu0 %v6600
        %6794 = vmatpush.bf16.msra.mxu0 %v6597
        %6795 = vmatmul.bf16.gmra.mxu0 %v6687
        %v6796 = vpop.f32.mrf.mxu0
        %v6797 = vadd.f32 %v6783, %v6796
        %v6798 = vpop.f32.mrf.mxu0
        %v6799 = vadd.f32 %v6785, %v6798
        %6800 = vdwg.mxu0
        %6801 = vmatpush.bf16.msra.mxu0 %v6547
        %6802 = vmatpush.bf16.msra.mxu0 %v6544
        %6803 = vmatpush.bf16.msra.mxu0 %v6541
        %6804 = vmatpush.bf16.msra.mxu0 %v6538
        %6805 = vmatpush.bf16.msra.mxu0 %v6535
        %6806 = vmatpush.bf16.msra.mxu0 %v6532
        %6807 = vmatpush.bf16.msra.mxu0 %v6529
        %6808 = vmatpush.bf16.msra.mxu0 %v6526
        %6809 = vmatmul.bf16.gmra.mxu0 %v6134
        %v6810 = vpop.f32.mrf.mxu0
        %v6811 = vadd.f32 %v6250, %v6810
        %v6812 = vpop.f32.mrf.mxu0
        %v6813 = vadd.f32 %v6250, %v6812
        %6814 = vdwg.mxu0
        %6815 = vmatpush.bf16.msra.mxu0 %v6571
        %6816 = vmatpush.bf16.msra.mxu0 %v6568
        %6817 = vmatpush.bf16.msra.mxu0 %v6565
        %6818 = vmatpush.bf16.msra.mxu0 %v6562
        %6819 = vmatpush.bf16.msra.mxu0 %v6559
        %6820 = vmatpush.bf16.msra.mxu0 %v6556
        %6821 = vmatpush.bf16.msra.mxu0 %v6553
        %6822 = vmatpush.bf16.msra.mxu0 %v6550
        %6823 = vmatmul.bf16.gmra.mxu0 %v6135
        %v6824 = vpop.f32.mrf.mxu0
        %v6825 = vadd.f32 %v6811, %v6824
        %v6826 = vpop.f32.mrf.mxu0
        %v6827 = vadd.f32 %v6813, %v6826
        %6828 = vdwg.mxu0
        %6829 = vmatpush.bf16.msra.mxu0 %v6595
        %6830 = vmatpush.bf16.msra.mxu0 %v6592
        %6831 = vmatpush.bf16.msra.mxu0 %v6589
        %6832 = vmatpush.bf16.msra.mxu0 %v6586
        %6833 = vmatpush.bf16.msra.mxu0 %v6583
        %6834 = vmatpush.bf16.msra.mxu0 %v6580
        %6835 = vmatpush.bf16.msra.mxu0 %v6577
        %6836 = vmatpush.bf16.msra.mxu0 %v6574
        %6837 = vmatmul.bf16.gmra.mxu0 %v6136
        %v6838 = vpop.f32.mrf.mxu0
        %v6839 = vadd.f32 %v6825, %v6838
        %v6840 = vpop.f32.mrf.mxu0
        %v6841 = vadd.f32 %v6827, %v6840
        %6842 = vdwg.mxu0
        %6843 = vmatpush.bf16.msra.mxu0 0
        %6844 = vmatpush.bf16.msra.mxu0 0
        %6845 = vmatpush.bf16.msra.mxu0 0
        %6846 = vmatpush.bf16.msra.mxu0 0
        %6847 = vmatpush.bf16.msra.mxu0 0
        %6848 = vmatpush.bf16.msra.mxu0 %v6604
        %6849 = vmatpush.bf16.msra.mxu0 %v6601
        %6850 = vmatpush.bf16.msra.mxu0 %v6598
        %6851 = vmatmul.bf16.gmra.mxu0 %v6687
        %v6852 = vpop.f32.mrf.mxu0
        %v6853 = vadd.f32 %v6839, %v6852
        %v6854 = vpop.f32.mrf.mxu0
        %v6855 = vadd.f32 %v6841, %v6854
        %6856 = vdwg.mxu0
        %v6857 = vmax.f32 %v6741, 0.0
        %v6858 = vmax.f32 %v6797, 0.0
        %v6859 = vmax.f32 %v6853, 0.0
        %v6860 = vmax.f32 %v6743, 0.0
        %v6861 = vmax.f32 %v6799, 0.0
        %v6862 = vmax.f32 %v6855, 0.0
        %v6869 = vrot.slane %v6857, 2
        %v6870 = vrot.slane %v6858, 2
        %v6871 = vrot.slane %v6859, 2
        %v6872 = vrot.slane %v6860, 2
        %v6873 = vsel %vm1807, %v6869, %v6872
        %v6874 = vrot.slane %v6861, 2
        %v6875 = vsel %vm1807, %v6870, %v6874
        %v6876 = vrot.slane %v6862, 2
        %v6877 = vsel %vm1807, %v6871, %v6876
        %v6887 = vsel %vm1807, 0.0, %v6869
        %v6888 = vsel %vm1807, 0.0, %v6870
        %v6889 = vsel %vm1807, 0.0, %v6871
        %v6890 = vsel %vm1731, %v6872, 0.0
        %v6891 = vsel %vm1731, %v6874, 0.0
        %v6892 = vsel %vm1731, %v6876, 0.0
        %v6893 = vmul.f32 %v6887, %v4270
        %v6894 = vmul.f32 %v6888, %v4270
        %v6895 = vmul.f32 %v6889, %v4270
        %v6896 = vmul.f32 %v6873, %v4275
        %v6897 = vmul.f32 %v6875, %v4275
        %v6898 = vmul.f32 %v6877, %v4275
        %v6899 = vmul.f32 %v6890, %v4280
        %v6900 = vmul.f32 %v6891, %v4280
        %v6901 = vmul.f32 %v6892, %v4280
        %v6902 = vadd.f32 %v6893, %v5765
        %v6903 = vadd.f32 %v6894, %v5766
        %v6904 = vadd.f32 %v6895, %v5767
        %v6905 = vadd.f32 %v6896, %v5768
        %v6906 = vadd.f32 %v6897, %v5769
        %v6907 = vadd.f32 %v6898, %v5770
        %v6908 = vadd.f32 %v6899, %v5771
        %v6909 = vadd.f32 %v6900, %v5772
        %v6910 = vadd.f32 %v6901, %v5773
        %v6911 = vadd.f32 %v4722, %v4722
        %v6912 = vpack.c.bf16 %v6905, %v6902
        %v6913 = vpack.c.bf16 %v6906, %v6903
        %v6914 = vpack.c.bf16 %v6907, %v6904
        %v6915 = vpack.c.bf16 %v6911, %v6908
        %v6916 = vpack.c.bf16 %v6911, %v6909
        %v6917 = vpack.c.bf16 %v6911, %v6910
        %v6918 = vld [vmem:[%s67] sm:$0xf]
        %v6919 = vld [vmem:[%s67 + $0x4] sm:$0xf]
        %v6920 = vld [vmem:[%s67 + $0x8] sm:$0xf]
        %v6921 = vld [vmem:[%s67 + $0xc] sm:$0xf]
        %v6922 = vld [vmem:[%s67 + $0x10] sm:$0xf]
        %v6923 = vld [vmem:[%s67 + $0x14] sm:$0xf]
        %v6924 = vld [vmem:[%s67 + $0x18] sm:$0xf]
        %v6925 = vld [vmem:[%s67 + $0x1c] sm:$0xf]
        %v6926 = vld [vmem:[%s67 + $0x20] sm:$0xf]
        %v6927 = vld [vmem:[%s67 + $0x24] sm:$0xf]
        %v6928 = vld [vmem:[%s67 + $0x28] sm:$0xf]
        %v6929 = vld [vmem:[%s67 + $0x2c] sm:$0xf]
        %v6930 = vld [vmem:[%s67 + $0x30] sm:$0xf]
        %v6931 = vld [vmem:[%s67 + $0x34] sm:$0xf]
        %v6932 = vld [vmem:[%s67 + $0x38] sm:$0xf]
        %v6933 = vld [vmem:[%s67 + $0x3c] sm:$0xf]
        %v6934 = vld [vmem:[%s67 + $0x40] sm:$0xf]
        %v6935 = vld [vmem:[%s67 + $0x44] sm:$0xf]
        %v6936 = vld [vmem:[%s67 + $0x48] sm:$0xf]
        %v6937 = vld [vmem:[%s67 + $0x4c] sm:$0xf]
        %v6938 = vld [vmem:[%s67 + $0x50] sm:$0xf]
        %v6939 = vld [vmem:[%s67 + $0x54] sm:$0xf]
        %v6940 = vld [vmem:[%s67 + $0x58] sm:$0xf]
        %v6941 = vld [vmem:[%s67 + $0x5c] sm:$0xf]
        %v6942 = vld [vmem:[%s67 + $0x60] sm:$0xf]
        %v6943 = vld [vmem:[%s67 + $0x64] sm:$0xf]
        %v6944 = vld [vmem:[%s67 + $0x68] sm:$0xf]
        %v6945 = vld [vmem:[%s67 + $0x6c] sm:$0xf]
        %v6946 = vld [vmem:[%s67 + $0x70] sm:$0xf]
        %v6947 = vld [vmem:[%s67 + $0x74] sm:$0xf]
        %v6948 = vld [vmem:[%s67 + $0x78] sm:$0xf]
        %v6949 = vld [vmem:[%s67 + $0x7c] sm:$0xf]
        %v6950 = vld [vmem:[%s67 + $0x80] sm:$0xf]
        %v6951 = vld [vmem:[%s67 + $0x84] sm:$0xf]
        %v6952 = vld [vmem:[%s67 + $0x88] sm:$0xf]
        %v6953 = vld [vmem:[%s67 + $0x8c] sm:$0xf]
        %v6954 = vld [vmem:[%s67 + $0x90] sm:$0xf]
        %v6955 = vld [vmem:[%s67 + $0x94] sm:$0xf]
        %v6956 = vld [vmem:[%s67 + $0x98] sm:$0xf]
        %v6957 = vld [vmem:[%s67 + $0x9c] sm:$0xf]
        %v6958 = vld [vmem:[%s67 + $0xa0] sm:$0xf]
        %v6959 = vld [vmem:[%s67 + $0xa4] sm:$0xf]
        %v6960 = vld [vmem:[%s67 + $0xa8] sm:$0xf]
        %v6961 = vld [vmem:[%s67 + $0xac] sm:$0xf]
        %v6962 = vld [vmem:[%s67 + $0xb0] sm:$0xf]
        %v6963 = vld [vmem:[%s67 + $0xb4] sm:$0xf]
        %v6964 = vld [vmem:[%s67 + $0xb8] sm:$0xf]
        %v6965 = vld [vmem:[%s67 + $0xbc] sm:$0xf]
        %v6966 = vld [vmem:[%s69] sm:$0x1]
        %v6968 = vperm.slane %v6966, 0
        %v7018 = vunpack.c.l.b16 %v6918
        %v7019 = vunpack.c.l.b16 %v6919
        %v7020 = vunpack.c.l.b16 %v6920
        %v7021 = vunpack.c.l.b16 %v6921
        %v7022 = vunpack.c.l.b16 %v6922
        %v7023 = vunpack.c.l.b16 %v6923
        %v7024 = vunpack.c.l.b16 %v6924
        %v7025 = vunpack.c.l.b16 %v6925
        %v7026 = vunpack.c.l.b16 %v6926
        %v7027 = vunpack.c.l.b16 %v6927
        %v7028 = vunpack.c.l.b16 %v6928
        %v7029 = vunpack.c.l.b16 %v6929
        %v7030 = vunpack.c.l.b16 %v6930
        %v7031 = vunpack.c.l.b16 %v6931
        %v7032 = vunpack.c.l.b16 %v6932
        %v7033 = vunpack.c.l.b16 %v6933
        %v7034 = vunpack.c.l.b16 %v6934
        %v7035 = vunpack.c.l.b16 %v6935
        %v7036 = vunpack.c.l.b16 %v6936
        %v7037 = vunpack.c.l.b16 %v6937
        %v7038 = vunpack.c.l.b16 %v6938
        %v7039 = vunpack.c.l.b16 %v6939
        %v7040 = vunpack.c.l.b16 %v6940
        %v7041 = vunpack.c.l.b16 %v6941
        %v7042 = vunpack.c.l.b16 %v6942
        %v7043 = vunpack.c.l.b16 %v6943
        %v7044 = vunpack.c.l.b16 %v6944
        %v7045 = vunpack.c.l.b16 %v6945
        %v7046 = vunpack.c.l.b16 %v6946
        %v7047 = vunpack.c.l.b16 %v6947
        %v7048 = vunpack.c.l.b16 %v6948
        %v7049 = vunpack.c.l.b16 %v6949
        %v7050 = vunpack.c.l.b16 %v6950
        %v7051 = vunpack.c.l.b16 %v6951
        %v7052 = vunpack.c.l.b16 %v6952
        %v7053 = vunpack.c.l.b16 %v6953
        %v7054 = vunpack.c.l.b16 %v6954
        %v7055 = vunpack.c.l.b16 %v6955
        %v7056 = vunpack.c.l.b16 %v6956
        %v7057 = vunpack.c.l.b16 %v6957
        %v7058 = vunpack.c.l.b16 %v6958
        %v7059 = vunpack.c.l.b16 %v6959
        %v7060 = vunpack.c.l.b16 %v6960
        %v7061 = vunpack.c.l.b16 %v6961
        %v7062 = vunpack.c.l.b16 %v6962
        %v7063 = vunpack.c.l.b16 %v6963
        %v7064 = vunpack.c.l.b16 %v6964
        %v7065 = vunpack.c.l.b16 %v6965
        %v7066 = vpack.c.b16 %v7019, %v7018
        %v7067 = vpack.c.b16 %v7021, %v7020
        %v7068 = vpack.c.b16 %v7023, %v7022
        %v7069 = vpack.c.b16 %v7025, %v7024
        %v7070 = vpack.c.b16 %v7027, %v7026
        %v7071 = vpack.c.b16 %v7029, %v7028
        %v7072 = vpack.c.b16 %v7031, %v7030
        %v7073 = vpack.c.b16 %v7033, %v7032
        %v7074 = vpack.c.b16 %v7035, %v7034
        %v7075 = vpack.c.b16 %v7037, %v7036
        %v7076 = vpack.c.b16 %v7039, %v7038
        %v7077 = vpack.c.b16 %v7041, %v7040
        %v7078 = vpack.c.b16 %v7043, %v7042
        %v7079 = vpack.c.b16 %v7045, %v7044
        %v7080 = vpack.c.b16 %v7047, %v7046
        %v7081 = vpack.c.b16 %v7049, %v7048
        %v7082 = vpack.c.b16 %v7051, %v7050
        %v7083 = vpack.c.b16 %v7053, %v7052
        %v7084 = vpack.c.b16 %v7055, %v7054
        %v7085 = vpack.c.b16 %v7057, %v7056
        %v7086 = vpack.c.b16 %v7059, %v7058
        %v7087 = vpack.c.b16 %v7061, %v7060
        %v7088 = vpack.c.b16 %v7063, %v7062
        %v7089 = vpack.c.b16 %v7065, %v7064
        %7114 = vmatpush.bf16.msra.mxu0 %v7073
        %7115 = vmatpush.bf16.msra.mxu0 %v7072
        %7116 = vmatpush.bf16.msra.mxu0 %v7071
        %7117 = vmatpush.bf16.msra.mxu0 %v7070
        %7118 = vmatpush.bf16.msra.mxu0 %v7069
        %7119 = vmatpush.bf16.msra.mxu0 %v7068
        %7120 = vmatpush.bf16.msra.mxu0 %v7067
        %7121 = vmatpush.bf16.msra.mxu0 %v7066
        %7122 = vmatmul.bf16.gmra.mxu0 %v6912
        %v7123 = vpop.f32.mrf.mxu0
        %v7124 = vadd.f32 %v6968, %v7123
        %v7125 = vpop.f32.mrf.mxu0
        %v7126 = vadd.f32 %v6968, %v7125
        %7127 = vmatmul.bf16.gmra.mxu0 %v6915
        %v7128 = vpop.f32.mrf.mxu0
        %v7129 = vadd.f32 %v6968, %v7128
        %v7130 = vpop.f32.mrf.mxu0
        %v7131 = vadd.f32 %v6968, %v7130
        %7132 = vdwg.mxu0
        %7133 = vmatpush.bf16.msra.mxu0 %v7081
        %7134 = vmatpush.bf16.msra.mxu0 %v7080
        %7135 = vmatpush.bf16.msra.mxu0 %v7079
        %7136 = vmatpush.bf16.msra.mxu0 %v7078
        %7137 = vmatpush.bf16.msra.mxu0 %v7077
        %7138 = vmatpush.bf16.msra.mxu0 %v7076
        %7139 = vmatpush.bf16.msra.mxu0 %v7075
        %7140 = vmatpush.bf16.msra.mxu0 %v7074
        %7141 = vmatmul.bf16.gmra.mxu0 %v6913
        %v7142 = vpop.f32.mrf.mxu0
        %v7143 = vadd.f32 %v7124, %v7142
        %v7144 = vpop.f32.mrf.mxu0
        %v7145 = vadd.f32 %v7126, %v7144
        %7146 = vmatmul.bf16.gmra.mxu0 %v6916
        %v7147 = vpop.f32.mrf.mxu0
        %v7148 = vadd.f32 %v7129, %v7147
        %v7149 = vpop.f32.mrf.mxu0
        %v7150 = vadd.f32 %v7131, %v7149
        %7151 = vdwg.mxu0
        %7152 = vmatpush.bf16.msra.mxu0 %v7089
        %7153 = vmatpush.bf16.msra.mxu0 %v7088
        %7154 = vmatpush.bf16.msra.mxu0 %v7087
        %7155 = vmatpush.bf16.msra.mxu0 %v7086
        %7156 = vmatpush.bf16.msra.mxu0 %v7085
        %7157 = vmatpush.bf16.msra.mxu0 %v7084
        %7158 = vmatpush.bf16.msra.mxu0 %v7083
        %7159 = vmatpush.bf16.msra.mxu0 %v7082
        %7160 = vmatmul.bf16.gmra.mxu0 %v6914
        %v7161 = vpop.f32.mrf.mxu0
        %v7162 = vadd.f32 %v7143, %v7161
        %v7163 = vpop.f32.mrf.mxu0
        %v7164 = vadd.f32 %v7145, %v7163
        %7165 = vmatmul.bf16.gmra.mxu0 %v6917
        %v7166 = vpop.f32.mrf.mxu0
        %v7167 = vadd.f32 %v7148, %v7166
        %v7168 = vpop.f32.mrf.mxu0
        %v7169 = vadd.f32 %v7150, %v7168
        %7170 = vdwg.mxu0
        %v7171 = vmax.f32 %v7162, 0.0
        %v7172 = vmax.f32 %v7164, 0.0
        %v7173 = vmax.f32 %v7167, 0.0
        %v7174 = vmax.f32 %v7169, 0.0
        %v7175 = vmul.f32 %v7171, %v4270
        %v7176 = vmul.f32 %v7172, %v4275
        %v7177 = vmul.f32 %v7173, %v4280
        %v7178 = vmul.f32 %v7174, %v4285
        %v7181 = vrot.slane %v7175, 1
        %v7182 = vrot.slane %v7176, 1
        %v7183 = vsel %vm1899, %v7181, %v7182
        %7184 = vrot.lane.b32.xlu0 %v7183, 64
        %v7185 = vpop.permute.xlu0 %7184
        %7186 = vrot.lane.b32.xlu0 %v7182, 64
        %v7187 = vpop.permute.xlu0 %7186
        %v7190 = vrot.slane %v7175, 2
        %v7191 = vrot.slane %v7176, 2
        %v7192 = vsel %vm1807, %v7190, %v7191
        %v7196 = vrot.slane %v7175, 5
        %v7197 = vrot.slane %v7176, 5
        %v7198 = vsel %vm1731, %v7196, %v7197
        %v7199 = vrot.slane %v7177, 5
        %v7200 = vsel %vm1731, %v7197, %v7199
        %7201 = vrot.lane.b32.xlu0 %v7198, 64
        %v7202 = vpop.permute.xlu0 %7201
        %7203 = vrot.lane.b32.xlu0 %v7200, 64
        %v7204 = vpop.permute.xlu0 %7203
        %v7207 = vrot.slane %v7175, 6
        %v7208 = vrot.slane %v7176, 6
        %v7209 = vsel %vm4323, %v7207, %v7208
        %v7210 = vrot.slane %v7177, 6
        %v7211 = vsel %vm4323, %v7208, %v7210
        %v7214 = vrot.slane %v7175, 7
        %v7215 = vrot.slane %v7176, 7
        %v7216 = vsel %vm2705, %v7214, %v7215
        %v7217 = vrot.slane %v7177, 7
        %v7218 = vsel %vm2705, %v7215, %v7217
        %7219 = vrot.lane.b32.xlu0 %v7216, 64
        %v7220 = vpop.permute.xlu0 %7219
        %7221 = vrot.lane.b32.xlu0 %v7218, 64
        %v7222 = vpop.permute.xlu0 %7221
        %v7225 = vrot.slane %v7177, 2
        %v7226 = vsel %vm1807, %v7191, %v7225
        %v7229 = vrot.slane %v7176, 3
        %v7230 = vrot.slane %v7177, 3
        %v7231 = vsel %vm2083, %v7229, %v7230
        %7232 = vrot.lane.b32.xlu0 %v7231, 64
        %v7233 = vpop.permute.xlu0 %7232
        %7234 = vrot.lane.b32.xlu0 %v7230, 64
        %v7235 = vpop.permute.xlu0 %7234
        %v7239 = vrot.slane %v7176, 4
        %v7240 = vrot.slane %v7177, 4
        %v7241 = vsel %vm4360, %v7239, %v7240
        %v7242 = vrot.slane %v7178, 4
        %v7243 = vsel %vm4360, %v7240, %v7242
        %v7246 = vsel %vm2527, %v7175, %v7185
        %v7247 = vsel %vm2527, %v7176, %v7187
        %v7248 = vsel %vm2527, %v7192, %v7202
        %v7249 = vsel %vm2527, %v7191, %v7204
        %v7250 = vsel %vm2527, %v7209, %v7220
        %v7251 = vsel %vm2527, %v7211, %v7222
        %v7252 = vsel %vm2527, %v7226, %v7233
        %v7253 = vsel %vm2527, %v7225, %v7235
        %v7254 = vpack.c.bf16 %v7247, %v7246
        %v7255 = vpack.c.bf16 %v7249, %v7248
        %v7256 = vpack.c.bf16 %v7251, %v7250
        %v7257 = vpack.c.bf16 %v7253, %v7252
        %v7258 = vpack.c.bf16 %v7243, %v7241
        %v7259 = vld [vmem:[%s71] sm:$0xff]
        %v7260 = vld [vmem:[%s71 + $0x8] sm:$0xff]
        %v7261 = vld [vmem:[%s71 + $0x10] sm:$0xff]
        %v7262 = vld [vmem:[%s71 + $0x18] sm:$0xff]
        %v7263 = vld [vmem:[%s71 + $0x20] sm:$0xff]
        %v7264 = vld [vmem:[%s71 + $0x28] sm:$0xff]
        %v7265 = vld [vmem:[%s71 + $0x30] sm:$0xff]
        %v7266 = vld [vmem:[%s71 + $0x38] sm:$0xff]
        %v7267 = vld [vmem:[%s71 + $0x40] sm:$0xff]
        %v7268 = vld [vmem:[%s71 + $0x48] sm:$0xff]
        %v7269 = vld [vmem:[%s71 + $0x50] sm:$0xff]
        %v7270 = vld [vmem:[%s71 + $0x58] sm:$0xff]
        %v7271 = vld [vmem:[%s71 + $0x60] sm:$0xff]
        %v7272 = vld [vmem:[%s71 + $0x68] sm:$0xff]
        %v7273 = vld [vmem:[%s71 + $0x70] sm:$0xff]
        %v7274 = vld [vmem:[%s71 + $0x78] sm:$0xff]
        %v7275 = vld [vmem:[%s71 + $0x80] sm:$0xff]
        %v7276 = vld [vmem:[%s71 + $0x88] sm:$0xff]
        %v7277 = vld [vmem:[%s71 + $0x90] sm:$0xff]
        %v7278 = vld [vmem:[%s71 + $0x98] sm:$0xff]
        %v7279 = vld [vmem:[%s71 + $0xa0] sm:$0xff]
        %v7280 = vld [vmem:[%s71 + $0xa8] sm:$0xff]
        %v7281 = vld [vmem:[%s71 + $0xb0] sm:$0xff]
        %v7282 = vld [vmem:[%s71 + $0xb8] sm:$0xff]
        %v7283 = vld [vmem:[%s71 + $0xc0] sm:$0xff]
        %v7284 = vld [vmem:[%s71 + $0xc8] sm:$0xff]
        %v7285 = vld [vmem:[%s71 + $0xd0] sm:$0xff]
        %v7286 = vld [vmem:[%s71 + $0xd8] sm:$0xff]
        %v7287 = vld [vmem:[%s71 + $0xe0] sm:$0xff]
        %v7288 = vld [vmem:[%s71 + $0xe8] sm:$0xff]
        %v7289 = vld [vmem:[%s71 + $0xf0] sm:$0xff]
        %v7290 = vld [vmem:[%s71 + $0xf8] sm:$0xff]
        %v7291 = vld [vmem:[%s71 + $0x100] sm:$0xff]
        %v7292 = vld [vmem:[%s71 + $0x108] sm:$0xff]
        %v7293 = vld [vmem:[%s71 + $0x110] sm:$0xff]
        %v7294 = vld [vmem:[%s71 + $0x118] sm:$0xff]
        %v7295 = vld [vmem:[%s71 + $0x120] sm:$0xff]
        %v7296 = vld [vmem:[%s71 + $0x128] sm:$0xff]
        %v7297 = vld [vmem:[%s71 + $0x130] sm:$0xff]
        %v7298 = vld [vmem:[%s71 + $0x138] sm:$0xff]
        %v7299 = vld [vmem:[%s71 + $0x140] sm:$0xff]
        %v7300 = vld [vmem:[%s71 + $0x148] sm:$0xff]
        %v7301 = vld [vmem:[%s71 + $0x150] sm:$0xff]
        %v7302 = vld [vmem:[%s71 + $0x158] sm:$0xff]
        %v7303 = vld [vmem:[%s71 + $0x160] sm:$0xff]
        %v7304 = vld [vmem:[%s71 + $0x168] sm:$0xff]
        %v7305 = vld [vmem:[%s71 + $0x170] sm:$0xff]
        %v7306 = vld [vmem:[%s71 + $0x178] sm:$0xff]
        %v7307 = vld [vmem:[%s71 + $0x180] sm:$0xff]
        %v7308 = vld [vmem:[%s71 + $0x188] sm:$0xff]
        %v7309 = vld [vmem:[%s71 + $0x190] sm:$0xff]
        %v7310 = vld [vmem:[%s71 + $0x198] sm:$0xff]
        %v7311 = vld [vmem:[%s71 + $0x1a0] sm:$0xff]
        %v7312 = vld [vmem:[%s71 + $0x1a8] sm:$0xff]
        %v7313 = vld [vmem:[%s71 + $0x1b0] sm:$0xff]
        %v7314 = vld [vmem:[%s71 + $0x1b8] sm:$0xff]
        %v7315 = vld [vmem:[%s71 + $0x1c0] sm:$0xff]
        %v7316 = vld [vmem:[%s71 + $0x1c8] sm:$0xff]
        %v7317 = vld [vmem:[%s71 + $0x1d0] sm:$0xff]
        %v7318 = vld [vmem:[%s71 + $0x1d8] sm:$0xff]
        %v7319 = vld [vmem:[%s71 + $0x1e0] sm:$0xff]
        %v7320 = vld [vmem:[%s71 + $0x1e8] sm:$0xff]
        %v7321 = vld [vmem:[%s71 + $0x1f0] sm:$0xff]
        %v7322 = vld [vmem:[%s71 + $0x1f8] sm:$0xff]
        %v7323 = vld [vmem:[%s71 + $0x200] sm:$0xff]
        %v7324 = vld [vmem:[%s71 + $0x208] sm:$0xff]
        %v7325 = vld [vmem:[%s71 + $0x210] sm:$0xff]
        %v7326 = vld [vmem:[%s71 + $0x218] sm:$0xff]
        %v7327 = vld [vmem:[%s71 + $0x220] sm:$0xff]
        %v7328 = vld [vmem:[%s71 + $0x228] sm:$0xff]
        %v7329 = vld [vmem:[%s71 + $0x230] sm:$0xff]
        %v7330 = vld [vmem:[%s71 + $0x238] sm:$0xff]
        %v7331 = vld [vmem:[%s71 + $0x240] sm:$0xff]
        %v7332 = vld [vmem:[%s71 + $0x248] sm:$0xff]
        %v7333 = vld [vmem:[%s71 + $0x250] sm:$0xff]
        %v7334 = vld [vmem:[%s71 + $0x258] sm:$0xff]
        %v7335 = vld [vmem:[%s71 + $0x260] sm:$0xff]
        %v7336 = vld [vmem:[%s71 + $0x268] sm:$0xff]
        %v7337 = vld [vmem:[%s71 + $0x270] sm:$0xff]
        %v7338 = vld [vmem:[%s71 + $0x278] sm:$0xff]
        %v7339 = vld [vmem:[%s71 + $0x280] sm:$0xff]
        %v7340 = vld [vmem:[%s71 + $0x288] sm:$0xff]
        %v7341 = vld [vmem:[%s71 + $0x290] sm:$0xff]
        %v7342 = vld [vmem:[%s71 + $0x298] sm:$0xff]
        %v7343 = vld [vmem:[%s71 + $0x2a0] sm:$0xff]
        %v7344 = vld [vmem:[%s71 + $0x2a8] sm:$0xff]
        %v7345 = vld [vmem:[%s71 + $0x2b0] sm:$0xff]
        %v7346 = vld [vmem:[%s71 + $0x2b8] sm:$0xff]
        %v7347 = vld [vmem:[%s71 + $0x2c0] sm:$0xff]
        %v7348 = vld [vmem:[%s71 + $0x2c8] sm:$0xff]
        %v7349 = vld [vmem:[%s71 + $0x2d0] sm:$0xff]
        %v7350 = vld [vmem:[%s71 + $0x2d8] sm:$0xff]
        %v7351 = vld [vmem:[%s71 + $0x2e0] sm:$0xff]
        %v7352 = vld [vmem:[%s71 + $0x2e8] sm:$0xff]
        %v7353 = vld [vmem:[%s71 + $0x2f0] sm:$0xff]
        %v7354 = vld [vmem:[%s71 + $0x2f8] sm:$0xff]
        %v7355 = vld [vmem:[%s71 + $0x300] sm:$0xff]
        %v7356 = vld [vmem:[%s71 + $0x308] sm:$0xff]
        %v7357 = vld [vmem:[%s71 + $0x310] sm:$0xff]
        %v7358 = vld [vmem:[%s71 + $0x318] sm:$0xff]
        %v7359 = vld [vmem:[%s71 + $0x320] sm:$0xff]
        %v7360 = vld [vmem:[%s71 + $0x328] sm:$0xff]
        %v7361 = vld [vmem:[%s71 + $0x330] sm:$0xff]
        %v7362 = vld [vmem:[%s71 + $0x338] sm:$0xff]
        %v7363 = vld [vmem:[%s71 + $0x340] sm:$0xff]
        %v7364 = vld [vmem:[%s71 + $0x348] sm:$0xff]
        %v7365 = vld [vmem:[%s71 + $0x350] sm:$0xff]
        %v7366 = vld [vmem:[%s71 + $0x358] sm:$0xff]
        %v7367 = vld [vmem:[%s71 + $0x360] sm:$0xff]
        %v7368 = vld [vmem:[%s71 + $0x368] sm:$0xff]
        %v7369 = vld [vmem:[%s71 + $0x370] sm:$0xff]
        %v7370 = vld [vmem:[%s71 + $0x378] sm:$0xff]
        %v7371 = vld [vmem:[%s71 + $0x380] sm:$0xff]
        %v7372 = vld [vmem:[%s71 + $0x388] sm:$0xff]
        %v7373 = vld [vmem:[%s71 + $0x390] sm:$0xff]
        %v7374 = vld [vmem:[%s71 + $0x398] sm:$0xff]
        %v7375 = vld [vmem:[%s71 + $0x3a0] sm:$0xff]
        %v7376 = vld [vmem:[%s71 + $0x3a8] sm:$0xff]
        %v7377 = vld [vmem:[%s71 + $0x3b0] sm:$0xff]
        %v7378 = vld [vmem:[%s71 + $0x3b8] sm:$0xff]
        %v7379 = vld [vmem:[%s71 + $0x3c0] sm:$0xff]
        %v7380 = vld [vmem:[%s71 + $0x3c8] sm:$0xff]
        %v7381 = vld [vmem:[%s71 + $0x3d0] sm:$0xff]
        %v7382 = vld [vmem:[%s71 + $0x3d8] sm:$0xff]
        %v7383 = vld [vmem:[%s71 + $0x3e0] sm:$0xff]
        %v7384 = vld [vmem:[%s71 + $0x3e8] sm:$0xff]
        %v7385 = vld [vmem:[%s71 + $0x3f0] sm:$0xff]
        %v7386 = vld [vmem:[%s71 + $0x3f8] sm:$0xff]
        %v7387 = vld [vmem:[%s71 + $0x400] sm:$0xff]
        %v7388 = vld [vmem:[%s71 + $0x408] sm:$0xff]
        %v7389 = vld [vmem:[%s71 + $0x410] sm:$0xff]
        %v7390 = vld [vmem:[%s71 + $0x418] sm:$0xff]
        %v7391 = vld [vmem:[%s71 + $0x420] sm:$0xff]
        %v7392 = vld [vmem:[%s71 + $0x428] sm:$0xff]
        %v7393 = vld [vmem:[%s71 + $0x430] sm:$0xff]
        %v7394 = vld [vmem:[%s71 + $0x438] sm:$0xff]
        %v7395 = vld [vmem:[%s71 + $0x440] sm:$0xff]
        %v7396 = vld [vmem:[%s71 + $0x448] sm:$0xff]
        %v7397 = vld [vmem:[%s71 + $0x450] sm:$0xff]
        %v7398 = vld [vmem:[%s71 + $0x458] sm:$0xff]
        %v7399 = vld [vmem:[%s71 + $0x460] sm:$0xff]
        %v7400 = vld [vmem:[%s71 + $0x468] sm:$0xff]
        %v7401 = vld [vmem:[%s71 + $0x470] sm:$0xff]
        %v7402 = vld [vmem:[%s71 + $0x478] sm:$0xff]
        %v7403 = vld [vmem:[%s73] sm:$0xf]
        %v7405 = vperm.slane %v7403, 0
        %v7406 = vperm.slane %v7403, 1
        %v7407 = vperm.slane %v7403, 2
        %v7408 = vperm.slane %v7403, 3
        %v7557 = vunpack.c.l.b16 %v7259
        %v7558 = vunpack.c.h.b16 %v7259
        %v7559 = vunpack.c.l.b16 %v7260
        %v7560 = vunpack.c.h.b16 %v7260
        %v7561 = vunpack.c.l.b16 %v7261
        %v7562 = vunpack.c.h.b16 %v7261
        %v7563 = vunpack.c.l.b16 %v7262
        %v7564 = vunpack.c.h.b16 %v7262
        %v7565 = vunpack.c.l.b16 %v7263
        %v7566 = vunpack.c.h.b16 %v7263
        %v7567 = vunpack.c.l.b16 %v7264
        %v7568 = vunpack.c.h.b16 %v7264
        %v7569 = vunpack.c.l.b16 %v7265
        %v7570 = vunpack.c.h.b16 %v7265
        %v7571 = vunpack.c.l.b16 %v7266
        %v7572 = vunpack.c.h.b16 %v7266
        %v7573 = vunpack.c.l.b16 %v7267
        %v7574 = vunpack.c.h.b16 %v7267
        %v7575 = vunpack.c.l.b16 %v7268
        %v7576 = vunpack.c.h.b16 %v7268
        %v7577 = vunpack.c.l.b16 %v7269
        %v7578 = vunpack.c.h.b16 %v7269
        %v7579 = vunpack.c.l.b16 %v7270
        %v7580 = vunpack.c.h.b16 %v7270
        %v7581 = vunpack.c.l.b16 %v7271
        %v7582 = vunpack.c.h.b16 %v7271
        %v7583 = vunpack.c.l.b16 %v7272
        %v7584 = vunpack.c.h.b16 %v7272
        %v7585 = vunpack.c.l.b16 %v7273
        %v7586 = vunpack.c.h.b16 %v7273
        %v7587 = vunpack.c.l.b16 %v7274
        %v7588 = vunpack.c.h.b16 %v7274
        %v7589 = vunpack.c.l.b16 %v7275
        %v7590 = vunpack.c.h.b16 %v7275
        %v7591 = vunpack.c.l.b16 %v7276
        %v7592 = vunpack.c.h.b16 %v7276
        %v7593 = vunpack.c.l.b16 %v7277
        %v7594 = vunpack.c.h.b16 %v7277
        %v7595 = vunpack.c.l.b16 %v7278
        %v7596 = vunpack.c.h.b16 %v7278
        %v7597 = vunpack.c.l.b16 %v7279
        %v7598 = vunpack.c.h.b16 %v7279
        %v7599 = vunpack.c.l.b16 %v7280
        %v7600 = vunpack.c.h.b16 %v7280
        %v7601 = vunpack.c.l.b16 %v7281
        %v7602 = vunpack.c.h.b16 %v7281
        %v7603 = vunpack.c.l.b16 %v7282
        %v7604 = vunpack.c.h.b16 %v7282
        %v7605 = vunpack.c.l.b16 %v7283
        %v7606 = vunpack.c.h.b16 %v7283
        %v7607 = vunpack.c.l.b16 %v7284
        %v7608 = vunpack.c.h.b16 %v7284
        %v7609 = vunpack.c.l.b16 %v7285
        %v7610 = vunpack.c.h.b16 %v7285
        %v7611 = vunpack.c.l.b16 %v7286
        %v7612 = vunpack.c.h.b16 %v7286
        %v7613 = vunpack.c.l.b16 %v7287
        %v7614 = vunpack.c.h.b16 %v7287
        %v7615 = vunpack.c.l.b16 %v7288
        %v7616 = vunpack.c.h.b16 %v7288
        %v7617 = vunpack.c.l.b16 %v7289
        %v7618 = vunpack.c.h.b16 %v7289
        %v7619 = vunpack.c.l.b16 %v7290
        %v7620 = vunpack.c.h.b16 %v7290
        %v7621 = vunpack.c.l.b16 %v7291
        %v7622 = vunpack.c.h.b16 %v7291
        %v7623 = vunpack.c.l.b16 %v7292
        %v7624 = vunpack.c.h.b16 %v7292
        %v7625 = vunpack.c.l.b16 %v7293
        %v7626 = vunpack.c.h.b16 %v7293
        %v7627 = vunpack.c.l.b16 %v7294
        %v7628 = vunpack.c.h.b16 %v7294
        %v7629 = vunpack.c.l.b16 %v7295
        %v7630 = vunpack.c.h.b16 %v7295
        %v7631 = vunpack.c.l.b16 %v7296
        %v7632 = vunpack.c.h.b16 %v7296
        %v7633 = vunpack.c.l.b16 %v7297
        %v7634 = vunpack.c.h.b16 %v7297
        %v7635 = vunpack.c.l.b16 %v7298
        %v7636 = vunpack.c.h.b16 %v7298
        %v7637 = vunpack.c.l.b16 %v7299
        %v7638 = vunpack.c.h.b16 %v7299
        %v7639 = vunpack.c.l.b16 %v7300
        %v7640 = vunpack.c.h.b16 %v7300
        %v7641 = vunpack.c.l.b16 %v7301
        %v7642 = vunpack.c.h.b16 %v7301
        %v7643 = vunpack.c.l.b16 %v7302
        %v7644 = vunpack.c.h.b16 %v7302
        %v7645 = vunpack.c.l.b16 %v7303
        %v7646 = vunpack.c.h.b16 %v7303
        %v7647 = vunpack.c.l.b16 %v7304
        %v7648 = vunpack.c.h.b16 %v7304
        %v7649 = vunpack.c.l.b16 %v7305
        %v7650 = vunpack.c.h.b16 %v7305
        %v7651 = vunpack.c.l.b16 %v7306
        %v7652 = vunpack.c.h.b16 %v7306
        %v7653 = vunpack.c.l.b16 %v7307
        %v7654 = vunpack.c.h.b16 %v7307
        %v7655 = vunpack.c.l.b16 %v7308
        %v7656 = vunpack.c.h.b16 %v7308
        %v7657 = vunpack.c.l.b16 %v7309
        %v7658 = vunpack.c.h.b16 %v7309
        %v7659 = vunpack.c.l.b16 %v7310
        %v7660 = vunpack.c.h.b16 %v7310
        %v7661 = vunpack.c.l.b16 %v7311
        %v7662 = vunpack.c.h.b16 %v7311
        %v7663 = vunpack.c.l.b16 %v7312
        %v7664 = vunpack.c.h.b16 %v7312
        %v7665 = vunpack.c.l.b16 %v7313
        %v7666 = vunpack.c.h.b16 %v7313
        %v7667 = vunpack.c.l.b16 %v7314
        %v7668 = vunpack.c.h.b16 %v7314
        %v7669 = vunpack.c.l.b16 %v7315
        %v7670 = vunpack.c.h.b16 %v7315
        %v7671 = vunpack.c.l.b16 %v7316
        %v7672 = vunpack.c.h.b16 %v7316
        %v7673 = vunpack.c.l.b16 %v7317
        %v7674 = vunpack.c.h.b16 %v7317
        %v7675 = vunpack.c.l.b16 %v7318
        %v7676 = vunpack.c.h.b16 %v7318
        %v7677 = vunpack.c.l.b16 %v7319
        %v7678 = vunpack.c.h.b16 %v7319
        %v7679 = vunpack.c.l.b16 %v7320
        %v7680 = vunpack.c.h.b16 %v7320
        %v7681 = vunpack.c.l.b16 %v7321
        %v7682 = vunpack.c.h.b16 %v7321
        %v7683 = vunpack.c.l.b16 %v7322
        %v7684 = vunpack.c.h.b16 %v7322
        %v7685 = vunpack.c.l.b16 %v7323
        %v7686 = vunpack.c.h.b16 %v7323
        %v7687 = vunpack.c.l.b16 %v7324
        %v7688 = vunpack.c.h.b16 %v7324
        %v7689 = vunpack.c.l.b16 %v7325
        %v7690 = vunpack.c.h.b16 %v7325
        %v7691 = vunpack.c.l.b16 %v7326
        %v7692 = vunpack.c.h.b16 %v7326
        %v7693 = vunpack.c.l.b16 %v7327
        %v7694 = vunpack.c.h.b16 %v7327
        %v7695 = vunpack.c.l.b16 %v7328
        %v7696 = vunpack.c.h.b16 %v7328
        %v7697 = vunpack.c.l.b16 %v7329
        %v7698 = vunpack.c.h.b16 %v7329
        %v7699 = vunpack.c.l.b16 %v7330
        %v7700 = vunpack.c.h.b16 %v7330
        %v7701 = vunpack.c.l.b16 %v7331
        %v7702 = vunpack.c.h.b16 %v7331
        %v7703 = vunpack.c.l.b16 %v7332
        %v7704 = vunpack.c.h.b16 %v7332
        %v7705 = vunpack.c.l.b16 %v7333
        %v7706 = vunpack.c.h.b16 %v7333
        %v7707 = vunpack.c.l.b16 %v7334
        %v7708 = vunpack.c.h.b16 %v7334
        %v7709 = vunpack.c.l.b16 %v7335
        %v7710 = vunpack.c.h.b16 %v7335
        %v7711 = vunpack.c.l.b16 %v7336
        %v7712 = vunpack.c.h.b16 %v7336
        %v7713 = vunpack.c.l.b16 %v7337
        %v7714 = vunpack.c.h.b16 %v7337
        %v7715 = vunpack.c.l.b16 %v7338
        %v7716 = vunpack.c.h.b16 %v7338
        %v7717 = vunpack.c.l.b16 %v7339
        %v7718 = vunpack.c.h.b16 %v7339
        %v7719 = vunpack.c.l.b16 %v7340
        %v7720 = vunpack.c.h.b16 %v7340
        %v7721 = vunpack.c.l.b16 %v7341
        %v7722 = vunpack.c.h.b16 %v7341
        %v7723 = vunpack.c.l.b16 %v7342
        %v7724 = vunpack.c.h.b16 %v7342
        %v7725 = vunpack.c.l.b16 %v7343
        %v7726 = vunpack.c.h.b16 %v7343
        %v7727 = vunpack.c.l.b16 %v7344
        %v7728 = vunpack.c.h.b16 %v7344
        %v7729 = vunpack.c.l.b16 %v7345
        %v7730 = vunpack.c.h.b16 %v7345
        %v7731 = vunpack.c.l.b16 %v7346
        %v7732 = vunpack.c.h.b16 %v7346
        %v7733 = vunpack.c.l.b16 %v7347
        %v7734 = vunpack.c.h.b16 %v7347
        %v7735 = vunpack.c.l.b16 %v7348
        %v7736 = vunpack.c.h.b16 %v7348
        %v7737 = vunpack.c.l.b16 %v7349
        %v7738 = vunpack.c.h.b16 %v7349
        %v7739 = vunpack.c.l.b16 %v7350
        %v7740 = vunpack.c.h.b16 %v7350
        %v7741 = vunpack.c.l.b16 %v7351
        %v7742 = vunpack.c.h.b16 %v7351
        %v7743 = vunpack.c.l.b16 %v7352
        %v7744 = vunpack.c.h.b16 %v7352
        %v7745 = vunpack.c.l.b16 %v7353
        %v7746 = vunpack.c.h.b16 %v7353
        %v7747 = vunpack.c.l.b16 %v7354
        %v7748 = vunpack.c.h.b16 %v7354
        %v7749 = vunpack.c.l.b16 %v7355
        %v7750 = vunpack.c.h.b16 %v7355
        %v7751 = vunpack.c.l.b16 %v7356
        %v7752 = vunpack.c.h.b16 %v7356
        %v7753 = vunpack.c.l.b16 %v7357
        %v7754 = vunpack.c.h.b16 %v7357
        %v7755 = vunpack.c.l.b16 %v7358
        %v7756 = vunpack.c.h.b16 %v7358
        %v7757 = vunpack.c.l.b16 %v7359
        %v7758 = vunpack.c.h.b16 %v7359
        %v7759 = vunpack.c.l.b16 %v7360
        %v7760 = vunpack.c.h.b16 %v7360
        %v7761 = vunpack.c.l.b16 %v7361
        %v7762 = vunpack.c.h.b16 %v7361
        %v7763 = vunpack.c.l.b16 %v7362
        %v7764 = vunpack.c.h.b16 %v7362
        %v7765 = vunpack.c.l.b16 %v7363
        %v7766 = vunpack.c.h.b16 %v7363
        %v7767 = vunpack.c.l.b16 %v7364
        %v7768 = vunpack.c.h.b16 %v7364
        %v7769 = vunpack.c.l.b16 %v7365
        %v7770 = vunpack.c.h.b16 %v7365
        %v7771 = vunpack.c.l.b16 %v7366
        %v7772 = vunpack.c.h.b16 %v7366
        %v7773 = vunpack.c.l.b16 %v7367
        %v7774 = vunpack.c.h.b16 %v7367
        %v7775 = vunpack.c.l.b16 %v7368
        %v7776 = vunpack.c.h.b16 %v7368
        %v7777 = vunpack.c.l.b16 %v7369
        %v7778 = vunpack.c.h.b16 %v7369
        %v7779 = vunpack.c.l.b16 %v7370
        %v7780 = vunpack.c.h.b16 %v7370
        %v7781 = vunpack.c.l.b16 %v7371
        %v7782 = vunpack.c.h.b16 %v7371
        %v7783 = vunpack.c.l.b16 %v7372
        %v7784 = vunpack.c.h.b16 %v7372
        %v7785 = vunpack.c.l.b16 %v7373
        %v7786 = vunpack.c.h.b16 %v7373
        %v7787 = vunpack.c.l.b16 %v7374
        %v7788 = vunpack.c.h.b16 %v7374
        %v7789 = vunpack.c.l.b16 %v7375
        %v7790 = vunpack.c.h.b16 %v7375
        %v7791 = vunpack.c.l.b16 %v7376
        %v7792 = vunpack.c.h.b16 %v7376
        %v7793 = vunpack.c.l.b16 %v7377
        %v7794 = vunpack.c.h.b16 %v7377
        %v7795 = vunpack.c.l.b16 %v7378
        %v7796 = vunpack.c.h.b16 %v7378
        %v7797 = vunpack.c.l.b16 %v7379
        %v7798 = vunpack.c.h.b16 %v7379
        %v7799 = vunpack.c.l.b16 %v7380
        %v7800 = vunpack.c.h.b16 %v7380
        %v7801 = vunpack.c.l.b16 %v7381
        %v7802 = vunpack.c.h.b16 %v7381
        %v7803 = vunpack.c.l.b16 %v7382
        %v7804 = vunpack.c.h.b16 %v7382
        %v7805 = vunpack.c.l.b16 %v7383
        %v7806 = vunpack.c.h.b16 %v7383
        %v7807 = vunpack.c.l.b16 %v7384
        %v7808 = vunpack.c.h.b16 %v7384
        %v7809 = vunpack.c.l.b16 %v7385
        %v7810 = vunpack.c.h.b16 %v7385
        %v7811 = vunpack.c.l.b16 %v7386
        %v7812 = vunpack.c.h.b16 %v7386
        %v7813 = vunpack.c.l.b16 %v7387
        %v7814 = vunpack.c.h.b16 %v7387
        %v7815 = vunpack.c.l.b16 %v7388
        %v7816 = vunpack.c.h.b16 %v7388
        %v7817 = vunpack.c.l.b16 %v7389
        %v7818 = vunpack.c.h.b16 %v7389
        %v7819 = vunpack.c.l.b16 %v7390
        %v7820 = vunpack.c.h.b16 %v7390
        %v7821 = vunpack.c.l.b16 %v7391
        %v7822 = vunpack.c.h.b16 %v7391
        %v7823 = vunpack.c.l.b16 %v7392
        %v7824 = vunpack.c.h.b16 %v7392
        %v7825 = vunpack.c.l.b16 %v7393
        %v7826 = vunpack.c.h.b16 %v7393
        %v7827 = vunpack.c.l.b16 %v7394
        %v7828 = vunpack.c.h.b16 %v7394
        %v7829 = vunpack.c.l.b16 %v7395
        %v7830 = vunpack.c.h.b16 %v7395
        %v7831 = vunpack.c.l.b16 %v7396
        %v7832 = vunpack.c.h.b16 %v7396
        %v7833 = vunpack.c.l.b16 %v7397
        %v7834 = vunpack.c.h.b16 %v7397
        %v7835 = vunpack.c.l.b16 %v7398
        %v7836 = vunpack.c.h.b16 %v7398
        %v7837 = vunpack.c.l.b16 %v7399
        %v7838 = vunpack.c.h.b16 %v7399
        %v7839 = vunpack.c.l.b16 %v7400
        %v7840 = vunpack.c.h.b16 %v7400
        %v7841 = vunpack.c.l.b16 %v7401
        %v7842 = vunpack.c.h.b16 %v7401
        %v7843 = vunpack.c.l.b16 %v7402
        %v7844 = vunpack.c.h.b16 %v7402
        %v7845 = vpack.c.b16 %v7561, %v7557
        %v7846 = vpack.c.b16 %v7562, %v7558
        %v7847 = vpack.c.b16 %v7563, %v7559
        %v7848 = vpack.c.b16 %v7564, %v7560
        %v7849 = vpack.c.b16 %v7569, %v7565
        %v7850 = vpack.c.b16 %v7570, %v7566
        %v7851 = vpack.c.b16 %v7571, %v7567
        %v7852 = vpack.c.b16 %v7572, %v7568
        %v7853 = vpack.c.b16 %v7577, %v7573
        %v7854 = vpack.c.b16 %v7578, %v7574
        %v7855 = vpack.c.b16 %v7579, %v7575
        %v7856 = vpack.c.b16 %v7580, %v7576
        %v7857 = vpack.c.b16 %v7585, %v7581
        %v7858 = vpack.c.b16 %v7586, %v7582
        %v7859 = vpack.c.b16 %v7587, %v7583
        %v7860 = vpack.c.b16 %v7588, %v7584
        %v7861 = vpack.c.b16 %v7593, %v7589
        %v7862 = vpack.c.b16 %v7594, %v7590
        %v7863 = vpack.c.b16 %v7595, %v7591
        %v7864 = vpack.c.b16 %v7596, %v7592
        %v7865 = vpack.c.b16 %v7601, %v7597
        %v7866 = vpack.c.b16 %v7602, %v7598
        %v7867 = vpack.c.b16 %v7603, %v7599
        %v7868 = vpack.c.b16 %v7604, %v7600
        %v7869 = vpack.c.b16 %v7609, %v7605
        %v7870 = vpack.c.b16 %v7610, %v7606
        %v7871 = vpack.c.b16 %v7611, %v7607
        %v7872 = vpack.c.b16 %v7612, %v7608
        %v7873 = vpack.c.b16 %v7617, %v7613
        %v7874 = vpack.c.b16 %v7618, %v7614
        %v7875 = vpack.c.b16 %v7619, %v7615
        %v7876 = vpack.c.b16 %v7620, %v7616
        %v7877 = vpack.c.b16 %v7625, %v7621
        %v7878 = vpack.c.b16 %v7626, %v7622
        %v7879 = vpack.c.b16 %v7627, %v7623
        %v7880 = vpack.c.b16 %v7628, %v7624
        %v7881 = vpack.c.b16 %v7633, %v7629
        %v7882 = vpack.c.b16 %v7634, %v7630
        %v7883 = vpack.c.b16 %v7635, %v7631
        %v7884 = vpack.c.b16 %v7636, %v7632
        %v7885 = vpack.c.b16 %v7641, %v7637
        %v7886 = vpack.c.b16 %v7642, %v7638
        %v7887 = vpack.c.b16 %v7643, %v7639
        %v7888 = vpack.c.b16 %v7644, %v7640
        %v7889 = vpack.c.b16 %v7649, %v7645
        %v7890 = vpack.c.b16 %v7650, %v7646
        %v7891 = vpack.c.b16 %v7651, %v7647
        %v7892 = vpack.c.b16 %v7652, %v7648
        %v7893 = vpack.c.b16 %v7657, %v7653
        %v7894 = vpack.c.b16 %v7658, %v7654
        %v7895 = vpack.c.b16 %v7659, %v7655
        %v7896 = vpack.c.b16 %v7660, %v7656
        %v7897 = vpack.c.b16 %v7665, %v7661
        %v7898 = vpack.c.b16 %v7666, %v7662
        %v7899 = vpack.c.b16 %v7667, %v7663
        %v7900 = vpack.c.b16 %v7668, %v7664
        %v7901 = vpack.c.b16 %v7673, %v7669
        %v7902 = vpack.c.b16 %v7674, %v7670
        %v7903 = vpack.c.b16 %v7675, %v7671
        %v7904 = vpack.c.b16 %v7676, %v7672
        %v7905 = vpack.c.b16 %v7681, %v7677
        %v7906 = vpack.c.b16 %v7682, %v7678
        %v7907 = vpack.c.b16 %v7683, %v7679
        %v7908 = vpack.c.b16 %v7684, %v7680
        %v7909 = vpack.c.b16 %v7689, %v7685
        %v7910 = vpack.c.b16 %v7690, %v7686
        %v7911 = vpack.c.b16 %v7691, %v7687
        %v7912 = vpack.c.b16 %v7692, %v7688
        %v7913 = vpack.c.b16 %v7697, %v7693
        %v7914 = vpack.c.b16 %v7698, %v7694
        %v7915 = vpack.c.b16 %v7699, %v7695
        %v7916 = vpack.c.b16 %v7700, %v7696
        %v7917 = vpack.c.b16 %v7705, %v7701
        %v7918 = vpack.c.b16 %v7706, %v7702
        %v7919 = vpack.c.b16 %v7707, %v7703
        %v7920 = vpack.c.b16 %v7708, %v7704
        %v7921 = vpack.c.b16 %v7713, %v7709
        %v7922 = vpack.c.b16 %v7714, %v7710
        %v7923 = vpack.c.b16 %v7715, %v7711
        %v7924 = vpack.c.b16 %v7716, %v7712
        %v7925 = vpack.c.b16 %v7721, %v7717
        %v7926 = vpack.c.b16 %v7722, %v7718
        %v7927 = vpack.c.b16 %v7723, %v7719
        %v7928 = vpack.c.b16 %v7724, %v7720
        %v7929 = vpack.c.b16 %v7729, %v7725
        %v7930 = vpack.c.b16 %v7730, %v7726
        %v7931 = vpack.c.b16 %v7731, %v7727
        %v7932 = vpack.c.b16 %v7732, %v7728
        %v7933 = vpack.c.b16 %v7737, %v7733
        %v7934 = vpack.c.b16 %v7738, %v7734
        %v7935 = vpack.c.b16 %v7739, %v7735
        %v7936 = vpack.c.b16 %v7740, %v7736
        %v7937 = vpack.c.b16 %v7745, %v7741
        %v7938 = vpack.c.b16 %v7746, %v7742
        %v7939 = vpack.c.b16 %v7747, %v7743
        %v7940 = vpack.c.b16 %v7748, %v7744
        %v7941 = vpack.c.b16 %v7753, %v7749
        %v7942 = vpack.c.b16 %v7754, %v7750
        %v7943 = vpack.c.b16 %v7755, %v7751
        %v7944 = vpack.c.b16 %v7756, %v7752
        %v7945 = vpack.c.b16 %v7761, %v7757
        %v7946 = vpack.c.b16 %v7762, %v7758
        %v7947 = vpack.c.b16 %v7763, %v7759
        %v7948 = vpack.c.b16 %v7764, %v7760
        %v7949 = vpack.c.b16 %v7769, %v7765
        %v7950 = vpack.c.b16 %v7770, %v7766
        %v7951 = vpack.c.b16 %v7771, %v7767
        %v7952 = vpack.c.b16 %v7772, %v7768
        %v7953 = vpack.c.b16 %v7777, %v7773
        %v7954 = vpack.c.b16 %v7778, %v7774
        %v7955 = vpack.c.b16 %v7779, %v7775
        %v7956 = vpack.c.b16 %v7780, %v7776
        %v7957 = vpack.c.b16 %v7785, %v7781
        %v7958 = vpack.c.b16 %v7786, %v7782
        %v7959 = vpack.c.b16 %v7787, %v7783
        %v7960 = vpack.c.b16 %v7788, %v7784
        %v7961 = vpack.c.b16 %v7793, %v7789
        %v7962 = vpack.c.b16 %v7794, %v7790
        %v7963 = vpack.c.b16 %v7795, %v7791
        %v7964 = vpack.c.b16 %v7796, %v7792
        %v7965 = vpack.c.b16 %v7801, %v7797
        %v7966 = vpack.c.b16 %v7802, %v7798
        %v7967 = vpack.c.b16 %v7803, %v7799
        %v7968 = vpack.c.b16 %v7804, %v7800
        %v7969 = vpack.c.b16 %v7809, %v7805
        %v7970 = vpack.c.b16 %v7810, %v7806
        %v7971 = vpack.c.b16 %v7811, %v7807
        %v7972 = vpack.c.b16 %v7812, %v7808
        %v7973 = vpack.c.b16 %v7817, %v7813
        %v7974 = vpack.c.b16 %v7818, %v7814
        %v7975 = vpack.c.b16 %v7819, %v7815
        %v7976 = vpack.c.b16 %v7820, %v7816
        %v7977 = vpack.c.b16 %v7825, %v7821
        %v7978 = vpack.c.b16 %v7826, %v7822
        %v7979 = vpack.c.b16 %v7827, %v7823
        %v7980 = vpack.c.b16 %v7828, %v7824
        %v7981 = vpack.c.b16 %v7833, %v7829
        %v7982 = vpack.c.b16 %v7834, %v7830
        %v7983 = vpack.c.b16 %v7835, %v7831
        %v7984 = vpack.c.b16 %v7836, %v7832
        %v7985 = vpack.c.b16 %v7841, %v7837
        %v7986 = vpack.c.b16 %v7842, %v7838
        %v7987 = vpack.c.b16 %v7843, %v7839
        %v7988 = vpack.c.b16 %v7844, %v7840
        %v8134 = vsel %vm2527, %v7258, 0
        %8136 = vmatpush.bf16.msra.mxu0 %v7873
        %8137 = vmatpush.bf16.msra.mxu0 %v7869
        %8138 = vmatpush.bf16.msra.mxu0 %v7865
        %8139 = vmatpush.bf16.msra.mxu0 %v7861
        %8140 = vmatpush.bf16.msra.mxu0 %v7857
        %8141 = vmatpush.bf16.msra.mxu0 %v7853
        %8142 = vmatpush.bf16.msra.mxu0 %v7849
        %8143 = vmatpush.bf16.msra.mxu0 %v7845
        %8144 = vmatmul.bf16.gmra.mxu0 %v7254
        %v8145 = vpop.f32.mrf.mxu0
        %v8146 = vadd.f32 %v7405, %v8145
        %v8147 = vpop.f32.mrf.mxu0
        %v8148 = vadd.f32 %v7405, %v8147
        %8149 = vdwg.mxu0
        %8150 = vmatpush.bf16.msra.mxu0 %v7905
        %8151 = vmatpush.bf16.msra.mxu0 %v7901
        %8152 = vmatpush.bf16.msra.mxu0 %v7897
        %8153 = vmatpush.bf16.msra.mxu0 %v7893
        %8154 = vmatpush.bf16.msra.mxu0 %v7889
        %8155 = vmatpush.bf16.msra.mxu0 %v7885
        %8156 = vmatpush.bf16.msra.mxu0 %v7881
        %8157 = vmatpush.bf16.msra.mxu0 %v7877
        %8158 = vmatmul.bf16.gmra.mxu0 %v7255
        %v8159 = vpop.f32.mrf.mxu0
        %v8160 = vadd.f32 %v8146, %v8159
        %v8161 = vpop.f32.mrf.mxu0
        %v8162 = vadd.f32 %v8148, %v8161
        %8163 = vdwg.mxu0
        %8164 = vmatpush.bf16.msra.mxu0 %v7937
        %8165 = vmatpush.bf16.msra.mxu0 %v7933
        %8166 = vmatpush.bf16.msra.mxu0 %v7929
        %8167 = vmatpush.bf16.msra.mxu0 %v7925
        %8168 = vmatpush.bf16.msra.mxu0 %v7921
        %8169 = vmatpush.bf16.msra.mxu0 %v7917
        %8170 = vmatpush.bf16.msra.mxu0 %v7913
        %8171 = vmatpush.bf16.msra.mxu0 %v7909
        %8172 = vmatmul.bf16.gmra.mxu0 %v7256
        %v8173 = vpop.f32.mrf.mxu0
        %v8174 = vadd.f32 %v8160, %v8173
        %v8175 = vpop.f32.mrf.mxu0
        %v8176 = vadd.f32 %v8162, %v8175
        %8177 = vdwg.mxu0
        %8178 = vmatpush.bf16.msra.mxu0 %v7969
        %8179 = vmatpush.bf16.msra.mxu0 %v7965
        %8180 = vmatpush.bf16.msra.mxu0 %v7961
        %8181 = vmatpush.bf16.msra.mxu0 %v7957
        %8182 = vmatpush.bf16.msra.mxu0 %v7953
        %8183 = vmatpush.bf16.msra.mxu0 %v7949
        %8184 = vmatpush.bf16.msra.mxu0 %v7945
        %8185 = vmatpush.bf16.msra.mxu0 %v7941
        %8186 = vmatmul.bf16.gmra.mxu0 %v7257
        %v8187 = vpop.f32.mrf.mxu0
        %v8188 = vadd.f32 %v8174, %v8187
        %v8189 = vpop.f32.mrf.mxu0
        %v8190 = vadd.f32 %v8176, %v8189
        %8191 = vdwg.mxu0
        %8192 = vmatpush.bf16.msra.mxu0 0
        %8193 = vmatpush.bf16.msra.mxu0 0
        %8194 = vmatpush.bf16.msra.mxu0 0
        %8195 = vmatpush.bf16.msra.mxu0 0
        %8196 = vmatpush.bf16.msra.mxu0 %v7985
        %8197 = vmatpush.bf16.msra.mxu0 %v7981
        %8198 = vmatpush.bf16.msra.mxu0 %v7977
        %8199 = vmatpush.bf16.msra.mxu0 %v7973
        %8200 = vmatmul.bf16.gmra.mxu0 %v8134
        %v8201 = vpop.f32.mrf.mxu0
        %v8202 = vadd.f32 %v8188, %v8201
        %v8203 = vpop.f32.mrf.mxu0
        %v8204 = vadd.f32 %v8190, %v8203
        %8205 = vdwg.mxu0
        %8206 = vmatpush.bf16.msra.mxu0 %v7874
        %8207 = vmatpush.bf16.msra.mxu0 %v7870
        %8208 = vmatpush.bf16.msra.mxu0 %v7866
        %8209 = vmatpush.bf16.msra.mxu0 %v7862
        %8210 = vmatpush.bf16.msra.mxu0 %v7858
        %8211 = vmatpush.bf16.msra.mxu0 %v7854
        %8212 = vmatpush.bf16.msra.mxu0 %v7850
        %8213 = vmatpush.bf16.msra.mxu0 %v7846
        %8214 = vmatmul.bf16.gmra.mxu0 %v7254
        %v8215 = vpop.f32.mrf.mxu0
        %v8216 = vadd.f32 %v7406, %v8215
        %v8217 = vpop.f32.mrf.mxu0
        %v8218 = vadd.f32 %v7406, %v8217
        %8219 = vdwg.mxu0
        %8220 = vmatpush.bf16.msra.mxu0 %v7906
        %8221 = vmatpush.bf16.msra.mxu0 %v7902
        %8222 = vmatpush.bf16.msra.mxu0 %v7898
        %8223 = vmatpush.bf16.msra.mxu0 %v7894
        %8224 = vmatpush.bf16.msra.mxu0 %v7890
        %8225 = vmatpush.bf16.msra.mxu0 %v7886
        %8226 = vmatpush.bf16.msra.mxu0 %v7882
        %8227 = vmatpush.bf16.msra.mxu0 %v7878
        %8228 = vmatmul.bf16.gmra.mxu0 %v7255
        %v8229 = vpop.f32.mrf.mxu0
        %v8230 = vadd.f32 %v8216, %v8229
        %v8231 = vpop.f32.mrf.mxu0
        %v8232 = vadd.f32 %v8218, %v8231
        %8233 = vdwg.mxu0
        %8234 = vmatpush.bf16.msra.mxu0 %v7938
        %8235 = vmatpush.bf16.msra.mxu0 %v7934
        %8236 = vmatpush.bf16.msra.mxu0 %v7930
        %8237 = vmatpush.bf16.msra.mxu0 %v7926
        %8238 = vmatpush.bf16.msra.mxu0 %v7922
        %8239 = vmatpush.bf16.msra.mxu0 %v7918
        %8240 = vmatpush.bf16.msra.mxu0 %v7914
        %8241 = vmatpush.bf16.msra.mxu0 %v7910
        %8242 = vmatmul.bf16.gmra.mxu0 %v7256
        %v8243 = vpop.f32.mrf.mxu0
        %v8244 = vadd.f32 %v8230, %v8243
        %v8245 = vpop.f32.mrf.mxu0
        %v8246 = vadd.f32 %v8232, %v8245
        %8247 = vdwg.mxu0
        %8248 = vmatpush.bf16.msra.mxu0 %v7970
        %8249 = vmatpush.bf16.msra.mxu0 %v7966
        %8250 = vmatpush.bf16.msra.mxu0 %v7962
        %8251 = vmatpush.bf16.msra.mxu0 %v7958
        %8252 = vmatpush.bf16.msra.mxu0 %v7954
        %8253 = vmatpush.bf16.msra.mxu0 %v7950
        %8254 = vmatpush.bf16.msra.mxu0 %v7946
        %8255 = vmatpush.bf16.msra.mxu0 %v7942
        %8256 = vmatmul.bf16.gmra.mxu0 %v7257
        %v8257 = vpop.f32.mrf.mxu0
        %v8258 = vadd.f32 %v8244, %v8257
        %v8259 = vpop.f32.mrf.mxu0
        %v8260 = vadd.f32 %v8246, %v8259
        %8261 = vdwg.mxu0
        %8262 = vmatpush.bf16.msra.mxu0 0
        %8263 = vmatpush.bf16.msra.mxu0 0
        %8264 = vmatpush.bf16.msra.mxu0 0
        %8265 = vmatpush.bf16.msra.mxu0 0
        %8266 = vmatpush.bf16.msra.mxu0 %v7986
        %8267 = vmatpush.bf16.msra.mxu0 %v7982
        %8268 = vmatpush.bf16.msra.mxu0 %v7978
        %8269 = vmatpush.bf16.msra.mxu0 %v7974
        %8270 = vmatmul.bf16.gmra.mxu0 %v8134
        %v8271 = vpop.f32.mrf.mxu0
        %v8272 = vadd.f32 %v8258, %v8271
        %v8273 = vpop.f32.mrf.mxu0
        %v8274 = vadd.f32 %v8260, %v8273
        %8275 = vdwg.mxu0
        %8276 = vmatpush.bf16.msra.mxu0 %v7875
        %8277 = vmatpush.bf16.msra.mxu0 %v7871
        %8278 = vmatpush.bf16.msra.mxu0 %v7867
        %8279 = vmatpush.bf16.msra.mxu0 %v7863
        %8280 = vmatpush.bf16.msra.mxu0 %v7859
        %8281 = vmatpush.bf16.msra.mxu0 %v7855
        %8282 = vmatpush.bf16.msra.mxu0 %v7851
        %8283 = vmatpush.bf16.msra.mxu0 %v7847
        %8284 = vmatmul.bf16.gmra.mxu0 %v7254
        %v8285 = vpop.f32.mrf.mxu0
        %v8286 = vadd.f32 %v7407, %v8285
        %v8287 = vpop.f32.mrf.mxu0
        %v8288 = vadd.f32 %v7407, %v8287
        %8289 = vdwg.mxu0
        %8290 = vmatpush.bf16.msra.mxu0 %v7907
        %8291 = vmatpush.bf16.msra.mxu0 %v7903
        %8292 = vmatpush.bf16.msra.mxu0 %v7899
        %8293 = vmatpush.bf16.msra.mxu0 %v7895
        %8294 = vmatpush.bf16.msra.mxu0 %v7891
        %8295 = vmatpush.bf16.msra.mxu0 %v7887
        %8296 = vmatpush.bf16.msra.mxu0 %v7883
        %8297 = vmatpush.bf16.msra.mxu0 %v7879
        %8298 = vmatmul.bf16.gmra.mxu0 %v7255
        %v8299 = vpop.f32.mrf.mxu0
        %v8300 = vadd.f32 %v8286, %v8299
        %v8301 = vpop.f32.mrf.mxu0
        %v8302 = vadd.f32 %v8288, %v8301
        %8303 = vdwg.mxu0
        %8304 = vmatpush.bf16.msra.mxu0 %v7939
        %8305 = vmatpush.bf16.msra.mxu0 %v7935
        %8306 = vmatpush.bf16.msra.mxu0 %v7931
        %8307 = vmatpush.bf16.msra.mxu0 %v7927
        %8308 = vmatpush.bf16.msra.mxu0 %v7923
        %8309 = vmatpush.bf16.msra.mxu0 %v7919
        %8310 = vmatpush.bf16.msra.mxu0 %v7915
        %8311 = vmatpush.bf16.msra.mxu0 %v7911
        %8312 = vmatmul.bf16.gmra.mxu0 %v7256
        %v8313 = vpop.f32.mrf.mxu0
        %v8314 = vadd.f32 %v8300, %v8313
        %v8315 = vpop.f32.mrf.mxu0
        %v8316 = vadd.f32 %v8302, %v8315
        %8317 = vdwg.mxu0
        %8318 = vmatpush.bf16.msra.mxu0 %v7971
        %8319 = vmatpush.bf16.msra.mxu0 %v7967
        %8320 = vmatpush.bf16.msra.mxu0 %v7963
        %8321 = vmatpush.bf16.msra.mxu0 %v7959
        %8322 = vmatpush.bf16.msra.mxu0 %v7955
        %8323 = vmatpush.bf16.msra.mxu0 %v7951
        %8324 = vmatpush.bf16.msra.mxu0 %v7947
        %8325 = vmatpush.bf16.msra.mxu0 %v7943
        %8326 = vmatmul.bf16.gmra.mxu0 %v7257
        %v8327 = vpop.f32.mrf.mxu0
        %v8328 = vadd.f32 %v8314, %v8327
        %v8329 = vpop.f32.mrf.mxu0
        %v8330 = vadd.f32 %v8316, %v8329
        %8331 = vdwg.mxu0
        %8332 = vmatpush.bf16.msra.mxu0 0
        %8333 = vmatpush.bf16.msra.mxu0 0
        %8334 = vmatpush.bf16.msra.mxu0 0
        %8335 = vmatpush.bf16.msra.mxu0 0
        %8336 = vmatpush.bf16.msra.mxu0 %v7987
        %8337 = vmatpush.bf16.msra.mxu0 %v7983
        %8338 = vmatpush.bf16.msra.mxu0 %v7979
        %8339 = vmatpush.bf16.msra.mxu0 %v7975
        %8340 = vmatmul.bf16.gmra.mxu0 %v8134
        %v8341 = vpop.f32.mrf.mxu0
        %v8342 = vadd.f32 %v8328, %v8341
        %v8343 = vpop.f32.mrf.mxu0
        %v8344 = vadd.f32 %v8330, %v8343
        %8345 = vdwg.mxu0
        %8346 = vmatpush.bf16.msra.mxu0 %v7876
        %8347 = vmatpush.bf16.msra.mxu0 %v7872
        %8348 = vmatpush.bf16.msra.mxu0 %v7868
        %8349 = vmatpush.bf16.msra.mxu0 %v7864
        %8350 = vmatpush.bf16.msra.mxu0 %v7860
        %8351 = vmatpush.bf16.msra.mxu0 %v7856
        %8352 = vmatpush.bf16.msra.mxu0 %v7852
        %8353 = vmatpush.bf16.msra.mxu0 %v7848
        %8354 = vmatmul.bf16.gmra.mxu0 %v7254
        %v8355 = vpop.f32.mrf.mxu0
        %v8356 = vadd.f32 %v7408, %v8355
        %v8357 = vpop.f32.mrf.mxu0
        %v8358 = vadd.f32 %v7408, %v8357
        %8359 = vdwg.mxu0
        %8360 = vmatpush.bf16.msra.mxu0 %v7908
        %8361 = vmatpush.bf16.msra.mxu0 %v7904
        %8362 = vmatpush.bf16.msra.mxu0 %v7900
        %8363 = vmatpush.bf16.msra.mxu0 %v7896
        %8364 = vmatpush.bf16.msra.mxu0 %v7892
        %8365 = vmatpush.bf16.msra.mxu0 %v7888
        %8366 = vmatpush.bf16.msra.mxu0 %v7884
        %8367 = vmatpush.bf16.msra.mxu0 %v7880
        %8368 = vmatmul.bf16.gmra.mxu0 %v7255
        %v8369 = vpop.f32.mrf.mxu0
        %v8370 = vadd.f32 %v8356, %v8369
        %v8371 = vpop.f32.mrf.mxu0
        %v8372 = vadd.f32 %v8358, %v8371
        %8373 = vdwg.mxu0
        %8374 = vmatpush.bf16.msra.mxu0 %v7940
        %8375 = vmatpush.bf16.msra.mxu0 %v7936
        %8376 = vmatpush.bf16.msra.mxu0 %v7932
        %8377 = vmatpush.bf16.msra.mxu0 %v7928
        %8378 = vmatpush.bf16.msra.mxu0 %v7924
        %8379 = vmatpush.bf16.msra.mxu0 %v7920
        %8380 = vmatpush.bf16.msra.mxu0 %v7916
        %8381 = vmatpush.bf16.msra.mxu0 %v7912
        %8382 = vmatmul.bf16.gmra.mxu0 %v7256
        %v8383 = vpop.f32.mrf.mxu0
        %v8384 = vadd.f32 %v8370, %v8383
        %v8385 = vpop.f32.mrf.mxu0
        %v8386 = vadd.f32 %v8372, %v8385
        %8387 = vdwg.mxu0
        %8388 = vmatpush.bf16.msra.mxu0 %v7972
        %8389 = vmatpush.bf16.msra.mxu0 %v7968
        %8390 = vmatpush.bf16.msra.mxu0 %v7964
        %8391 = vmatpush.bf16.msra.mxu0 %v7960
        %8392 = vmatpush.bf16.msra.mxu0 %v7956
        %8393 = vmatpush.bf16.msra.mxu0 %v7952
        %8394 = vmatpush.bf16.msra.mxu0 %v7948
        %8395 = vmatpush.bf16.msra.mxu0 %v7944
        %8396 = vmatmul.bf16.gmra.mxu0 %v7257
        %v8397 = vpop.f32.mrf.mxu0
        %v8398 = vadd.f32 %v8384, %v8397
        %v8399 = vpop.f32.mrf.mxu0
        %v8400 = vadd.f32 %v8386, %v8399
        %8401 = vdwg.mxu0
        %8402 = vmatpush.bf16.msra.mxu0 0
        %8403 = vmatpush.bf16.msra.mxu0 0
        %8404 = vmatpush.bf16.msra.mxu0 0
        %8405 = vmatpush.bf16.msra.mxu0 0
        %8406 = vmatpush.bf16.msra.mxu0 %v7988
        %8407 = vmatpush.bf16.msra.mxu0 %v7984
        %8408 = vmatpush.bf16.msra.mxu0 %v7980
        %8409 = vmatpush.bf16.msra.mxu0 %v7976
        %8410 = vmatmul.bf16.gmra.mxu0 %v8134
        %v8411 = vpop.f32.mrf.mxu0
        %v8412 = vadd.f32 %v8398, %v8411
        %v8413 = vpop.f32.mrf.mxu0
        %v8414 = vadd.f32 %v8400, %v8413
        %8415 = vdwg.mxu0
        %v8416 = vmax.f32 %v8202, 0.0
        %v8417 = vmax.f32 %v8272, 0.0
        %v8418 = vmax.f32 %v8342, 0.0
        %v8419 = vmax.f32 %v8412, 0.0
        %v8420 = vmax.f32 %v8204, 0.0
        %v8421 = vmax.f32 %v8274, 0.0
        %v8422 = vmax.f32 %v8344, 0.0
        %v8423 = vmax.f32 %v8414, 0.0
        %v8432 = vrot.slane %v8416, 2
        %v8433 = vrot.slane %v8417, 2
        %v8434 = vrot.slane %v8418, 2
        %v8435 = vrot.slane %v8419, 2
        %v8436 = vrot.slane %v8420, 2
        %v8437 = vsel %vm1807, %v8432, %v8436
        %v8438 = vrot.slane %v8421, 2
        %v8439 = vsel %vm1807, %v8433, %v8438
        %v8440 = vrot.slane %v8422, 2
        %v8441 = vsel %vm1807, %v8434, %v8440
        %v8442 = vrot.slane %v8423, 2
        %v8443 = vsel %vm1807, %v8435, %v8442
        %v8456 = vsel %vm1807, 0.0, %v8432
        %v8457 = vsel %vm1807, 0.0, %v8433
        %v8458 = vsel %vm1807, 0.0, %v8434
        %v8459 = vsel %vm1807, 0.0, %v8435
        %v8460 = vsel %vm1731, %v8436, 0.0
        %v8461 = vsel %vm1731, %v8438, 0.0
        %v8462 = vsel %vm1731, %v8440, 0.0
        %v8463 = vsel %vm1731, %v8442, 0.0
        %v8464 = vmul.f32 %v8456, %v4270
        %v8465 = vmul.f32 %v8457, %v4270
        %v8466 = vmul.f32 %v8458, %v4270
        %v8467 = vmul.f32 %v8459, %v4270
        %v8468 = vmul.f32 %v8437, %v4275
        %v8469 = vmul.f32 %v8439, %v4275
        %v8470 = vmul.f32 %v8441, %v4275
        %v8471 = vmul.f32 %v8443, %v4275
        %v8472 = vmul.f32 %v8460, %v4280
        %v8473 = vmul.f32 %v8461, %v4280
        %v8474 = vmul.f32 %v8462, %v4280
        %v8475 = vmul.f32 %v8463, %v4280
        %v8476 = vld [vmem:[%s7] sm:$0xff]
        %v8477 = vld [vmem:[%s7 + $0x8] sm:$0x1]
        %vm8478 = vcmask 203776
        %v8480 = vsel %vm8478, %v8476, 0
        %v8483 = vsel %vm8478, %v8477, 0
        %v8486 = vsel %vm2705, %v4722, 0
        %8488 = vmatpush.msra.mxu0 0.0
        %8489 = vmatpush.msra.mxu0 0.0
        %8490 = vmatpush.msra.mxu0 0.0
        %8491 = vmatpush.msra.mxu0 0.0
        %8492 = vmatpush.msra.mxu0 0.0
        %8493 = vmatpush.msra.mxu0 0.0
        %8494 = vmatpush.msra.mxu0 0.0
        %8495 = vmatpush.msra.mxu0 0.0
        %8496 = vmatpush.msra.mxu0 0.0
        %8497 = vmatpush.msra.mxu0 0.0
        %8498 = vmatpush.msra.mxu0 0.0
        %8499 = vmatpush.msra.mxu0 0.0
        %8500 = vmatpush.msra.mxu0 %v8486
        %8501 = vmatpush.msra.mxu0 %v8472
        %8502 = vmatpush.msra.mxu0 %v8468
        %8503 = vmatpush.msra.mxu0 %v8464
        %8504 = vmatmul.f32.gmra.mxu0 %v8480
        %v8505 = vpop.f32.mrf.mxu0
        %v8506 = vadd.f32 0.0, %v8505
        %8507 = vmatmul.f32.gmra.mxu0 %v8483
        %v8508 = vpop.f32.mrf.mxu0
        %v8509 = vadd.f32 0.0, %v8508
        %8510 = vdwg.mxu0
        %8511 = vmatpush.msra.mxu0 0.0
        %8512 = vmatpush.msra.mxu0 0.0
        %8513 = vmatpush.msra.mxu0 0.0
        %8514 = vmatpush.msra.mxu0 0.0
        %8515 = vmatpush.msra.mxu0 0.0
        %8516 = vmatpush.msra.mxu0 0.0
        %8517 = vmatpush.msra.mxu0 0.0
        %8518 = vmatpush.msra.mxu0 0.0
        %8519 = vmatpush.msra.mxu0 0.0
        %8520 = vmatpush.msra.mxu0 0.0
        %8521 = vmatpush.msra.mxu0 0.0
        %8522 = vmatpush.msra.mxu0 0.0
        %8523 = vmatpush.msra.mxu0 %v8486
        %8524 = vmatpush.msra.mxu0 %v8473
        %8525 = vmatpush.msra.mxu0 %v8469
        %8526 = vmatpush.msra.mxu0 %v8465
        %8527 = vmatmul.f32.gmra.mxu0 %v8480
        %v8528 = vpop.f32.mrf.mxu0
        %v8529 = vadd.f32 0.0, %v8528
        %8530 = vmatmul.f32.gmra.mxu0 %v8483
        %v8531 = vpop.f32.mrf.mxu0
        %v8532 = vadd.f32 0.0, %v8531
        %8533 = vdwg.mxu0
        %8534 = vmatpush.msra.mxu0 0.0
        %8535 = vmatpush.msra.mxu0 0.0
        %8536 = vmatpush.msra.mxu0 0.0
        %8537 = vmatpush.msra.mxu0 0.0
        %8538 = vmatpush.msra.mxu0 0.0
        %8539 = vmatpush.msra.mxu0 0.0
        %8540 = vmatpush.msra.mxu0 0.0
        %8541 = vmatpush.msra.mxu0 0.0
        %8542 = vmatpush.msra.mxu0 0.0
        %8543 = vmatpush.msra.mxu0 0.0
        %8544 = vmatpush.msra.mxu0 0.0
        %8545 = vmatpush.msra.mxu0 0.0
        %8546 = vmatpush.msra.mxu0 %v8486
        %8547 = vmatpush.msra.mxu0 %v8474
        %8548 = vmatpush.msra.mxu0 %v8470
        %8549 = vmatpush.msra.mxu0 %v8466
        %8550 = vmatmul.f32.gmra.mxu0 %v8480
        %v8551 = vpop.f32.mrf.mxu0
        %v8552 = vadd.f32 0.0, %v8551
        %8553 = vmatmul.f32.gmra.mxu0 %v8483
        %v8554 = vpop.f32.mrf.mxu0
        %v8555 = vadd.f32 0.0, %v8554
        %8556 = vdwg.mxu0
        %8557 = vmatpush.msra.mxu0 0.0
        %8558 = vmatpush.msra.mxu0 0.0
        %8559 = vmatpush.msra.mxu0 0.0
        %8560 = vmatpush.msra.mxu0 0.0
        %8561 = vmatpush.msra.mxu0 0.0
        %8562 = vmatpush.msra.mxu0 0.0
        %8563 = vmatpush.msra.mxu0 0.0
        %8564 = vmatpush.msra.mxu0 0.0
        %8565 = vmatpush.msra.mxu0 0.0
        %8566 = vmatpush.msra.mxu0 0.0
        %8567 = vmatpush.msra.mxu0 0.0
        %8568 = vmatpush.msra.mxu0 0.0
        %8569 = vmatpush.msra.mxu0 %v8486
        %8570 = vmatpush.msra.mxu0 %v8475
        %8571 = vmatpush.msra.mxu0 %v8471
        %8572 = vmatpush.msra.mxu0 %v8467
        %8573 = vmatmul.f32.gmra.mxu0 %v8480
        %v8574 = vpop.f32.mrf.mxu0
        %v8575 = vadd.f32 0.0, %v8574
        %8576 = vmatmul.f32.gmra.mxu0 %v8483
        %v8577 = vpop.f32.mrf.mxu0
        %v8578 = vadd.f32 0.0, %v8577
        %8579 = vdwg.mxu0
        %v8580 = vpack.c.bf16 %v8509, %v8506
        %v8581 = vpack.c.bf16 %v8532, %v8529
        %v8582 = vpack.c.bf16 %v8555, %v8552
        %v8583 = vpack.c.bf16 %v8578, %v8575
        %v8584 = vld [vmem:[%s75] sm:$0xf]
        %v8585 = vld [vmem:[%s75 + $0x4] sm:$0xf]
        %v8586 = vld [vmem:[%s75 + $0x8] sm:$0xf]
        %v8587 = vld [vmem:[%s75 + $0xc] sm:$0xf]
        %v8588 = vld [vmem:[%s75 + $0x10] sm:$0xf]
        %v8589 = vld [vmem:[%s75 + $0x14] sm:$0xf]
        %v8590 = vld [vmem:[%s75 + $0x18] sm:$0xf]
        %v8591 = vld [vmem:[%s75 + $0x1c] sm:$0xf]
        %v8592 = vld [vmem:[%s75 + $0x20] sm:$0xf]
        %v8593 = vld [vmem:[%s75 + $0x24] sm:$0xf]
        %v8594 = vld [vmem:[%s75 + $0x28] sm:$0xf]
        %v8595 = vld [vmem:[%s75 + $0x2c] sm:$0xf]
        %v8596 = vld [vmem:[%s75 + $0x30] sm:$0xf]
        %v8597 = vld [vmem:[%s75 + $0x34] sm:$0xf]
        %v8598 = vld [vmem:[%s75 + $0x38] sm:$0xf]
        %v8599 = vld [vmem:[%s75 + $0x3c] sm:$0xf]
        %v8600 = vld [vmem:[%s75 + $0x40] sm:$0xf]
        %v8601 = vld [vmem:[%s75 + $0x44] sm:$0xf]
        %v8602 = vld [vmem:[%s75 + $0x48] sm:$0xf]
        %v8603 = vld [vmem:[%s75 + $0x4c] sm:$0xf]
        %v8604 = vld [vmem:[%s75 + $0x50] sm:$0xf]
        %v8605 = vld [vmem:[%s75 + $0x54] sm:$0xf]
        %v8606 = vld [vmem:[%s75 + $0x58] sm:$0xf]
        %v8607 = vld [vmem:[%s75 + $0x5c] sm:$0xf]
        %v8608 = vld [vmem:[%s75 + $0x60] sm:$0xf]
        %v8609 = vld [vmem:[%s75 + $0x64] sm:$0xf]
        %v8610 = vld [vmem:[%s75 + $0x68] sm:$0xf]
        %v8611 = vld [vmem:[%s75 + $0x6c] sm:$0xf]
        %v8612 = vld [vmem:[%s75 + $0x70] sm:$0xf]
        %v8613 = vld [vmem:[%s75 + $0x74] sm:$0xf]
        %v8614 = vld [vmem:[%s75 + $0x78] sm:$0xf]
        %v8615 = vld [vmem:[%s75 + $0x7c] sm:$0xf]
        %v8616 = vld [vmem:[%s75 + $0x80] sm:$0xf]
        %v8617 = vld [vmem:[%s75 + $0x84] sm:$0xf]
        %v8618 = vld [vmem:[%s75 + $0x88] sm:$0xf]
        %v8619 = vld [vmem:[%s75 + $0x8c] sm:$0xf]
        %v8620 = vld [vmem:[%s75 + $0x90] sm:$0xf]
        %v8621 = vld [vmem:[%s75 + $0x94] sm:$0xf]
        %v8622 = vld [vmem:[%s75 + $0x98] sm:$0xf]
        %v8623 = vld [vmem:[%s75 + $0x9c] sm:$0xf]
        %v8624 = vld [vmem:[%s75 + $0xa0] sm:$0xf]
        %v8625 = vld [vmem:[%s75 + $0xa4] sm:$0xf]
        %v8626 = vld [vmem:[%s75 + $0xa8] sm:$0xf]
        %v8627 = vld [vmem:[%s75 + $0xac] sm:$0xf]
        %v8628 = vld [vmem:[%s75 + $0xb0] sm:$0xf]
        %v8629 = vld [vmem:[%s75 + $0xb4] sm:$0xf]
        %v8630 = vld [vmem:[%s75 + $0xb8] sm:$0xf]
        %v8631 = vld [vmem:[%s75 + $0xbc] sm:$0xf]
        %v8632 = vld [vmem:[%s75 + $0xc0] sm:$0xf]
        %v8633 = vld [vmem:[%s75 + $0xc4] sm:$0xf]
        %v8634 = vld [vmem:[%s75 + $0xc8] sm:$0xf]
        %v8635 = vld [vmem:[%s75 + $0xcc] sm:$0xf]
        %v8636 = vld [vmem:[%s75 + $0xd0] sm:$0xf]
        %v8637 = vld [vmem:[%s75 + $0xd4] sm:$0xf]
        %v8638 = vld [vmem:[%s75 + $0xd8] sm:$0xf]
        %v8639 = vld [vmem:[%s75 + $0xdc] sm:$0xf]
        %v8640 = vld [vmem:[%s75 + $0xe0] sm:$0xf]
        %v8641 = vld [vmem:[%s75 + $0xe4] sm:$0xf]
        %v8642 = vld [vmem:[%s75 + $0xe8] sm:$0xf]
        %v8643 = vld [vmem:[%s75 + $0xec] sm:$0xf]
        %v8644 = vld [vmem:[%s75 + $0xf0] sm:$0xf]
        %v8645 = vld [vmem:[%s75 + $0xf4] sm:$0xf]
        %v8646 = vld [vmem:[%s75 + $0xf8] sm:$0xf]
        %v8647 = vld [vmem:[%s75 + $0xfc] sm:$0xf]
        %v8648 = vld [vmem:[#allocation2] sm:$0x1]
        %v8650 = vperm.slane %v8648, 0
        %v8716 = vunpack.c.l.b16 %v8584
        %v8717 = vunpack.c.l.b16 %v8585
        %v8718 = vunpack.c.l.b16 %v8586
        %v8719 = vunpack.c.l.b16 %v8587
        %v8720 = vunpack.c.l.b16 %v8588
        %v8721 = vunpack.c.l.b16 %v8589
        %v8722 = vunpack.c.l.b16 %v8590
        %v8723 = vunpack.c.l.b16 %v8591
        %v8724 = vunpack.c.l.b16 %v8592
        %v8725 = vunpack.c.l.b16 %v8593
        %v8726 = vunpack.c.l.b16 %v8594
        %v8727 = vunpack.c.l.b16 %v8595
        %v8728 = vunpack.c.l.b16 %v8596
        %v8729 = vunpack.c.l.b16 %v8597
        %v8730 = vunpack.c.l.b16 %v8598
        %v8731 = vunpack.c.l.b16 %v8599
        %v8732 = vunpack.c.l.b16 %v8600
        %v8733 = vunpack.c.l.b16 %v8601
        %v8734 = vunpack.c.l.b16 %v8602
        %v8735 = vunpack.c.l.b16 %v8603
        %v8736 = vunpack.c.l.b16 %v8604
        %v8737 = vunpack.c.l.b16 %v8605
        %v8738 = vunpack.c.l.b16 %v8606
        %v8739 = vunpack.c.l.b16 %v8607
        %v8740 = vunpack.c.l.b16 %v8608
        %v8741 = vunpack.c.l.b16 %v8609
        %v8742 = vunpack.c.l.b16 %v8610
        %v8743 = vunpack.c.l.b16 %v8611
        %v8744 = vunpack.c.l.b16 %v8612
        %v8745 = vunpack.c.l.b16 %v8613
        %v8746 = vunpack.c.l.b16 %v8614
        %v8747 = vunpack.c.l.b16 %v8615
        %v8748 = vunpack.c.l.b16 %v8616
        %v8749 = vunpack.c.l.b16 %v8617
        %v8750 = vunpack.c.l.b16 %v8618
        %v8751 = vunpack.c.l.b16 %v8619
        %v8752 = vunpack.c.l.b16 %v8620
        %v8753 = vunpack.c.l.b16 %v8621
        %v8754 = vunpack.c.l.b16 %v8622
        %v8755 = vunpack.c.l.b16 %v8623
        %v8756 = vunpack.c.l.b16 %v8624
        %v8757 = vunpack.c.l.b16 %v8625
        %v8758 = vunpack.c.l.b16 %v8626
        %v8759 = vunpack.c.l.b16 %v8627
        %v8760 = vunpack.c.l.b16 %v8628
        %v8761 = vunpack.c.l.b16 %v8629
        %v8762 = vunpack.c.l.b16 %v8630
        %v8763 = vunpack.c.l.b16 %v8631
        %v8764 = vunpack.c.l.b16 %v8632
        %v8765 = vunpack.c.l.b16 %v8633
        %v8766 = vunpack.c.l.b16 %v8634
        %v8767 = vunpack.c.l.b16 %v8635
        %v8768 = vunpack.c.l.b16 %v8636
        %v8769 = vunpack.c.l.b16 %v8637
        %v8770 = vunpack.c.l.b16 %v8638
        %v8771 = vunpack.c.l.b16 %v8639
        %v8772 = vunpack.c.l.b16 %v8640
        %v8773 = vunpack.c.l.b16 %v8641
        %v8774 = vunpack.c.l.b16 %v8642
        %v8775 = vunpack.c.l.b16 %v8643
        %v8776 = vunpack.c.l.b16 %v8644
        %v8777 = vunpack.c.l.b16 %v8645
        %v8778 = vunpack.c.l.b16 %v8646
        %v8779 = vunpack.c.l.b16 %v8647
        %v8780 = vpack.c.b16 %v8717, %v8716
        %v8781 = vpack.c.b16 %v8719, %v8718
        %v8782 = vpack.c.b16 %v8721, %v8720
        %v8783 = vpack.c.b16 %v8723, %v8722
        %v8784 = vpack.c.b16 %v8725, %v8724
        %v8785 = vpack.c.b16 %v8727, %v8726
        %v8786 = vpack.c.b16 %v8729, %v8728
        %v8787 = vpack.c.b16 %v8731, %v8730
        %v8788 = vpack.c.b16 %v8733, %v8732
        %v8789 = vpack.c.b16 %v8735, %v8734
        %v8790 = vpack.c.b16 %v8737, %v8736
        %v8791 = vpack.c.b16 %v8739, %v8738
        %v8792 = vpack.c.b16 %v8741, %v8740
        %v8793 = vpack.c.b16 %v8743, %v8742
        %v8794 = vpack.c.b16 %v8745, %v8744
        %v8795 = vpack.c.b16 %v8747, %v8746
        %v8796 = vpack.c.b16 %v8749, %v8748
        %v8797 = vpack.c.b16 %v8751, %v8750
        %v8798 = vpack.c.b16 %v8753, %v8752
        %v8799 = vpack.c.b16 %v8755, %v8754
        %v8800 = vpack.c.b16 %v8757, %v8756
        %v8801 = vpack.c.b16 %v8759, %v8758
        %v8802 = vpack.c.b16 %v8761, %v8760
        %v8803 = vpack.c.b16 %v8763, %v8762
        %v8804 = vpack.c.b16 %v8765, %v8764
        %v8805 = vpack.c.b16 %v8767, %v8766
        %v8806 = vpack.c.b16 %v8769, %v8768
        %v8807 = vpack.c.b16 %v8771, %v8770
        %v8808 = vpack.c.b16 %v8773, %v8772
        %v8809 = vpack.c.b16 %v8775, %v8774
        %v8810 = vpack.c.b16 %v8777, %v8776
        %v8811 = vpack.c.b16 %v8779, %v8778
        %8844 = vmatpush.bf16.msra.mxu0 %v8787
        %8845 = vmatpush.bf16.msra.mxu0 %v8786
        %8846 = vmatpush.bf16.msra.mxu0 %v8785
        %8847 = vmatpush.bf16.msra.mxu0 %v8784
        %8848 = vmatpush.bf16.msra.mxu0 %v8783
        %8849 = vmatpush.bf16.msra.mxu0 %v8782
        %8850 = vmatpush.bf16.msra.mxu0 %v8781
        %8851 = vmatpush.bf16.msra.mxu0 %v8780
        %8852 = vmatmul.bf16.gmra.mxu0 %v8580
        %v8853 = vpop.f32.mrf.mxu0
        %v8854 = vadd.f32 %v8650, %v8853
        %v8855 = vpop.f32.mrf.mxu0
        %v8856 = vadd.f32 %v8650, %v8855
        %8857 = vdwg.mxu0
        %8858 = vmatpush.bf16.msra.mxu0 %v8795
        %8859 = vmatpush.bf16.msra.mxu0 %v8794
        %8860 = vmatpush.bf16.msra.mxu0 %v8793
        %8861 = vmatpush.bf16.msra.mxu0 %v8792
        %8862 = vmatpush.bf16.msra.mxu0 %v8791
        %8863 = vmatpush.bf16.msra.mxu0 %v8790
        %8864 = vmatpush.bf16.msra.mxu0 %v8789
        %8865 = vmatpush.bf16.msra.mxu0 %v8788
        %8866 = vmatmul.bf16.gmra.mxu0 %v8581
        %v8867 = vpop.f32.mrf.mxu0
        %v8868 = vadd.f32 %v8854, %v8867
        %v8869 = vpop.f32.mrf.mxu0
        %v8870 = vadd.f32 %v8856, %v8869
        %8871 = vdwg.mxu0
        %8872 = vmatpush.bf16.msra.mxu0 %v8803
        %8873 = vmatpush.bf16.msra.mxu0 %v8802
        %8874 = vmatpush.bf16.msra.mxu0 %v8801
        %8875 = vmatpush.bf16.msra.mxu0 %v8800
        %8876 = vmatpush.bf16.msra.mxu0 %v8799
        %8877 = vmatpush.bf16.msra.mxu0 %v8798
        %8878 = vmatpush.bf16.msra.mxu0 %v8797
        %8879 = vmatpush.bf16.msra.mxu0 %v8796
        %8880 = vmatmul.bf16.gmra.mxu0 %v8582
        %v8881 = vpop.f32.mrf.mxu0
        %v8882 = vadd.f32 %v8868, %v8881
        %v8883 = vpop.f32.mrf.mxu0
        %v8884 = vadd.f32 %v8870, %v8883
        %8885 = vdwg.mxu0
        %8886 = vmatpush.bf16.msra.mxu0 %v8811
        %8887 = vmatpush.bf16.msra.mxu0 %v8810
        %8888 = vmatpush.bf16.msra.mxu0 %v8809
        %8889 = vmatpush.bf16.msra.mxu0 %v8808
        %8890 = vmatpush.bf16.msra.mxu0 %v8807
        %8891 = vmatpush.bf16.msra.mxu0 %v8806
        %8892 = vmatpush.bf16.msra.mxu0 %v8805
        %8893 = vmatpush.bf16.msra.mxu0 %v8804
        %8894 = vmatmul.bf16.gmra.mxu0 %v8583
        %v8895 = vpop.f32.mrf.mxu0
        %v8896 = vadd.f32 %v8882, %v8895
        %v8897 = vpop.f32.mrf.mxu0
        %v8898 = vadd.f32 %v8884, %v8897
        %8899 = vdwg.mxu0
        %v8900 = vmax.f32 %v8896, 0.0
        %v8901 = vmax.f32 %v8898, 0.0
        %8903 = vset.pattern.permute.xlu0 0
        %8904 = vperm.xlu0 %8903, %v2181
        %v8905 = vpop.permute.xlu0 %8904
        %8908 = vset.pattern.permute.xlu0 0
        %8909 = vperm.xlu0 %8908, %v2182
        %v8910 = vpop.permute.xlu0 %8909
        %v8912 = vmul.f32 %v8900, %v8905
        %v8913 = vmul.f32 %v8901, %v8910
        %v8915 = vrot.slane %v8912, 1
        %8916 = vrot.lane.b32.xlu0 %v8915, 64
        %v8917 = vpop.permute.xlu0 %8916
        %v8919 = vrot.slane %v8912, 2
        %v8921 = vrot.slane %v8912, 3
        %8922 = vrot.lane.b32.xlu0 %v8921, 64
        %v8923 = vpop.permute.xlu0 %8922
        %v8925 = vrot.slane %v8912, 4
        %v8927 = vrot.slane %v8912, 5
        %8928 = vrot.lane.b32.xlu0 %v8927, 64
        %v8929 = vpop.permute.xlu0 %8928
        %v8931 = vrot.slane %v8912, 6
        %v8933 = vrot.slane %v8912, 7
        %8934 = vrot.lane.b32.xlu0 %v8933, 64
        %v8935 = vpop.permute.xlu0 %8934
        %v8937 = vsel %vm2527, %v8912, %v8917
        %v8938 = vsel %vm2527, %v8919, %v8923
        %v8939 = vsel %vm2527, %v8925, %v8929
        %v8940 = vsel %vm2527, %v8931, %v8935
        %v8941 = vpack.c.bf16 %v8937, %v8937
        %v8942 = vpack.c.bf16 %v8938, %v8938
        %v8943 = vpack.c.bf16 %v8939, %v8939
        %v8944 = vpack.c.bf16 %v8940, %v8940
        %v8945 = vpack.c.bf16 %v8913, %v8913
        %v8946 = vld [vmem:[%s79] sm:$0xff]
        %v8947 = vld [vmem:[%s79 + $0x8] sm:$0xff]
        %v8948 = vld [vmem:[%s79 + $0x10] sm:$0xff]
        %v8949 = vld [vmem:[%s79 + $0x18] sm:$0xff]
        %v8950 = vld [vmem:[%s79 + $0x20] sm:$0xff]
        %v8951 = vld [vmem:[%s79 + $0x28] sm:$0xff]
        %v8952 = vld [vmem:[%s79 + $0x30] sm:$0xff]
        %v8953 = vld [vmem:[%s79 + $0x38] sm:$0xff]
        %v8954 = vld [vmem:[%s79 + $0x40] sm:$0xff]
        %v8955 = vld [vmem:[%s79 + $0x48] sm:$0xff]
        %v8956 = vld [vmem:[%s79 + $0x50] sm:$0xff]
        %v8957 = vld [vmem:[%s79 + $0x58] sm:$0xff]
        %v8958 = vld [vmem:[%s79 + $0x60] sm:$0xff]
        %v8959 = vld [vmem:[%s79 + $0x68] sm:$0xff]
        %v8960 = vld [vmem:[%s79 + $0x70] sm:$0xff]
        %v8961 = vld [vmem:[%s79 + $0x78] sm:$0xff]
        %v8962 = vld [vmem:[%s79 + $0x80] sm:$0xff]
        %v8963 = vld [vmem:[%s79 + $0x88] sm:$0xff]
        %v8964 = vld [vmem:[%s79 + $0x90] sm:$0xff]
        %v8965 = vld [vmem:[%s79 + $0x98] sm:$0xff]
        %v8966 = vld [vmem:[%s79 + $0xa0] sm:$0xff]
        %v8967 = vld [vmem:[%s79 + $0xa8] sm:$0xff]
        %v8968 = vld [vmem:[%s79 + $0xb0] sm:$0xff]
        %v8969 = vld [vmem:[%s79 + $0xb8] sm:$0xff]
        %v8970 = vld [vmem:[%s79 + $0xc0] sm:$0xff]
        %v8971 = vld [vmem:[%s79 + $0xc8] sm:$0xff]
        %v8972 = vld [vmem:[%s79 + $0xd0] sm:$0xff]
        %v8973 = vld [vmem:[%s79 + $0xd8] sm:$0xff]
        %v8974 = vld [vmem:[%s79 + $0xe0] sm:$0xff]
        %v8975 = vld [vmem:[%s79 + $0xe8] sm:$0xff]
        %v8976 = vld [vmem:[%s79 + $0xf0] sm:$0xff]
        %v8977 = vld [vmem:[%s79 + $0xf8] sm:$0xff]
        %v8978 = vld [vmem:[%s79 + $0x100] sm:$0xff]
        %v8979 = vld [vmem:[%s79 + $0x108] sm:$0xff]
        %v8980 = vld [vmem:[%s79 + $0x110] sm:$0xff]
        %v8981 = vld [vmem:[%s79 + $0x118] sm:$0xff]
        %v8982 = vld [vmem:[%s79 + $0x120] sm:$0xff]
        %v8983 = vld [vmem:[%s79 + $0x128] sm:$0xff]
        %v8984 = vld [vmem:[%s79 + $0x130] sm:$0xff]
        %v8985 = vld [vmem:[%s79 + $0x138] sm:$0xff]
        %v8986 = vld [vmem:[%s79 + $0x140] sm:$0xff]
        %v8987 = vld [vmem:[%s79 + $0x148] sm:$0xff]
        %v8988 = vld [vmem:[%s79 + $0x150] sm:$0xff]
        %v8989 = vld [vmem:[%s79 + $0x158] sm:$0xff]
        %v8990 = vld [vmem:[%s79 + $0x160] sm:$0xff]
        %v8991 = vld [vmem:[%s79 + $0x168] sm:$0xff]
        %v8992 = vld [vmem:[%s79 + $0x170] sm:$0xff]
        %v8993 = vld [vmem:[%s79 + $0x178] sm:$0xff]
        %v8994 = vld [vmem:[%s79 + $0x180] sm:$0xff]
        %v8995 = vld [vmem:[%s79 + $0x188] sm:$0xff]
        %v8996 = vld [vmem:[%s79 + $0x190] sm:$0xff]
        %v8997 = vld [vmem:[%s79 + $0x198] sm:$0xff]
        %v8998 = vld [vmem:[%s79 + $0x1a0] sm:$0xff]
        %v8999 = vld [vmem:[%s79 + $0x1a8] sm:$0xff]
        %v9000 = vld [vmem:[%s79 + $0x1b0] sm:$0xff]
        %v9001 = vld [vmem:[%s79 + $0x1b8] sm:$0xff]
        %v9002 = vld [vmem:[%s79 + $0x1c0] sm:$0xff]
        %v9003 = vld [vmem:[%s79 + $0x1c8] sm:$0xff]
        %v9004 = vld [vmem:[%s79 + $0x1d0] sm:$0xff]
        %v9005 = vld [vmem:[%s79 + $0x1d8] sm:$0xff]
        %v9006 = vld [vmem:[%s79 + $0x1e0] sm:$0xff]
        %v9007 = vld [vmem:[%s79 + $0x1e8] sm:$0xff]
        %v9008 = vld [vmem:[%s79 + $0x1f0] sm:$0xff]
        %v9009 = vld [vmem:[%s79 + $0x1f8] sm:$0xff]
        %v9010 = vld [vmem:[%s79 + $0x200] sm:$0xff]
        %v9011 = vld [vmem:[%s79 + $0x208] sm:$0xff]
        %v9012 = vld [vmem:[%s79 + $0x210] sm:$0xff]
        %v9013 = vld [vmem:[%s79 + $0x218] sm:$0xff]
        %v9014 = vld [vmem:[%s79 + $0x220] sm:$0xff]
        %v9015 = vld [vmem:[%s79 + $0x228] sm:$0xff]
        %v9016 = vld [vmem:[%s79 + $0x230] sm:$0xff]
        %v9017 = vld [vmem:[%s79 + $0x238] sm:$0xff]
        %v9018 = vld [vmem:[%s79 + $0x240] sm:$0xff]
        %v9019 = vld [vmem:[%s79 + $0x248] sm:$0xff]
        %v9020 = vld [vmem:[%s79 + $0x250] sm:$0xff]
        %v9021 = vld [vmem:[%s79 + $0x258] sm:$0xff]
        %v9022 = vld [vmem:[%s79 + $0x260] sm:$0xff]
        %v9023 = vld [vmem:[%s79 + $0x268] sm:$0xff]
        %v9024 = vld [vmem:[%s79 + $0x270] sm:$0xff]
        %v9025 = vld [vmem:[%s79 + $0x278] sm:$0xff]
        %v9026 = vld [vmem:[%s79 + $0x280] sm:$0xff]
        %v9027 = vld [vmem:[%s79 + $0x288] sm:$0xff]
        %v9028 = vld [vmem:[%s79 + $0x290] sm:$0xff]
        %v9029 = vld [vmem:[%s79 + $0x298] sm:$0xff]
        %v9030 = vld [vmem:[%s79 + $0x2a0] sm:$0xff]
        %v9031 = vld [vmem:[%s79 + $0x2a8] sm:$0xff]
        %v9032 = vld [vmem:[%s79 + $0x2b0] sm:$0xff]
        %v9033 = vld [vmem:[%s79 + $0x2b8] sm:$0xff]
        %v9034 = vld [vmem:[%s79 + $0x2c0] sm:$0xff]
        %v9035 = vld [vmem:[%s79 + $0x2c8] sm:$0xff]
        %v9036 = vld [vmem:[%s79 + $0x2d0] sm:$0xff]
        %v9037 = vld [vmem:[%s79 + $0x2d8] sm:$0xff]
        %v9038 = vld [vmem:[%s79 + $0x2e0] sm:$0xff]
        %v9039 = vld [vmem:[%s79 + $0x2e8] sm:$0xff]
        %v9040 = vld [vmem:[%s79 + $0x2f0] sm:$0xff]
        %v9041 = vld [vmem:[%s79 + $0x2f8] sm:$0xff]
        %v9042 = vld [vmem:[%s79 + $0x300] sm:$0xff]
        %v9043 = vld [vmem:[%s79 + $0x308] sm:$0xff]
        %v9044 = vld [vmem:[%s79 + $0x310] sm:$0xff]
        %v9045 = vld [vmem:[%s79 + $0x318] sm:$0xff]
        %v9046 = vld [vmem:[%s79 + $0x320] sm:$0xff]
        %v9047 = vld [vmem:[%s79 + $0x328] sm:$0xff]
        %v9048 = vld [vmem:[%s79 + $0x330] sm:$0xff]
        %v9049 = vld [vmem:[%s79 + $0x338] sm:$0xff]
        %v9050 = vld [vmem:[%s79 + $0x340] sm:$0xff]
        %v9051 = vld [vmem:[%s79 + $0x348] sm:$0xff]
        %v9052 = vld [vmem:[%s79 + $0x350] sm:$0xff]
        %v9053 = vld [vmem:[%s79 + $0x358] sm:$0xff]
        %v9054 = vld [vmem:[%s79 + $0x360] sm:$0xff]
        %v9055 = vld [vmem:[%s79 + $0x368] sm:$0xff]
        %v9056 = vld [vmem:[%s79 + $0x370] sm:$0xff]
        %v9057 = vld [vmem:[%s79 + $0x378] sm:$0xff]
        %v9058 = vld [vmem:[%s79 + $0x380] sm:$0xff]
        %v9059 = vld [vmem:[%s79 + $0x388] sm:$0xff]
        %v9060 = vld [vmem:[%s79 + $0x390] sm:$0xff]
        %v9061 = vld [vmem:[%s79 + $0x398] sm:$0xff]
        %v9062 = vld [vmem:[%s79 + $0x3a0] sm:$0xff]
        %v9063 = vld [vmem:[%s79 + $0x3a8] sm:$0xff]
        %v9064 = vld [vmem:[%s79 + $0x3b0] sm:$0xff]
        %v9065 = vld [vmem:[%s79 + $0x3b8] sm:$0xff]
        %v9066 = vld [vmem:[%s79 + $0x3c0] sm:$0xff]
        %v9067 = vld [vmem:[%s79 + $0x3c8] sm:$0xff]
        %v9068 = vld [vmem:[%s79 + $0x3d0] sm:$0xff]
        %v9069 = vld [vmem:[%s79 + $0x3d8] sm:$0xff]
        %v9070 = vld [vmem:[%s79 + $0x3e0] sm:$0xff]
        %v9071 = vld [vmem:[%s79 + $0x3e8] sm:$0xff]
        %v9072 = vld [vmem:[%s79 + $0x3f0] sm:$0xff]
        %v9073 = vld [vmem:[%s79 + $0x3f8] sm:$0xff]
        %v9074 = vld [vmem:[%s79 + $0x400] sm:$0xff]
        %v9075 = vld [vmem:[%s79 + $0x408] sm:$0xff]
        %v9076 = vld [vmem:[%s79 + $0x410] sm:$0xff]
        %v9077 = vld [vmem:[%s79 + $0x418] sm:$0xff]
        %v9078 = vld [vmem:[%s79 + $0x420] sm:$0xff]
        %v9079 = vld [vmem:[%s79 + $0x428] sm:$0xff]
        %v9080 = vld [vmem:[%s79 + $0x430] sm:$0xff]
        %v9081 = vld [vmem:[%s79 + $0x438] sm:$0xff]
        %v9082 = vld [vmem:[%s79 + $0x440] sm:$0xff]
        %v9083 = vld [vmem:[%s79 + $0x448] sm:$0xff]
        %v9084 = vld [vmem:[%s79 + $0x450] sm:$0xff]
        %v9085 = vld [vmem:[%s79 + $0x458] sm:$0xff]
        %v9086 = vld [vmem:[%s79 + $0x460] sm:$0xff]
        %v9087 = vld [vmem:[%s79 + $0x468] sm:$0xff]
        %v9088 = vld [vmem:[%s79 + $0x470] sm:$0xff]
        %v9089 = vld [vmem:[%s79 + $0x478] sm:$0xff]
        %v9090 = vld [vmem:[%s81] sm:$0xf]
        %v9235 = vunpack.c.l.b16 %v8946
        %v9236 = vunpack.c.h.b16 %v8946
        %v9237 = vunpack.c.l.b16 %v8947
        %v9238 = vunpack.c.h.b16 %v8947
        %v9239 = vunpack.c.l.b16 %v8948
        %v9240 = vunpack.c.h.b16 %v8948
        %v9241 = vunpack.c.l.b16 %v8949
        %v9242 = vunpack.c.h.b16 %v8949
        %v9243 = vunpack.c.l.b16 %v8950
        %v9244 = vunpack.c.h.b16 %v8950
        %v9245 = vunpack.c.l.b16 %v8951
        %v9246 = vunpack.c.h.b16 %v8951
        %v9247 = vunpack.c.l.b16 %v8952
        %v9248 = vunpack.c.h.b16 %v8952
        %v9249 = vunpack.c.l.b16 %v8953
        %v9250 = vunpack.c.h.b16 %v8953
        %v9251 = vunpack.c.l.b16 %v8954
        %v9252 = vunpack.c.h.b16 %v8954
        %v9253 = vunpack.c.l.b16 %v8955
        %v9254 = vunpack.c.h.b16 %v8955
        %v9255 = vunpack.c.l.b16 %v8956
        %v9256 = vunpack.c.h.b16 %v8956
        %v9257 = vunpack.c.l.b16 %v8957
        %v9258 = vunpack.c.h.b16 %v8957
        %v9259 = vunpack.c.l.b16 %v8958
        %v9260 = vunpack.c.h.b16 %v8958
        %v9261 = vunpack.c.l.b16 %v8959
        %v9262 = vunpack.c.h.b16 %v8959
        %v9263 = vunpack.c.l.b16 %v8960
        %v9264 = vunpack.c.h.b16 %v8960
        %v9265 = vunpack.c.l.b16 %v8961
        %v9266 = vunpack.c.h.b16 %v8961
        %v9267 = vunpack.c.l.b16 %v8962
        %v9268 = vunpack.c.h.b16 %v8962
        %v9269 = vunpack.c.l.b16 %v8963
        %v9270 = vunpack.c.h.b16 %v8963
        %v9271 = vunpack.c.l.b16 %v8964
        %v9272 = vunpack.c.h.b16 %v8964
        %v9273 = vunpack.c.l.b16 %v8965
        %v9274 = vunpack.c.h.b16 %v8965
        %v9275 = vunpack.c.l.b16 %v8966
        %v9276 = vunpack.c.h.b16 %v8966
        %v9277 = vunpack.c.l.b16 %v8967
        %v9278 = vunpack.c.h.b16 %v8967
        %v9279 = vunpack.c.l.b16 %v8968
        %v9280 = vunpack.c.h.b16 %v8968
        %v9281 = vunpack.c.l.b16 %v8969
        %v9282 = vunpack.c.h.b16 %v8969
        %v9283 = vunpack.c.l.b16 %v8970
        %v9284 = vunpack.c.h.b16 %v8970
        %v9285 = vunpack.c.l.b16 %v8971
        %v9286 = vunpack.c.h.b16 %v8971
        %v9287 = vunpack.c.l.b16 %v8972
        %v9288 = vunpack.c.h.b16 %v8972
        %v9289 = vunpack.c.l.b16 %v8973
        %v9290 = vunpack.c.h.b16 %v8973
        %v9291 = vunpack.c.l.b16 %v8974
        %v9292 = vunpack.c.h.b16 %v8974
        %v9293 = vunpack.c.l.b16 %v8975
        %v9294 = vunpack.c.h.b16 %v8975
        %v9295 = vunpack.c.l.b16 %v8976
        %v9296 = vunpack.c.h.b16 %v8976
        %v9297 = vunpack.c.l.b16 %v8977
        %v9298 = vunpack.c.h.b16 %v8977
        %v9299 = vunpack.c.l.b16 %v8978
        %v9300 = vunpack.c.h.b16 %v8978
        %v9301 = vunpack.c.l.b16 %v8979
        %v9302 = vunpack.c.h.b16 %v8979
        %v9303 = vunpack.c.l.b16 %v8980
        %v9304 = vunpack.c.h.b16 %v8980
        %v9305 = vunpack.c.l.b16 %v8981
        %v9306 = vunpack.c.h.b16 %v8981
        %v9307 = vunpack.c.l.b16 %v8982
        %v9308 = vunpack.c.h.b16 %v8982
        %v9309 = vunpack.c.l.b16 %v8983
        %v9310 = vunpack.c.h.b16 %v8983
        %v9311 = vunpack.c.l.b16 %v8984
        %v9312 = vunpack.c.h.b16 %v8984
        %v9313 = vunpack.c.l.b16 %v8985
        %v9314 = vunpack.c.h.b16 %v8985
        %v9315 = vunpack.c.l.b16 %v8986
        %v9316 = vunpack.c.h.b16 %v8986
        %v9317 = vunpack.c.l.b16 %v8987
        %v9318 = vunpack.c.h.b16 %v8987
        %v9319 = vunpack.c.l.b16 %v8988
        %v9320 = vunpack.c.h.b16 %v8988
        %v9321 = vunpack.c.l.b16 %v8989
        %v9322 = vunpack.c.h.b16 %v8989
        %v9323 = vunpack.c.l.b16 %v8990
        %v9324 = vunpack.c.h.b16 %v8990
        %v9325 = vunpack.c.l.b16 %v8991
        %v9326 = vunpack.c.h.b16 %v8991
        %v9327 = vunpack.c.l.b16 %v8992
        %v9328 = vunpack.c.h.b16 %v8992
        %v9329 = vunpack.c.l.b16 %v8993
        %v9330 = vunpack.c.h.b16 %v8993
        %v9331 = vunpack.c.l.b16 %v8994
        %v9332 = vunpack.c.h.b16 %v8994
        %v9333 = vunpack.c.l.b16 %v8995
        %v9334 = vunpack.c.h.b16 %v8995
        %v9335 = vunpack.c.l.b16 %v8996
        %v9336 = vunpack.c.h.b16 %v8996
        %v9337 = vunpack.c.l.b16 %v8997
        %v9338 = vunpack.c.h.b16 %v8997
        %v9339 = vunpack.c.l.b16 %v8998
        %v9340 = vunpack.c.h.b16 %v8998
        %v9341 = vunpack.c.l.b16 %v8999
        %v9342 = vunpack.c.h.b16 %v8999
        %v9343 = vunpack.c.l.b16 %v9000
        %v9344 = vunpack.c.h.b16 %v9000
        %v9345 = vunpack.c.l.b16 %v9001
        %v9346 = vunpack.c.h.b16 %v9001
        %v9347 = vunpack.c.l.b16 %v9002
        %v9348 = vunpack.c.h.b16 %v9002
        %v9349 = vunpack.c.l.b16 %v9003
        %v9350 = vunpack.c.h.b16 %v9003
        %v9351 = vunpack.c.l.b16 %v9004
        %v9352 = vunpack.c.h.b16 %v9004
        %v9353 = vunpack.c.l.b16 %v9005
        %v9354 = vunpack.c.h.b16 %v9005
        %v9355 = vunpack.c.l.b16 %v9006
        %v9356 = vunpack.c.h.b16 %v9006
        %v9357 = vunpack.c.l.b16 %v9007
        %v9358 = vunpack.c.h.b16 %v9007
        %v9359 = vunpack.c.l.b16 %v9008
        %v9360 = vunpack.c.h.b16 %v9008
        %v9361 = vunpack.c.l.b16 %v9009
        %v9362 = vunpack.c.h.b16 %v9009
        %v9363 = vunpack.c.l.b16 %v9010
        %v9364 = vunpack.c.h.b16 %v9010
        %v9365 = vunpack.c.l.b16 %v9011
        %v9366 = vunpack.c.h.b16 %v9011
        %v9367 = vunpack.c.l.b16 %v9012
        %v9368 = vunpack.c.h.b16 %v9012
        %v9369 = vunpack.c.l.b16 %v9013
        %v9370 = vunpack.c.h.b16 %v9013
        %v9371 = vunpack.c.l.b16 %v9014
        %v9372 = vunpack.c.h.b16 %v9014
        %v9373 = vunpack.c.l.b16 %v9015
        %v9374 = vunpack.c.h.b16 %v9015
        %v9375 = vunpack.c.l.b16 %v9016
        %v9376 = vunpack.c.h.b16 %v9016
        %v9377 = vunpack.c.l.b16 %v9017
        %v9378 = vunpack.c.h.b16 %v9017
        %v9379 = vunpack.c.l.b16 %v9018
        %v9380 = vunpack.c.h.b16 %v9018
        %v9381 = vunpack.c.l.b16 %v9019
        %v9382 = vunpack.c.h.b16 %v9019
        %v9383 = vunpack.c.l.b16 %v9020
        %v9384 = vunpack.c.h.b16 %v9020
        %v9385 = vunpack.c.l.b16 %v9021
        %v9386 = vunpack.c.h.b16 %v9021
        %v9387 = vunpack.c.l.b16 %v9022
        %v9388 = vunpack.c.h.b16 %v9022
        %v9389 = vunpack.c.l.b16 %v9023
        %v9390 = vunpack.c.h.b16 %v9023
        %v9391 = vunpack.c.l.b16 %v9024
        %v9392 = vunpack.c.h.b16 %v9024
        %v9393 = vunpack.c.l.b16 %v9025
        %v9394 = vunpack.c.h.b16 %v9025
        %v9395 = vunpack.c.l.b16 %v9026
        %v9396 = vunpack.c.h.b16 %v9026
        %v9397 = vunpack.c.l.b16 %v9027
        %v9398 = vunpack.c.h.b16 %v9027
        %v9399 = vunpack.c.l.b16 %v9028
        %v9400 = vunpack.c.h.b16 %v9028
        %v9401 = vunpack.c.l.b16 %v9029
        %v9402 = vunpack.c.h.b16 %v9029
        %v9403 = vunpack.c.l.b16 %v9030
        %v9404 = vunpack.c.h.b16 %v9030
        %v9405 = vunpack.c.l.b16 %v9031
        %v9406 = vunpack.c.h.b16 %v9031
        %v9407 = vunpack.c.l.b16 %v9032
        %v9408 = vunpack.c.h.b16 %v9032
        %v9409 = vunpack.c.l.b16 %v9033
        %v9410 = vunpack.c.h.b16 %v9033
        %v9411 = vunpack.c.l.b16 %v9034
        %v9412 = vunpack.c.h.b16 %v9034
        %v9413 = vunpack.c.l.b16 %v9035
        %v9414 = vunpack.c.h.b16 %v9035
        %v9415 = vunpack.c.l.b16 %v9036
        %v9416 = vunpack.c.h.b16 %v9036
        %v9417 = vunpack.c.l.b16 %v9037
        %v9418 = vunpack.c.h.b16 %v9037
        %v9419 = vunpack.c.l.b16 %v9038
        %v9420 = vunpack.c.h.b16 %v9038
        %v9421 = vunpack.c.l.b16 %v9039
        %v9422 = vunpack.c.h.b16 %v9039
        %v9423 = vunpack.c.l.b16 %v9040
        %v9424 = vunpack.c.h.b16 %v9040
        %v9425 = vunpack.c.l.b16 %v9041
        %v9426 = vunpack.c.h.b16 %v9041
        %v9427 = vunpack.c.l.b16 %v9042
        %v9428 = vunpack.c.h.b16 %v9042
        %v9429 = vunpack.c.l.b16 %v9043
        %v9430 = vunpack.c.h.b16 %v9043
        %v9431 = vunpack.c.l.b16 %v9044
        %v9432 = vunpack.c.h.b16 %v9044
        %v9433 = vunpack.c.l.b16 %v9045
        %v9434 = vunpack.c.h.b16 %v9045
        %v9435 = vunpack.c.l.b16 %v9046
        %v9436 = vunpack.c.h.b16 %v9046
        %v9437 = vunpack.c.l.b16 %v9047
        %v9438 = vunpack.c.h.b16 %v9047
        %v9439 = vunpack.c.l.b16 %v9048
        %v9440 = vunpack.c.h.b16 %v9048
        %v9441 = vunpack.c.l.b16 %v9049
        %v9442 = vunpack.c.h.b16 %v9049
        %v9443 = vunpack.c.l.b16 %v9050
        %v9444 = vunpack.c.h.b16 %v9050
        %v9445 = vunpack.c.l.b16 %v9051
        %v9446 = vunpack.c.h.b16 %v9051
        %v9447 = vunpack.c.l.b16 %v9052
        %v9448 = vunpack.c.h.b16 %v9052
        %v9449 = vunpack.c.l.b16 %v9053
        %v9450 = vunpack.c.h.b16 %v9053
        %v9451 = vunpack.c.l.b16 %v9054
        %v9452 = vunpack.c.h.b16 %v9054
        %v9453 = vunpack.c.l.b16 %v9055
        %v9454 = vunpack.c.h.b16 %v9055
        %v9455 = vunpack.c.l.b16 %v9056
        %v9456 = vunpack.c.h.b16 %v9056
        %v9457 = vunpack.c.l.b16 %v9057
        %v9458 = vunpack.c.h.b16 %v9057
        %v9459 = vunpack.c.l.b16 %v9058
        %v9460 = vunpack.c.h.b16 %v9058
        %v9461 = vunpack.c.l.b16 %v9059
        %v9462 = vunpack.c.h.b16 %v9059
        %v9463 = vunpack.c.l.b16 %v9060
        %v9464 = vunpack.c.h.b16 %v9060
        %v9465 = vunpack.c.l.b16 %v9061
        %v9466 = vunpack.c.h.b16 %v9061
        %v9467 = vunpack.c.l.b16 %v9062
        %v9468 = vunpack.c.h.b16 %v9062
        %v9469 = vunpack.c.l.b16 %v9063
        %v9470 = vunpack.c.h.b16 %v9063
        %v9471 = vunpack.c.l.b16 %v9064
        %v9472 = vunpack.c.h.b16 %v9064
        %v9473 = vunpack.c.l.b16 %v9065
        %v9474 = vunpack.c.h.b16 %v9065
        %v9475 = vunpack.c.l.b16 %v9066
        %v9476 = vunpack.c.h.b16 %v9066
        %v9477 = vunpack.c.l.b16 %v9067
        %v9478 = vunpack.c.h.b16 %v9067
        %v9479 = vunpack.c.l.b16 %v9068
        %v9480 = vunpack.c.h.b16 %v9068
        %v9481 = vunpack.c.l.b16 %v9069
        %v9482 = vunpack.c.h.b16 %v9069
        %v9483 = vunpack.c.l.b16 %v9070
        %v9484 = vunpack.c.h.b16 %v9070
        %v9485 = vunpack.c.l.b16 %v9071
        %v9486 = vunpack.c.h.b16 %v9071
        %v9487 = vunpack.c.l.b16 %v9072
        %v9488 = vunpack.c.h.b16 %v9072
        %v9489 = vunpack.c.l.b16 %v9073
        %v9490 = vunpack.c.h.b16 %v9073
        %v9491 = vunpack.c.l.b16 %v9074
        %v9492 = vunpack.c.h.b16 %v9074
        %v9493 = vunpack.c.l.b16 %v9075
        %v9494 = vunpack.c.h.b16 %v9075
        %v9495 = vunpack.c.l.b16 %v9076
        %v9496 = vunpack.c.h.b16 %v9076
        %v9497 = vunpack.c.l.b16 %v9077
        %v9498 = vunpack.c.h.b16 %v9077
        %v9499 = vunpack.c.l.b16 %v9078
        %v9500 = vunpack.c.h.b16 %v9078
        %v9501 = vunpack.c.l.b16 %v9079
        %v9502 = vunpack.c.h.b16 %v9079
        %v9503 = vunpack.c.l.b16 %v9080
        %v9504 = vunpack.c.h.b16 %v9080
        %v9505 = vunpack.c.l.b16 %v9081
        %v9506 = vunpack.c.h.b16 %v9081
        %v9507 = vunpack.c.l.b16 %v9082
        %v9508 = vunpack.c.h.b16 %v9082
        %v9509 = vunpack.c.l.b16 %v9083
        %v9510 = vunpack.c.h.b16 %v9083
        %v9511 = vunpack.c.l.b16 %v9084
        %v9512 = vunpack.c.h.b16 %v9084
        %v9513 = vunpack.c.l.b16 %v9085
        %v9514 = vunpack.c.h.b16 %v9085
        %v9515 = vunpack.c.l.b16 %v9086
        %v9516 = vunpack.c.h.b16 %v9086
        %v9517 = vunpack.c.l.b16 %v9087
        %v9518 = vunpack.c.h.b16 %v9087
        %v9519 = vunpack.c.l.b16 %v9088
        %v9520 = vunpack.c.h.b16 %v9088
        %v9521 = vunpack.c.l.b16 %v9089
        %v9522 = vunpack.c.h.b16 %v9089
        %v9523 = vpack.c.b16 %v9239, %v9235
        %v9524 = vpack.c.b16 %v9240, %v9236
        %v9525 = vpack.c.b16 %v9241, %v9237
        %v9526 = vpack.c.b16 %v9242, %v9238
        %v9527 = vpack.c.b16 %v9247, %v9243
        %v9528 = vpack.c.b16 %v9248, %v9244
        %v9529 = vpack.c.b16 %v9249, %v9245
        %v9530 = vpack.c.b16 %v9250, %v9246
        %v9531 = vpack.c.b16 %v9255, %v9251
        %v9532 = vpack.c.b16 %v9256, %v9252
        %v9533 = vpack.c.b16 %v9257, %v9253
        %v9534 = vpack.c.b16 %v9258, %v9254
        %v9535 = vpack.c.b16 %v9263, %v9259
        %v9536 = vpack.c.b16 %v9264, %v9260
        %v9537 = vpack.c.b16 %v9265, %v9261
        %v9538 = vpack.c.b16 %v9266, %v9262
        %v9539 = vpack.c.b16 %v9271, %v9267
        %v9540 = vpack.c.b16 %v9272, %v9268
        %v9541 = vpack.c.b16 %v9273, %v9269
        %v9542 = vpack.c.b16 %v9274, %v9270
        %v9543 = vpack.c.b16 %v9279, %v9275
        %v9544 = vpack.c.b16 %v9280, %v9276
        %v9545 = vpack.c.b16 %v9281, %v9277
        %v9546 = vpack.c.b16 %v9282, %v9278
        %v9547 = vpack.c.b16 %v9287, %v9283
        %v9548 = vpack.c.b16 %v9288, %v9284
        %v9549 = vpack.c.b16 %v9289, %v9285
        %v9550 = vpack.c.b16 %v9290, %v9286
        %v9551 = vpack.c.b16 %v9295, %v9291
        %v9552 = vpack.c.b16 %v9296, %v9292
        %v9553 = vpack.c.b16 %v9297, %v9293
        %v9554 = vpack.c.b16 %v9298, %v9294
        %v9555 = vpack.c.b16 %v9303, %v9299
        %v9556 = vpack.c.b16 %v9304, %v9300
        %v9557 = vpack.c.b16 %v9305, %v9301
        %v9558 = vpack.c.b16 %v9306, %v9302
        %v9559 = vpack.c.b16 %v9311, %v9307
        %v9560 = vpack.c.b16 %v9312, %v9308
        %v9561 = vpack.c.b16 %v9313, %v9309
        %v9562 = vpack.c.b16 %v9314, %v9310
        %v9563 = vpack.c.b16 %v9319, %v9315
        %v9564 = vpack.c.b16 %v9320, %v9316
        %v9565 = vpack.c.b16 %v9321, %v9317
        %v9566 = vpack.c.b16 %v9322, %v9318
        %v9567 = vpack.c.b16 %v9327, %v9323
        %v9568 = vpack.c.b16 %v9328, %v9324
        %v9569 = vpack.c.b16 %v9329, %v9325
        %v9570 = vpack.c.b16 %v9330, %v9326
        %v9571 = vpack.c.b16 %v9335, %v9331
        %v9572 = vpack.c.b16 %v9336, %v9332
        %v9573 = vpack.c.b16 %v9337, %v9333
        %v9574 = vpack.c.b16 %v9338, %v9334
        %v9575 = vpack.c.b16 %v9343, %v9339
        %v9576 = vpack.c.b16 %v9344, %v9340
        %v9577 = vpack.c.b16 %v9345, %v9341
        %v9578 = vpack.c.b16 %v9346, %v9342
        %v9579 = vpack.c.b16 %v9351, %v9347
        %v9580 = vpack.c.b16 %v9352, %v9348
        %v9581 = vpack.c.b16 %v9353, %v9349
        %v9582 = vpack.c.b16 %v9354, %v9350
        %v9583 = vpack.c.b16 %v9359, %v9355
        %v9584 = vpack.c.b16 %v9360, %v9356
        %v9585 = vpack.c.b16 %v9361, %v9357
        %v9586 = vpack.c.b16 %v9362, %v9358
        %v9587 = vpack.c.b16 %v9367, %v9363
        %v9588 = vpack.c.b16 %v9368, %v9364
        %v9589 = vpack.c.b16 %v9369, %v9365
        %v9590 = vpack.c.b16 %v9370, %v9366
        %v9591 = vpack.c.b16 %v9375, %v9371
        %v9592 = vpack.c.b16 %v9376, %v9372
        %v9593 = vpack.c.b16 %v9377, %v9373
        %v9594 = vpack.c.b16 %v9378, %v9374
        %v9595 = vpack.c.b16 %v9383, %v9379
        %v9596 = vpack.c.b16 %v9384, %v9380
        %v9597 = vpack.c.b16 %v9385, %v9381
        %v9598 = vpack.c.b16 %v9386, %v9382
        %v9599 = vpack.c.b16 %v9391, %v9387
        %v9600 = vpack.c.b16 %v9392, %v9388
        %v9601 = vpack.c.b16 %v9393, %v9389
        %v9602 = vpack.c.b16 %v9394, %v9390
        %v9603 = vpack.c.b16 %v9399, %v9395
        %v9604 = vpack.c.b16 %v9400, %v9396
        %v9605 = vpack.c.b16 %v9401, %v9397
        %v9606 = vpack.c.b16 %v9402, %v9398
        %v9607 = vpack.c.b16 %v9407, %v9403
        %v9608 = vpack.c.b16 %v9408, %v9404
        %v9609 = vpack.c.b16 %v9409, %v9405
        %v9610 = vpack.c.b16 %v9410, %v9406
        %v9611 = vpack.c.b16 %v9415, %v9411
        %v9612 = vpack.c.b16 %v9416, %v9412
        %v9613 = vpack.c.b16 %v9417, %v9413
        %v9614 = vpack.c.b16 %v9418, %v9414
        %v9615 = vpack.c.b16 %v9423, %v9419
        %v9616 = vpack.c.b16 %v9424, %v9420
        %v9617 = vpack.c.b16 %v9425, %v9421
        %v9618 = vpack.c.b16 %v9426, %v9422
        %v9619 = vpack.c.b16 %v9431, %v9427
        %v9620 = vpack.c.b16 %v9432, %v9428
        %v9621 = vpack.c.b16 %v9433, %v9429
        %v9622 = vpack.c.b16 %v9434, %v9430
        %v9623 = vpack.c.b16 %v9439, %v9435
        %v9624 = vpack.c.b16 %v9440, %v9436
        %v9625 = vpack.c.b16 %v9441, %v9437
        %v9626 = vpack.c.b16 %v9442, %v9438
        %v9627 = vpack.c.b16 %v9447, %v9443
        %v9628 = vpack.c.b16 %v9448, %v9444
        %v9629 = vpack.c.b16 %v9449, %v9445
        %v9630 = vpack.c.b16 %v9450, %v9446
        %v9631 = vpack.c.b16 %v9455, %v9451
        %v9632 = vpack.c.b16 %v9456, %v9452
        %v9633 = vpack.c.b16 %v9457, %v9453
        %v9634 = vpack.c.b16 %v9458, %v9454
        %v9635 = vpack.c.b16 %v9463, %v9459
        %v9636 = vpack.c.b16 %v9464, %v9460
        %v9637 = vpack.c.b16 %v9465, %v9461
        %v9638 = vpack.c.b16 %v9466, %v9462
        %v9639 = vpack.c.b16 %v9471, %v9467
        %v9640 = vpack.c.b16 %v9472, %v9468
        %v9641 = vpack.c.b16 %v9473, %v9469
        %v9642 = vpack.c.b16 %v9474, %v9470
        %v9643 = vpack.c.b16 %v9479, %v9475
        %v9644 = vpack.c.b16 %v9480, %v9476
        %v9645 = vpack.c.b16 %v9481, %v9477
        %v9646 = vpack.c.b16 %v9482, %v9478
        %v9647 = vpack.c.b16 %v9487, %v9483
        %v9648 = vpack.c.b16 %v9488, %v9484
        %v9649 = vpack.c.b16 %v9489, %v9485
        %v9650 = vpack.c.b16 %v9490, %v9486
        %v9651 = vpack.c.b16 %v9495, %v9491
        %v9652 = vpack.c.b16 %v9496, %v9492
        %v9653 = vpack.c.b16 %v9497, %v9493
        %v9654 = vpack.c.b16 %v9498, %v9494
        %v9655 = vpack.c.b16 %v9503, %v9499
        %v9656 = vpack.c.b16 %v9504, %v9500
        %v9657 = vpack.c.b16 %v9505, %v9501
        %v9658 = vpack.c.b16 %v9506, %v9502
        %v9659 = vpack.c.b16 %v9511, %v9507
        %v9660 = vpack.c.b16 %v9512, %v9508
        %v9661 = vpack.c.b16 %v9513, %v9509
        %v9662 = vpack.c.b16 %v9514, %v9510
        %v9663 = vpack.c.b16 %v9519, %v9515
        %v9664 = vpack.c.b16 %v9520, %v9516
        %v9665 = vpack.c.b16 %v9521, %v9517
        %v9666 = vpack.c.b16 %v9522, %v9518
        %v9812 = vperm.slane %v9090, 0
        %v9813 = vperm.slane %v9090, 1
        %v9814 = vperm.slane %v9090, 2
        %v9815 = vperm.slane %v9090, 3
        %v9821 = vsel %vm2527, %v8945, 0
        %9823 = vmatpush.bf16.msra.mxu0 %v9551
        %9824 = vmatpush.bf16.msra.mxu0 %v9547
        %9825 = vmatpush.bf16.msra.mxu0 %v9543
        %9826 = vmatpush.bf16.msra.mxu0 %v9539
        %9827 = vmatpush.bf16.msra.mxu0 %v9535
        %9828 = vmatpush.bf16.msra.mxu0 %v9531
        %9829 = vmatpush.bf16.msra.mxu0 %v9527
        %9830 = vmatpush.bf16.msra.mxu0 %v9523
        %9831 = vmatmul.bf16.gmra.mxu0 %v8941
        %v9832 = vpop.f32.mrf.mxu0
        %v9833 = vadd.f32 %v9812, %v9832
        %v9834 = vpop.f32.mrf.mxu0
        %9835 = vdwg.mxu0
        %9836 = vmatpush.bf16.msra.mxu0 %v9583
        %9837 = vmatpush.bf16.msra.mxu0 %v9579
        %9838 = vmatpush.bf16.msra.mxu0 %v9575
        %9839 = vmatpush.bf16.msra.mxu0 %v9571
        %9840 = vmatpush.bf16.msra.mxu0 %v9567
        %9841 = vmatpush.bf16.msra.mxu0 %v9563
        %9842 = vmatpush.bf16.msra.mxu0 %v9559
        %9843 = vmatpush.bf16.msra.mxu0 %v9555
        %9844 = vmatmul.bf16.gmra.mxu0 %v8942
        %v9845 = vpop.f32.mrf.mxu0
        %v9846 = vadd.f32 %v9833, %v9845
        %v9847 = vpop.f32.mrf.mxu0
        %9848 = vdwg.mxu0
        %9849 = vmatpush.bf16.msra.mxu0 %v9615
        %9850 = vmatpush.bf16.msra.mxu0 %v9611
        %9851 = vmatpush.bf16.msra.mxu0 %v9607
        %9852 = vmatpush.bf16.msra.mxu0 %v9603
        %9853 = vmatpush.bf16.msra.mxu0 %v9599
        %9854 = vmatpush.bf16.msra.mxu0 %v9595
        %9855 = vmatpush.bf16.msra.mxu0 %v9591
        %9856 = vmatpush.bf16.msra.mxu0 %v9587
        %9857 = vmatmul.bf16.gmra.mxu0 %v8943
        %v9858 = vpop.f32.mrf.mxu0
        %v9859 = vadd.f32 %v9846, %v9858
        %v9860 = vpop.f32.mrf.mxu0
        %9861 = vdwg.mxu0
        %9862 = vmatpush.bf16.msra.mxu0 %v9647
        %9863 = vmatpush.bf16.msra.mxu0 %v9643
        %9864 = vmatpush.bf16.msra.mxu0 %v9639
        %9865 = vmatpush.bf16.msra.mxu0 %v9635
        %9866 = vmatpush.bf16.msra.mxu0 %v9631
        %9867 = vmatpush.bf16.msra.mxu0 %v9627
        %9868 = vmatpush.bf16.msra.mxu0 %v9623
        %9869 = vmatpush.bf16.msra.mxu0 %v9619
        %9870 = vmatmul.bf16.gmra.mxu0 %v8944
        %v9871 = vpop.f32.mrf.mxu0
        %v9872 = vadd.f32 %v9859, %v9871
        %v9873 = vpop.f32.mrf.mxu0
        %9874 = vdwg.mxu0
        %9875 = vmatpush.bf16.msra.mxu0 0
        %9876 = vmatpush.bf16.msra.mxu0 0
        %9877 = vmatpush.bf16.msra.mxu0 0
        %9878 = vmatpush.bf16.msra.mxu0 0
        %9879 = vmatpush.bf16.msra.mxu0 %v9663
        %9880 = vmatpush.bf16.msra.mxu0 %v9659
        %9881 = vmatpush.bf16.msra.mxu0 %v9655
        %9882 = vmatpush.bf16.msra.mxu0 %v9651
        %9883 = vmatmul.bf16.gmra.mxu0 %v9821
        %v9884 = vpop.f32.mrf.mxu0
        %v9885 = vadd.f32 %v9872, %v9884
        %v9886 = vpop.f32.mrf.mxu0
        %9887 = vdwg.mxu0
        %9888 = vmatpush.bf16.msra.mxu0 %v9552
        %9889 = vmatpush.bf16.msra.mxu0 %v9548
        %9890 = vmatpush.bf16.msra.mxu0 %v9544
        %9891 = vmatpush.bf16.msra.mxu0 %v9540
        %9892 = vmatpush.bf16.msra.mxu0 %v9536
        %9893 = vmatpush.bf16.msra.mxu0 %v9532
        %9894 = vmatpush.bf16.msra.mxu0 %v9528
        %9895 = vmatpush.bf16.msra.mxu0 %v9524
        %9896 = vmatmul.bf16.gmra.mxu0 %v8941
        %v9897 = vpop.f32.mrf.mxu0
        %v9898 = vadd.f32 %v9813, %v9897
        %v9899 = vpop.f32.mrf.mxu0
        %9900 = vdwg.mxu0
        %9901 = vmatpush.bf16.msra.mxu0 %v9584
        %9902 = vmatpush.bf16.msra.mxu0 %v9580
        %9903 = vmatpush.bf16.msra.mxu0 %v9576
        %9904 = vmatpush.bf16.msra.mxu0 %v9572
        %9905 = vmatpush.bf16.msra.mxu0 %v9568
        %9906 = vmatpush.bf16.msra.mxu0 %v9564
        %9907 = vmatpush.bf16.msra.mxu0 %v9560
        %9908 = vmatpush.bf16.msra.mxu0 %v9556
        %9909 = vmatmul.bf16.gmra.mxu0 %v8942
        %v9910 = vpop.f32.mrf.mxu0
        %v9911 = vadd.f32 %v9898, %v9910
        %v9912 = vpop.f32.mrf.mxu0
        %9913 = vdwg.mxu0
        %9914 = vmatpush.bf16.msra.mxu0 %v9616
        %9915 = vmatpush.bf16.msra.mxu0 %v9612
        %9916 = vmatpush.bf16.msra.mxu0 %v9608
        %9917 = vmatpush.bf16.msra.mxu0 %v9604
        %9918 = vmatpush.bf16.msra.mxu0 %v9600
        %9919 = vmatpush.bf16.msra.mxu0 %v9596
        %9920 = vmatpush.bf16.msra.mxu0 %v9592
        %9921 = vmatpush.bf16.msra.mxu0 %v9588
        %9922 = vmatmul.bf16.gmra.mxu0 %v8943
        %v9923 = vpop.f32.mrf.mxu0
        %v9924 = vadd.f32 %v9911, %v9923
        %v9925 = vpop.f32.mrf.mxu0
        %9926 = vdwg.mxu0
        %9927 = vmatpush.bf16.msra.mxu0 %v9648
        %9928 = vmatpush.bf16.msra.mxu0 %v9644
        %9929 = vmatpush.bf16.msra.mxu0 %v9640
        %9930 = vmatpush.bf16.msra.mxu0 %v9636
        %9931 = vmatpush.bf16.msra.mxu0 %v9632
        %9932 = vmatpush.bf16.msra.mxu0 %v9628
        %9933 = vmatpush.bf16.msra.mxu0 %v9624
        %9934 = vmatpush.bf16.msra.mxu0 %v9620
        %9935 = vmatmul.bf16.gmra.mxu0 %v8944
        %v9936 = vpop.f32.mrf.mxu0
        %v9937 = vadd.f32 %v9924, %v9936
        %v9938 = vpop.f32.mrf.mxu0
        %9939 = vdwg.mxu0
        %9940 = vmatpush.bf16.msra.mxu0 0
        %9941 = vmatpush.bf16.msra.mxu0 0
        %9942 = vmatpush.bf16.msra.mxu0 0
        %9943 = vmatpush.bf16.msra.mxu0 0
        %9944 = vmatpush.bf16.msra.mxu0 %v9664
        %9945 = vmatpush.bf16.msra.mxu0 %v9660
        %9946 = vmatpush.bf16.msra.mxu0 %v9656
        %9947 = vmatpush.bf16.msra.mxu0 %v9652
        %9948 = vmatmul.bf16.gmra.mxu0 %v9821
        %v9949 = vpop.f32.mrf.mxu0
        %v9950 = vadd.f32 %v9937, %v9949
        %v9951 = vpop.f32.mrf.mxu0
        %9952 = vdwg.mxu0
        %9953 = vmatpush.bf16.msra.mxu0 %v9553
        %9954 = vmatpush.bf16.msra.mxu0 %v9549
        %9955 = vmatpush.bf16.msra.mxu0 %v9545
        %9956 = vmatpush.bf16.msra.mxu0 %v9541
        %9957 = vmatpush.bf16.msra.mxu0 %v9537
        %9958 = vmatpush.bf16.msra.mxu0 %v9533
        %9959 = vmatpush.bf16.msra.mxu0 %v9529
        %9960 = vmatpush.bf16.msra.mxu0 %v9525
        %9961 = vmatmul.bf16.gmra.mxu0 %v8941
        %v9962 = vpop.f32.mrf.mxu0
        %v9963 = vadd.f32 %v9814, %v9962
        %v9964 = vpop.f32.mrf.mxu0
        %9965 = vdwg.mxu0
        %9966 = vmatpush.bf16.msra.mxu0 %v9585
        %9967 = vmatpush.bf16.msra.mxu0 %v9581
        %9968 = vmatpush.bf16.msra.mxu0 %v9577
        %9969 = vmatpush.bf16.msra.mxu0 %v9573
        %9970 = vmatpush.bf16.msra.mxu0 %v9569
        %9971 = vmatpush.bf16.msra.mxu0 %v9565
        %9972 = vmatpush.bf16.msra.mxu0 %v9561
        %9973 = vmatpush.bf16.msra.mxu0 %v9557
        %9974 = vmatmul.bf16.gmra.mxu0 %v8942
        %v9975 = vpop.f32.mrf.mxu0
        %v9976 = vadd.f32 %v9963, %v9975
        %v9977 = vpop.f32.mrf.mxu0
        %9978 = vdwg.mxu0
        %9979 = vmatpush.bf16.msra.mxu0 %v9617
        %9980 = vmatpush.bf16.msra.mxu0 %v9613
        %9981 = vmatpush.bf16.msra.mxu0 %v9609
        %9982 = vmatpush.bf16.msra.mxu0 %v9605
        %9983 = vmatpush.bf16.msra.mxu0 %v9601
        %9984 = vmatpush.bf16.msra.mxu0 %v9597
        %9985 = vmatpush.bf16.msra.mxu0 %v9593
        %9986 = vmatpush.bf16.msra.mxu0 %v9589
        %9987 = vmatmul.bf16.gmra.mxu0 %v8943
        %v9988 = vpop.f32.mrf.mxu0
        %v9989 = vadd.f32 %v9976, %v9988
        %v9990 = vpop.f32.mrf.mxu0
        %9991 = vdwg.mxu0
        %9992 = vmatpush.bf16.msra.mxu0 %v9649
        %9993 = vmatpush.bf16.msra.mxu0 %v9645
        %9994 = vmatpush.bf16.msra.mxu0 %v9641
        %9995 = vmatpush.bf16.msra.mxu0 %v9637
        %9996 = vmatpush.bf16.msra.mxu0 %v9633
        %9997 = vmatpush.bf16.msra.mxu0 %v9629
        %9998 = vmatpush.bf16.msra.mxu0 %v9625
        %9999 = vmatpush.bf16.msra.mxu0 %v9621
        %10000 = vmatmul.bf16.gmra.mxu0 %v8944
        %v10001 = vpop.f32.mrf.mxu0
        %v10002 = vadd.f32 %v9989, %v10001
        %v10003 = vpop.f32.mrf.mxu0
        %10004 = vdwg.mxu0
        %10005 = vmatpush.bf16.msra.mxu0 0
        %10006 = vmatpush.bf16.msra.mxu0 0
        %10007 = vmatpush.bf16.msra.mxu0 0
        %10008 = vmatpush.bf16.msra.mxu0 0
        %10009 = vmatpush.bf16.msra.mxu0 %v9665
        %10010 = vmatpush.bf16.msra.mxu0 %v9661
        %10011 = vmatpush.bf16.msra.mxu0 %v9657
        %10012 = vmatpush.bf16.msra.mxu0 %v9653
        %10013 = vmatmul.bf16.gmra.mxu0 %v9821
        %v10014 = vpop.f32.mrf.mxu0
        %v10015 = vadd.f32 %v10002, %v10014
        %v10016 = vpop.f32.mrf.mxu0
        %10017 = vdwg.mxu0
        %10018 = vmatpush.bf16.msra.mxu0 %v9554
        %10019 = vmatpush.bf16.msra.mxu0 %v9550
        %10020 = vmatpush.bf16.msra.mxu0 %v9546
        %10021 = vmatpush.bf16.msra.mxu0 %v9542
        %10022 = vmatpush.bf16.msra.mxu0 %v9538
        %10023 = vmatpush.bf16.msra.mxu0 %v9534
        %10024 = vmatpush.bf16.msra.mxu0 %v9530
        %10025 = vmatpush.bf16.msra.mxu0 %v9526
        %10026 = vmatmul.bf16.gmra.mxu0 %v8941
        %v10027 = vpop.f32.mrf.mxu0
        %v10028 = vadd.f32 %v9815, %v10027
        %v10029 = vpop.f32.mrf.mxu0
        %10030 = vdwg.mxu0
        %10031 = vmatpush.bf16.msra.mxu0 %v9586
        %10032 = vmatpush.bf16.msra.mxu0 %v9582
        %10033 = vmatpush.bf16.msra.mxu0 %v9578
        %10034 = vmatpush.bf16.msra.mxu0 %v9574
        %10035 = vmatpush.bf16.msra.mxu0 %v9570
        %10036 = vmatpush.bf16.msra.mxu0 %v9566
        %10037 = vmatpush.bf16.msra.mxu0 %v9562
        %10038 = vmatpush.bf16.msra.mxu0 %v9558
        %10039 = vmatmul.bf16.gmra.mxu0 %v8942
        %v10040 = vpop.f32.mrf.mxu0
        %v10041 = vadd.f32 %v10028, %v10040
        %v10042 = vpop.f32.mrf.mxu0
        %10043 = vdwg.mxu0
        %10044 = vmatpush.bf16.msra.mxu0 %v9618
        %10045 = vmatpush.bf16.msra.mxu0 %v9614
        %10046 = vmatpush.bf16.msra.mxu0 %v9610
        %10047 = vmatpush.bf16.msra.mxu0 %v9606
        %10048 = vmatpush.bf16.msra.mxu0 %v9602
        %10049 = vmatpush.bf16.msra.mxu0 %v9598
        %10050 = vmatpush.bf16.msra.mxu0 %v9594
        %10051 = vmatpush.bf16.msra.mxu0 %v9590
        %10052 = vmatmul.bf16.gmra.mxu0 %v8943
        %v10053 = vpop.f32.mrf.mxu0
        %v10054 = vadd.f32 %v10041, %v10053
        %v10055 = vpop.f32.mrf.mxu0
        %10056 = vdwg.mxu0
        %10057 = vmatpush.bf16.msra.mxu0 %v9650
        %10058 = vmatpush.bf16.msra.mxu0 %v9646
        %10059 = vmatpush.bf16.msra.mxu0 %v9642
        %10060 = vmatpush.bf16.msra.mxu0 %v9638
        %10061 = vmatpush.bf16.msra.mxu0 %v9634
        %10062 = vmatpush.bf16.msra.mxu0 %v9630
        %10063 = vmatpush.bf16.msra.mxu0 %v9626
        %10064 = vmatpush.bf16.msra.mxu0 %v9622
        %10065 = vmatmul.bf16.gmra.mxu0 %v8944
        %v10066 = vpop.f32.mrf.mxu0
        %v10067 = vadd.f32 %v10054, %v10066
        %v10068 = vpop.f32.mrf.mxu0
        %10069 = vdwg.mxu0
        %10070 = vmatpush.bf16.msra.mxu0 0
        %10071 = vmatpush.bf16.msra.mxu0 0
        %10072 = vmatpush.bf16.msra.mxu0 0
        %10073 = vmatpush.bf16.msra.mxu0 0
        %10074 = vmatpush.bf16.msra.mxu0 %v9666
        %10075 = vmatpush.bf16.msra.mxu0 %v9662
        %10076 = vmatpush.bf16.msra.mxu0 %v9658
        %10077 = vmatpush.bf16.msra.mxu0 %v9654
        %10078 = vmatmul.bf16.gmra.mxu0 %v9821
        %v10079 = vpop.f32.mrf.mxu0
        %v10080 = vadd.f32 %v10067, %v10079
        %v10081 = vpop.f32.mrf.mxu0
        %10082 = vdwg.mxu0
        %v10083 = vmax.f32 %v9885, 0.0
        %v10084 = vmax.f32 %v9950, 0.0
        %v10085 = vmax.f32 %v10015, 0.0
        %v10086 = vmax.f32 %v10080, 0.0
        %v10091 = vrot.slane %v10083, 4
        %v10092 = vrot.slane %v10084, 4
        %v10093 = vrot.slane %v10085, 4
        %v10094 = vrot.slane %v10086, 4
        %v10099 = vsel %vm4360, 0.0, %v10091
        %v10100 = vsel %vm4360, 0.0, %v10092
        %v10101 = vsel %vm4360, 0.0, %v10093
        %v10102 = vsel %vm4360, 0.0, %v10094
        %v10103 = vsel %vm2083, %v10099, 0.0
        %v10104 = vsel %vm2083, %v10100, 0.0
        %v10105 = vsel %vm2083, %v10101, 0.0
        %v10106 = vsel %vm2083, %v10102, 0.0
        %v10107 = vmul.f32 %v10103, %v8905
        %v10108 = vmul.f32 %v10104, %v8905
        %v10109 = vmul.f32 %v10105, %v8905
        %v10110 = vmul.f32 %v10106, %v8905
        %v10111 = vmul.f32 %v8910, 0.0
        %v10112 = vadd.f32 %v10107, %v8506
        %v10113 = vadd.f32 %v10108, %v8529
        %v10114 = vadd.f32 %v10109, %v8552
        %v10115 = vadd.f32 %v10110, %v8575
        %v10116 = vadd.f32 %v10111, %v8509
        %v10117 = vadd.f32 %v10111, %v8532
        %v10118 = vadd.f32 %v10111, %v8555
        %v10119 = vadd.f32 %v10111, %v8578
        %v10120 = vmul.f32 %v10112, %v8905
        %v10121 = vmul.f32 %v10113, %v8905
        %v10122 = vmul.f32 %v10114, %v8905
        %v10123 = vmul.f32 %v10115, %v8905
        %v10124 = vmul.f32 %v10116, %v8910
        %v10125 = vmul.f32 %v10117, %v8910
        %v10126 = vmul.f32 %v10118, %v8910
        %v10127 = vmul.f32 %v10119, %v8910
        %v10128 = vsel %vm2705, %v10124, 0.0
        %v10129 = vadd.f32 %v10120, %v10128
        %v10130 = vrot.slane %v10129, 4
        %v10131 = vadd.f32 %v10129, %v10130
        %v10132 = vrot.slane %v10131, 2
        %v10133 = vadd.f32 %v10131, %v10132
        %v10134 = vrot.slane %v10133, 1
        %v10135 = vadd.f32 %v10133, %v10134
        %v10136 = vsel %vm2705, %v10125, 0.0
        %v10137 = vadd.f32 %v10121, %v10136
        %v10138 = vrot.slane %v10137, 4
        %v10139 = vadd.f32 %v10137, %v10138
        %v10140 = vrot.slane %v10139, 2
        %v10141 = vadd.f32 %v10139, %v10140
        %v10142 = vrot.slane %v10141, 1
        %v10143 = vadd.f32 %v10141, %v10142
        %v10144 = vsel %vm2705, %v10126, 0.0
        %v10145 = vadd.f32 %v10122, %v10144
        %v10146 = vrot.slane %v10145, 4
        %v10147 = vadd.f32 %v10145, %v10146
        %v10148 = vrot.slane %v10147, 2
        %v10149 = vadd.f32 %v10147, %v10148
        %v10150 = vrot.slane %v10149, 1
        %v10151 = vadd.f32 %v10149, %v10150
        %v10152 = vsel %vm2705, %v10127, 0.0
        %v10153 = vadd.f32 %v10123, %v10152
        %v10154 = vrot.slane %v10153, 4
        %v10155 = vadd.f32 %v10153, %v10154
        %v10156 = vrot.slane %v10155, 2
        %v10157 = vadd.f32 %v10155, %v10156
        %v10158 = vrot.slane %v10157, 1
        %v10159 = vadd.f32 %v10157, %v10158
        %v10160 = vpack.c.bf16 %v10135, %v10135
        %v10161 = vpack.c.bf16 %v10143, %v10143
        %v10162 = vpack.c.bf16 %v10151, %v10151
        %v10163 = vpack.c.bf16 %v10159, %v10159
        %v10164 = vld [vmem:[%s83] sm:$0xf]
        %v10165 = vld [vmem:[%s83 + $0x4] sm:$0xf]
        %v10166 = vld [vmem:[%s83 + $0x8] sm:$0xf]
        %v10167 = vld [vmem:[%s83 + $0xc] sm:$0xf]
        %v10168 = vld [vmem:[%s83 + $0x10] sm:$0xf]
        %v10169 = vld [vmem:[%s83 + $0x14] sm:$0xf]
        %v10170 = vld [vmem:[%s83 + $0x18] sm:$0xf]
        %v10171 = vld [vmem:[%s83 + $0x1c] sm:$0xf]
        %v10172 = vld [vmem:[%s83 + $0x20] sm:$0xf]
        %v10173 = vld [vmem:[%s83 + $0x24] sm:$0xf]
        %v10174 = vld [vmem:[%s83 + $0x28] sm:$0xf]
        %v10175 = vld [vmem:[%s83 + $0x2c] sm:$0xf]
        %v10176 = vld [vmem:[%s83 + $0x30] sm:$0xf]
        %v10177 = vld [vmem:[%s83 + $0x34] sm:$0xf]
        %v10178 = vld [vmem:[%s83 + $0x38] sm:$0xf]
        %v10179 = vld [vmem:[%s83 + $0x3c] sm:$0xf]
        %v10180 = vld [vmem:[%s83 + $0x40] sm:$0xf]
        %v10181 = vld [vmem:[%s83 + $0x44] sm:$0xf]
        %v10182 = vld [vmem:[%s83 + $0x48] sm:$0xf]
        %v10183 = vld [vmem:[%s83 + $0x4c] sm:$0xf]
        %v10184 = vld [vmem:[%s83 + $0x50] sm:$0xf]
        %v10185 = vld [vmem:[%s83 + $0x54] sm:$0xf]
        %v10186 = vld [vmem:[%s83 + $0x58] sm:$0xf]
        %v10187 = vld [vmem:[%s83 + $0x5c] sm:$0xf]
        %v10188 = vld [vmem:[%s83 + $0x60] sm:$0xf]
        %v10189 = vld [vmem:[%s83 + $0x64] sm:$0xf]
        %v10190 = vld [vmem:[%s83 + $0x68] sm:$0xf]
        %v10191 = vld [vmem:[%s83 + $0x6c] sm:$0xf]
        %v10192 = vld [vmem:[%s83 + $0x70] sm:$0xf]
        %v10193 = vld [vmem:[%s83 + $0x74] sm:$0xf]
        %v10194 = vld [vmem:[%s83 + $0x78] sm:$0xf]
        %v10195 = vld [vmem:[%s83 + $0x7c] sm:$0xf]
        %v10196 = vld [vmem:[%s83 + $0x80] sm:$0xf]
        %v10197 = vld [vmem:[%s83 + $0x84] sm:$0xf]
        %v10198 = vld [vmem:[%s83 + $0x88] sm:$0xf]
        %v10199 = vld [vmem:[%s83 + $0x8c] sm:$0xf]
        %v10200 = vld [vmem:[%s83 + $0x90] sm:$0xf]
        %v10201 = vld [vmem:[%s83 + $0x94] sm:$0xf]
        %v10202 = vld [vmem:[%s83 + $0x98] sm:$0xf]
        %v10203 = vld [vmem:[%s83 + $0x9c] sm:$0xf]
        %v10204 = vld [vmem:[%s83 + $0xa0] sm:$0xf]
        %v10205 = vld [vmem:[%s83 + $0xa4] sm:$0xf]
        %v10206 = vld [vmem:[%s83 + $0xa8] sm:$0xf]
        %v10207 = vld [vmem:[%s83 + $0xac] sm:$0xf]
        %v10208 = vld [vmem:[%s83 + $0xb0] sm:$0xf]
        %v10209 = vld [vmem:[%s83 + $0xb4] sm:$0xf]
        %v10210 = vld [vmem:[%s83 + $0xb8] sm:$0xf]
        %v10211 = vld [vmem:[%s83 + $0xbc] sm:$0xf]
        %v10212 = vld [vmem:[%s83 + $0xc0] sm:$0xf]
        %v10213 = vld [vmem:[%s83 + $0xc4] sm:$0xf]
        %v10214 = vld [vmem:[%s83 + $0xc8] sm:$0xf]
        %v10215 = vld [vmem:[%s83 + $0xcc] sm:$0xf]
        %v10216 = vld [vmem:[%s83 + $0xd0] sm:$0xf]
        %v10217 = vld [vmem:[%s83 + $0xd4] sm:$0xf]
        %v10218 = vld [vmem:[%s83 + $0xd8] sm:$0xf]
        %v10219 = vld [vmem:[%s83 + $0xdc] sm:$0xf]
        %v10220 = vld [vmem:[%s83 + $0xe0] sm:$0xf]
        %v10221 = vld [vmem:[%s83 + $0xe4] sm:$0xf]
        %v10222 = vld [vmem:[%s83 + $0xe8] sm:$0xf]
        %v10223 = vld [vmem:[%s83 + $0xec] sm:$0xf]
        %v10224 = vld [vmem:[%s83 + $0xf0] sm:$0xf]
        %v10225 = vld [vmem:[%s83 + $0xf4] sm:$0xf]
        %v10226 = vld [vmem:[%s83 + $0xf8] sm:$0xf]
        %v10227 = vld [vmem:[%s83 + $0xfc] sm:$0xf]
        %v10228 = vld [vmem:[#allocation5] sm:$0x1]
        %v10293 = vunpack.c.l.b16 %v10164
        %v10294 = vunpack.c.l.b16 %v10165
        %v10295 = vunpack.c.l.b16 %v10166
        %v10296 = vunpack.c.l.b16 %v10167
        %v10297 = vunpack.c.l.b16 %v10168
        %v10298 = vunpack.c.l.b16 %v10169
        %v10299 = vunpack.c.l.b16 %v10170
        %v10300 = vunpack.c.l.b16 %v10171
        %v10301 = vunpack.c.l.b16 %v10172
        %v10302 = vunpack.c.l.b16 %v10173
        %v10303 = vunpack.c.l.b16 %v10174
        %v10304 = vunpack.c.l.b16 %v10175
        %v10305 = vunpack.c.l.b16 %v10176
        %v10306 = vunpack.c.l.b16 %v10177
        %v10307 = vunpack.c.l.b16 %v10178
        %v10308 = vunpack.c.l.b16 %v10179
        %v10309 = vunpack.c.l.b16 %v10180
        %v10310 = vunpack.c.l.b16 %v10181
        %v10311 = vunpack.c.l.b16 %v10182
        %v10312 = vunpack.c.l.b16 %v10183
        %v10313 = vunpack.c.l.b16 %v10184
        %v10314 = vunpack.c.l.b16 %v10185
        %v10315 = vunpack.c.l.b16 %v10186
        %v10316 = vunpack.c.l.b16 %v10187
        %v10317 = vunpack.c.l.b16 %v10188
        %v10318 = vunpack.c.l.b16 %v10189
        %v10319 = vunpack.c.l.b16 %v10190
        %v10320 = vunpack.c.l.b16 %v10191
        %v10321 = vunpack.c.l.b16 %v10192
        %v10322 = vunpack.c.l.b16 %v10193
        %v10323 = vunpack.c.l.b16 %v10194
        %v10324 = vunpack.c.l.b16 %v10195
        %v10325 = vunpack.c.l.b16 %v10196
        %v10326 = vunpack.c.l.b16 %v10197
        %v10327 = vunpack.c.l.b16 %v10198
        %v10328 = vunpack.c.l.b16 %v10199
        %v10329 = vunpack.c.l.b16 %v10200
        %v10330 = vunpack.c.l.b16 %v10201
        %v10331 = vunpack.c.l.b16 %v10202
        %v10332 = vunpack.c.l.b16 %v10203
        %v10333 = vunpack.c.l.b16 %v10204
        %v10334 = vunpack.c.l.b16 %v10205
        %v10335 = vunpack.c.l.b16 %v10206
        %v10336 = vunpack.c.l.b16 %v10207
        %v10337 = vunpack.c.l.b16 %v10208
        %v10338 = vunpack.c.l.b16 %v10209
        %v10339 = vunpack.c.l.b16 %v10210
        %v10340 = vunpack.c.l.b16 %v10211
        %v10341 = vunpack.c.l.b16 %v10212
        %v10342 = vunpack.c.l.b16 %v10213
        %v10343 = vunpack.c.l.b16 %v10214
        %v10344 = vunpack.c.l.b16 %v10215
        %v10345 = vunpack.c.l.b16 %v10216
        %v10346 = vunpack.c.l.b16 %v10217
        %v10347 = vunpack.c.l.b16 %v10218
        %v10348 = vunpack.c.l.b16 %v10219
        %v10349 = vunpack.c.l.b16 %v10220
        %v10350 = vunpack.c.l.b16 %v10221
        %v10351 = vunpack.c.l.b16 %v10222
        %v10352 = vunpack.c.l.b16 %v10223
        %v10353 = vunpack.c.l.b16 %v10224
        %v10354 = vunpack.c.l.b16 %v10225
        %v10355 = vunpack.c.l.b16 %v10226
        %v10356 = vunpack.c.l.b16 %v10227
        %v10357 = vpack.c.b16 %v10294, %v10293
        %v10358 = vpack.c.b16 %v10296, %v10295
        %v10359 = vpack.c.b16 %v10298, %v10297
        %v10360 = vpack.c.b16 %v10300, %v10299
        %v10361 = vpack.c.b16 %v10302, %v10301
        %v10362 = vpack.c.b16 %v10304, %v10303
        %v10363 = vpack.c.b16 %v10306, %v10305
        %v10364 = vpack.c.b16 %v10308, %v10307
        %v10365 = vpack.c.b16 %v10310, %v10309
        %v10366 = vpack.c.b16 %v10312, %v10311
        %v10367 = vpack.c.b16 %v10314, %v10313
        %v10368 = vpack.c.b16 %v10316, %v10315
        %v10369 = vpack.c.b16 %v10318, %v10317
        %v10370 = vpack.c.b16 %v10320, %v10319
        %v10371 = vpack.c.b16 %v10322, %v10321
        %v10372 = vpack.c.b16 %v10324, %v10323
        %v10373 = vpack.c.b16 %v10326, %v10325
        %v10374 = vpack.c.b16 %v10328, %v10327
        %v10375 = vpack.c.b16 %v10330, %v10329
        %v10376 = vpack.c.b16 %v10332, %v10331
        %v10377 = vpack.c.b16 %v10334, %v10333
        %v10378 = vpack.c.b16 %v10336, %v10335
        %v10379 = vpack.c.b16 %v10338, %v10337
        %v10380 = vpack.c.b16 %v10340, %v10339
        %v10381 = vpack.c.b16 %v10342, %v10341
        %v10382 = vpack.c.b16 %v10344, %v10343
        %v10383 = vpack.c.b16 %v10346, %v10345
        %v10384 = vpack.c.b16 %v10348, %v10347
        %v10385 = vpack.c.b16 %v10350, %v10349
        %v10386 = vpack.c.b16 %v10352, %v10351
        %v10387 = vpack.c.b16 %v10354, %v10353
        %v10388 = vpack.c.b16 %v10356, %v10355
        %10421 = vmatpush.bf16.msra.mxu0 %v10364
        %10422 = vmatpush.bf16.msra.mxu0 %v10363
        %10423 = vmatpush.bf16.msra.mxu0 %v10362
        %10424 = vmatpush.bf16.msra.mxu0 %v10361
        %10425 = vmatpush.bf16.msra.mxu0 %v10360
        %10426 = vmatpush.bf16.msra.mxu0 %v10359
        %10427 = vmatpush.bf16.msra.mxu0 %v10358
        %10428 = vmatpush.bf16.msra.mxu0 %v10357
        %10429 = vmatmul.bf16.gmra.mxu0 %v10160
        %v10430 = vpop.f32.mrf.mxu0
        %v10431 = vadd.f32 %v10228, %v10430
        %v10432 = vpop.f32.mrf.mxu0
        %10433 = vdwg.mxu0
        %10434 = vmatpush.bf16.msra.mxu0 %v10372
        %10435 = vmatpush.bf16.msra.mxu0 %v10371
        %10436 = vmatpush.bf16.msra.mxu0 %v10370
        %10437 = vmatpush.bf16.msra.mxu0 %v10369
        %10438 = vmatpush.bf16.msra.mxu0 %v10368
        %10439 = vmatpush.bf16.msra.mxu0 %v10367
        %10440 = vmatpush.bf16.msra.mxu0 %v10366
        %10441 = vmatpush.bf16.msra.mxu0 %v10365
        %10442 = vmatmul.bf16.gmra.mxu0 %v10161
        %v10443 = vpop.f32.mrf.mxu0
        %v10444 = vadd.f32 %v10431, %v10443
        %v10445 = vpop.f32.mrf.mxu0
        %10446 = vdwg.mxu0
        %10447 = vmatpush.bf16.msra.mxu0 %v10380
        %10448 = vmatpush.bf16.msra.mxu0 %v10379
        %10449 = vmatpush.bf16.msra.mxu0 %v10378
        %10450 = vmatpush.bf16.msra.mxu0 %v10377
        %10451 = vmatpush.bf16.msra.mxu0 %v10376
        %10452 = vmatpush.bf16.msra.mxu0 %v10375
        %10453 = vmatpush.bf16.msra.mxu0 %v10374
        %10454 = vmatpush.bf16.msra.mxu0 %v10373
        %10455 = vmatmul.bf16.gmra.mxu0 %v10162
        %v10456 = vpop.f32.mrf.mxu0
        %v10457 = vadd.f32 %v10444, %v10456
        %v10458 = vpop.f32.mrf.mxu0
        %10459 = vdwg.mxu0
        %10460 = vmatpush.bf16.msra.mxu0 %v10388
        %10461 = vmatpush.bf16.msra.mxu0 %v10387
        %10462 = vmatpush.bf16.msra.mxu0 %v10386
        %10463 = vmatpush.bf16.msra.mxu0 %v10385
        %10464 = vmatpush.bf16.msra.mxu0 %v10384
        %10465 = vmatpush.bf16.msra.mxu0 %v10383
        %10466 = vmatpush.bf16.msra.mxu0 %v10382
        %10467 = vmatpush.bf16.msra.mxu0 %v10381
        %10468 = vmatmul.bf16.gmra.mxu0 %v10163
        %v10469 = vpop.f32.mrf.mxu0
        %v10470 = vadd.f32 %v10457, %v10469
        %v10471 = vpop.f32.mrf.mxu0
        %10472 = vdwg.mxu0
        %v10473 = vmax.f32 %v10470, 0.0
        %vm10474 = vcmask 73728
        %10475 = vst.msk [vmem:[%s1316] sm:$0x1] %vm10474, %v10473
        %s10476 = sand.u32 %s1019, 1
        %s10477 = scalar_lea.sflag [#allocation4], %s10476
        %s10478 = sand.u32 %s1019, 1
        %s10479 = scalar_lea.vmem [#allocation7], %s10478
        // Predicated region
        $region201: #{squeezenet_forward.1} parent=191 // pred_check
          %p10480 = pneg %p1029
        $region202: #{squeezenet_forward.1} parent=191 // pred_check_branch
          %10482 = sbr.rel (%p10480) target = $region204
        $region203: #{squeezenet_forward.1} parent=191 // pred_region
          %10484 = vsyncadd %s10477, 0
          %s10485 = scalar_lea.hbm %s87, %s103
          %s10487 = sshll.u32 %s10479, 4
          %s10488 = int_to_ptr.vmem [resolvable:$true] %s10487
          %s10489 = sshll.u32 %s10485, 4
          %s10490 = int_to_ptr.hbm [resolvable:$true] %s10489
          %10492 = dma.vmem_to_hbm [thread:$0]  %s10488, 16, %s10490, %s10477
        $region204: #{squeezenet_forward.1} parent=191 // pred_fallthru
          _
      $region192: #{squeezenet_forward.1} parent=5 // pred_fallthru
        _
      %p10493 = scmp.le.s32.totalorder 2, %s98
      // Predicated region
      $region205: #{squeezenet_forward.1} parent=5 // pred_check
        %p10494 = pneg %p10493
      $region206: #{squeezenet_forward.1} parent=5 // pred_check_branch
        %10496 = sbr.rel (%p10494) target = $region208
      $region207: #{squeezenet_forward.1} parent=5 // pred_region
        %s10497 = ssub.s32 %s98, 2
        // Predicated region
        $region209: #{squeezenet_forward.1} parent=207 // pred_check
          %p10498 = pneg %p1035
        $region210: #{squeezenet_forward.1} parent=207 // pred_check_branch
          %10500 = sbr.rel (%p10498) target = $region212
        $region211: #{squeezenet_forward.1} parent=207 // pred_region
          %s10501 = sand.u32 %s1020, 1
          %s10502 = scalar_lea.sflag [#allocation4], %s10501
          %s10503 = sand.u32 %s1020, 1
          %s10504 = scalar_lea.vmem [#allocation7], %s10503
          %10506 = dma.done %s10502, 16
        $region212: #{squeezenet_forward.1} parent=207 // pred_fallthru
          _
      $region208: #{squeezenet_forward.1} parent=5 // pred_fallthru
        _
    $region6: #{squeezenet_forward.1} parent=1 // loop_footer
      %s102 = sadd.s32 1, %s98
    $region7: #{squeezenet_forward.1} parent=1 // loop_footer_branch
      %97 = sbr.rel target = $region3
    $region8: #{squeezenet_forward.1} parent=1 // loop_exit
      _
    %10507 = vsyncpa [#allocation3], 1
    %s10508 = scalar_lea.sflag [#allocation3], 1
    %10509 = vsyncpa %s10508, 1
    %10510 = vsyncpa [#allocation6], 1
    %10511 = vsyncpa [#allocation4], 1
    %s10512 = scalar_lea.sflag [#allocation4], 1
    %10513 = vsyncpa %s10512, 1

</llo_original>
